<compile_context>
chip_gen: v7x
topology: tpu7x:2x2x1
jax: 0.10.0
libtpu: 0.0.40
codegen_flags: <defaults>
</compile_context>

<pallas_src>
import math

import numpy as np
import jax
import jax.numpy as jnp
from jax.experimental import pallas as pl
from jax.experimental.pallas import tpu as pltpu

LayerNumber = 3
NumberofFeatureChannel = 4
FILTER_SIZE = 11
MERGE_FILTER_SIZE = 11  # equal to FILTER_SIZE; the fused kernel relies on that
BN_EPS = 1e-5
LRELU_SLOPE = 0.1

_VMEM_SPEC = pl.BlockSpec(memory_space=pltpu.MemorySpace.VMEM)


# --------------------------------------------------------------------------
# Fused Pallas kernel: the entire U-Net forward in one invocation.
# --------------------------------------------------------------------------
def _unet_fused_kernel(*refs):
    """Ref order (see unet_forward):
      x                              (1, N*L)         packed input
      G[0..nlayers]                  (K, NL_s, NL_s)  per-tap shift/pad matrices
      D[0..nlayers-1]                (NL_s, NL_s/2)   ::2 decimation matrices
      U[0..nlayers-1]                (NL_s, 2*NL_s)   2x linear upsample matrices
      per conv layer (enc0..enc2, mid, dec0..dec2):
        W2 (Cout, K*Cin), gamma (Cout, 1), beta (Cout, 1)
      Wout (1, nef+1), bout (1, 1)
      out                            (1, N*L)
    """
    nl = LayerNumber
    K = FILTER_SIZE

    idx = 0
    x_ref = refs[idx]; idx += 1
    g_refs = refs[idx:idx + nl + 1]; idx += nl + 1
    d_refs = refs[idx:idx + nl]; idx += nl
    u_refs = refs[idx:idx + nl]; idx += nl
    conv_refs = refs[idx:idx + 3 * (2 * nl + 1)]; idx += 3 * (2 * nl + 1)
    wout_ref = refs[idx]; idx += 1
    bout_ref = refs[idx]; idx += 1
    o_ref = refs[idx]

    def conv_bn_lrelu(xv, g_ref, w2_ref, gamma_ref, beta_ref):
        # im2col: K shifted copies built with static 0/1 matrices (zero 'same'
        # padding + batch boundaries folded in), then ONE weight matmul with
        # contraction depth K*Cin.  Conv bias omitted: train-mode BatchNorm
        # subtracts the per-channel mean, cancelling it exactly.
        taps = [
            jnp.dot(xv, g_ref[k], preferred_element_type=jnp.float32)
            for k in range(K)
        ]
        patches = jnp.concatenate(taps, axis=0)                  # (K*Cin, NL)
        y = jnp.dot(w2_ref[...], patches,
                    preferred_element_type=jnp.float32)          # (Cout, NL)
        # BatchNorm1d, training-mode batch stats, single pass E[x^2]-E[x]^2.
        mean = jnp.mean(y, axis=1, keepdims=True)
        var = jnp.mean(y * y, axis=1, keepdims=True) - mean * mean
        yh = (y - mean) * jax.lax.rsqrt(var + BN_EPS)
        yh = yh * gamma_ref[...] + beta_ref[...]
        return jnp.where(yh >= 0, yh, LRELU_SLOPE * yh)          # LeakyReLU(0.1)

    x = x_ref[...]                                               # (1, N*L)
    inp = x
    enc_feats = []

    # Encoder: conv/bn/lrelu, stash skip, ::2 decimation via selection matmul.
    for i in range(nl):
        w2, gm, bt = conv_refs[3 * i:3 * i + 3]
        x = conv_bn_lrelu(x, g_refs[i], w2, gm, bt)
        enc_feats.append(x)
        x = jnp.dot(x, d_refs[i][...], preferred_element_type=jnp.float32)

    # Middle block.
    w2, gm, bt = conv_refs[3 * nl:3 * nl + 3]
    x = conv_bn_lrelu(x, g_refs[nl], w2, gm, bt)

    # Decoder: 2x linear upsample (static interp-weight matmul), skip concat,
    # conv/bn/lrelu.
    for i in range(nl):
        x = jnp.dot(x, u_refs[i][...], preferred_element_type=jnp.float32)
        x = jnp.concatenate([x, enc_feats[nl - 1 - i]], axis=0)
        j = nl + 1 + i
        w2, gm, bt = conv_refs[3 * j:3 * j + 3]
        x = conv_bn_lrelu(x, g_refs[nl - 1 - i], w2, gm, bt)

    # Output head: concat raw input, 1x1 conv + tanh, one lane-dense store.
    xa = jnp.concatenate([x, inp], axis=0)                       # (nef+1, N*L)
    y = jnp.dot(wout_ref[...], xa, preferred_element_type=jnp.float32)
    o_ref[...] = jnp.tanh(y + bout_ref[...])


# --------------------------------------------------------------------------
# Static helper matrices (host-side numpy; tiny).
# Packed index convention: column b = n*L + l for batch n, position l.
# --------------------------------------------------------------------------
def _make_shift_mats(n, length, k):
    """G[k][a, b] = 1  iff  a is the tap-k source of output b (same batch,
    zero 'same' padding => rows simply missing when out of range)."""
    pad = k // 2
    nl_tot = n * length
    g = np.zeros((k, nl_tot, nl_tot), np.float32)
    b = np.arange(nl_tot)
    bn, bl = b // length, b % length
    for kk in range(k):
        src = bl + kk - pad
        valid = (src >= 0) & (src < length)
        a = bn * length + np.where(valid, src, 0)
        g[kk, a[valid], b[valid]] = 1.0
    return g


def _make_downsample_mat(n, length):
    """Selection matrix implementing x[:, :, ::2] on the packed layout."""
    lo = length // 2
    d = np.zeros((n * length, n * lo), np.float32)
    b = np.arange(n * lo)
    bn, bl = b // lo, b % lo
    d[bn * length + 2 * bl, b] = 1.0
    return d


def _make_upsample_mat(n, length):
    """F.upsample(scale_factor=2, mode='linear', align_corners=False)."""
    lo = 2 * length
    u = np.zeros((n * length, n * lo), np.float32)
    for bn in range(n):
        for j in range(lo):
            src = max((j + 0.5) * 0.5 - 0.5, 0.0)
            i0 = min(int(math.floor(src)), length - 1)
            i1 = min(i0 + 1, length - 1)
            lam = src - i0
            u[bn * length + i0, bn * lo + j] += 1.0 - lam
            u[bn * length + i1, bn * lo + j] += lam
    return u


# --------------------------------------------------------------------------
# Parameter construction (deterministic, PyTorch-default-style uniform init)
# --------------------------------------------------------------------------
def init_conv(key, cout, cin, k):
    kw, kb = jax.random.split(key)
    bound = 1.0 / math.sqrt(cin * k)
    w = jax.random.uniform(kw, (cout, cin, k), jnp.float32, -bound, bound)
    b = jax.random.uniform(kb, (cout,), jnp.float32, -bound, bound)
    return w, b


def build_params(key):
    nlayers = LayerNumber
    nef = NumberofFeatureChannel
    echannelin = [1] + [(i + 1) * nef for i in range(nlayers - 1)]
    echannelout = [(i + 1) * nef for i in range(nlayers)]
    dchannelout = echannelout[::-1]
    dchannelin = [dchannelout[0] * 2] + [
        i * nef + (i - 1) * nef for i in range(nlayers, 1, -1)
    ]

    params = {"enc": [], "dec": []}
    keys = jax.random.split(key, 2 * nlayers + 2)
    ki = 0
    for i in range(nlayers):
        w, b = init_conv(keys[ki], echannelout[i], echannelin[i], FILTER_SIZE)
        ki += 1
        g = jnp.ones((echannelout[i],), jnp.float32)
        bt = jnp.zeros((echannelout[i],), jnp.float32)
        params["enc"].append((w, b, g, bt))
    for i in range(nlayers):
        w, b = init_conv(keys[ki], dchannelout[i], dchannelin[i], MERGE_FILTER_SIZE)
        ki += 1
        g = jnp.ones((dchannelout[i],), jnp.float32)
        bt = jnp.zeros((dchannelout[i],), jnp.float32)
        params["dec"].append((w, b, g, bt))
    w, b = init_conv(keys[ki], echannelout[-1], echannelout[-1], FILTER_SIZE)
    ki += 1
    params["mid"] = (
        w, b,
        jnp.ones((echannelout[-1],), jnp.float32),
        jnp.zeros((echannelout[-1],), jnp.float32),
    )
    w, b = init_conv(keys[ki], 1, NumberofFeatureChannel + 1, 1)
    params["out"] = (w, b)
    return params


# --------------------------------------------------------------------------
# Forward wrapper: one pallas_call for the whole network.
# --------------------------------------------------------------------------
def unet_forward(x, params):
    nl = LayerNumber
    K = FILTER_SIZE
    assert FILTER_SIZE == MERGE_FILTER_SIZE
    N, cin, L = x.shape
    assert cin == 1 and L % (2 ** nl) == 0

    lengths = [L // (2 ** i) for i in range(nl + 1)]        # e.g. [64,32,16,8]

    g_mats = [jnp.asarray(_make_shift_mats(N, s, K)) for s in lengths]
    d_mats = [jnp.asarray(_make_downsample_mat(N, lengths[i])) for i in range(nl)]
    u_mats = [jnp.asarray(_make_upsample_mat(N, lengths[nl - i])) for i in range(nl)]

    conv_inputs = []
    for w, _b, gamma, beta in params["enc"] + [params["mid"]] + params["dec"]:
        cout, cin_l, k = w.shape
        # (Cout, Cin, K) -> (Cout, K*Cin): row k*Cin + c matches the tap-major
        # patch matrix built in the kernel.
        w2 = jnp.transpose(w, (0, 2, 1)).reshape(cout, k * cin_l)
        conv_inputs += [w2, gamma.reshape(cout, 1), beta.reshape(cout, 1)]
        # conv bias _b intentionally unused: train-mode BatchNorm cancels it.

    w_out, b_out = params["out"]
    wout2 = w_out[:, :, 0]                                   # (1, nef+1)
    bout2 = b_out.reshape(1, 1)

    inputs = ([x.reshape(1, N * L)] + g_mats + d_mats + u_mats
              + conv_inputs + [wout2, bout2])

    out_packed = pl.pallas_call(
        _unet_fused_kernel,
        out_shape=jax.ShapeDtypeStruct((1, N * L), jnp.float32),
        in_specs=[_VMEM_SPEC] * len(inputs),
        out_specs=_VMEM_SPEC,
    )(*inputs)

    return out_packed.reshape(N, 1, L)


# --------------------------------------------------------------------------
if __name__ == "__main__":
    key = jax.random.PRNGKey(0)
    k_x, k_p = jax.random.split(key)

    N, L = 2, 64  # L divisible by 2**LayerNumber; N*L = 128 (lane-dense)
    x = jax.random.normal(k_x, (N, 1, L), jnp.float32)
    params = build_params(k_p)

    fwd = jax.jit(unet_forward)
    out = jax.block_until_ready(fwd(x, params))

    assert out.shape == (N, 1, L), out.shape
    assert bool(jnp.all(jnp.isfinite(out)))
    print("KERNEL_OK")
</pallas_src>

<mosaic_0001>
module attributes {stable_mosaic.version = 11 : i64} {
  func.func @_unet_fused_kernel(%arg0: memref<1x128xf32, #tpu.memory_space<vmem>>, %arg1: memref<11x128x128xf32, #tpu.memory_space<vmem>>, %arg2: memref<11x64x64xf32, #tpu.memory_space<vmem>>, %arg3: memref<11x32x32xf32, #tpu.memory_space<vmem>>, %arg4: memref<11x16x16xf32, #tpu.memory_space<vmem>>, %arg5: memref<128x64xf32, #tpu.memory_space<vmem>>, %arg6: memref<64x32xf32, #tpu.memory_space<vmem>>, %arg7: memref<32x16xf32, #tpu.memory_space<vmem>>, %arg8: memref<16x32xf32, #tpu.memory_space<vmem>>, %arg9: memref<32x64xf32, #tpu.memory_space<vmem>>, %arg10: memref<64x128xf32, #tpu.memory_space<vmem>>, %arg11: memref<4x11xf32, #tpu.memory_space<vmem>>, %arg12: memref<4x1xf32, #tpu.memory_space<vmem>>, %arg13: memref<4x1xf32, #tpu.memory_space<vmem>>, %arg14: memref<8x44xf32, #tpu.memory_space<vmem>>, %arg15: memref<8x1xf32, #tpu.memory_space<vmem>>, %arg16: memref<8x1xf32, #tpu.memory_space<vmem>>, %arg17: memref<12x88xf32, #tpu.memory_space<vmem>>, %arg18: memref<12x1xf32, #tpu.memory_space<vmem>>, %arg19: memref<12x1xf32, #tpu.memory_space<vmem>>, %arg20: memref<12x132xf32, #tpu.memory_space<vmem>>, %arg21: memref<12x1xf32, #tpu.memory_space<vmem>>, %arg22: memref<12x1xf32, #tpu.memory_space<vmem>>, %arg23: memref<12x264xf32, #tpu.memory_space<vmem>>, %arg24: memref<12x1xf32, #tpu.memory_space<vmem>>, %arg25: memref<12x1xf32, #tpu.memory_space<vmem>>, %arg26: memref<8x220xf32, #tpu.memory_space<vmem>>, %arg27: memref<8x1xf32, #tpu.memory_space<vmem>>, %arg28: memref<8x1xf32, #tpu.memory_space<vmem>>, %arg29: memref<4x132xf32, #tpu.memory_space<vmem>>, %arg30: memref<4x1xf32, #tpu.memory_space<vmem>>, %arg31: memref<4x1xf32, #tpu.memory_space<vmem>>, %arg32: memref<1x5xf32, #tpu.memory_space<vmem>>, %arg33: memref<1x1xf32, #tpu.memory_space<vmem>>, %arg34: memref<1x128xf32, #tpu.memory_space<vmem>>) attributes {dimension_semantics = [], scalar_prefetch = 0 : i64, scratch_operands = 0 : i64, tpu.core_type = #tpu.core_type<tc>} {
    %c0 = arith.constant 0 : index
    %c0_0 = arith.constant 0 : index
    %0 = vector.load %arg0[%c0, %c0_0] : memref<1x128xf32, #tpu.memory_space<vmem>>, vector<1x128xf32>
    %c0_1 = arith.constant 0 : index
    %c0_2 = arith.constant 0 : index
    %c0_3 = arith.constant 0 : index
    %1 = vector.load %arg1[%c0_1, %c0_2, %c0_3] : memref<11x128x128xf32, #tpu.memory_space<vmem>>, vector<1x128x128xf32>
    %2 = vector.shape_cast %1 : vector<1x128x128xf32> to vector<128x128xf32>
    %cst = arith.constant dense<0.000000e+00> : vector<1x128xf32>
    %3 = tpu.matmul %0, %2, %cst {dimension_numbers = #tpu.dot_dimension_numbers<[1], [0], [0], [1], [0, 0, 1, 1], [], []>} : vector<1x128xf32>, vector<128x128xf32>, vector<1x128xf32> -> vector<1x128xf32>
    %c1 = arith.constant 1 : index
    %c0_4 = arith.constant 0 : index
    %c0_5 = arith.constant 0 : index
    %4 = vector.load %arg1[%c1, %c0_4, %c0_5] : memref<11x128x128xf32, #tpu.memory_space<vmem>>, vector<1x128x128xf32>
    %5 = vector.shape_cast %4 : vector<1x128x128xf32> to vector<128x128xf32>
    %cst_6 = arith.constant dense<0.000000e+00> : vector<1x128xf32>
    %6 = tpu.matmul %0, %5, %cst_6 {dimension_numbers = #tpu.dot_dimension_numbers<[1], [0], [0], [1], [0, 0, 1, 1], [], []>} : vector<1x128xf32>, vector<128x128xf32>, vector<1x128xf32> -> vector<1x128xf32>
    %c2 = arith.constant 2 : index
    %c0_7 = arith.constant 0 : index
    %c0_8 = arith.constant 0 : index
    %7 = vector.load %arg1[%c2, %c0_7, %c0_8] : memref<11x128x128xf32, #tpu.memory_space<vmem>>, vector<1x128x128xf32>
    %8 = vector.shape_cast %7 : vector<1x128x128xf32> to vector<128x128xf32>
    %cst_9 = arith.constant dense<0.000000e+00> : vector<1x128xf32>
    %9 = tpu.matmul %0, %8, %cst_9 {dimension_numbers = #tpu.dot_dimension_numbers<[1], [0], [0], [1], [0, 0, 1, 1], [], []>} : vector<1x128xf32>, vector<128x128xf32>, vector<1x128xf32> -> vector<1x128xf32>
    %c3 = arith.constant 3 : index
    %c0_10 = arith.constant 0 : index
    %c0_11 = arith.constant 0 : index
    %10 = vector.load %arg1[%c3, %c0_10, %c0_11] : memref<11x128x128xf32, #tpu.memory_space<vmem>>, vector<1x128x128xf32>
    %11 = vector.shape_cast %10 : vector<1x128x128xf32> to vector<128x128xf32>
    %cst_12 = arith.constant dense<0.000000e+00> : vector<1x128xf32>
    %12 = tpu.matmul %0, %11, %cst_12 {dimension_numbers = #tpu.dot_dimension_numbers<[1], [0], [0], [1], [0, 0, 1, 1], [], []>} : vector<1x128xf32>, vector<128x128xf32>, vector<1x128xf32> -> vector<1x128xf32>
    %c4 = arith.constant 4 : index
    %c0_13 = arith.constant 0 : index
    %c0_14 = arith.constant 0 : index
    %13 = vector.load %arg1[%c4, %c0_13, %c0_14] : memref<11x128x128xf32, #tpu.memory_space<vmem>>, vector<1x128x128xf32>
    %14 = vector.shape_cast %13 : vector<1x128x128xf32> to vector<128x128xf32>
    %cst_15 = arith.constant dense<0.000000e+00> : vector<1x128xf32>
    %15 = tpu.matmul %0, %14, %cst_15 {dimension_numbers = #tpu.dot_dimension_numbers<[1], [0], [0], [1], [0, 0, 1, 1], [], []>} : vector<1x128xf32>, vector<128x128xf32>, vector<1x128xf32> -> vector<1x128xf32>
    %c5 = arith.constant 5 : index
    %c0_16 = arith.constant 0 : index
    %c0_17 = arith.constant 0 : index
    %16 = vector.load %arg1[%c5, %c0_16, %c0_17] : memref<11x128x128xf32, #tpu.memory_space<vmem>>, vector<1x128x128xf32>
    %17 = vector.shape_cast %16 : vector<1x128x128xf32> to vector<128x128xf32>
    %cst_18 = arith.constant dense<0.000000e+00> : vector<1x128xf32>
    %18 = tpu.matmul %0, %17, %cst_18 {dimension_numbers = #tpu.dot_dimension_numbers<[1], [0], [0], [1], [0, 0, 1, 1], [], []>} : vector<1x128xf32>, vector<128x128xf32>, vector<1x128xf32> -> vector<1x128xf32>
    %c6 = arith.constant 6 : index
    %c0_19 = arith.constant 0 : index
    %c0_20 = arith.constant 0 : index
    %19 = vector.load %arg1[%c6, %c0_19, %c0_20] : memref<11x128x128xf32, #tpu.memory_space<vmem>>, vector<1x128x128xf32>
    %20 = vector.shape_cast %19 : vector<1x128x128xf32> to vector<128x128xf32>
    %cst_21 = arith.constant dense<0.000000e+00> : vector<1x128xf32>
    %21 = tpu.matmul %0, %20, %cst_21 {dimension_numbers = #tpu.dot_dimension_numbers<[1], [0], [0], [1], [0, 0, 1, 1], [], []>} : vector<1x128xf32>, vector<128x128xf32>, vector<1x128xf32> -> vector<1x128xf32>
    %c7 = arith.constant 7 : index
    %c0_22 = arith.constant 0 : index
    %c0_23 = arith.constant 0 : index
    %22 = vector.load %arg1[%c7, %c0_22, %c0_23] : memref<11x128x128xf32, #tpu.memory_space<vmem>>, vector<1x128x128xf32>
    %23 = vector.shape_cast %22 : vector<1x128x128xf32> to vector<128x128xf32>
    %cst_24 = arith.constant dense<0.000000e+00> : vector<1x128xf32>
    %24 = tpu.matmul %0, %23, %cst_24 {dimension_numbers = #tpu.dot_dimension_numbers<[1], [0], [0], [1], [0, 0, 1, 1], [], []>} : vector<1x128xf32>, vector<128x128xf32>, vector<1x128xf32> -> vector<1x128xf32>
    %c8 = arith.constant 8 : index
    %c0_25 = arith.constant 0 : index
    %c0_26 = arith.constant 0 : index
    %25 = vector.load %arg1[%c8, %c0_25, %c0_26] : memref<11x128x128xf32, #tpu.memory_space<vmem>>, vector<1x128x128xf32>
    %26 = vector.shape_cast %25 : vector<1x128x128xf32> to vector<128x128xf32>
    %cst_27 = arith.constant dense<0.000000e+00> : vector<1x128xf32>
    %27 = tpu.matmul %0, %26, %cst_27 {dimension_numbers = #tpu.dot_dimension_numbers<[1], [0], [0], [1], [0, 0, 1, 1], [], []>} : vector<1x128xf32>, vector<128x128xf32>, vector<1x128xf32> -> vector<1x128xf32>
    %c9 = arith.constant 9 : index
    %c0_28 = arith.constant 0 : index
    %c0_29 = arith.constant 0 : index
    %28 = vector.load %arg1[%c9, %c0_28, %c0_29] : memref<11x128x128xf32, #tpu.memory_space<vmem>>, vector<1x128x128xf32>
    %29 = vector.shape_cast %28 : vector<1x128x128xf32> to vector<128x128xf32>
    %cst_30 = arith.constant dense<0.000000e+00> : vector<1x128xf32>
    %30 = tpu.matmul %0, %29, %cst_30 {dimension_numbers = #tpu.dot_dimension_numbers<[1], [0], [0], [1], [0, 0, 1, 1], [], []>} : vector<1x128xf32>, vector<128x128xf32>, vector<1x128xf32> -> vector<1x128xf32>
    %c10 = arith.constant 10 : index
    %c0_31 = arith.constant 0 : index
    %c0_32 = arith.constant 0 : index
    %31 = vector.load %arg1[%c10, %c0_31, %c0_32] : memref<11x128x128xf32, #tpu.memory_space<vmem>>, vector<1x128x128xf32>
    %32 = vector.shape_cast %31 : vector<1x128x128xf32> to vector<128x128xf32>
    %cst_33 = arith.constant dense<0.000000e+00> : vector<1x128xf32>
    %33 = tpu.matmul %0, %32, %cst_33 {dimension_numbers = #tpu.dot_dimension_numbers<[1], [0], [0], [1], [0, 0, 1, 1], [], []>} : vector<1x128xf32>, vector<128x128xf32>, vector<1x128xf32> -> vector<1x128xf32>
    %34 = tpu.concatenate %3, %6, %9, %12, %15, %18, %21, %24, %27, %30, %33 in 0 : vector<1x128xf32>, vector<1x128xf32>, vector<1x128xf32>, vector<1x128xf32>, vector<1x128xf32>, vector<1x128xf32>, vector<1x128xf32>, vector<1x128xf32>, vector<1x128xf32>, vector<1x128xf32>, vector<1x128xf32> -> vector<11x128xf32>
    %c0_34 = arith.constant 0 : index
    %c0_35 = arith.constant 0 : index
    %35 = vector.load %arg11[%c0_34, %c0_35] : memref<4x11xf32, #tpu.memory_space<vmem>>, vector<4x11xf32>
    %cst_36 = arith.constant dense<0.000000e+00> : vector<4x128xf32>
    %36 = tpu.matmul %35, %34, %cst_36 {dimension_numbers = #tpu.dot_dimension_numbers<[1], [0], [0], [1], [0, 0, 1, 1], [], []>} : vector<4x11xf32>, vector<11x128xf32>, vector<4x128xf32> -> vector<4x128xf32>
    %cst_37 = arith.constant dense<0.000000e+00> : vector<4xf32>
    %37 = vector.multi_reduction <add>, %36, %cst_37 [1] : vector<4x128xf32> to vector<4xf32>
    %38 = vector.shape_cast %37 : vector<4xf32> to vector<4x1xf32>
    %cst_38 = arith.constant 1.280000e+02 : f32
    %39 = vector.broadcast %cst_38 : f32 to vector<4x1xf32>
    %40 = arith.divf %38, %39 : vector<4x1xf32>
    %41 = arith.mulf %36, %36 : vector<4x128xf32>
    %cst_39 = arith.constant dense<0.000000e+00> : vector<4xf32>
    %42 = vector.multi_reduction <add>, %41, %cst_39 [1] : vector<4x128xf32> to vector<4xf32>
    %43 = vector.shape_cast %42 : vector<4xf32> to vector<4x1xf32>
    %cst_40 = arith.constant 1.280000e+02 : f32
    %44 = vector.broadcast %cst_40 : f32 to vector<4x1xf32>
    %45 = arith.divf %43, %44 : vector<4x1xf32>
    %46 = arith.mulf %40, %40 : vector<4x1xf32>
    %47 = arith.subf %45, %46 : vector<4x1xf32>
    %48 = vector.broadcast %40 : vector<4x1xf32> to vector<4x128xf32>
    %49 = arith.subf %36, %48 : vector<4x128xf32>
    %cst_41 = arith.constant 9.99999974E-6 : f32
    %50 = vector.broadcast %cst_41 : f32 to vector<4x1xf32>
    %51 = arith.addf %47, %50 : vector<4x1xf32>
    %52 = math.rsqrt %51 : vector<4x1xf32>
    %53 = vector.broadcast %52 : vector<4x1xf32> to vector<4x128xf32>
    %54 = arith.mulf %49, %53 : vector<4x128xf32>
    %c0_42 = arith.constant 0 : index
    %c0_43 = arith.constant 0 : index
    %55 = vector.load %arg12[%c0_42, %c0_43] : memref<4x1xf32, #tpu.memory_space<vmem>>, vector<4x1xf32>
    %56 = vector.broadcast %55 : vector<4x1xf32> to vector<4x128xf32>
    %57 = arith.mulf %54, %56 : vector<4x128xf32>
    %c0_44 = arith.constant 0 : index
    %c0_45 = arith.constant 0 : index
    %58 = vector.load %arg13[%c0_44, %c0_45] : memref<4x1xf32, #tpu.memory_space<vmem>>, vector<4x1xf32>
    %59 = vector.broadcast %58 : vector<4x1xf32> to vector<4x128xf32>
    %60 = arith.addf %57, %59 : vector<4x128xf32>
    %cst_46 = arith.constant 0.000000e+00 : f32
    %61 = vector.broadcast %cst_46 : f32 to vector<4x128xf32>
    %62 = arith.cmpf oge, %60, %61 : vector<4x128xf32>
    %cst_47 = arith.constant 1.000000e-01 : f32
    %63 = vector.broadcast %cst_47 : f32 to vector<4x128xf32>
    %64 = arith.mulf %63, %60 : vector<4x128xf32>
    %65 = arith.select %62, %60, %64 : vector<4x128xi1>, vector<4x128xf32>
    %c0_48 = arith.constant 0 : index
    %c0_49 = arith.constant 0 : index
    %66 = vector.load %arg5[%c0_48, %c0_49] : memref<128x64xf32, #tpu.memory_space<vmem>>, vector<128x64xf32>
    %cst_50 = arith.constant dense<0.000000e+00> : vector<4x64xf32>
    %67 = tpu.matmul %65, %66, %cst_50 {dimension_numbers = #tpu.dot_dimension_numbers<[1], [0], [0], [1], [0, 0, 1, 1], [], []>} : vector<4x128xf32>, vector<128x64xf32>, vector<4x64xf32> -> vector<4x64xf32>
    %c0_51 = arith.constant 0 : index
    %c0_52 = arith.constant 0 : index
    %c0_53 = arith.constant 0 : index
    %68 = vector.load %arg2[%c0_51, %c0_52, %c0_53] : memref<11x64x64xf32, #tpu.memory_space<vmem>>, vector<1x64x64xf32>
    %69 = vector.shape_cast %68 : vector<1x64x64xf32> to vector<64x64xf32>
    %cst_54 = arith.constant dense<0.000000e+00> : vector<4x64xf32>
    %70 = tpu.matmul %67, %69, %cst_54 {dimension_numbers = #tpu.dot_dimension_numbers<[1], [0], [0], [1], [0, 0, 1, 1], [], []>} : vector<4x64xf32>, vector<64x64xf32>, vector<4x64xf32> -> vector<4x64xf32>
    %c1_55 = arith.constant 1 : index
    %c0_56 = arith.constant 0 : index
    %c0_57 = arith.constant 0 : index
    %71 = vector.load %arg2[%c1_55, %c0_56, %c0_57] : memref<11x64x64xf32, #tpu.memory_space<vmem>>, vector<1x64x64xf32>
    %72 = vector.shape_cast %71 : vector<1x64x64xf32> to vector<64x64xf32>
    %cst_58 = arith.constant dense<0.000000e+00> : vector<4x64xf32>
    %73 = tpu.matmul %67, %72, %cst_58 {dimension_numbers = #tpu.dot_dimension_numbers<[1], [0], [0], [1], [0, 0, 1, 1], [], []>} : vector<4x64xf32>, vector<64x64xf32>, vector<4x64xf32> -> vector<4x64xf32>
    %c2_59 = arith.constant 2 : index
    %c0_60 = arith.constant 0 : index
    %c0_61 = arith.constant 0 : index
    %74 = vector.load %arg2[%c2_59, %c0_60, %c0_61] : memref<11x64x64xf32, #tpu.memory_space<vmem>>, vector<1x64x64xf32>
    %75 = vector.shape_cast %74 : vector<1x64x64xf32> to vector<64x64xf32>
    %cst_62 = arith.constant dense<0.000000e+00> : vector<4x64xf32>
    %76 = tpu.matmul %67, %75, %cst_62 {dimension_numbers = #tpu.dot_dimension_numbers<[1], [0], [0], [1], [0, 0, 1, 1], [], []>} : vector<4x64xf32>, vector<64x64xf32>, vector<4x64xf32> -> vector<4x64xf32>
    %c3_63 = arith.constant 3 : index
    %c0_64 = arith.constant 0 : index
    %c0_65 = arith.constant 0 : index
    %77 = vector.load %arg2[%c3_63, %c0_64, %c0_65] : memref<11x64x64xf32, #tpu.memory_space<vmem>>, vector<1x64x64xf32>
    %78 = vector.shape_cast %77 : vector<1x64x64xf32> to vector<64x64xf32>
    %cst_66 = arith.constant dense<0.000000e+00> : vector<4x64xf32>
    %79 = tpu.matmul %67, %78, %cst_66 {dimension_numbers = #tpu.dot_dimension_numbers<[1], [0], [0], [1], [0, 0, 1, 1], [], []>} : vector<4x64xf32>, vector<64x64xf32>, vector<4x64xf32> -> vector<4x64xf32>
    %c4_67 = arith.constant 4 : index
    %c0_68 = arith.constant 0 : index
    %c0_69 = arith.constant 0 : index
    %80 = vector.load %arg2[%c4_67, %c0_68, %c0_69] : memref<11x64x64xf32, #tpu.memory_space<vmem>>, vector<1x64x64xf32>
    %81 = vector.shape_cast %80 : vector<1x64x64xf32> to vector<64x64xf32>
    %cst_70 = arith.constant dense<0.000000e+00> : vector<4x64xf32>
    %82 = tpu.matmul %67, %81, %cst_70 {dimension_numbers = #tpu.dot_dimension_numbers<[1], [0], [0], [1], [0, 0, 1, 1], [], []>} : vector<4x64xf32>, vector<64x64xf32>, vector<4x64xf32> -> vector<4x64xf32>
    %c5_71 = arith.constant 5 : index
    %c0_72 = arith.constant 0 : index
    %c0_73 = arith.constant 0 : index
    %83 = vector.load %arg2[%c5_71, %c0_72, %c0_73] : memref<11x64x64xf32, #tpu.memory_space<vmem>>, vector<1x64x64xf32>
    %84 = vector.shape_cast %83 : vector<1x64x64xf32> to vector<64x64xf32>
    %cst_74 = arith.constant dense<0.000000e+00> : vector<4x64xf32>
    %85 = tpu.matmul %67, %84, %cst_74 {dimension_numbers = #tpu.dot_dimension_numbers<[1], [0], [0], [1], [0, 0, 1, 1], [], []>} : vector<4x64xf32>, vector<64x64xf32>, vector<4x64xf32> -> vector<4x64xf32>
    %c6_75 = arith.constant 6 : index
    %c0_76 = arith.constant 0 : index
    %c0_77 = arith.constant 0 : index
    %86 = vector.load %arg2[%c6_75, %c0_76, %c0_77] : memref<11x64x64xf32, #tpu.memory_space<vmem>>, vector<1x64x64xf32>
    %87 = vector.shape_cast %86 : vector<1x64x64xf32> to vector<64x64xf32>
    %cst_78 = arith.constant dense<0.000000e+00> : vector<4x64xf32>
    %88 = tpu.matmul %67, %87, %cst_78 {dimension_numbers = #tpu.dot_dimension_numbers<[1], [0], [0], [1], [0, 0, 1, 1], [], []>} : vector<4x64xf32>, vector<64x64xf32>, vector<4x64xf32> -> vector<4x64xf32>
    %c7_79 = arith.constant 7 : index
    %c0_80 = arith.constant 0 : index
    %c0_81 = arith.constant 0 : index
    %89 = vector.load %arg2[%c7_79, %c0_80, %c0_81] : memref<11x64x64xf32, #tpu.memory_space<vmem>>, vector<1x64x64xf32>
    %90 = vector.shape_cast %89 : vector<1x64x64xf32> to vector<64x64xf32>
    %cst_82 = arith.constant dense<0.000000e+00> : vector<4x64xf32>
    %91 = tpu.matmul %67, %90, %cst_82 {dimension_numbers = #tpu.dot_dimension_numbers<[1], [0], [0], [1], [0, 0, 1, 1], [], []>} : vector<4x64xf32>, vector<64x64xf32>, vector<4x64xf32> -> vector<4x64xf32>
    %c8_83 = arith.constant 8 : index
    %c0_84 = arith.constant 0 : index
    %c0_85 = arith.constant 0 : index
    %92 = vector.load %arg2[%c8_83, %c0_84, %c0_85] : memref<11x64x64xf32, #tpu.memory_space<vmem>>, vector<1x64x64xf32>
    %93 = vector.shape_cast %92 : vector<1x64x64xf32> to vector<64x64xf32>
    %cst_86 = arith.constant dense<0.000000e+00> : vector<4x64xf32>
    %94 = tpu.matmul %67, %93, %cst_86 {dimension_numbers = #tpu.dot_dimension_numbers<[1], [0], [0], [1], [0, 0, 1, 1], [], []>} : vector<4x64xf32>, vector<64x64xf32>, vector<4x64xf32> -> vector<4x64xf32>
    %c9_87 = arith.constant 9 : index
    %c0_88 = arith.constant 0 : index
    %c0_89 = arith.constant 0 : index
    %95 = vector.load %arg2[%c9_87, %c0_88, %c0_89] : memref<11x64x64xf32, #tpu.memory_space<vmem>>, vector<1x64x64xf32>
    %96 = vector.shape_cast %95 : vector<1x64x64xf32> to vector<64x64xf32>
    %cst_90 = arith.constant dense<0.000000e+00> : vector<4x64xf32>
    %97 = tpu.matmul %67, %96, %cst_90 {dimension_numbers = #tpu.dot_dimension_numbers<[1], [0], [0], [1], [0, 0, 1, 1], [], []>} : vector<4x64xf32>, vector<64x64xf32>, vector<4x64xf32> -> vector<4x64xf32>
    %c10_91 = arith.constant 10 : index
    %c0_92 = arith.constant 0 : index
    %c0_93 = arith.constant 0 : index
    %98 = vector.load %arg2[%c10_91, %c0_92, %c0_93] : memref<11x64x64xf32, #tpu.memory_space<vmem>>, vector<1x64x64xf32>
    %99 = vector.shape_cast %98 : vector<1x64x64xf32> to vector<64x64xf32>
    %cst_94 = arith.constant dense<0.000000e+00> : vector<4x64xf32>
    %100 = tpu.matmul %67, %99, %cst_94 {dimension_numbers = #tpu.dot_dimension_numbers<[1], [0], [0], [1], [0, 0, 1, 1], [], []>} : vector<4x64xf32>, vector<64x64xf32>, vector<4x64xf32> -> vector<4x64xf32>
    %101 = tpu.concatenate %70, %73, %76, %79, %82, %85, %88, %91, %94, %97, %100 in 0 : vector<4x64xf32>, vector<4x64xf32>, vector<4x64xf32>, vector<4x64xf32>, vector<4x64xf32>, vector<4x64xf32>, vector<4x64xf32>, vector<4x64xf32>, vector<4x64xf32>, vector<4x64xf32>, vector<4x64xf32> -> vector<44x64xf32>
    %c0_95 = arith.constant 0 : index
    %c0_96 = arith.constant 0 : index
    %102 = vector.load %arg14[%c0_95, %c0_96] : memref<8x44xf32, #tpu.memory_space<vmem>>, vector<8x44xf32>
    %cst_97 = arith.constant dense<0.000000e+00> : vector<8x64xf32>
    %103 = tpu.matmul %102, %101, %cst_97 {dimension_numbers = #tpu.dot_dimension_numbers<[1], [0], [0], [1], [0, 0, 1, 1], [], []>} : vector<8x44xf32>, vector<44x64xf32>, vector<8x64xf32> -> vector<8x64xf32>
    %cst_98 = arith.constant dense<0.000000e+00> : vector<8xf32>
    %104 = vector.multi_reduction <add>, %103, %cst_98 [1] : vector<8x64xf32> to vector<8xf32>
    %105 = vector.shape_cast %104 : vector<8xf32> to vector<8x1xf32>
    %cst_99 = arith.constant 6.400000e+01 : f32
    %106 = vector.broadcast %cst_99 : f32 to vector<8x1xf32>
    %107 = arith.divf %105, %106 : vector<8x1xf32>
    %108 = arith.mulf %103, %103 : vector<8x64xf32>
    %cst_100 = arith.constant dense<0.000000e+00> : vector<8xf32>
    %109 = vector.multi_reduction <add>, %108, %cst_100 [1] : vector<8x64xf32> to vector<8xf32>
    %110 = vector.shape_cast %109 : vector<8xf32> to vector<8x1xf32>
    %cst_101 = arith.constant 6.400000e+01 : f32
    %111 = vector.broadcast %cst_101 : f32 to vector<8x1xf32>
    %112 = arith.divf %110, %111 : vector<8x1xf32>
    %113 = arith.mulf %107, %107 : vector<8x1xf32>
    %114 = arith.subf %112, %113 : vector<8x1xf32>
    %115 = vector.broadcast %107 : vector<8x1xf32> to vector<8x64xf32>
    %116 = arith.subf %103, %115 : vector<8x64xf32>
    %cst_102 = arith.constant 9.99999974E-6 : f32
    %117 = vector.broadcast %cst_102 : f32 to vector<8x1xf32>
    %118 = arith.addf %114, %117 : vector<8x1xf32>
    %119 = math.rsqrt %118 : vector<8x1xf32>
    %120 = vector.broadcast %119 : vector<8x1xf32> to vector<8x64xf32>
    %121 = arith.mulf %116, %120 : vector<8x64xf32>
    %c0_103 = arith.constant 0 : index
    %c0_104 = arith.constant 0 : index
    %122 = vector.load %arg15[%c0_103, %c0_104] : memref<8x1xf32, #tpu.memory_space<vmem>>, vector<8x1xf32>
    %123 = vector.broadcast %122 : vector<8x1xf32> to vector<8x64xf32>
    %124 = arith.mulf %121, %123 : vector<8x64xf32>
    %c0_105 = arith.constant 0 : index
    %c0_106 = arith.constant 0 : index
    %125 = vector.load %arg16[%c0_105, %c0_106] : memref<8x1xf32, #tpu.memory_space<vmem>>, vector<8x1xf32>
    %126 = vector.broadcast %125 : vector<8x1xf32> to vector<8x64xf32>
    %127 = arith.addf %124, %126 : vector<8x64xf32>
    %cst_107 = arith.constant 0.000000e+00 : f32
    %128 = vector.broadcast %cst_107 : f32 to vector<8x64xf32>
    %129 = arith.cmpf oge, %127, %128 : vector<8x64xf32>
    %cst_108 = arith.constant 1.000000e-01 : f32
    %130 = vector.broadcast %cst_108 : f32 to vector<8x64xf32>
    %131 = arith.mulf %130, %127 : vector<8x64xf32>
    %132 = arith.select %129, %127, %131 : vector<8x64xi1>, vector<8x64xf32>
    %c0_109 = arith.constant 0 : index
    %c0_110 = arith.constant 0 : index
    %133 = vector.load %arg6[%c0_109, %c0_110] : memref<64x32xf32, #tpu.memory_space<vmem>>, vector<64x32xf32>
    %cst_111 = arith.constant dense<0.000000e+00> : vector<8x32xf32>
    %134 = tpu.matmul %132, %133, %cst_111 {dimension_numbers = #tpu.dot_dimension_numbers<[1], [0], [0], [1], [0, 0, 1, 1], [], []>} : vector<8x64xf32>, vector<64x32xf32>, vector<8x32xf32> -> vector<8x32xf32>
    %c0_112 = arith.constant 0 : index
    %c0_113 = arith.constant 0 : index
    %c0_114 = arith.constant 0 : index
    %135 = vector.load %arg3[%c0_112, %c0_113, %c0_114] : memref<11x32x32xf32, #tpu.memory_space<vmem>>, vector<1x32x32xf32>
    %136 = vector.shape_cast %135 : vector<1x32x32xf32> to vector<32x32xf32>
    %cst_115 = arith.constant dense<0.000000e+00> : vector<8x32xf32>
    %137 = tpu.matmul %134, %136, %cst_115 {dimension_numbers = #tpu.dot_dimension_numbers<[1], [0], [0], [1], [0, 0, 1, 1], [], []>} : vector<8x32xf32>, vector<32x32xf32>, vector<8x32xf32> -> vector<8x32xf32>
    %c1_116 = arith.constant 1 : index
    %c0_117 = arith.constant 0 : index
    %c0_118 = arith.constant 0 : index
    %138 = vector.load %arg3[%c1_116, %c0_117, %c0_118] : memref<11x32x32xf32, #tpu.memory_space<vmem>>, vector<1x32x32xf32>
    %139 = vector.shape_cast %138 : vector<1x32x32xf32> to vector<32x32xf32>
    %cst_119 = arith.constant dense<0.000000e+00> : vector<8x32xf32>
    %140 = tpu.matmul %134, %139, %cst_119 {dimension_numbers = #tpu.dot_dimension_numbers<[1], [0], [0], [1], [0, 0, 1, 1], [], []>} : vector<8x32xf32>, vector<32x32xf32>, vector<8x32xf32> -> vector<8x32xf32>
    %c2_120 = arith.constant 2 : index
    %c0_121 = arith.constant 0 : index
    %c0_122 = arith.constant 0 : index
    %141 = vector.load %arg3[%c2_120, %c0_121, %c0_122] : memref<11x32x32xf32, #tpu.memory_space<vmem>>, vector<1x32x32xf32>
    %142 = vector.shape_cast %141 : vector<1x32x32xf32> to vector<32x32xf32>
    %cst_123 = arith.constant dense<0.000000e+00> : vector<8x32xf32>
    %143 = tpu.matmul %134, %142, %cst_123 {dimension_numbers = #tpu.dot_dimension_numbers<[1], [0], [0], [1], [0, 0, 1, 1], [], []>} : vector<8x32xf32>, vector<32x32xf32>, vector<8x32xf32> -> vector<8x32xf32>
    %c3_124 = arith.constant 3 : index
    %c0_125 = arith.constant 0 : index
    %c0_126 = arith.constant 0 : index
    %144 = vector.load %arg3[%c3_124, %c0_125, %c0_126] : memref<11x32x32xf32, #tpu.memory_space<vmem>>, vector<1x32x32xf32>
    %145 = vector.shape_cast %144 : vector<1x32x32xf32> to vector<32x32xf32>
    %cst_127 = arith.constant dense<0.000000e+00> : vector<8x32xf32>
    %146 = tpu.matmul %134, %145, %cst_127 {dimension_numbers = #tpu.dot_dimension_numbers<[1], [0], [0], [1], [0, 0, 1, 1], [], []>} : vector<8x32xf32>, vector<32x32xf32>, vector<8x32xf32> -> vector<8x32xf32>
    %c4_128 = arith.constant 4 : index
    %c0_129 = arith.constant 0 : index
    %c0_130 = arith.constant 0 : index
    %147 = vector.load %arg3[%c4_128, %c0_129, %c0_130] : memref<11x32x32xf32, #tpu.memory_space<vmem>>, vector<1x32x32xf32>
    %148 = vector.shape_cast %147 : vector<1x32x32xf32> to vector<32x32xf32>
    %cst_131 = arith.constant dense<0.000000e+00> : vector<8x32xf32>
    %149 = tpu.matmul %134, %148, %cst_131 {dimension_numbers = #tpu.dot_dimension_numbers<[1], [0], [0], [1], [0, 0, 1, 1], [], []>} : vector<8x32xf32>, vector<32x32xf32>, vector<8x32xf32> -> vector<8x32xf32>
    %c5_132 = arith.constant 5 : index
    %c0_133 = arith.constant 0 : index
    %c0_134 = arith.constant 0 : index
    %150 = vector.load %arg3[%c5_132, %c0_133, %c0_134] : memref<11x32x32xf32, #tpu.memory_space<vmem>>, vector<1x32x32xf32>
    %151 = vector.shape_cast %150 : vector<1x32x32xf32> to vector<32x32xf32>
    %cst_135 = arith.constant dense<0.000000e+00> : vector<8x32xf32>
    %152 = tpu.matmul %134, %151, %cst_135 {dimension_numbers = #tpu.dot_dimension_numbers<[1], [0], [0], [1], [0, 0, 1, 1], [], []>} : vector<8x32xf32>, vector<32x32xf32>, vector<8x32xf32> -> vector<8x32xf32>
    %c6_136 = arith.constant 6 : index
    %c0_137 = arith.constant 0 : index
    %c0_138 = arith.constant 0 : index
    %153 = vector.load %arg3[%c6_136, %c0_137, %c0_138] : memref<11x32x32xf32, #tpu.memory_space<vmem>>, vector<1x32x32xf32>
    %154 = vector.shape_cast %153 : vector<1x32x32xf32> to vector<32x32xf32>
    %cst_139 = arith.constant dense<0.000000e+00> : vector<8x32xf32>
    %155 = tpu.matmul %134, %154, %cst_139 {dimension_numbers = #tpu.dot_dimension_numbers<[1], [0], [0], [1], [0, 0, 1, 1], [], []>} : vector<8x32xf32>, vector<32x32xf32>, vector<8x32xf32> -> vector<8x32xf32>
    %c7_140 = arith.constant 7 : index
    %c0_141 = arith.constant 0 : index
    %c0_142 = arith.constant 0 : index
    %156 = vector.load %arg3[%c7_140, %c0_141, %c0_142] : memref<11x32x32xf32, #tpu.memory_space<vmem>>, vector<1x32x32xf32>
    %157 = vector.shape_cast %156 : vector<1x32x32xf32> to vector<32x32xf32>
    %cst_143 = arith.constant dense<0.000000e+00> : vector<8x32xf32>
    %158 = tpu.matmul %134, %157, %cst_143 {dimension_numbers = #tpu.dot_dimension_numbers<[1], [0], [0], [1], [0, 0, 1, 1], [], []>} : vector<8x32xf32>, vector<32x32xf32>, vector<8x32xf32> -> vector<8x32xf32>
    %c8_144 = arith.constant 8 : index
    %c0_145 = arith.constant 0 : index
    %c0_146 = arith.constant 0 : index
    %159 = vector.load %arg3[%c8_144, %c0_145, %c0_146] : memref<11x32x32xf32, #tpu.memory_space<vmem>>, vector<1x32x32xf32>
    %160 = vector.shape_cast %159 : vector<1x32x32xf32> to vector<32x32xf32>
    %cst_147 = arith.constant dense<0.000000e+00> : vector<8x32xf32>
    %161 = tpu.matmul %134, %160, %cst_147 {dimension_numbers = #tpu.dot_dimension_numbers<[1], [0], [0], [1], [0, 0, 1, 1], [], []>} : vector<8x32xf32>, vector<32x32xf32>, vector<8x32xf32> -> vector<8x32xf32>
    %c9_148 = arith.constant 9 : index
    %c0_149 = arith.constant 0 : index
    %c0_150 = arith.constant 0 : index
    %162 = vector.load %arg3[%c9_148, %c0_149, %c0_150] : memref<11x32x32xf32, #tpu.memory_space<vmem>>, vector<1x32x32xf32>
    %163 = vector.shape_cast %162 : vector<1x32x32xf32> to vector<32x32xf32>
    %cst_151 = arith.constant dense<0.000000e+00> : vector<8x32xf32>
    %164 = tpu.matmul %134, %163, %cst_151 {dimension_numbers = #tpu.dot_dimension_numbers<[1], [0], [0], [1], [0, 0, 1, 1], [], []>} : vector<8x32xf32>, vector<32x32xf32>, vector<8x32xf32> -> vector<8x32xf32>
    %c10_152 = arith.constant 10 : index
    %c0_153 = arith.constant 0 : index
    %c0_154 = arith.constant 0 : index
    %165 = vector.load %arg3[%c10_152, %c0_153, %c0_154] : memref<11x32x32xf32, #tpu.memory_space<vmem>>, vector<1x32x32xf32>
    %166 = vector.shape_cast %165 : vector<1x32x32xf32> to vector<32x32xf32>
    %cst_155 = arith.constant dense<0.000000e+00> : vector<8x32xf32>
    %167 = tpu.matmul %134, %166, %cst_155 {dimension_numbers = #tpu.dot_dimension_numbers<[1], [0], [0], [1], [0, 0, 1, 1], [], []>} : vector<8x32xf32>, vector<32x32xf32>, vector<8x32xf32> -> vector<8x32xf32>
    %168 = tpu.concatenate %137, %140, %143, %146, %149, %152, %155, %158, %161, %164, %167 in 0 : vector<8x32xf32>, vector<8x32xf32>, vector<8x32xf32>, vector<8x32xf32>, vector<8x32xf32>, vector<8x32xf32>, vector<8x32xf32>, vector<8x32xf32>, vector<8x32xf32>, vector<8x32xf32>, vector<8x32xf32> -> vector<88x32xf32>
    %c0_156 = arith.constant 0 : index
    %c0_157 = arith.constant 0 : index
    %169 = vector.load %arg17[%c0_156, %c0_157] : memref<12x88xf32, #tpu.memory_space<vmem>>, vector<12x88xf32>
    %cst_158 = arith.constant dense<0.000000e+00> : vector<12x32xf32>
    %170 = tpu.matmul %169, %168, %cst_158 {dimension_numbers = #tpu.dot_dimension_numbers<[1], [0], [0], [1], [0, 0, 1, 1], [], []>} : vector<12x88xf32>, vector<88x32xf32>, vector<12x32xf32> -> vector<12x32xf32>
    %cst_159 = arith.constant dense<0.000000e+00> : vector<12xf32>
    %171 = vector.multi_reduction <add>, %170, %cst_159 [1] : vector<12x32xf32> to vector<12xf32>
    %172 = vector.shape_cast %171 : vector<12xf32> to vector<12x1xf32>
    %cst_160 = arith.constant 3.200000e+01 : f32
    %173 = vector.broadcast %cst_160 : f32 to vector<12x1xf32>
    %174 = arith.divf %172, %173 : vector<12x1xf32>
    %175 = arith.mulf %170, %170 : vector<12x32xf32>
    %cst_161 = arith.constant dense<0.000000e+00> : vector<12xf32>
    %176 = vector.multi_reduction <add>, %175, %cst_161 [1] : vector<12x32xf32> to vector<12xf32>
    %177 = vector.shape_cast %176 : vector<12xf32> to vector<12x1xf32>
    %cst_162 = arith.constant 3.200000e+01 : f32
    %178 = vector.broadcast %cst_162 : f32 to vector<12x1xf32>
    %179 = arith.divf %177, %178 : vector<12x1xf32>
    %180 = arith.mulf %174, %174 : vector<12x1xf32>
    %181 = arith.subf %179, %180 : vector<12x1xf32>
    %182 = vector.broadcast %174 : vector<12x1xf32> to vector<12x32xf32>
    %183 = arith.subf %170, %182 : vector<12x32xf32>
    %cst_163 = arith.constant 9.99999974E-6 : f32
    %184 = vector.broadcast %cst_163 : f32 to vector<12x1xf32>
    %185 = arith.addf %181, %184 : vector<12x1xf32>
    %186 = math.rsqrt %185 : vector<12x1xf32>
    %187 = vector.broadcast %186 : vector<12x1xf32> to vector<12x32xf32>
    %188 = arith.mulf %183, %187 : vector<12x32xf32>
    %c0_164 = arith.constant 0 : index
    %c0_165 = arith.constant 0 : index
    %189 = vector.load %arg18[%c0_164, %c0_165] : memref<12x1xf32, #tpu.memory_space<vmem>>, vector<12x1xf32>
    %190 = vector.broadcast %189 : vector<12x1xf32> to vector<12x32xf32>
    %191 = arith.mulf %188, %190 : vector<12x32xf32>
    %c0_166 = arith.constant 0 : index
    %c0_167 = arith.constant 0 : index
    %192 = vector.load %arg19[%c0_166, %c0_167] : memref<12x1xf32, #tpu.memory_space<vmem>>, vector<12x1xf32>
    %193 = vector.broadcast %192 : vector<12x1xf32> to vector<12x32xf32>
    %194 = arith.addf %191, %193 : vector<12x32xf32>
    %cst_168 = arith.constant 0.000000e+00 : f32
    %195 = vector.broadcast %cst_168 : f32 to vector<12x32xf32>
    %196 = arith.cmpf oge, %194, %195 : vector<12x32xf32>
    %cst_169 = arith.constant 1.000000e-01 : f32
    %197 = vector.broadcast %cst_169 : f32 to vector<12x32xf32>
    %198 = arith.mulf %197, %194 : vector<12x32xf32>
    %199 = arith.select %196, %194, %198 : vector<12x32xi1>, vector<12x32xf32>
    %c0_170 = arith.constant 0 : index
    %c0_171 = arith.constant 0 : index
    %200 = vector.load %arg7[%c0_170, %c0_171] : memref<32x16xf32, #tpu.memory_space<vmem>>, vector<32x16xf32>
    %cst_172 = arith.constant dense<0.000000e+00> : vector<12x16xf32>
    %201 = tpu.matmul %199, %200, %cst_172 {dimension_numbers = #tpu.dot_dimension_numbers<[1], [0], [0], [1], [0, 0, 1, 1], [], []>} : vector<12x32xf32>, vector<32x16xf32>, vector<12x16xf32> -> vector<12x16xf32>
    %c0_173 = arith.constant 0 : index
    %c0_174 = arith.constant 0 : index
    %c0_175 = arith.constant 0 : index
    %202 = vector.load %arg4[%c0_173, %c0_174, %c0_175] : memref<11x16x16xf32, #tpu.memory_space<vmem>>, vector<1x16x16xf32>
    %203 = vector.shape_cast %202 : vector<1x16x16xf32> to vector<16x16xf32>
    %cst_176 = arith.constant dense<0.000000e+00> : vector<12x16xf32>
    %204 = tpu.matmul %201, %203, %cst_176 {dimension_numbers = #tpu.dot_dimension_numbers<[1], [0], [0], [1], [0, 0, 1, 1], [], []>} : vector<12x16xf32>, vector<16x16xf32>, vector<12x16xf32> -> vector<12x16xf32>
    %c1_177 = arith.constant 1 : index
    %c0_178 = arith.constant 0 : index
    %c0_179 = arith.constant 0 : index
    %205 = vector.load %arg4[%c1_177, %c0_178, %c0_179] : memref<11x16x16xf32, #tpu.memory_space<vmem>>, vector<1x16x16xf32>
    %206 = vector.shape_cast %205 : vector<1x16x16xf32> to vector<16x16xf32>
    %cst_180 = arith.constant dense<0.000000e+00> : vector<12x16xf32>
    %207 = tpu.matmul %201, %206, %cst_180 {dimension_numbers = #tpu.dot_dimension_numbers<[1], [0], [0], [1], [0, 0, 1, 1], [], []>} : vector<12x16xf32>, vector<16x16xf32>, vector<12x16xf32> -> vector<12x16xf32>
    %c2_181 = arith.constant 2 : index
    %c0_182 = arith.constant 0 : index
    %c0_183 = arith.constant 0 : index
    %208 = vector.load %arg4[%c2_181, %c0_182, %c0_183] : memref<11x16x16xf32, #tpu.memory_space<vmem>>, vector<1x16x16xf32>
    %209 = vector.shape_cast %208 : vector<1x16x16xf32> to vector<16x16xf32>
    %cst_184 = arith.constant dense<0.000000e+00> : vector<12x16xf32>
    %210 = tpu.matmul %201, %209, %cst_184 {dimension_numbers = #tpu.dot_dimension_numbers<[1], [0], [0], [1], [0, 0, 1, 1], [], []>} : vector<12x16xf32>, vector<16x16xf32>, vector<12x16xf32> -> vector<12x16xf32>
    %c3_185 = arith.constant 3 : index
    %c0_186 = arith.constant 0 : index
    %c0_187 = arith.constant 0 : index
    %211 = vector.load %arg4[%c3_185, %c0_186, %c0_187] : memref<11x16x16xf32, #tpu.memory_space<vmem>>, vector<1x16x16xf32>
    %212 = vector.shape_cast %211 : vector<1x16x16xf32> to vector<16x16xf32>
    %cst_188 = arith.constant dense<0.000000e+00> : vector<12x16xf32>
    %213 = tpu.matmul %201, %212, %cst_188 {dimension_numbers = #tpu.dot_dimension_numbers<[1], [0], [0], [1], [0, 0, 1, 1], [], []>} : vector<12x16xf32>, vector<16x16xf32>, vector<12x16xf32> -> vector<12x16xf32>
    %c4_189 = arith.constant 4 : index
    %c0_190 = arith.constant 0 : index
    %c0_191 = arith.constant 0 : index
    %214 = vector.load %arg4[%c4_189, %c0_190, %c0_191] : memref<11x16x16xf32, #tpu.memory_space<vmem>>, vector<1x16x16xf32>
    %215 = vector.shape_cast %214 : vector<1x16x16xf32> to vector<16x16xf32>
    %cst_192 = arith.constant dense<0.000000e+00> : vector<12x16xf32>
    %216 = tpu.matmul %201, %215, %cst_192 {dimension_numbers = #tpu.dot_dimension_numbers<[1], [0], [0], [1], [0, 0, 1, 1], [], []>} : vector<12x16xf32>, vector<16x16xf32>, vector<12x16xf32> -> vector<12x16xf32>
    %c5_193 = arith.constant 5 : index
    %c0_194 = arith.constant 0 : index
    %c0_195 = arith.constant 0 : index
    %217 = vector.load %arg4[%c5_193, %c0_194, %c0_195] : memref<11x16x16xf32, #tpu.memory_space<vmem>>, vector<1x16x16xf32>
    %218 = vector.shape_cast %217 : vector<1x16x16xf32> to vector<16x16xf32>
    %cst_196 = arith.constant dense<0.000000e+00> : vector<12x16xf32>
    %219 = tpu.matmul %201, %218, %cst_196 {dimension_numbers = #tpu.dot_dimension_numbers<[1], [0], [0], [1], [0, 0, 1, 1], [], []>} : vector<12x16xf32>, vector<16x16xf32>, vector<12x16xf32> -> vector<12x16xf32>
    %c6_197 = arith.constant 6 : index
    %c0_198 = arith.constant 0 : index
    %c0_199 = arith.constant 0 : index
    %220 = vector.load %arg4[%c6_197, %c0_198, %c0_199] : memref<11x16x16xf32, #tpu.memory_space<vmem>>, vector<1x16x16xf32>
    %221 = vector.shape_cast %220 : vector<1x16x16xf32> to vector<16x16xf32>
    %cst_200 = arith.constant dense<0.000000e+00> : vector<12x16xf32>
    %222 = tpu.matmul %201, %221, %cst_200 {dimension_numbers = #tpu.dot_dimension_numbers<[1], [0], [0], [1], [0, 0, 1, 1], [], []>} : vector<12x16xf32>, vector<16x16xf32>, vector<12x16xf32> -> vector<12x16xf32>
    %c7_201 = arith.constant 7 : index
    %c0_202 = arith.constant 0 : index
    %c0_203 = arith.constant 0 : index
    %223 = vector.load %arg4[%c7_201, %c0_202, %c0_203] : memref<11x16x16xf32, #tpu.memory_space<vmem>>, vector<1x16x16xf32>
    %224 = vector.shape_cast %223 : vector<1x16x16xf32> to vector<16x16xf32>
    %cst_204 = arith.constant dense<0.000000e+00> : vector<12x16xf32>
    %225 = tpu.matmul %201, %224, %cst_204 {dimension_numbers = #tpu.dot_dimension_numbers<[1], [0], [0], [1], [0, 0, 1, 1], [], []>} : vector<12x16xf32>, vector<16x16xf32>, vector<12x16xf32> -> vector<12x16xf32>
    %c8_205 = arith.constant 8 : index
    %c0_206 = arith.constant 0 : index
    %c0_207 = arith.constant 0 : index
    %226 = vector.load %arg4[%c8_205, %c0_206, %c0_207] : memref<11x16x16xf32, #tpu.memory_space<vmem>>, vector<1x16x16xf32>
    %227 = vector.shape_cast %226 : vector<1x16x16xf32> to vector<16x16xf32>
    %cst_208 = arith.constant dense<0.000000e+00> : vector<12x16xf32>
    %228 = tpu.matmul %201, %227, %cst_208 {dimension_numbers = #tpu.dot_dimension_numbers<[1], [0], [0], [1], [0, 0, 1, 1], [], []>} : vector<12x16xf32>, vector<16x16xf32>, vector<12x16xf32> -> vector<12x16xf32>
    %c9_209 = arith.constant 9 : index
    %c0_210 = arith.constant 0 : index
    %c0_211 = arith.constant 0 : index
    %229 = vector.load %arg4[%c9_209, %c0_210, %c0_211] : memref<11x16x16xf32, #tpu.memory_space<vmem>>, vector<1x16x16xf32>
    %230 = vector.shape_cast %229 : vector<1x16x16xf32> to vector<16x16xf32>
    %cst_212 = arith.constant dense<0.000000e+00> : vector<12x16xf32>
    %231 = tpu.matmul %201, %230, %cst_212 {dimension_numbers = #tpu.dot_dimension_numbers<[1], [0], [0], [1], [0, 0, 1, 1], [], []>} : vector<12x16xf32>, vector<16x16xf32>, vector<12x16xf32> -> vector<12x16xf32>
    %c10_213 = arith.constant 10 : index
    %c0_214 = arith.constant 0 : index
    %c0_215 = arith.constant 0 : index
    %232 = vector.load %arg4[%c10_213, %c0_214, %c0_215] : memref<11x16x16xf32, #tpu.memory_space<vmem>>, vector<1x16x16xf32>
    %233 = vector.shape_cast %232 : vector<1x16x16xf32> to vector<16x16xf32>
    %cst_216 = arith.constant dense<0.000000e+00> : vector<12x16xf32>
    %234 = tpu.matmul %201, %233, %cst_216 {dimension_numbers = #tpu.dot_dimension_numbers<[1], [0], [0], [1], [0, 0, 1, 1], [], []>} : vector<12x16xf32>, vector<16x16xf32>, vector<12x16xf32> -> vector<12x16xf32>
    %235 = tpu.concatenate %204, %207, %210, %213, %216, %219, %222, %225, %228, %231, %234 in 0 : vector<12x16xf32>, vector<12x16xf32>, vector<12x16xf32>, vector<12x16xf32>, vector<12x16xf32>, vector<12x16xf32>, vector<12x16xf32>, vector<12x16xf32>, vector<12x16xf32>, vector<12x16xf32>, vector<12x16xf32> -> vector<132x16xf32>
    %c0_217 = arith.constant 0 : index
    %c0_218 = arith.constant 0 : index
    %236 = vector.load %arg20[%c0_217, %c0_218] : memref<12x132xf32, #tpu.memory_space<vmem>>, vector<12x132xf32>
    %cst_219 = arith.constant dense<0.000000e+00> : vector<12x16xf32>
    %237 = tpu.matmul %236, %235, %cst_219 {dimension_numbers = #tpu.dot_dimension_numbers<[1], [0], [0], [1], [0, 0, 1, 1], [], []>} : vector<12x132xf32>, vector<132x16xf32>, vector<12x16xf32> -> vector<12x16xf32>
    %cst_220 = arith.constant dense<0.000000e+00> : vector<12xf32>
    %238 = vector.multi_reduction <add>, %237, %cst_220 [1] : vector<12x16xf32> to vector<12xf32>
    %239 = vector.shape_cast %238 : vector<12xf32> to vector<12x1xf32>
    %cst_221 = arith.constant 1.600000e+01 : f32
    %240 = vector.broadcast %cst_221 : f32 to vector<12x1xf32>
    %241 = arith.divf %239, %240 : vector<12x1xf32>
    %242 = arith.mulf %237, %237 : vector<12x16xf32>
    %cst_222 = arith.constant dense<0.000000e+00> : vector<12xf32>
    %243 = vector.multi_reduction <add>, %242, %cst_222 [1] : vector<12x16xf32> to vector<12xf32>
    %244 = vector.shape_cast %243 : vector<12xf32> to vector<12x1xf32>
    %cst_223 = arith.constant 1.600000e+01 : f32
    %245 = vector.broadcast %cst_223 : f32 to vector<12x1xf32>
    %246 = arith.divf %244, %245 : vector<12x1xf32>
    %247 = arith.mulf %241, %241 : vector<12x1xf32>
    %248 = arith.subf %246, %247 : vector<12x1xf32>
    %249 = vector.broadcast %241 : vector<12x1xf32> to vector<12x16xf32>
    %250 = arith.subf %237, %249 : vector<12x16xf32>
    %cst_224 = arith.constant 9.99999974E-6 : f32
    %251 = vector.broadcast %cst_224 : f32 to vector<12x1xf32>
    %252 = arith.addf %248, %251 : vector<12x1xf32>
    %253 = math.rsqrt %252 : vector<12x1xf32>
    %254 = vector.broadcast %253 : vector<12x1xf32> to vector<12x16xf32>
    %255 = arith.mulf %250, %254 : vector<12x16xf32>
    %c0_225 = arith.constant 0 : index
    %c0_226 = arith.constant 0 : index
    %256 = vector.load %arg21[%c0_225, %c0_226] : memref<12x1xf32, #tpu.memory_space<vmem>>, vector<12x1xf32>
    %257 = vector.broadcast %256 : vector<12x1xf32> to vector<12x16xf32>
    %258 = arith.mulf %255, %257 : vector<12x16xf32>
    %c0_227 = arith.constant 0 : index
    %c0_228 = arith.constant 0 : index
    %259 = vector.load %arg22[%c0_227, %c0_228] : memref<12x1xf32, #tpu.memory_space<vmem>>, vector<12x1xf32>
    %260 = vector.broadcast %259 : vector<12x1xf32> to vector<12x16xf32>
    %261 = arith.addf %258, %260 : vector<12x16xf32>
    %cst_229 = arith.constant 0.000000e+00 : f32
    %262 = vector.broadcast %cst_229 : f32 to vector<12x16xf32>
    %263 = arith.cmpf oge, %261, %262 : vector<12x16xf32>
    %cst_230 = arith.constant 1.000000e-01 : f32
    %264 = vector.broadcast %cst_230 : f32 to vector<12x16xf32>
    %265 = arith.mulf %264, %261 : vector<12x16xf32>
    %266 = arith.select %263, %261, %265 : vector<12x16xi1>, vector<12x16xf32>
    %c0_231 = arith.constant 0 : index
    %c0_232 = arith.constant 0 : index
    %267 = vector.load %arg8[%c0_231, %c0_232] : memref<16x32xf32, #tpu.memory_space<vmem>>, vector<16x32xf32>
    %cst_233 = arith.constant dense<0.000000e+00> : vector<12x32xf32>
    %268 = tpu.matmul %266, %267, %cst_233 {dimension_numbers = #tpu.dot_dimension_numbers<[1], [0], [0], [1], [0, 0, 1, 1], [], []>} : vector<12x16xf32>, vector<16x32xf32>, vector<12x32xf32> -> vector<12x32xf32>
    %269 = tpu.concatenate %268, %199 in 0 : vector<12x32xf32>, vector<12x32xf32> -> vector<24x32xf32>
    %c0_234 = arith.constant 0 : index
    %c0_235 = arith.constant 0 : index
    %c0_236 = arith.constant 0 : index
    %270 = vector.load %arg3[%c0_234, %c0_235, %c0_236] : memref<11x32x32xf32, #tpu.memory_space<vmem>>, vector<1x32x32xf32>
    %271 = vector.shape_cast %270 : vector<1x32x32xf32> to vector<32x32xf32>
    %cst_237 = arith.constant dense<0.000000e+00> : vector<24x32xf32>
    %272 = tpu.matmul %269, %271, %cst_237 {dimension_numbers = #tpu.dot_dimension_numbers<[1], [0], [0], [1], [0, 0, 1, 1], [], []>} : vector<24x32xf32>, vector<32x32xf32>, vector<24x32xf32> -> vector<24x32xf32>
    %c1_238 = arith.constant 1 : index
    %c0_239 = arith.constant 0 : index
    %c0_240 = arith.constant 0 : index
    %273 = vector.load %arg3[%c1_238, %c0_239, %c0_240] : memref<11x32x32xf32, #tpu.memory_space<vmem>>, vector<1x32x32xf32>
    %274 = vector.shape_cast %273 : vector<1x32x32xf32> to vector<32x32xf32>
    %cst_241 = arith.constant dense<0.000000e+00> : vector<24x32xf32>
    %275 = tpu.matmul %269, %274, %cst_241 {dimension_numbers = #tpu.dot_dimension_numbers<[1], [0], [0], [1], [0, 0, 1, 1], [], []>} : vector<24x32xf32>, vector<32x32xf32>, vector<24x32xf32> -> vector<24x32xf32>
    %c2_242 = arith.constant 2 : index
    %c0_243 = arith.constant 0 : index
    %c0_244 = arith.constant 0 : index
    %276 = vector.load %arg3[%c2_242, %c0_243, %c0_244] : memref<11x32x32xf32, #tpu.memory_space<vmem>>, vector<1x32x32xf32>
    %277 = vector.shape_cast %276 : vector<1x32x32xf32> to vector<32x32xf32>
    %cst_245 = arith.constant dense<0.000000e+00> : vector<24x32xf32>
    %278 = tpu.matmul %269, %277, %cst_245 {dimension_numbers = #tpu.dot_dimension_numbers<[1], [0], [0], [1], [0, 0, 1, 1], [], []>} : vector<24x32xf32>, vector<32x32xf32>, vector<24x32xf32> -> vector<24x32xf32>
    %c3_246 = arith.constant 3 : index
    %c0_247 = arith.constant 0 : index
    %c0_248 = arith.constant 0 : index
    %279 = vector.load %arg3[%c3_246, %c0_247, %c0_248] : memref<11x32x32xf32, #tpu.memory_space<vmem>>, vector<1x32x32xf32>
    %280 = vector.shape_cast %279 : vector<1x32x32xf32> to vector<32x32xf32>
    %cst_249 = arith.constant dense<0.000000e+00> : vector<24x32xf32>
    %281 = tpu.matmul %269, %280, %cst_249 {dimension_numbers = #tpu.dot_dimension_numbers<[1], [0], [0], [1], [0, 0, 1, 1], [], []>} : vector<24x32xf32>, vector<32x32xf32>, vector<24x32xf32> -> vector<24x32xf32>
    %c4_250 = arith.constant 4 : index
    %c0_251 = arith.constant 0 : index
    %c0_252 = arith.constant 0 : index
    %282 = vector.load %arg3[%c4_250, %c0_251, %c0_252] : memref<11x32x32xf32, #tpu.memory_space<vmem>>, vector<1x32x32xf32>
    %283 = vector.shape_cast %282 : vector<1x32x32xf32> to vector<32x32xf32>
    %cst_253 = arith.constant dense<0.000000e+00> : vector<24x32xf32>
    %284 = tpu.matmul %269, %283, %cst_253 {dimension_numbers = #tpu.dot_dimension_numbers<[1], [0], [0], [1], [0, 0, 1, 1], [], []>} : vector<24x32xf32>, vector<32x32xf32>, vector<24x32xf32> -> vector<24x32xf32>
    %c5_254 = arith.constant 5 : index
    %c0_255 = arith.constant 0 : index
    %c0_256 = arith.constant 0 : index
    %285 = vector.load %arg3[%c5_254, %c0_255, %c0_256] : memref<11x32x32xf32, #tpu.memory_space<vmem>>, vector<1x32x32xf32>
    %286 = vector.shape_cast %285 : vector<1x32x32xf32> to vector<32x32xf32>
    %cst_257 = arith.constant dense<0.000000e+00> : vector<24x32xf32>
    %287 = tpu.matmul %269, %286, %cst_257 {dimension_numbers = #tpu.dot_dimension_numbers<[1], [0], [0], [1], [0, 0, 1, 1], [], []>} : vector<24x32xf32>, vector<32x32xf32>, vector<24x32xf32> -> vector<24x32xf32>
    %c6_258 = arith.constant 6 : index
    %c0_259 = arith.constant 0 : index
    %c0_260 = arith.constant 0 : index
    %288 = vector.load %arg3[%c6_258, %c0_259, %c0_260] : memref<11x32x32xf32, #tpu.memory_space<vmem>>, vector<1x32x32xf32>
    %289 = vector.shape_cast %288 : vector<1x32x32xf32> to vector<32x32xf32>
    %cst_261 = arith.constant dense<0.000000e+00> : vector<24x32xf32>
    %290 = tpu.matmul %269, %289, %cst_261 {dimension_numbers = #tpu.dot_dimension_numbers<[1], [0], [0], [1], [0, 0, 1, 1], [], []>} : vector<24x32xf32>, vector<32x32xf32>, vector<24x32xf32> -> vector<24x32xf32>
    %c7_262 = arith.constant 7 : index
    %c0_263 = arith.constant 0 : index
    %c0_264 = arith.constant 0 : index
    %291 = vector.load %arg3[%c7_262, %c0_263, %c0_264] : memref<11x32x32xf32, #tpu.memory_space<vmem>>, vector<1x32x32xf32>
    %292 = vector.shape_cast %291 : vector<1x32x32xf32> to vector<32x32xf32>
    %cst_265 = arith.constant dense<0.000000e+00> : vector<24x32xf32>
    %293 = tpu.matmul %269, %292, %cst_265 {dimension_numbers = #tpu.dot_dimension_numbers<[1], [0], [0], [1], [0, 0, 1, 1], [], []>} : vector<24x32xf32>, vector<32x32xf32>, vector<24x32xf32> -> vector<24x32xf32>
    %c8_266 = arith.constant 8 : index
    %c0_267 = arith.constant 0 : index
    %c0_268 = arith.constant 0 : index
    %294 = vector.load %arg3[%c8_266, %c0_267, %c0_268] : memref<11x32x32xf32, #tpu.memory_space<vmem>>, vector<1x32x32xf32>
    %295 = vector.shape_cast %294 : vector<1x32x32xf32> to vector<32x32xf32>
    %cst_269 = arith.constant dense<0.000000e+00> : vector<24x32xf32>
    %296 = tpu.matmul %269, %295, %cst_269 {dimension_numbers = #tpu.dot_dimension_numbers<[1], [0], [0], [1], [0, 0, 1, 1], [], []>} : vector<24x32xf32>, vector<32x32xf32>, vector<24x32xf32> -> vector<24x32xf32>
    %c9_270 = arith.constant 9 : index
    %c0_271 = arith.constant 0 : index
    %c0_272 = arith.constant 0 : index
    %297 = vector.load %arg3[%c9_270, %c0_271, %c0_272] : memref<11x32x32xf32, #tpu.memory_space<vmem>>, vector<1x32x32xf32>
    %298 = vector.shape_cast %297 : vector<1x32x32xf32> to vector<32x32xf32>
    %cst_273 = arith.constant dense<0.000000e+00> : vector<24x32xf32>
    %299 = tpu.matmul %269, %298, %cst_273 {dimension_numbers = #tpu.dot_dimension_numbers<[1], [0], [0], [1], [0, 0, 1, 1], [], []>} : vector<24x32xf32>, vector<32x32xf32>, vector<24x32xf32> -> vector<24x32xf32>
    %c10_274 = arith.constant 10 : index
    %c0_275 = arith.constant 0 : index
    %c0_276 = arith.constant 0 : index
    %300 = vector.load %arg3[%c10_274, %c0_275, %c0_276] : memref<11x32x32xf32, #tpu.memory_space<vmem>>, vector<1x32x32xf32>
    %301 = vector.shape_cast %300 : vector<1x32x32xf32> to vector<32x32xf32>
    %cst_277 = arith.constant dense<0.000000e+00> : vector<24x32xf32>
    %302 = tpu.matmul %269, %301, %cst_277 {dimension_numbers = #tpu.dot_dimension_numbers<[1], [0], [0], [1], [0, 0, 1, 1], [], []>} : vector<24x32xf32>, vector<32x32xf32>, vector<24x32xf32> -> vector<24x32xf32>
    %303 = tpu.concatenate %272, %275, %278, %281, %284, %287, %290, %293, %296, %299, %302 in 0 : vector<24x32xf32>, vector<24x32xf32>, vector<24x32xf32>, vector<24x32xf32>, vector<24x32xf32>, vector<24x32xf32>, vector<24x32xf32>, vector<24x32xf32>, vector<24x32xf32>, vector<24x32xf32>, vector<24x32xf32> -> vector<264x32xf32>
    %c0_278 = arith.constant 0 : index
    %c0_279 = arith.constant 0 : index
    %304 = vector.load %arg23[%c0_278, %c0_279] : memref<12x264xf32, #tpu.memory_space<vmem>>, vector<12x264xf32>
    %cst_280 = arith.constant dense<0.000000e+00> : vector<12x32xf32>
    %305 = tpu.matmul %304, %303, %cst_280 {dimension_numbers = #tpu.dot_dimension_numbers<[1], [0], [0], [1], [0, 0, 1, 1], [], []>} : vector<12x264xf32>, vector<264x32xf32>, vector<12x32xf32> -> vector<12x32xf32>
    %cst_281 = arith.constant dense<0.000000e+00> : vector<12xf32>
    %306 = vector.multi_reduction <add>, %305, %cst_281 [1] : vector<12x32xf32> to vector<12xf32>
    %307 = vector.shape_cast %306 : vector<12xf32> to vector<12x1xf32>
    %cst_282 = arith.constant 3.200000e+01 : f32
    %308 = vector.broadcast %cst_282 : f32 to vector<12x1xf32>
    %309 = arith.divf %307, %308 : vector<12x1xf32>
    %310 = arith.mulf %305, %305 : vector<12x32xf32>
    %cst_283 = arith.constant dense<0.000000e+00> : vector<12xf32>
    %311 = vector.multi_reduction <add>, %310, %cst_283 [1] : vector<12x32xf32> to vector<12xf32>
    %312 = vector.shape_cast %311 : vector<12xf32> to vector<12x1xf32>
    %cst_284 = arith.constant 3.200000e+01 : f32
    %313 = vector.broadcast %cst_284 : f32 to vector<12x1xf32>
    %314 = arith.divf %312, %313 : vector<12x1xf32>
    %315 = arith.mulf %309, %309 : vector<12x1xf32>
    %316 = arith.subf %314, %315 : vector<12x1xf32>
    %317 = vector.broadcast %309 : vector<12x1xf32> to vector<12x32xf32>
    %318 = arith.subf %305, %317 : vector<12x32xf32>
    %cst_285 = arith.constant 9.99999974E-6 : f32
    %319 = vector.broadcast %cst_285 : f32 to vector<12x1xf32>
    %320 = arith.addf %316, %319 : vector<12x1xf32>
    %321 = math.rsqrt %320 : vector<12x1xf32>
    %322 = vector.broadcast %321 : vector<12x1xf32> to vector<12x32xf32>
    %323 = arith.mulf %318, %322 : vector<12x32xf32>
    %c0_286 = arith.constant 0 : index
    %c0_287 = arith.constant 0 : index
    %324 = vector.load %arg24[%c0_286, %c0_287] : memref<12x1xf32, #tpu.memory_space<vmem>>, vector<12x1xf32>
    %325 = vector.broadcast %324 : vector<12x1xf32> to vector<12x32xf32>
    %326 = arith.mulf %323, %325 : vector<12x32xf32>
    %c0_288 = arith.constant 0 : index
    %c0_289 = arith.constant 0 : index
    %327 = vector.load %arg25[%c0_288, %c0_289] : memref<12x1xf32, #tpu.memory_space<vmem>>, vector<12x1xf32>
    %328 = vector.broadcast %327 : vector<12x1xf32> to vector<12x32xf32>
    %329 = arith.addf %326, %328 : vector<12x32xf32>
    %cst_290 = arith.constant 0.000000e+00 : f32
    %330 = vector.broadcast %cst_290 : f32 to vector<12x32xf32>
    %331 = arith.cmpf oge, %329, %330 : vector<12x32xf32>
    %cst_291 = arith.constant 1.000000e-01 : f32
    %332 = vector.broadcast %cst_291 : f32 to vector<12x32xf32>
    %333 = arith.mulf %332, %329 : vector<12x32xf32>
    %334 = arith.select %331, %329, %333 : vector<12x32xi1>, vector<12x32xf32>
    %c0_292 = arith.constant 0 : index
    %c0_293 = arith.constant 0 : index
    %335 = vector.load %arg9[%c0_292, %c0_293] : memref<32x64xf32, #tpu.memory_space<vmem>>, vector<32x64xf32>
    %cst_294 = arith.constant dense<0.000000e+00> : vector<12x64xf32>
    %336 = tpu.matmul %334, %335, %cst_294 {dimension_numbers = #tpu.dot_dimension_numbers<[1], [0], [0], [1], [0, 0, 1, 1], [], []>} : vector<12x32xf32>, vector<32x64xf32>, vector<12x64xf32> -> vector<12x64xf32>
    %337 = tpu.concatenate %336, %132 in 0 : vector<12x64xf32>, vector<8x64xf32> -> vector<20x64xf32>
    %c0_295 = arith.constant 0 : index
    %c0_296 = arith.constant 0 : index
    %c0_297 = arith.constant 0 : index
    %338 = vector.load %arg2[%c0_295, %c0_296, %c0_297] : memref<11x64x64xf32, #tpu.memory_space<vmem>>, vector<1x64x64xf32>
    %339 = vector.shape_cast %338 : vector<1x64x64xf32> to vector<64x64xf32>
    %cst_298 = arith.constant dense<0.000000e+00> : vector<20x64xf32>
    %340 = tpu.matmul %337, %339, %cst_298 {dimension_numbers = #tpu.dot_dimension_numbers<[1], [0], [0], [1], [0, 0, 1, 1], [], []>} : vector<20x64xf32>, vector<64x64xf32>, vector<20x64xf32> -> vector<20x64xf32>
    %c1_299 = arith.constant 1 : index
    %c0_300 = arith.constant 0 : index
    %c0_301 = arith.constant 0 : index
    %341 = vector.load %arg2[%c1_299, %c0_300, %c0_301] : memref<11x64x64xf32, #tpu.memory_space<vmem>>, vector<1x64x64xf32>
    %342 = vector.shape_cast %341 : vector<1x64x64xf32> to vector<64x64xf32>
    %cst_302 = arith.constant dense<0.000000e+00> : vector<20x64xf32>
    %343 = tpu.matmul %337, %342, %cst_302 {dimension_numbers = #tpu.dot_dimension_numbers<[1], [0], [0], [1], [0, 0, 1, 1], [], []>} : vector<20x64xf32>, vector<64x64xf32>, vector<20x64xf32> -> vector<20x64xf32>
    %c2_303 = arith.constant 2 : index
    %c0_304 = arith.constant 0 : index
    %c0_305 = arith.constant 0 : index
    %344 = vector.load %arg2[%c2_303, %c0_304, %c0_305] : memref<11x64x64xf32, #tpu.memory_space<vmem>>, vector<1x64x64xf32>
    %345 = vector.shape_cast %344 : vector<1x64x64xf32> to vector<64x64xf32>
    %cst_306 = arith.constant dense<0.000000e+00> : vector<20x64xf32>
    %346 = tpu.matmul %337, %345, %cst_306 {dimension_numbers = #tpu.dot_dimension_numbers<[1], [0], [0], [1], [0, 0, 1, 1], [], []>} : vector<20x64xf32>, vector<64x64xf32>, vector<20x64xf32> -> vector<20x64xf32>
    %c3_307 = arith.constant 3 : index
    %c0_308 = arith.constant 0 : index
    %c0_309 = arith.constant 0 : index
    %347 = vector.load %arg2[%c3_307, %c0_308, %c0_309] : memref<11x64x64xf32, #tpu.memory_space<vmem>>, vector<1x64x64xf32>
    %348 = vector.shape_cast %347 : vector<1x64x64xf32> to vector<64x64xf32>
    %cst_310 = arith.constant dense<0.000000e+00> : vector<20x64xf32>
    %349 = tpu.matmul %337, %348, %cst_310 {dimension_numbers = #tpu.dot_dimension_numbers<[1], [0], [0], [1], [0, 0, 1, 1], [], []>} : vector<20x64xf32>, vector<64x64xf32>, vector<20x64xf32> -> vector<20x64xf32>
    %c4_311 = arith.constant 4 : index
    %c0_312 = arith.constant 0 : index
    %c0_313 = arith.constant 0 : index
    %350 = vector.load %arg2[%c4_311, %c0_312, %c0_313] : memref<11x64x64xf32, #tpu.memory_space<vmem>>, vector<1x64x64xf32>
    %351 = vector.shape_cast %350 : vector<1x64x64xf32> to vector<64x64xf32>
    %cst_314 = arith.constant dense<0.000000e+00> : vector<20x64xf32>
    %352 = tpu.matmul %337, %351, %cst_314 {dimension_numbers = #tpu.dot_dimension_numbers<[1], [0], [0], [1], [0, 0, 1, 1], [], []>} : vector<20x64xf32>, vector<64x64xf32>, vector<20x64xf32> -> vector<20x64xf32>
    %c5_315 = arith.constant 5 : index
    %c0_316 = arith.constant 0 : index
    %c0_317 = arith.constant 0 : index
    %353 = vector.load %arg2[%c5_315, %c0_316, %c0_317] : memref<11x64x64xf32, #tpu.memory_space<vmem>>, vector<1x64x64xf32>
    %354 = vector.shape_cast %353 : vector<1x64x64xf32> to vector<64x64xf32>
    %cst_318 = arith.constant dense<0.000000e+00> : vector<20x64xf32>
    %355 = tpu.matmul %337, %354, %cst_318 {dimension_numbers = #tpu.dot_dimension_numbers<[1], [0], [0], [1], [0, 0, 1, 1], [], []>} : vector<20x64xf32>, vector<64x64xf32>, vector<20x64xf32> -> vector<20x64xf32>
    %c6_319 = arith.constant 6 : index
    %c0_320 = arith.constant 0 : index
    %c0_321 = arith.constant 0 : index
    %356 = vector.load %arg2[%c6_319, %c0_320, %c0_321] : memref<11x64x64xf32, #tpu.memory_space<vmem>>, vector<1x64x64xf32>
    %357 = vector.shape_cast %356 : vector<1x64x64xf32> to vector<64x64xf32>
    %cst_322 = arith.constant dense<0.000000e+00> : vector<20x64xf32>
    %358 = tpu.matmul %337, %357, %cst_322 {dimension_numbers = #tpu.dot_dimension_numbers<[1], [0], [0], [1], [0, 0, 1, 1], [], []>} : vector<20x64xf32>, vector<64x64xf32>, vector<20x64xf32> -> vector<20x64xf32>
    %c7_323 = arith.constant 7 : index
    %c0_324 = arith.constant 0 : index
    %c0_325 = arith.constant 0 : index
    %359 = vector.load %arg2[%c7_323, %c0_324, %c0_325] : memref<11x64x64xf32, #tpu.memory_space<vmem>>, vector<1x64x64xf32>
    %360 = vector.shape_cast %359 : vector<1x64x64xf32> to vector<64x64xf32>
    %cst_326 = arith.constant dense<0.000000e+00> : vector<20x64xf32>
    %361 = tpu.matmul %337, %360, %cst_326 {dimension_numbers = #tpu.dot_dimension_numbers<[1], [0], [0], [1], [0, 0, 1, 1], [], []>} : vector<20x64xf32>, vector<64x64xf32>, vector<20x64xf32> -> vector<20x64xf32>
    %c8_327 = arith.constant 8 : index
    %c0_328 = arith.constant 0 : index
    %c0_329 = arith.constant 0 : index
    %362 = vector.load %arg2[%c8_327, %c0_328, %c0_329] : memref<11x64x64xf32, #tpu.memory_space<vmem>>, vector<1x64x64xf32>
    %363 = vector.shape_cast %362 : vector<1x64x64xf32> to vector<64x64xf32>
    %cst_330 = arith.constant dense<0.000000e+00> : vector<20x64xf32>
    %364 = tpu.matmul %337, %363, %cst_330 {dimension_numbers = #tpu.dot_dimension_numbers<[1], [0], [0], [1], [0, 0, 1, 1], [], []>} : vector<20x64xf32>, vector<64x64xf32>, vector<20x64xf32> -> vector<20x64xf32>
    %c9_331 = arith.constant 9 : index
    %c0_332 = arith.constant 0 : index
    %c0_333 = arith.constant 0 : index
    %365 = vector.load %arg2[%c9_331, %c0_332, %c0_333] : memref<11x64x64xf32, #tpu.memory_space<vmem>>, vector<1x64x64xf32>
    %366 = vector.shape_cast %365 : vector<1x64x64xf32> to vector<64x64xf32>
    %cst_334 = arith.constant dense<0.000000e+00> : vector<20x64xf32>
    %367 = tpu.matmul %337, %366, %cst_334 {dimension_numbers = #tpu.dot_dimension_numbers<[1], [0], [0], [1], [0, 0, 1, 1], [], []>} : vector<20x64xf32>, vector<64x64xf32>, vector<20x64xf32> -> vector<20x64xf32>
    %c10_335 = arith.constant 10 : index
    %c0_336 = arith.constant 0 : index
    %c0_337 = arith.constant 0 : index
    %368 = vector.load %arg2[%c10_335, %c0_336, %c0_337] : memref<11x64x64xf32, #tpu.memory_space<vmem>>, vector<1x64x64xf32>
    %369 = vector.shape_cast %368 : vector<1x64x64xf32> to vector<64x64xf32>
    %cst_338 = arith.constant dense<0.000000e+00> : vector<20x64xf32>
    %370 = tpu.matmul %337, %369, %cst_338 {dimension_numbers = #tpu.dot_dimension_numbers<[1], [0], [0], [1], [0, 0, 1, 1], [], []>} : vector<20x64xf32>, vector<64x64xf32>, vector<20x64xf32> -> vector<20x64xf32>
    %371 = tpu.concatenate %340, %343, %346, %349, %352, %355, %358, %361, %364, %367, %370 in 0 : vector<20x64xf32>, vector<20x64xf32>, vector<20x64xf32>, vector<20x64xf32>, vector<20x64xf32>, vector<20x64xf32>, vector<20x64xf32>, vector<20x64xf32>, vector<20x64xf32>, vector<20x64xf32>, vector<20x64xf32> -> vector<220x64xf32>
    %c0_339 = arith.constant 0 : index
    %c0_340 = arith.constant 0 : index
    %372 = vector.load %arg26[%c0_339, %c0_340] : memref<8x220xf32, #tpu.memory_space<vmem>>, vector<8x220xf32>
    %cst_341 = arith.constant dense<0.000000e+00> : vector<8x64xf32>
    %373 = tpu.matmul %372, %371, %cst_341 {dimension_numbers = #tpu.dot_dimension_numbers<[1], [0], [0], [1], [0, 0, 1, 1], [], []>} : vector<8x220xf32>, vector<220x64xf32>, vector<8x64xf32> -> vector<8x64xf32>
    %cst_342 = arith.constant dense<0.000000e+00> : vector<8xf32>
    %374 = vector.multi_reduction <add>, %373, %cst_342 [1] : vector<8x64xf32> to vector<8xf32>
    %375 = vector.shape_cast %374 : vector<8xf32> to vector<8x1xf32>
    %cst_343 = arith.constant 6.400000e+01 : f32
    %376 = vector.broadcast %cst_343 : f32 to vector<8x1xf32>
    %377 = arith.divf %375, %376 : vector<8x1xf32>
    %378 = arith.mulf %373, %373 : vector<8x64xf32>
    %cst_344 = arith.constant dense<0.000000e+00> : vector<8xf32>
    %379 = vector.multi_reduction <add>, %378, %cst_344 [1] : vector<8x64xf32> to vector<8xf32>
    %380 = vector.shape_cast %379 : vector<8xf32> to vector<8x1xf32>
    %cst_345 = arith.constant 6.400000e+01 : f32
    %381 = vector.broadcast %cst_345 : f32 to vector<8x1xf32>
    %382 = arith.divf %380, %381 : vector<8x1xf32>
    %383 = arith.mulf %377, %377 : vector<8x1xf32>
    %384 = arith.subf %382, %383 : vector<8x1xf32>
    %385 = vector.broadcast %377 : vector<8x1xf32> to vector<8x64xf32>
    %386 = arith.subf %373, %385 : vector<8x64xf32>
    %cst_346 = arith.constant 9.99999974E-6 : f32
    %387 = vector.broadcast %cst_346 : f32 to vector<8x1xf32>
    %388 = arith.addf %384, %387 : vector<8x1xf32>
    %389 = math.rsqrt %388 : vector<8x1xf32>
    %390 = vector.broadcast %389 : vector<8x1xf32> to vector<8x64xf32>
    %391 = arith.mulf %386, %390 : vector<8x64xf32>
    %c0_347 = arith.constant 0 : index
    %c0_348 = arith.constant 0 : index
    %392 = vector.load %arg27[%c0_347, %c0_348] : memref<8x1xf32, #tpu.memory_space<vmem>>, vector<8x1xf32>
    %393 = vector.broadcast %392 : vector<8x1xf32> to vector<8x64xf32>
    %394 = arith.mulf %391, %393 : vector<8x64xf32>
    %c0_349 = arith.constant 0 : index
    %c0_350 = arith.constant 0 : index
    %395 = vector.load %arg28[%c0_349, %c0_350] : memref<8x1xf32, #tpu.memory_space<vmem>>, vector<8x1xf32>
    %396 = vector.broadcast %395 : vector<8x1xf32> to vector<8x64xf32>
    %397 = arith.addf %394, %396 : vector<8x64xf32>
    %cst_351 = arith.constant 0.000000e+00 : f32
    %398 = vector.broadcast %cst_351 : f32 to vector<8x64xf32>
    %399 = arith.cmpf oge, %397, %398 : vector<8x64xf32>
    %cst_352 = arith.constant 1.000000e-01 : f32
    %400 = vector.broadcast %cst_352 : f32 to vector<8x64xf32>
    %401 = arith.mulf %400, %397 : vector<8x64xf32>
    %402 = arith.select %399, %397, %401 : vector<8x64xi1>, vector<8x64xf32>
    %c0_353 = arith.constant 0 : index
    %c0_354 = arith.constant 0 : index
    %403 = vector.load %arg10[%c0_353, %c0_354] : memref<64x128xf32, #tpu.memory_space<vmem>>, vector<64x128xf32>
    %cst_355 = arith.constant dense<0.000000e+00> : vector<8x128xf32>
    %404 = tpu.matmul %402, %403, %cst_355 {dimension_numbers = #tpu.dot_dimension_numbers<[1], [0], [0], [1], [0, 0, 1, 1], [], []>} : vector<8x64xf32>, vector<64x128xf32>, vector<8x128xf32> -> vector<8x128xf32>
    %405 = tpu.concatenate %404, %65 in 0 : vector<8x128xf32>, vector<4x128xf32> -> vector<12x128xf32>
    %c0_356 = arith.constant 0 : index
    %c0_357 = arith.constant 0 : index
    %c0_358 = arith.constant 0 : index
    %406 = vector.load %arg1[%c0_356, %c0_357, %c0_358] : memref<11x128x128xf32, #tpu.memory_space<vmem>>, vector<1x128x128xf32>
    %407 = vector.shape_cast %406 : vector<1x128x128xf32> to vector<128x128xf32>
    %cst_359 = arith.constant dense<0.000000e+00> : vector<12x128xf32>
    %408 = tpu.matmul %405, %407, %cst_359 {dimension_numbers = #tpu.dot_dimension_numbers<[1], [0], [0], [1], [0, 0, 1, 1], [], []>} : vector<12x128xf32>, vector<128x128xf32>, vector<12x128xf32> -> vector<12x128xf32>
    %c1_360 = arith.constant 1 : index
    %c0_361 = arith.constant 0 : index
    %c0_362 = arith.constant 0 : index
    %409 = vector.load %arg1[%c1_360, %c0_361, %c0_362] : memref<11x128x128xf32, #tpu.memory_space<vmem>>, vector<1x128x128xf32>
    %410 = vector.shape_cast %409 : vector<1x128x128xf32> to vector<128x128xf32>
    %cst_363 = arith.constant dense<0.000000e+00> : vector<12x128xf32>
    %411 = tpu.matmul %405, %410, %cst_363 {dimension_numbers = #tpu.dot_dimension_numbers<[1], [0], [0], [1], [0, 0, 1, 1], [], []>} : vector<12x128xf32>, vector<128x128xf32>, vector<12x128xf32> -> vector<12x128xf32>
    %c2_364 = arith.constant 2 : index
    %c0_365 = arith.constant 0 : index
    %c0_366 = arith.constant 0 : index
    %412 = vector.load %arg1[%c2_364, %c0_365, %c0_366] : memref<11x128x128xf32, #tpu.memory_space<vmem>>, vector<1x128x128xf32>
    %413 = vector.shape_cast %412 : vector<1x128x128xf32> to vector<128x128xf32>
    %cst_367 = arith.constant dense<0.000000e+00> : vector<12x128xf32>
    %414 = tpu.matmul %405, %413, %cst_367 {dimension_numbers = #tpu.dot_dimension_numbers<[1], [0], [0], [1], [0, 0, 1, 1], [], []>} : vector<12x128xf32>, vector<128x128xf32>, vector<12x128xf32> -> vector<12x128xf32>
    %c3_368 = arith.constant 3 : index
    %c0_369 = arith.constant 0 : index
    %c0_370 = arith.constant 0 : index
    %415 = vector.load %arg1[%c3_368, %c0_369, %c0_370] : memref<11x128x128xf32, #tpu.memory_space<vmem>>, vector<1x128x128xf32>
    %416 = vector.shape_cast %415 : vector<1x128x128xf32> to vector<128x128xf32>
    %cst_371 = arith.constant dense<0.000000e+00> : vector<12x128xf32>
    %417 = tpu.matmul %405, %416, %cst_371 {dimension_numbers = #tpu.dot_dimension_numbers<[1], [0], [0], [1], [0, 0, 1, 1], [], []>} : vector<12x128xf32>, vector<128x128xf32>, vector<12x128xf32> -> vector<12x128xf32>
    %c4_372 = arith.constant 4 : index
    %c0_373 = arith.constant 0 : index
    %c0_374 = arith.constant 0 : index
    %418 = vector.load %arg1[%c4_372, %c0_373, %c0_374] : memref<11x128x128xf32, #tpu.memory_space<vmem>>, vector<1x128x128xf32>
    %419 = vector.shape_cast %418 : vector<1x128x128xf32> to vector<128x128xf32>
    %cst_375 = arith.constant dense<0.000000e+00> : vector<12x128xf32>
    %420 = tpu.matmul %405, %419, %cst_375 {dimension_numbers = #tpu.dot_dimension_numbers<[1], [0], [0], [1], [0, 0, 1, 1], [], []>} : vector<12x128xf32>, vector<128x128xf32>, vector<12x128xf32> -> vector<12x128xf32>
    %c5_376 = arith.constant 5 : index
    %c0_377 = arith.constant 0 : index
    %c0_378 = arith.constant 0 : index
    %421 = vector.load %arg1[%c5_376, %c0_377, %c0_378] : memref<11x128x128xf32, #tpu.memory_space<vmem>>, vector<1x128x128xf32>
    %422 = vector.shape_cast %421 : vector<1x128x128xf32> to vector<128x128xf32>
    %cst_379 = arith.constant dense<0.000000e+00> : vector<12x128xf32>
    %423 = tpu.matmul %405, %422, %cst_379 {dimension_numbers = #tpu.dot_dimension_numbers<[1], [0], [0], [1], [0, 0, 1, 1], [], []>} : vector<12x128xf32>, vector<128x128xf32>, vector<12x128xf32> -> vector<12x128xf32>
    %c6_380 = arith.constant 6 : index
    %c0_381 = arith.constant 0 : index
    %c0_382 = arith.constant 0 : index
    %424 = vector.load %arg1[%c6_380, %c0_381, %c0_382] : memref<11x128x128xf32, #tpu.memory_space<vmem>>, vector<1x128x128xf32>
    %425 = vector.shape_cast %424 : vector<1x128x128xf32> to vector<128x128xf32>
    %cst_383 = arith.constant dense<0.000000e+00> : vector<12x128xf32>
    %426 = tpu.matmul %405, %425, %cst_383 {dimension_numbers = #tpu.dot_dimension_numbers<[1], [0], [0], [1], [0, 0, 1, 1], [], []>} : vector<12x128xf32>, vector<128x128xf32>, vector<12x128xf32> -> vector<12x128xf32>
    %c7_384 = arith.constant 7 : index
    %c0_385 = arith.constant 0 : index
    %c0_386 = arith.constant 0 : index
    %427 = vector.load %arg1[%c7_384, %c0_385, %c0_386] : memref<11x128x128xf32, #tpu.memory_space<vmem>>, vector<1x128x128xf32>
    %428 = vector.shape_cast %427 : vector<1x128x128xf32> to vector<128x128xf32>
    %cst_387 = arith.constant dense<0.000000e+00> : vector<12x128xf32>
    %429 = tpu.matmul %405, %428, %cst_387 {dimension_numbers = #tpu.dot_dimension_numbers<[1], [0], [0], [1], [0, 0, 1, 1], [], []>} : vector<12x128xf32>, vector<128x128xf32>, vector<12x128xf32> -> vector<12x128xf32>
    %c8_388 = arith.constant 8 : index
    %c0_389 = arith.constant 0 : index
    %c0_390 = arith.constant 0 : index
    %430 = vector.load %arg1[%c8_388, %c0_389, %c0_390] : memref<11x128x128xf32, #tpu.memory_space<vmem>>, vector<1x128x128xf32>
    %431 = vector.shape_cast %430 : vector<1x128x128xf32> to vector<128x128xf32>
    %cst_391 = arith.constant dense<0.000000e+00> : vector<12x128xf32>
    %432 = tpu.matmul %405, %431, %cst_391 {dimension_numbers = #tpu.dot_dimension_numbers<[1], [0], [0], [1], [0, 0, 1, 1], [], []>} : vector<12x128xf32>, vector<128x128xf32>, vector<12x128xf32> -> vector<12x128xf32>
    %c9_392 = arith.constant 9 : index
    %c0_393 = arith.constant 0 : index
    %c0_394 = arith.constant 0 : index
    %433 = vector.load %arg1[%c9_392, %c0_393, %c0_394] : memref<11x128x128xf32, #tpu.memory_space<vmem>>, vector<1x128x128xf32>
    %434 = vector.shape_cast %433 : vector<1x128x128xf32> to vector<128x128xf32>
    %cst_395 = arith.constant dense<0.000000e+00> : vector<12x128xf32>
    %435 = tpu.matmul %405, %434, %cst_395 {dimension_numbers = #tpu.dot_dimension_numbers<[1], [0], [0], [1], [0, 0, 1, 1], [], []>} : vector<12x128xf32>, vector<128x128xf32>, vector<12x128xf32> -> vector<12x128xf32>
    %c10_396 = arith.constant 10 : index
    %c0_397 = arith.constant 0 : index
    %c0_398 = arith.constant 0 : index
    %436 = vector.load %arg1[%c10_396, %c0_397, %c0_398] : memref<11x128x128xf32, #tpu.memory_space<vmem>>, vector<1x128x128xf32>
    %437 = vector.shape_cast %436 : vector<1x128x128xf32> to vector<128x128xf32>
    %cst_399 = arith.constant dense<0.000000e+00> : vector<12x128xf32>
    %438 = tpu.matmul %405, %437, %cst_399 {dimension_numbers = #tpu.dot_dimension_numbers<[1], [0], [0], [1], [0, 0, 1, 1], [], []>} : vector<12x128xf32>, vector<128x128xf32>, vector<12x128xf32> -> vector<12x128xf32>
    %439 = tpu.concatenate %408, %411, %414, %417, %420, %423, %426, %429, %432, %435, %438 in 0 : vector<12x128xf32>, vector<12x128xf32>, vector<12x128xf32>, vector<12x128xf32>, vector<12x128xf32>, vector<12x128xf32>, vector<12x128xf32>, vector<12x128xf32>, vector<12x128xf32>, vector<12x128xf32>, vector<12x128xf32> -> vector<132x128xf32>
    %c0_400 = arith.constant 0 : index
    %c0_401 = arith.constant 0 : index
    %440 = vector.load %arg29[%c0_400, %c0_401] : memref<4x132xf32, #tpu.memory_space<vmem>>, vector<4x132xf32>
    %cst_402 = arith.constant dense<0.000000e+00> : vector<4x128xf32>
    %441 = tpu.matmul %440, %439, %cst_402 {dimension_numbers = #tpu.dot_dimension_numbers<[1], [0], [0], [1], [0, 0, 1, 1], [], []>} : vector<4x132xf32>, vector<132x128xf32>, vector<4x128xf32> -> vector<4x128xf32>
    %cst_403 = arith.constant dense<0.000000e+00> : vector<4xf32>
    %442 = vector.multi_reduction <add>, %441, %cst_403 [1] : vector<4x128xf32> to vector<4xf32>
    %443 = vector.shape_cast %442 : vector<4xf32> to vector<4x1xf32>
    %cst_404 = arith.constant 1.280000e+02 : f32
    %444 = vector.broadcast %cst_404 : f32 to vector<4x1xf32>
    %445 = arith.divf %443, %444 : vector<4x1xf32>
    %446 = arith.mulf %441, %441 : vector<4x128xf32>
    %cst_405 = arith.constant dense<0.000000e+00> : vector<4xf32>
    %447 = vector.multi_reduction <add>, %446, %cst_405 [1] : vector<4x128xf32> to vector<4xf32>
    %448 = vector.shape_cast %447 : vector<4xf32> to vector<4x1xf32>
    %cst_406 = arith.constant 1.280000e+02 : f32
    %449 = vector.broadcast %cst_406 : f32 to vector<4x1xf32>
    %450 = arith.divf %448, %449 : vector<4x1xf32>
    %451 = arith.mulf %445, %445 : vector<4x1xf32>
    %452 = arith.subf %450, %451 : vector<4x1xf32>
    %453 = vector.broadcast %445 : vector<4x1xf32> to vector<4x128xf32>
    %454 = arith.subf %441, %453 : vector<4x128xf32>
    %cst_407 = arith.constant 9.99999974E-6 : f32
    %455 = vector.broadcast %cst_407 : f32 to vector<4x1xf32>
    %456 = arith.addf %452, %455 : vector<4x1xf32>
    %457 = math.rsqrt %456 : vector<4x1xf32>
    %458 = vector.broadcast %457 : vector<4x1xf32> to vector<4x128xf32>
    %459 = arith.mulf %454, %458 : vector<4x128xf32>
    %c0_408 = arith.constant 0 : index
    %c0_409 = arith.constant 0 : index
    %460 = vector.load %arg30[%c0_408, %c0_409] : memref<4x1xf32, #tpu.memory_space<vmem>>, vector<4x1xf32>
    %461 = vector.broadcast %460 : vector<4x1xf32> to vector<4x128xf32>
    %462 = arith.mulf %459, %461 : vector<4x128xf32>
    %c0_410 = arith.constant 0 : index
    %c0_411 = arith.constant 0 : index
    %463 = vector.load %arg31[%c0_410, %c0_411] : memref<4x1xf32, #tpu.memory_space<vmem>>, vector<4x1xf32>
    %464 = vector.broadcast %463 : vector<4x1xf32> to vector<4x128xf32>
    %465 = arith.addf %462, %464 : vector<4x128xf32>
    %cst_412 = arith.constant 0.000000e+00 : f32
    %466 = vector.broadcast %cst_412 : f32 to vector<4x128xf32>
    %467 = arith.cmpf oge, %465, %466 : vector<4x128xf32>
    %cst_413 = arith.constant 1.000000e-01 : f32
    %468 = vector.broadcast %cst_413 : f32 to vector<4x128xf32>
    %469 = arith.mulf %468, %465 : vector<4x128xf32>
    %470 = arith.select %467, %465, %469 : vector<4x128xi1>, vector<4x128xf32>
    %471 = tpu.concatenate %470, %0 in 0 : vector<4x128xf32>, vector<1x128xf32> -> vector<5x128xf32>
    %c0_414 = arith.constant 0 : index
    %c0_415 = arith.constant 0 : index
    %472 = vector.load %arg32[%c0_414, %c0_415] : memref<1x5xf32, #tpu.memory_space<vmem>>, vector<1x5xf32>
    %cst_416 = arith.constant dense<0.000000e+00> : vector<1x128xf32>
    %473 = tpu.matmul %472, %471, %cst_416 {dimension_numbers = #tpu.dot_dimension_numbers<[1], [0], [0], [1], [0, 0, 1, 1], [], []>} : vector<1x5xf32>, vector<5x128xf32>, vector<1x128xf32> -> vector<1x128xf32>
    %c0_417 = arith.constant 0 : index
    %c0_418 = arith.constant 0 : index
    %474 = vector.load %arg33[%c0_417, %c0_418] : memref<1x1xf32, #tpu.memory_space<vmem>>, vector<1x1xf32>
    %475 = vector.broadcast %474 : vector<1x1xf32> to vector<1x128xf32>
    %476 = arith.addf %473, %475 : vector<1x128xf32>
    %477 = math.tanh %476 : vector<1x128xf32>
    %c0_419 = arith.constant 0 : index
    %c0_420 = arith.constant 0 : index
    %478 = vector.load %arg34[%c0_419, %c0_420] : memref<1x128xf32, #tpu.memory_space<vmem>>, vector<1x128xf32>
    tpu.vector_store %arg34[%c0_419, %c0_420], %477 {strides = array<i32>} : memref<1x128xf32, #tpu.memory_space<vmem>>, vector<1x128xf32>,
    return
  }
}

</mosaic_0001>

<llo_original>
// kernel: unet_forward.1
$region0: #{unet_forward.1}
  #allocation0 [shape = 'u32[]', space=smem, size = 0x4, offset = 0x4, fixed_abs, tag = 'smem constant byte address 0x4 - core index']
  #allocation1 [shape = 'u32[144,128]{1,0:T(1,128)}', space=vmem, size = 0x12000, scoped, tag = 'internal scratch']
  #allocation2 [shape = 'f32[1,1]{1,0:T(1,128)S(1)}', space=vmem, size = 0x200, scoped, tag = 'scoped memory for unet_forward.1']
  %s0 = inlined_call_operand.smem [shape: u32[35], index: -1, kind: input, shape index: {}]
  %s1 = sld [smem:[%s0]]
  %s2 = scalar_lea.smem %s0, 1
  %s3 = sld [smem:[%s2]]
  %s4 = scalar_lea.smem %s0, 2
  %s5 = sld [smem:[%s4]]
  %s6 = scalar_lea.smem %s0, 3
  %s7 = sld [smem:[%s6]]
  %s8 = scalar_lea.smem %s0, 4
  %s9 = sld [smem:[%s8]]
  %s10 = scalar_lea.smem %s0, 5
  %s11 = sld [smem:[%s10]]
  %s12 = scalar_lea.smem %s0, 6
  %s13 = sld [smem:[%s12]]
  %s14 = scalar_lea.smem %s0, 7
  %s15 = sld [smem:[%s14]]
  %s16 = scalar_lea.smem %s0, 8
  %s17 = sld [smem:[%s16]]
  %s18 = scalar_lea.smem %s0, 9
  %s19 = sld [smem:[%s18]]
  %s20 = scalar_lea.smem %s0, 10
  %s21 = sld [smem:[%s20]]
  %s22 = scalar_lea.smem %s0, 11
  %s23 = sld [smem:[%s22]]
  %s24 = scalar_lea.smem %s0, 12
  %s25 = sld [smem:[%s24]]
  %s26 = scalar_lea.smem %s0, 13
  %s27 = sld [smem:[%s26]]
  %s28 = scalar_lea.smem %s0, 14
  %s29 = sld [smem:[%s28]]
  %s30 = scalar_lea.smem %s0, 15
  %s31 = sld [smem:[%s30]]
  %s32 = scalar_lea.smem %s0, 16
  %s33 = sld [smem:[%s32]]
  %s34 = scalar_lea.smem %s0, 17
  %s35 = sld [smem:[%s34]]
  %s36 = scalar_lea.smem %s0, 18
  %s37 = sld [smem:[%s36]]
  %s38 = scalar_lea.smem %s0, 19
  %s39 = sld [smem:[%s38]]
  %s40 = scalar_lea.smem %s0, 20
  %s41 = sld [smem:[%s40]]
  %s42 = scalar_lea.smem %s0, 21
  %s43 = sld [smem:[%s42]]
  %s44 = scalar_lea.smem %s0, 22
  %s45 = sld [smem:[%s44]]
  %s46 = scalar_lea.smem %s0, 23
  %s47 = sld [smem:[%s46]]
  %s48 = scalar_lea.smem %s0, 24
  %s49 = sld [smem:[%s48]]
  %s50 = scalar_lea.smem %s0, 25
  %s51 = sld [smem:[%s50]]
  %s52 = scalar_lea.smem %s0, 26
  %s53 = sld [smem:[%s52]]
  %s54 = scalar_lea.smem %s0, 27
  %s55 = sld [smem:[%s54]]
  %s56 = scalar_lea.smem %s0, 28
  %s57 = sld [smem:[%s56]]
  %s58 = scalar_lea.smem %s0, 29
  %s59 = sld [smem:[%s58]]
  %s60 = scalar_lea.smem %s0, 30
  %s61 = sld [smem:[%s60]]
  %s62 = scalar_lea.smem %s0, 31
  %s63 = sld [smem:[%s62]]
  %s64 = scalar_lea.smem %s0, 32
  %s65 = sld [smem:[%s64]]
  %s66 = scalar_lea.smem %s0, 33
  %s67 = sld [smem:[%s66]]
  %s68 = scalar_lea.smem %s0, 34
  %s69 = sld [smem:[%s68]]
  %s70 = sld [smem:[#allocation0]]
  $region170: #{unet_forward.1} parent=0
    _
  %s72 = ssub.s32 1, %s70
  %s73 = scalar_select 0, %s72, %s70
  %v74 = vstv %s67
  %75 = vst [vmem:[#allocation2] sm:$0x1] %v74
  $region1: #{unet_forward.1} parent=0
    #allocation3 [shape = 'u8[180224]{0}', space=vmem, size = 0x2c000, scoped, tag = 'input window, operand 3, single buffered']
    #allocation4 [shape = 's32[1]{0}', space=sflag, size = 0x4, scoped, tag = 'scoped memory for unet_forward.1']
    #allocation5 [shape = 'u8[32768]{0}', space=vmem, size = 0x8000, scoped, tag = 'input window, operand 6, single buffered']
    #allocation6 [shape = 's32[1]{0}', space=sflag, size = 0x4, scoped, tag = 'scoped memory for unet_forward.1']
    #allocation7 [shape = 'u8[8192]{0}', space=vmem, size = 0x2000, scoped, tag = 'input window, operand 8, single buffered']
    #allocation8 [shape = 'u8[16384]{0}', space=vmem, size = 0x4000, scoped, tag = 'input window, operand 9, single buffered']
    #allocation9 [shape = 's32[1]{0}', space=sflag, size = 0x4, scoped, tag = 'scoped memory for unet_forward.1']
    #allocation10 [shape = 'u8[32768]{0}', space=vmem, size = 0x8000, scoped, tag = 'input window, operand 10, single buffered']
    #allocation11 [shape = 'u8[512]{0}', space=vmem, size = 0x400, scoped, tag = 'input window, operand 32, single buffered']
    #allocation12 [shape = 's32[1]{0}', space=sflag, size = 0x4, scoped, tag = 'scoped memory for unet_forward.1']
    %76 = vsyncpa [#allocation4], 0
    %77 = vsyncpa [#allocation6], 0
    %78 = vsyncpa [#allocation9], 0
    %79 = vsyncpa [#allocation12], 0
    // Predicated region
    $region2: #{unet_forward.1} parent=1 // pred_check
      _
    $region3: #{unet_forward.1} parent=1 // pred_check_branch
      %81 = sbr.rel (0) target = $region5
    $region4: #{unet_forward.1} parent=1 // pred_region
      _
    $region5: #{unet_forward.1} parent=1 // pred_fallthru
      _
    // Predicated region
    $region6: #{unet_forward.1} parent=1 // pred_check
      _
    $region7: #{unet_forward.1} parent=1 // pred_check_branch
      %83 = sbr.rel (0) target = $region9
    $region8: #{unet_forward.1} parent=1 // pred_region
      _
    $region9: #{unet_forward.1} parent=1 // pred_fallthru
      _
    // Predicated region
    $region10: #{unet_forward.1} parent=1 // pred_check
      _
    $region11: #{unet_forward.1} parent=1 // pred_check_branch
      %85 = sbr.rel (0) target = $region13
    $region12: #{unet_forward.1} parent=1 // pred_region
      _
    $region13: #{unet_forward.1} parent=1 // pred_fallthru
      _
    // Predicated region
    $region14: #{unet_forward.1} parent=1 // pred_check
      _
    $region15: #{unet_forward.1} parent=1 // pred_check_branch
      %87 = sbr.rel (0) target = $region17
    $region16: #{unet_forward.1} parent=1 // pred_region
      %s89 = ssub.s32 5632, 5632
      %90 = vsyncadd [#allocation4], %s89
      %s91 = sshll.u32 [#allocation3], 4
      %s92 = int_to_ptr.vmem [resolvable:$true] %s91
      %97 = dma.hbm_to_vmem [thread:$0]  %s7, 5632, %s92, [#allocation4], 128, 128, 8
    $region17: #{unet_forward.1} parent=1 // pred_fallthru
      _
    // Predicated region
    $region18: #{unet_forward.1} parent=1 // pred_check
      _
    $region19: #{unet_forward.1} parent=1 // pred_check_branch
      %99 = sbr.rel (0) target = $region21
    $region20: #{unet_forward.1} parent=1 // pred_region
      _
    $region21: #{unet_forward.1} parent=1 // pred_fallthru
      _
    // Predicated region
    $region22: #{unet_forward.1} parent=1 // pred_check
      _
    $region23: #{unet_forward.1} parent=1 // pred_check_branch
      %101 = sbr.rel (0) target = $region25
    $region24: #{unet_forward.1} parent=1 // pred_region
      _
    $region25: #{unet_forward.1} parent=1 // pred_fallthru
      _
    // Predicated region
    $region26: #{unet_forward.1} parent=1 // pred_check
      _
    $region27: #{unet_forward.1} parent=1 // pred_check_branch
      %103 = sbr.rel (0) target = $region29
    $region28: #{unet_forward.1} parent=1 // pred_region
      %s105 = ssub.s32 1024, 1024
      %106 = vsyncadd [#allocation6], %s105
      %s107 = sshll.u32 [#allocation5], 4
      %s108 = int_to_ptr.vmem [resolvable:$true] %s107
      %113 = dma.hbm_to_vmem [thread:$0]  %s13, 1024, %s108, [#allocation6], 128, 128, 8
    $region29: #{unet_forward.1} parent=1 // pred_fallthru
      _
    // Predicated region
    $region30: #{unet_forward.1} parent=1 // pred_check
      _
    $region31: #{unet_forward.1} parent=1 // pred_check_branch
      %115 = sbr.rel (0) target = $region33
    $region32: #{unet_forward.1} parent=1 // pred_region
      _
    $region33: #{unet_forward.1} parent=1 // pred_fallthru
      _
    // Predicated region
    $region34: #{unet_forward.1} parent=1 // pred_check
      _
    $region35: #{unet_forward.1} parent=1 // pred_check_branch
      %117 = sbr.rel (0) target = $region37
    $region36: #{unet_forward.1} parent=1 // pred_region
      %s119 = ssub.s32 256, 256
      %120 = vsyncadd [#allocation6], %s119
      %s121 = sshll.u32 [#allocation7], 4
      %s122 = int_to_ptr.vmem [resolvable:$true] %s121
      %127 = dma.hbm_to_vmem [thread:$0]  %s17, 256, %s122, [#allocation6], 128, 128, 8
    $region37: #{unet_forward.1} parent=1 // pred_fallthru
      _
    // Predicated region
    $region38: #{unet_forward.1} parent=1 // pred_check
      _
    $region39: #{unet_forward.1} parent=1 // pred_check_branch
      %129 = sbr.rel (0) target = $region41
    $region40: #{unet_forward.1} parent=1 // pred_region
      %s131 = ssub.s32 512, 512
      %132 = vsyncadd [#allocation9], %s131
      %s133 = sshll.u32 [#allocation8], 4
      %s134 = int_to_ptr.vmem [resolvable:$true] %s133
      %139 = dma.hbm_to_vmem [thread:$0]  %s19, 512, %s134, [#allocation9], 128, 128, 8
    $region41: #{unet_forward.1} parent=1 // pred_fallthru
      _
    // Predicated region
    $region42: #{unet_forward.1} parent=1 // pred_check
      _
    $region43: #{unet_forward.1} parent=1 // pred_check_branch
      %141 = sbr.rel (0) target = $region45
    $region44: #{unet_forward.1} parent=1 // pred_region
      %s143 = ssub.s32 1024, 1024
      %144 = vsyncadd [#allocation9], %s143
      %s145 = sshll.u32 [#allocation10], 4
      %s146 = int_to_ptr.vmem [resolvable:$true] %s145
      %151 = dma.hbm_to_vmem [thread:$0]  %s21, 1024, %s146, [#allocation9], 128, 128, 8
    $region45: #{unet_forward.1} parent=1 // pred_fallthru
      _
    // Predicated region
    $region46: #{unet_forward.1} parent=1 // pred_check
      _
    $region47: #{unet_forward.1} parent=1 // pred_check_branch
      %153 = sbr.rel (0) target = $region49
    $region48: #{unet_forward.1} parent=1 // pred_region
      _
    $region49: #{unet_forward.1} parent=1 // pred_fallthru
      _
    // Predicated region
    $region50: #{unet_forward.1} parent=1 // pred_check
      _
    $region51: #{unet_forward.1} parent=1 // pred_check_branch
      %155 = sbr.rel (0) target = $region53
    $region52: #{unet_forward.1} parent=1 // pred_region
      _
    $region53: #{unet_forward.1} parent=1 // pred_fallthru
      _
    // Predicated region
    $region54: #{unet_forward.1} parent=1 // pred_check
      _
    $region55: #{unet_forward.1} parent=1 // pred_check_branch
      %157 = sbr.rel (0) target = $region57
    $region56: #{unet_forward.1} parent=1 // pred_region
      _
    $region57: #{unet_forward.1} parent=1 // pred_fallthru
      _
    // Predicated region
    $region58: #{unet_forward.1} parent=1 // pred_check
      _
    $region59: #{unet_forward.1} parent=1 // pred_check_branch
      %159 = sbr.rel (0) target = $region61
    $region60: #{unet_forward.1} parent=1 // pred_region
      _
    $region61: #{unet_forward.1} parent=1 // pred_fallthru
      _
    // Predicated region
    $region62: #{unet_forward.1} parent=1 // pred_check
      _
    $region63: #{unet_forward.1} parent=1 // pred_check_branch
      %161 = sbr.rel (0) target = $region65
    $region64: #{unet_forward.1} parent=1 // pred_region
      _
    $region65: #{unet_forward.1} parent=1 // pred_fallthru
      _
    // Predicated region
    $region66: #{unet_forward.1} parent=1 // pred_check
      _
    $region67: #{unet_forward.1} parent=1 // pred_check_branch
      %163 = sbr.rel (0) target = $region69
    $region68: #{unet_forward.1} parent=1 // pred_region
      _
    $region69: #{unet_forward.1} parent=1 // pred_fallthru
      _
    // Predicated region
    $region70: #{unet_forward.1} parent=1 // pred_check
      _
    $region71: #{unet_forward.1} parent=1 // pred_check_branch
      %165 = sbr.rel (0) target = $region73
    $region72: #{unet_forward.1} parent=1 // pred_region
      _
    $region73: #{unet_forward.1} parent=1 // pred_fallthru
      _
    // Predicated region
    $region74: #{unet_forward.1} parent=1 // pred_check
      _
    $region75: #{unet_forward.1} parent=1 // pred_check_branch
      %167 = sbr.rel (0) target = $region77
    $region76: #{unet_forward.1} parent=1 // pred_region
      _
    $region77: #{unet_forward.1} parent=1 // pred_fallthru
      _
    // Predicated region
    $region78: #{unet_forward.1} parent=1 // pred_check
      _
    $region79: #{unet_forward.1} parent=1 // pred_check_branch
      %169 = sbr.rel (0) target = $region81
    $region80: #{unet_forward.1} parent=1 // pred_region
      _
    $region81: #{unet_forward.1} parent=1 // pred_fallthru
      _
    // Predicated region
    $region82: #{unet_forward.1} parent=1 // pred_check
      _
    $region83: #{unet_forward.1} parent=1 // pred_check_branch
      %171 = sbr.rel (0) target = $region85
    $region84: #{unet_forward.1} parent=1 // pred_region
      _
    $region85: #{unet_forward.1} parent=1 // pred_fallthru
      _
    // Predicated region
    $region86: #{unet_forward.1} parent=1 // pred_check
      _
    $region87: #{unet_forward.1} parent=1 // pred_check_branch
      %173 = sbr.rel (0) target = $region89
    $region88: #{unet_forward.1} parent=1 // pred_region
      _
    $region89: #{unet_forward.1} parent=1 // pred_fallthru
      _
    // Predicated region
    $region90: #{unet_forward.1} parent=1 // pred_check
      _
    $region91: #{unet_forward.1} parent=1 // pred_check_branch
      %175 = sbr.rel (0) target = $region93
    $region92: #{unet_forward.1} parent=1 // pred_region
      _
    $region93: #{unet_forward.1} parent=1 // pred_fallthru
      _
    // Predicated region
    $region94: #{unet_forward.1} parent=1 // pred_check
      _
    $region95: #{unet_forward.1} parent=1 // pred_check_branch
      %177 = sbr.rel (0) target = $region97
    $region96: #{unet_forward.1} parent=1 // pred_region
      _
    $region97: #{unet_forward.1} parent=1 // pred_fallthru
      _
    // Predicated region
    $region98: #{unet_forward.1} parent=1 // pred_check
      _
    $region99: #{unet_forward.1} parent=1 // pred_check_branch
      %179 = sbr.rel (0) target = $region101
    $region100: #{unet_forward.1} parent=1 // pred_region
      _
    $region101: #{unet_forward.1} parent=1 // pred_fallthru
      _
    // Predicated region
    $region102: #{unet_forward.1} parent=1 // pred_check
      _
    $region103: #{unet_forward.1} parent=1 // pred_check_branch
      %181 = sbr.rel (0) target = $region105
    $region104: #{unet_forward.1} parent=1 // pred_region
      _
    $region105: #{unet_forward.1} parent=1 // pred_fallthru
      _
    // Predicated region
    $region106: #{unet_forward.1} parent=1 // pred_check
      _
    $region107: #{unet_forward.1} parent=1 // pred_check_branch
      %183 = sbr.rel (0) target = $region109
    $region108: #{unet_forward.1} parent=1 // pred_region
      _
    $region109: #{unet_forward.1} parent=1 // pred_fallthru
      _
    // Predicated region
    $region110: #{unet_forward.1} parent=1 // pred_check
      _
    $region111: #{unet_forward.1} parent=1 // pred_check_branch
      %185 = sbr.rel (0) target = $region113
    $region112: #{unet_forward.1} parent=1 // pred_region
      _
    $region113: #{unet_forward.1} parent=1 // pred_fallthru
      _
    // Predicated region
    $region114: #{unet_forward.1} parent=1 // pred_check
      _
    $region115: #{unet_forward.1} parent=1 // pred_check_branch
      %187 = sbr.rel (0) target = $region117
    $region116: #{unet_forward.1} parent=1 // pred_region
      _
    $region117: #{unet_forward.1} parent=1 // pred_fallthru
      _
    // Predicated region
    $region118: #{unet_forward.1} parent=1 // pred_check
      _
    $region119: #{unet_forward.1} parent=1 // pred_check_branch
      %189 = sbr.rel (0) target = $region121
    $region120: #{unet_forward.1} parent=1 // pred_region
      _
    $region121: #{unet_forward.1} parent=1 // pred_fallthru
      _
    // Predicated region
    $region122: #{unet_forward.1} parent=1 // pred_check
      _
    $region123: #{unet_forward.1} parent=1 // pred_check_branch
      %191 = sbr.rel (0) target = $region125
    $region124: #{unet_forward.1} parent=1 // pred_region
      _
    $region125: #{unet_forward.1} parent=1 // pred_fallthru
      _
    // Predicated region
    $region126: #{unet_forward.1} parent=1 // pred_check
      _
    $region127: #{unet_forward.1} parent=1 // pred_check_branch
      %193 = sbr.rel (0) target = $region129
    $region128: #{unet_forward.1} parent=1 // pred_region
      _
    $region129: #{unet_forward.1} parent=1 // pred_fallthru
      _
    // Predicated region
    $region130: #{unet_forward.1} parent=1 // pred_check
      _
    $region131: #{unet_forward.1} parent=1 // pred_check_branch
      %195 = sbr.rel (0) target = $region133
    $region132: #{unet_forward.1} parent=1 // pred_region
      %s197 = ssub.s32 16, 16
      %198 = vsyncadd [#allocation12], %s197
      %s200 = sshll.u32 [#allocation11], 4
      %s201 = int_to_ptr.vmem [resolvable:$true] %s200
      %203 = dma.hbm_to_vmem [thread:$0]  %s65, 16, %s201, [#allocation12]
    $region133: #{unet_forward.1} parent=1 // pred_fallthru
      _
    // Predicated region
    $region134: #{unet_forward.1} parent=1 // pred_check
      _
    $region135: #{unet_forward.1} parent=1 // pred_check_branch
      %205 = sbr.rel (0) target = $region137
    $region136: #{unet_forward.1} parent=1 // pred_region
      _
    $region137: #{unet_forward.1} parent=1 // pred_fallthru
      _
    // Predicated region
    $region138: #{unet_forward.1} parent=1 // pred_check
      _
    $region139: #{unet_forward.1} parent=1 // pred_check_branch
      %207 = sbr.rel (0) target = $region141
    $region140: #{unet_forward.1} parent=1 // pred_region
      %208 = dma.done [#allocation4], 5632
    $region141: #{unet_forward.1} parent=1 // pred_fallthru
      _
    // Predicated region
    $region142: #{unet_forward.1} parent=1 // pred_check
      _
    $region143: #{unet_forward.1} parent=1 // pred_check_branch
      %210 = sbr.rel (0) target = $region145
    $region144: #{unet_forward.1} parent=1 // pred_region
      %211 = dma.done [#allocation6], 1024
    $region145: #{unet_forward.1} parent=1 // pred_fallthru
      _
    // Predicated region
    $region146: #{unet_forward.1} parent=1 // pred_check
      _
    $region147: #{unet_forward.1} parent=1 // pred_check_branch
      %213 = sbr.rel (0) target = $region149
    $region148: #{unet_forward.1} parent=1 // pred_region
      %214 = dma.done [#allocation6], 256
    $region149: #{unet_forward.1} parent=1 // pred_fallthru
      _
    // Predicated region
    $region150: #{unet_forward.1} parent=1 // pred_check
      _
    $region151: #{unet_forward.1} parent=1 // pred_check_branch
      %216 = sbr.rel (0) target = $region153
    $region152: #{unet_forward.1} parent=1 // pred_region
      %217 = dma.done [#allocation9], 512
    $region153: #{unet_forward.1} parent=1 // pred_fallthru
      _
    // Predicated region
    $region154: #{unet_forward.1} parent=1 // pred_check
      _
    $region155: #{unet_forward.1} parent=1 // pred_check_branch
      %219 = sbr.rel (0) target = $region157
    $region156: #{unet_forward.1} parent=1 // pred_region
      %220 = dma.done [#allocation9], 1024
    $region157: #{unet_forward.1} parent=1 // pred_fallthru
      _
    // Predicated region
    $region158: #{unet_forward.1} parent=1 // pred_check
      _
    $region159: #{unet_forward.1} parent=1 // pred_check_branch
      %222 = sbr.rel (0) target = $region161
    $region160: #{unet_forward.1} parent=1 // pred_region
      %223 = dma.done [#allocation12], 16
    $region161: #{unet_forward.1} parent=1 // pred_fallthru
      _
    %v224 = vld [vmem:[%s1] sm:$0x1]
    %v225 = vld [vmem:[%s3] sm:$0xff]
    %v226 = vld [vmem:[%s3 + $0x8] sm:$0xff]
    %v227 = vld [vmem:[%s3 + $0x10] sm:$0xff]
    %v228 = vld [vmem:[%s3 + $0x18] sm:$0xff]
    %v229 = vld [vmem:[%s3 + $0x20] sm:$0xff]
    %v230 = vld [vmem:[%s3 + $0x28] sm:$0xff]
    %v231 = vld [vmem:[%s3 + $0x30] sm:$0xff]
    %v232 = vld [vmem:[%s3 + $0x38] sm:$0xff]
    %v233 = vld [vmem:[%s3 + $0x40] sm:$0xff]
    %v234 = vld [vmem:[%s3 + $0x48] sm:$0xff]
    %v235 = vld [vmem:[%s3 + $0x50] sm:$0xff]
    %v236 = vld [vmem:[%s3 + $0x58] sm:$0xff]
    %v237 = vld [vmem:[%s3 + $0x60] sm:$0xff]
    %v238 = vld [vmem:[%s3 + $0x68] sm:$0xff]
    %v239 = vld [vmem:[%s3 + $0x70] sm:$0xff]
    %v240 = vld [vmem:[%s3 + $0x78] sm:$0xff]
    %241 = vmatprep.subr.mxu0 0.0
    %242 = vmatpush1.msra.mxu0 %v225
    %243 = vmatprep.subr.mxu0 0.0
    %244 = vmatpush1.msra.mxu0 %v226
    %245 = vmatprep.subr.mxu0 0.0
    %246 = vmatpush1.msra.mxu0 %v227
    %247 = vmatprep.subr.mxu0 0.0
    %248 = vmatpush1.msra.mxu0 %v228
    %249 = vmatprep.subr.mxu0 0.0
    %250 = vmatpush1.msra.mxu0 %v229
    %251 = vmatprep.subr.mxu0 0.0
    %252 = vmatpush1.msra.mxu0 %v230
    %253 = vmatprep.subr.mxu0 0.0
    %254 = vmatpush1.msra.mxu0 %v231
    %255 = vmatprep.subr.mxu0 0.0
    %256 = vmatpush1.msra.mxu0 %v232
    %257 = vmatprep.subr.mxu0 0.0
    %258 = vmatpush1.msra.mxu0 %v233
    %259 = vmatprep.subr.mxu0 0.0
    %260 = vmatpush1.msra.mxu0 %v234
    %261 = vmatprep.subr.mxu0 0.0
    %262 = vmatpush1.msra.mxu0 %v235
    %263 = vmatprep.subr.mxu0 0.0
    %264 = vmatpush1.msra.mxu0 %v236
    %265 = vmatprep.subr.mxu0 0.0
    %266 = vmatpush1.msra.mxu0 %v237
    %267 = vmatprep.subr.mxu0 0.0
    %268 = vmatpush1.msra.mxu0 %v238
    %269 = vmatprep.subr.mxu0 0.0
    %270 = vmatpush1.msra.mxu0 %v239
    %271 = vmatprep.subr.mxu0 0.0
    %272 = vmatpush1.msra.mxu0 %v240
    %273 = vmatprep.subr.mxu0 0.0
    %274 = vmatpush1.msra.mxu0 0.0
    %275 = vmatprep.subr.mxu0 0.0
    %276 = vmatpush1.msra.mxu0 0.0
    %277 = vmatprep.subr.mxu0 0.0
    %278 = vmatpush1.msra.mxu0 0.0
    %279 = vmatprep.subr.mxu0 0.0
    %280 = vmatpush1.msra.mxu0 0.0
    %281 = vmatprep.subr.mxu0 0.0
    %282 = vmatpush1.msra.mxu0 0.0
    %283 = vmatprep.subr.mxu0 0.0
    %284 = vmatpush1.msra.mxu0 0.0
    %285 = vmatprep.subr.mxu0 0.0
    %286 = vmatpush1.msra.mxu0 0.0
    %287 = vmatprep.subr.mxu0 0.0
    %288 = vmatpush1.msra.mxu0 0.0
    %289 = vmatprep.subr.mxu0 0.0
    %290 = vmatpush1.msra.mxu0 0.0
    %291 = vmatprep.subr.mxu0 0.0
    %292 = vmatpush1.msra.mxu0 0.0
    %293 = vmatprep.subr.mxu0 0.0
    %294 = vmatpush1.msra.mxu0 0.0
    %295 = vmatprep.subr.mxu0 0.0
    %296 = vmatpush1.msra.mxu0 0.0
    %297 = vmatprep.subr.mxu0 0.0
    %298 = vmatpush1.msra.mxu0 0.0
    %299 = vmatprep.subr.mxu0 0.0
    %300 = vmatpush1.msra.mxu0 0.0
    %301 = vmatprep.subr.mxu0 0.0
    %302 = vmatpush1.msra.mxu0 0.0
    %303 = vmatprep.subr.mxu0 0.0
    %304 = vmatpush1.msra.mxu0 0.0
    %305 = vmatprep.mubr.f32.mxu0 0.0
    %306 = vmatmul.mubr.f32.gmra.mrb[0].mxu0 %v224
    %v307 = vpop.f32.mrb[0].mxu0
    %v308 = vadd.f32 0.0, %v307
    %v309 = vpop.f32.mrb[0].mxu0
    %310 = vdwg.mxu0
    %s311 = scalar_lea.vmem %s3, 128
    %v312 = vld [vmem:[%s311] sm:$0xff]
    %v313 = vld [vmem:[%s311 + $0x8] sm:$0xff]
    %v314 = vld [vmem:[%s311 + $0x10] sm:$0xff]
    %v315 = vld [vmem:[%s311 + $0x18] sm:$0xff]
    %v316 = vld [vmem:[%s311 + $0x20] sm:$0xff]
    %v317 = vld [vmem:[%s311 + $0x28] sm:$0xff]
    %v318 = vld [vmem:[%s311 + $0x30] sm:$0xff]
    %v319 = vld [vmem:[%s311 + $0x38] sm:$0xff]
    %v320 = vld [vmem:[%s311 + $0x40] sm:$0xff]
    %v321 = vld [vmem:[%s311 + $0x48] sm:$0xff]
    %v322 = vld [vmem:[%s311 + $0x50] sm:$0xff]
    %v323 = vld [vmem:[%s311 + $0x58] sm:$0xff]
    %v324 = vld [vmem:[%s311 + $0x60] sm:$0xff]
    %v325 = vld [vmem:[%s311 + $0x68] sm:$0xff]
    %v326 = vld [vmem:[%s311 + $0x70] sm:$0xff]
    %v327 = vld [vmem:[%s311 + $0x78] sm:$0xff]
    %328 = vmatprep.subr.mxu0 0.0
    %329 = vmatpush1.msra.mxu0 %v312
    %330 = vmatprep.subr.mxu0 0.0
    %331 = vmatpush1.msra.mxu0 %v313
    %332 = vmatprep.subr.mxu0 0.0
    %333 = vmatpush1.msra.mxu0 %v314
    %334 = vmatprep.subr.mxu0 0.0
    %335 = vmatpush1.msra.mxu0 %v315
    %336 = vmatprep.subr.mxu0 0.0
    %337 = vmatpush1.msra.mxu0 %v316
    %338 = vmatprep.subr.mxu0 0.0
    %339 = vmatpush1.msra.mxu0 %v317
    %340 = vmatprep.subr.mxu0 0.0
    %341 = vmatpush1.msra.mxu0 %v318
    %342 = vmatprep.subr.mxu0 0.0
    %343 = vmatpush1.msra.mxu0 %v319
    %344 = vmatprep.subr.mxu0 0.0
    %345 = vmatpush1.msra.mxu0 %v320
    %346 = vmatprep.subr.mxu0 0.0
    %347 = vmatpush1.msra.mxu0 %v321
    %348 = vmatprep.subr.mxu0 0.0
    %349 = vmatpush1.msra.mxu0 %v322
    %350 = vmatprep.subr.mxu0 0.0
    %351 = vmatpush1.msra.mxu0 %v323
    %352 = vmatprep.subr.mxu0 0.0
    %353 = vmatpush1.msra.mxu0 %v324
    %354 = vmatprep.subr.mxu0 0.0
    %355 = vmatpush1.msra.mxu0 %v325
    %356 = vmatprep.subr.mxu0 0.0
    %357 = vmatpush1.msra.mxu0 %v326
    %358 = vmatprep.subr.mxu0 0.0
    %359 = vmatpush1.msra.mxu0 %v327
    %360 = vmatprep.subr.mxu0 0.0
    %361 = vmatpush1.msra.mxu0 0.0
    %362 = vmatprep.subr.mxu0 0.0
    %363 = vmatpush1.msra.mxu0 0.0
    %364 = vmatprep.subr.mxu0 0.0
    %365 = vmatpush1.msra.mxu0 0.0
    %366 = vmatprep.subr.mxu0 0.0
    %367 = vmatpush1.msra.mxu0 0.0
    %368 = vmatprep.subr.mxu0 0.0
    %369 = vmatpush1.msra.mxu0 0.0
    %370 = vmatprep.subr.mxu0 0.0
    %371 = vmatpush1.msra.mxu0 0.0
    %372 = vmatprep.subr.mxu0 0.0
    %373 = vmatpush1.msra.mxu0 0.0
    %374 = vmatprep.subr.mxu0 0.0
    %375 = vmatpush1.msra.mxu0 0.0
    %376 = vmatprep.subr.mxu0 0.0
    %377 = vmatpush1.msra.mxu0 0.0
    %378 = vmatprep.subr.mxu0 0.0
    %379 = vmatpush1.msra.mxu0 0.0
    %380 = vmatprep.subr.mxu0 0.0
    %381 = vmatpush1.msra.mxu0 0.0
    %382 = vmatprep.subr.mxu0 0.0
    %383 = vmatpush1.msra.mxu0 0.0
    %384 = vmatprep.subr.mxu0 0.0
    %385 = vmatpush1.msra.mxu0 0.0
    %386 = vmatprep.subr.mxu0 0.0
    %387 = vmatpush1.msra.mxu0 0.0
    %388 = vmatprep.subr.mxu0 0.0
    %389 = vmatpush1.msra.mxu0 0.0
    %390 = vmatprep.subr.mxu0 0.0
    %391 = vmatpush1.msra.mxu0 0.0
    %392 = vmatprep.mubr.f32.mxu0 0.0
    %393 = vmatmul.mubr.f32.gmra.mrb[0].mxu0 %v224
    %v394 = vpop.f32.mrb[0].mxu0
    %v395 = vadd.f32 0.0, %v394
    %v396 = vpop.f32.mrb[0].mxu0
    %397 = vdwg.mxu0
    %s398 = scalar_lea.vmem %s3, 256
    %v399 = vld [vmem:[%s398] sm:$0xff]
    %v400 = vld [vmem:[%s398 + $0x8] sm:$0xff]
    %v401 = vld [vmem:[%s398 + $0x10] sm:$0xff]
    %v402 = vld [vmem:[%s398 + $0x18] sm:$0xff]
    %v403 = vld [vmem:[%s398 + $0x20] sm:$0xff]
    %v404 = vld [vmem:[%s398 + $0x28] sm:$0xff]
    %v405 = vld [vmem:[%s398 + $0x30] sm:$0xff]
    %v406 = vld [vmem:[%s398 + $0x38] sm:$0xff]
    %v407 = vld [vmem:[%s398 + $0x40] sm:$0xff]
    %v408 = vld [vmem:[%s398 + $0x48] sm:$0xff]
    %v409 = vld [vmem:[%s398 + $0x50] sm:$0xff]
    %v410 = vld [vmem:[%s398 + $0x58] sm:$0xff]
    %v411 = vld [vmem:[%s398 + $0x60] sm:$0xff]
    %v412 = vld [vmem:[%s398 + $0x68] sm:$0xff]
    %v413 = vld [vmem:[%s398 + $0x70] sm:$0xff]
    %v414 = vld [vmem:[%s398 + $0x78] sm:$0xff]
    %415 = vmatprep.subr.mxu0 0.0
    %416 = vmatpush1.msra.mxu0 %v399
    %417 = vmatprep.subr.mxu0 0.0
    %418 = vmatpush1.msra.mxu0 %v400
    %419 = vmatprep.subr.mxu0 0.0
    %420 = vmatpush1.msra.mxu0 %v401
    %421 = vmatprep.subr.mxu0 0.0
    %422 = vmatpush1.msra.mxu0 %v402
    %423 = vmatprep.subr.mxu0 0.0
    %424 = vmatpush1.msra.mxu0 %v403
    %425 = vmatprep.subr.mxu0 0.0
    %426 = vmatpush1.msra.mxu0 %v404
    %427 = vmatprep.subr.mxu0 0.0
    %428 = vmatpush1.msra.mxu0 %v405
    %429 = vmatprep.subr.mxu0 0.0
    %430 = vmatpush1.msra.mxu0 %v406
    %431 = vmatprep.subr.mxu0 0.0
    %432 = vmatpush1.msra.mxu0 %v407
    %433 = vmatprep.subr.mxu0 0.0
    %434 = vmatpush1.msra.mxu0 %v408
    %435 = vmatprep.subr.mxu0 0.0
    %436 = vmatpush1.msra.mxu0 %v409
    %437 = vmatprep.subr.mxu0 0.0
    %438 = vmatpush1.msra.mxu0 %v410
    %439 = vmatprep.subr.mxu0 0.0
    %440 = vmatpush1.msra.mxu0 %v411
    %441 = vmatprep.subr.mxu0 0.0
    %442 = vmatpush1.msra.mxu0 %v412
    %443 = vmatprep.subr.mxu0 0.0
    %444 = vmatpush1.msra.mxu0 %v413
    %445 = vmatprep.subr.mxu0 0.0
    %446 = vmatpush1.msra.mxu0 %v414
    %447 = vmatprep.subr.mxu0 0.0
    %448 = vmatpush1.msra.mxu0 0.0
    %449 = vmatprep.subr.mxu0 0.0
    %450 = vmatpush1.msra.mxu0 0.0
    %451 = vmatprep.subr.mxu0 0.0
    %452 = vmatpush1.msra.mxu0 0.0
    %453 = vmatprep.subr.mxu0 0.0
    %454 = vmatpush1.msra.mxu0 0.0
    %455 = vmatprep.subr.mxu0 0.0
    %456 = vmatpush1.msra.mxu0 0.0
    %457 = vmatprep.subr.mxu0 0.0
    %458 = vmatpush1.msra.mxu0 0.0
    %459 = vmatprep.subr.mxu0 0.0
    %460 = vmatpush1.msra.mxu0 0.0
    %461 = vmatprep.subr.mxu0 0.0
    %462 = vmatpush1.msra.mxu0 0.0
    %463 = vmatprep.subr.mxu0 0.0
    %464 = vmatpush1.msra.mxu0 0.0
    %465 = vmatprep.subr.mxu0 0.0
    %466 = vmatpush1.msra.mxu0 0.0
    %467 = vmatprep.subr.mxu0 0.0
    %468 = vmatpush1.msra.mxu0 0.0
    %469 = vmatprep.subr.mxu0 0.0
    %470 = vmatpush1.msra.mxu0 0.0
    %471 = vmatprep.subr.mxu0 0.0
    %472 = vmatpush1.msra.mxu0 0.0
    %473 = vmatprep.subr.mxu0 0.0
    %474 = vmatpush1.msra.mxu0 0.0
    %475 = vmatprep.subr.mxu0 0.0
    %476 = vmatpush1.msra.mxu0 0.0
    %477 = vmatprep.subr.mxu0 0.0
    %478 = vmatpush1.msra.mxu0 0.0
    %479 = vmatprep.mubr.f32.mxu0 0.0
    %480 = vmatmul.mubr.f32.gmra.mrb[0].mxu0 %v224
    %v481 = vpop.f32.mrb[0].mxu0
    %v482 = vadd.f32 0.0, %v481
    %v483 = vpop.f32.mrb[0].mxu0
    %484 = vdwg.mxu0
    %s485 = scalar_lea.vmem %s3, 384
    %v486 = vld [vmem:[%s485] sm:$0xff]
    %v487 = vld [vmem:[%s485 + $0x8] sm:$0xff]
    %v488 = vld [vmem:[%s485 + $0x10] sm:$0xff]
    %v489 = vld [vmem:[%s485 + $0x18] sm:$0xff]
    %v490 = vld [vmem:[%s485 + $0x20] sm:$0xff]
    %v491 = vld [vmem:[%s485 + $0x28] sm:$0xff]
    %v492 = vld [vmem:[%s485 + $0x30] sm:$0xff]
    %v493 = vld [vmem:[%s485 + $0x38] sm:$0xff]
    %v494 = vld [vmem:[%s485 + $0x40] sm:$0xff]
    %v495 = vld [vmem:[%s485 + $0x48] sm:$0xff]
    %v496 = vld [vmem:[%s485 + $0x50] sm:$0xff]
    %v497 = vld [vmem:[%s485 + $0x58] sm:$0xff]
    %v498 = vld [vmem:[%s485 + $0x60] sm:$0xff]
    %v499 = vld [vmem:[%s485 + $0x68] sm:$0xff]
    %v500 = vld [vmem:[%s485 + $0x70] sm:$0xff]
    %v501 = vld [vmem:[%s485 + $0x78] sm:$0xff]
    %502 = vmatprep.subr.mxu0 0.0
    %503 = vmatpush1.msra.mxu0 %v486
    %504 = vmatprep.subr.mxu0 0.0
    %505 = vmatpush1.msra.mxu0 %v487
    %506 = vmatprep.subr.mxu0 0.0
    %507 = vmatpush1.msra.mxu0 %v488
    %508 = vmatprep.subr.mxu0 0.0
    %509 = vmatpush1.msra.mxu0 %v489
    %510 = vmatprep.subr.mxu0 0.0
    %511 = vmatpush1.msra.mxu0 %v490
    %512 = vmatprep.subr.mxu0 0.0
    %513 = vmatpush1.msra.mxu0 %v491
    %514 = vmatprep.subr.mxu0 0.0
    %515 = vmatpush1.msra.mxu0 %v492
    %516 = vmatprep.subr.mxu0 0.0
    %517 = vmatpush1.msra.mxu0 %v493
    %518 = vmatprep.subr.mxu0 0.0
    %519 = vmatpush1.msra.mxu0 %v494
    %520 = vmatprep.subr.mxu0 0.0
    %521 = vmatpush1.msra.mxu0 %v495
    %522 = vmatprep.subr.mxu0 0.0
    %523 = vmatpush1.msra.mxu0 %v496
    %524 = vmatprep.subr.mxu0 0.0
    %525 = vmatpush1.msra.mxu0 %v497
    %526 = vmatprep.subr.mxu0 0.0
    %527 = vmatpush1.msra.mxu0 %v498
    %528 = vmatprep.subr.mxu0 0.0
    %529 = vmatpush1.msra.mxu0 %v499
    %530 = vmatprep.subr.mxu0 0.0
    %531 = vmatpush1.msra.mxu0 %v500
    %532 = vmatprep.subr.mxu0 0.0
    %533 = vmatpush1.msra.mxu0 %v501
    %534 = vmatprep.subr.mxu0 0.0
    %535 = vmatpush1.msra.mxu0 0.0
    %536 = vmatprep.subr.mxu0 0.0
    %537 = vmatpush1.msra.mxu0 0.0
    %538 = vmatprep.subr.mxu0 0.0
    %539 = vmatpush1.msra.mxu0 0.0
    %540 = vmatprep.subr.mxu0 0.0
    %541 = vmatpush1.msra.mxu0 0.0
    %542 = vmatprep.subr.mxu0 0.0
    %543 = vmatpush1.msra.mxu0 0.0
    %544 = vmatprep.subr.mxu0 0.0
    %545 = vmatpush1.msra.mxu0 0.0
    %546 = vmatprep.subr.mxu0 0.0
    %547 = vmatpush1.msra.mxu0 0.0
    %548 = vmatprep.subr.mxu0 0.0
    %549 = vmatpush1.msra.mxu0 0.0
    %550 = vmatprep.subr.mxu0 0.0
    %551 = vmatpush1.msra.mxu0 0.0
    %552 = vmatprep.subr.mxu0 0.0
    %553 = vmatpush1.msra.mxu0 0.0
    %554 = vmatprep.subr.mxu0 0.0
    %555 = vmatpush1.msra.mxu0 0.0
    %556 = vmatprep.subr.mxu0 0.0
    %557 = vmatpush1.msra.mxu0 0.0
    %558 = vmatprep.subr.mxu0 0.0
    %559 = vmatpush1.msra.mxu0 0.0
    %560 = vmatprep.subr.mxu0 0.0
    %561 = vmatpush1.msra.mxu0 0.0
    %562 = vmatprep.subr.mxu0 0.0
    %563 = vmatpush1.msra.mxu0 0.0
    %564 = vmatprep.subr.mxu0 0.0
    %565 = vmatpush1.msra.mxu0 0.0
    %566 = vmatprep.mubr.f32.mxu0 0.0
    %567 = vmatmul.mubr.f32.gmra.mrb[0].mxu0 %v224
    %v568 = vpop.f32.mrb[0].mxu0
    %v569 = vadd.f32 0.0, %v568
    %v570 = vpop.f32.mrb[0].mxu0
    %571 = vdwg.mxu0
    %s572 = scalar_lea.vmem %s3, 512
    %v573 = vld [vmem:[%s572] sm:$0xff]
    %v574 = vld [vmem:[%s572 + $0x8] sm:$0xff]
    %v575 = vld [vmem:[%s572 + $0x10] sm:$0xff]
    %v576 = vld [vmem:[%s572 + $0x18] sm:$0xff]
    %v577 = vld [vmem:[%s572 + $0x20] sm:$0xff]
    %v578 = vld [vmem:[%s572 + $0x28] sm:$0xff]
    %v579 = vld [vmem:[%s572 + $0x30] sm:$0xff]
    %v580 = vld [vmem:[%s572 + $0x38] sm:$0xff]
    %v581 = vld [vmem:[%s572 + $0x40] sm:$0xff]
    %v582 = vld [vmem:[%s572 + $0x48] sm:$0xff]
    %v583 = vld [vmem:[%s572 + $0x50] sm:$0xff]
    %v584 = vld [vmem:[%s572 + $0x58] sm:$0xff]
    %v585 = vld [vmem:[%s572 + $0x60] sm:$0xff]
    %v586 = vld [vmem:[%s572 + $0x68] sm:$0xff]
    %v587 = vld [vmem:[%s572 + $0x70] sm:$0xff]
    %v588 = vld [vmem:[%s572 + $0x78] sm:$0xff]
    %589 = vmatprep.subr.mxu0 0.0
    %590 = vmatpush1.msra.mxu0 %v573
    %591 = vmatprep.subr.mxu0 0.0
    %592 = vmatpush1.msra.mxu0 %v574
    %593 = vmatprep.subr.mxu0 0.0
    %594 = vmatpush1.msra.mxu0 %v575
    %595 = vmatprep.subr.mxu0 0.0
    %596 = vmatpush1.msra.mxu0 %v576
    %597 = vmatprep.subr.mxu0 0.0
    %598 = vmatpush1.msra.mxu0 %v577
    %599 = vmatprep.subr.mxu0 0.0
    %600 = vmatpush1.msra.mxu0 %v578
    %601 = vmatprep.subr.mxu0 0.0
    %602 = vmatpush1.msra.mxu0 %v579
    %603 = vmatprep.subr.mxu0 0.0
    %604 = vmatpush1.msra.mxu0 %v580
    %605 = vmatprep.subr.mxu0 0.0
    %606 = vmatpush1.msra.mxu0 %v581
    %607 = vmatprep.subr.mxu0 0.0
    %608 = vmatpush1.msra.mxu0 %v582
    %609 = vmatprep.subr.mxu0 0.0
    %610 = vmatpush1.msra.mxu0 %v583
    %611 = vmatprep.subr.mxu0 0.0
    %612 = vmatpush1.msra.mxu0 %v584
    %613 = vmatprep.subr.mxu0 0.0
    %614 = vmatpush1.msra.mxu0 %v585
    %615 = vmatprep.subr.mxu0 0.0
    %616 = vmatpush1.msra.mxu0 %v586
    %617 = vmatprep.subr.mxu0 0.0
    %618 = vmatpush1.msra.mxu0 %v587
    %619 = vmatprep.subr.mxu0 0.0
    %620 = vmatpush1.msra.mxu0 %v588
    %621 = vmatprep.subr.mxu0 0.0
    %622 = vmatpush1.msra.mxu0 0.0
    %623 = vmatprep.subr.mxu0 0.0
    %624 = vmatpush1.msra.mxu0 0.0
    %625 = vmatprep.subr.mxu0 0.0
    %626 = vmatpush1.msra.mxu0 0.0
    %627 = vmatprep.subr.mxu0 0.0
    %628 = vmatpush1.msra.mxu0 0.0
    %629 = vmatprep.subr.mxu0 0.0
    %630 = vmatpush1.msra.mxu0 0.0
    %631 = vmatprep.subr.mxu0 0.0
    %632 = vmatpush1.msra.mxu0 0.0
    %633 = vmatprep.subr.mxu0 0.0
    %634 = vmatpush1.msra.mxu0 0.0
    %635 = vmatprep.subr.mxu0 0.0
    %636 = vmatpush1.msra.mxu0 0.0
    %637 = vmatprep.subr.mxu0 0.0
    %638 = vmatpush1.msra.mxu0 0.0
    %639 = vmatprep.subr.mxu0 0.0
    %640 = vmatpush1.msra.mxu0 0.0
    %641 = vmatprep.subr.mxu0 0.0
    %642 = vmatpush1.msra.mxu0 0.0
    %643 = vmatprep.subr.mxu0 0.0
    %644 = vmatpush1.msra.mxu0 0.0
    %645 = vmatprep.subr.mxu0 0.0
    %646 = vmatpush1.msra.mxu0 0.0
    %647 = vmatprep.subr.mxu0 0.0
    %648 = vmatpush1.msra.mxu0 0.0
    %649 = vmatprep.subr.mxu0 0.0
    %650 = vmatpush1.msra.mxu0 0.0
    %651 = vmatprep.subr.mxu0 0.0
    %652 = vmatpush1.msra.mxu0 0.0
    %653 = vmatprep.mubr.f32.mxu0 0.0
    %654 = vmatmul.mubr.f32.gmra.mrb[0].mxu0 %v224
    %v655 = vpop.f32.mrb[0].mxu0
    %v656 = vadd.f32 0.0, %v655
    %v657 = vpop.f32.mrb[0].mxu0
    %658 = vdwg.mxu0
    %s659 = scalar_lea.vmem %s3, 640
    %v660 = vld [vmem:[%s659] sm:$0xff]
    %v661 = vld [vmem:[%s659 + $0x8] sm:$0xff]
    %v662 = vld [vmem:[%s659 + $0x10] sm:$0xff]
    %v663 = vld [vmem:[%s659 + $0x18] sm:$0xff]
    %v664 = vld [vmem:[%s659 + $0x20] sm:$0xff]
    %v665 = vld [vmem:[%s659 + $0x28] sm:$0xff]
    %v666 = vld [vmem:[%s659 + $0x30] sm:$0xff]
    %v667 = vld [vmem:[%s659 + $0x38] sm:$0xff]
    %v668 = vld [vmem:[%s659 + $0x40] sm:$0xff]
    %v669 = vld [vmem:[%s659 + $0x48] sm:$0xff]
    %v670 = vld [vmem:[%s659 + $0x50] sm:$0xff]
    %v671 = vld [vmem:[%s659 + $0x58] sm:$0xff]
    %v672 = vld [vmem:[%s659 + $0x60] sm:$0xff]
    %v673 = vld [vmem:[%s659 + $0x68] sm:$0xff]
    %v674 = vld [vmem:[%s659 + $0x70] sm:$0xff]
    %v675 = vld [vmem:[%s659 + $0x78] sm:$0xff]
    %676 = vmatprep.subr.mxu0 0.0
    %677 = vmatpush1.msra.mxu0 %v660
    %678 = vmatprep.subr.mxu0 0.0
    %679 = vmatpush1.msra.mxu0 %v661
    %680 = vmatprep.subr.mxu0 0.0
    %681 = vmatpush1.msra.mxu0 %v662
    %682 = vmatprep.subr.mxu0 0.0
    %683 = vmatpush1.msra.mxu0 %v663
    %684 = vmatprep.subr.mxu0 0.0
    %685 = vmatpush1.msra.mxu0 %v664
    %686 = vmatprep.subr.mxu0 0.0
    %687 = vmatpush1.msra.mxu0 %v665
    %688 = vmatprep.subr.mxu0 0.0
    %689 = vmatpush1.msra.mxu0 %v666
    %690 = vmatprep.subr.mxu0 0.0
    %691 = vmatpush1.msra.mxu0 %v667
    %692 = vmatprep.subr.mxu0 0.0
    %693 = vmatpush1.msra.mxu0 %v668
    %694 = vmatprep.subr.mxu0 0.0
    %695 = vmatpush1.msra.mxu0 %v669
    %696 = vmatprep.subr.mxu0 0.0
    %697 = vmatpush1.msra.mxu0 %v670
    %698 = vmatprep.subr.mxu0 0.0
    %699 = vmatpush1.msra.mxu0 %v671
    %700 = vmatprep.subr.mxu0 0.0
    %701 = vmatpush1.msra.mxu0 %v672
    %702 = vmatprep.subr.mxu0 0.0
    %703 = vmatpush1.msra.mxu0 %v673
    %704 = vmatprep.subr.mxu0 0.0
    %705 = vmatpush1.msra.mxu0 %v674
    %706 = vmatprep.subr.mxu0 0.0
    %707 = vmatpush1.msra.mxu0 %v675
    %708 = vmatprep.subr.mxu0 0.0
    %709 = vmatpush1.msra.mxu0 0.0
    %710 = vmatprep.subr.mxu0 0.0
    %711 = vmatpush1.msra.mxu0 0.0
    %712 = vmatprep.subr.mxu0 0.0
    %713 = vmatpush1.msra.mxu0 0.0
    %714 = vmatprep.subr.mxu0 0.0
    %715 = vmatpush1.msra.mxu0 0.0
    %716 = vmatprep.subr.mxu0 0.0
    %717 = vmatpush1.msra.mxu0 0.0
    %718 = vmatprep.subr.mxu0 0.0
    %719 = vmatpush1.msra.mxu0 0.0
    %720 = vmatprep.subr.mxu0 0.0
    %721 = vmatpush1.msra.mxu0 0.0
    %722 = vmatprep.subr.mxu0 0.0
    %723 = vmatpush1.msra.mxu0 0.0
    %724 = vmatprep.subr.mxu0 0.0
    %725 = vmatpush1.msra.mxu0 0.0
    %726 = vmatprep.subr.mxu0 0.0
    %727 = vmatpush1.msra.mxu0 0.0
    %728 = vmatprep.subr.mxu0 0.0
    %729 = vmatpush1.msra.mxu0 0.0
    %730 = vmatprep.subr.mxu0 0.0
    %731 = vmatpush1.msra.mxu0 0.0
    %732 = vmatprep.subr.mxu0 0.0
    %733 = vmatpush1.msra.mxu0 0.0
    %734 = vmatprep.subr.mxu0 0.0
    %735 = vmatpush1.msra.mxu0 0.0
    %736 = vmatprep.subr.mxu0 0.0
    %737 = vmatpush1.msra.mxu0 0.0
    %738 = vmatprep.subr.mxu0 0.0
    %739 = vmatpush1.msra.mxu0 0.0
    %740 = vmatprep.mubr.f32.mxu0 0.0
    %741 = vmatmul.mubr.f32.gmra.mrb[0].mxu0 %v224
    %v742 = vpop.f32.mrb[0].mxu0
    %v743 = vadd.f32 0.0, %v742
    %v744 = vpop.f32.mrb[0].mxu0
    %745 = vdwg.mxu0
    %s746 = scalar_lea.vmem %s3, 768
    %v747 = vld [vmem:[%s746] sm:$0xff]
    %v748 = vld [vmem:[%s746 + $0x8] sm:$0xff]
    %v749 = vld [vmem:[%s746 + $0x10] sm:$0xff]
    %v750 = vld [vmem:[%s746 + $0x18] sm:$0xff]
    %v751 = vld [vmem:[%s746 + $0x20] sm:$0xff]
    %v752 = vld [vmem:[%s746 + $0x28] sm:$0xff]
    %v753 = vld [vmem:[%s746 + $0x30] sm:$0xff]
    %v754 = vld [vmem:[%s746 + $0x38] sm:$0xff]
    %v755 = vld [vmem:[%s746 + $0x40] sm:$0xff]
    %v756 = vld [vmem:[%s746 + $0x48] sm:$0xff]
    %v757 = vld [vmem:[%s746 + $0x50] sm:$0xff]
    %v758 = vld [vmem:[%s746 + $0x58] sm:$0xff]
    %v759 = vld [vmem:[%s746 + $0x60] sm:$0xff]
    %v760 = vld [vmem:[%s746 + $0x68] sm:$0xff]
    %v761 = vld [vmem:[%s746 + $0x70] sm:$0xff]
    %v762 = vld [vmem:[%s746 + $0x78] sm:$0xff]
    %763 = vmatprep.subr.mxu0 0.0
    %764 = vmatpush1.msra.mxu0 %v747
    %765 = vmatprep.subr.mxu0 0.0
    %766 = vmatpush1.msra.mxu0 %v748
    %767 = vmatprep.subr.mxu0 0.0
    %768 = vmatpush1.msra.mxu0 %v749
    %769 = vmatprep.subr.mxu0 0.0
    %770 = vmatpush1.msra.mxu0 %v750
    %771 = vmatprep.subr.mxu0 0.0
    %772 = vmatpush1.msra.mxu0 %v751
    %773 = vmatprep.subr.mxu0 0.0
    %774 = vmatpush1.msra.mxu0 %v752
    %775 = vmatprep.subr.mxu0 0.0
    %776 = vmatpush1.msra.mxu0 %v753
    %777 = vmatprep.subr.mxu0 0.0
    %778 = vmatpush1.msra.mxu0 %v754
    %779 = vmatprep.subr.mxu0 0.0
    %780 = vmatpush1.msra.mxu0 %v755
    %781 = vmatprep.subr.mxu0 0.0
    %782 = vmatpush1.msra.mxu0 %v756
    %783 = vmatprep.subr.mxu0 0.0
    %784 = vmatpush1.msra.mxu0 %v757
    %785 = vmatprep.subr.mxu0 0.0
    %786 = vmatpush1.msra.mxu0 %v758
    %787 = vmatprep.subr.mxu0 0.0
    %788 = vmatpush1.msra.mxu0 %v759
    %789 = vmatprep.subr.mxu0 0.0
    %790 = vmatpush1.msra.mxu0 %v760
    %791 = vmatprep.subr.mxu0 0.0
    %792 = vmatpush1.msra.mxu0 %v761
    %793 = vmatprep.subr.mxu0 0.0
    %794 = vmatpush1.msra.mxu0 %v762
    %795 = vmatprep.subr.mxu0 0.0
    %796 = vmatpush1.msra.mxu0 0.0
    %797 = vmatprep.subr.mxu0 0.0
    %798 = vmatpush1.msra.mxu0 0.0
    %799 = vmatprep.subr.mxu0 0.0
    %800 = vmatpush1.msra.mxu0 0.0
    %801 = vmatprep.subr.mxu0 0.0
    %802 = vmatpush1.msra.mxu0 0.0
    %803 = vmatprep.subr.mxu0 0.0
    %804 = vmatpush1.msra.mxu0 0.0
    %805 = vmatprep.subr.mxu0 0.0
    %806 = vmatpush1.msra.mxu0 0.0
    %807 = vmatprep.subr.mxu0 0.0
    %808 = vmatpush1.msra.mxu0 0.0
    %809 = vmatprep.subr.mxu0 0.0
    %810 = vmatpush1.msra.mxu0 0.0
    %811 = vmatprep.subr.mxu0 0.0
    %812 = vmatpush1.msra.mxu0 0.0
    %813 = vmatprep.subr.mxu0 0.0
    %814 = vmatpush1.msra.mxu0 0.0
    %815 = vmatprep.subr.mxu0 0.0
    %816 = vmatpush1.msra.mxu0 0.0
    %817 = vmatprep.subr.mxu0 0.0
    %818 = vmatpush1.msra.mxu0 0.0
    %819 = vmatprep.subr.mxu0 0.0
    %820 = vmatpush1.msra.mxu0 0.0
    %821 = vmatprep.subr.mxu0 0.0
    %822 = vmatpush1.msra.mxu0 0.0
    %823 = vmatprep.subr.mxu0 0.0
    %824 = vmatpush1.msra.mxu0 0.0
    %825 = vmatprep.subr.mxu0 0.0
    %826 = vmatpush1.msra.mxu0 0.0
    %827 = vmatprep.mubr.f32.mxu0 0.0
    %828 = vmatmul.mubr.f32.gmra.mrb[0].mxu0 %v224
    %v829 = vpop.f32.mrb[0].mxu0
    %v830 = vadd.f32 0.0, %v829
    %v831 = vpop.f32.mrb[0].mxu0
    %832 = vdwg.mxu0
    %s833 = scalar_lea.vmem %s3, 896
    %v834 = vld [vmem:[%s833] sm:$0xff]
    %v835 = vld [vmem:[%s833 + $0x8] sm:$0xff]
    %v836 = vld [vmem:[%s833 + $0x10] sm:$0xff]
    %v837 = vld [vmem:[%s833 + $0x18] sm:$0xff]
    %v838 = vld [vmem:[%s833 + $0x20] sm:$0xff]
    %v839 = vld [vmem:[%s833 + $0x28] sm:$0xff]
    %v840 = vld [vmem:[%s833 + $0x30] sm:$0xff]
    %v841 = vld [vmem:[%s833 + $0x38] sm:$0xff]
    %v842 = vld [vmem:[%s833 + $0x40] sm:$0xff]
    %v843 = vld [vmem:[%s833 + $0x48] sm:$0xff]
    %v844 = vld [vmem:[%s833 + $0x50] sm:$0xff]
    %v845 = vld [vmem:[%s833 + $0x58] sm:$0xff]
    %v846 = vld [vmem:[%s833 + $0x60] sm:$0xff]
    %v847 = vld [vmem:[%s833 + $0x68] sm:$0xff]
    %v848 = vld [vmem:[%s833 + $0x70] sm:$0xff]
    %v849 = vld [vmem:[%s833 + $0x78] sm:$0xff]
    %850 = vmatprep.subr.mxu0 0.0
    %851 = vmatpush1.msra.mxu0 %v834
    %852 = vmatprep.subr.mxu0 0.0
    %853 = vmatpush1.msra.mxu0 %v835
    %854 = vmatprep.subr.mxu0 0.0
    %855 = vmatpush1.msra.mxu0 %v836
    %856 = vmatprep.subr.mxu0 0.0
    %857 = vmatpush1.msra.mxu0 %v837
    %858 = vmatprep.subr.mxu0 0.0
    %859 = vmatpush1.msra.mxu0 %v838
    %860 = vmatprep.subr.mxu0 0.0
    %861 = vmatpush1.msra.mxu0 %v839
    %862 = vmatprep.subr.mxu0 0.0
    %863 = vmatpush1.msra.mxu0 %v840
    %864 = vmatprep.subr.mxu0 0.0
    %865 = vmatpush1.msra.mxu0 %v841
    %866 = vmatprep.subr.mxu0 0.0
    %867 = vmatpush1.msra.mxu0 %v842
    %868 = vmatprep.subr.mxu0 0.0
    %869 = vmatpush1.msra.mxu0 %v843
    %870 = vmatprep.subr.mxu0 0.0
    %871 = vmatpush1.msra.mxu0 %v844
    %872 = vmatprep.subr.mxu0 0.0
    %873 = vmatpush1.msra.mxu0 %v845
    %874 = vmatprep.subr.mxu0 0.0
    %875 = vmatpush1.msra.mxu0 %v846
    %876 = vmatprep.subr.mxu0 0.0
    %877 = vmatpush1.msra.mxu0 %v847
    %878 = vmatprep.subr.mxu0 0.0
    %879 = vmatpush1.msra.mxu0 %v848
    %880 = vmatprep.subr.mxu0 0.0
    %881 = vmatpush1.msra.mxu0 %v849
    %882 = vmatprep.subr.mxu0 0.0
    %883 = vmatpush1.msra.mxu0 0.0
    %884 = vmatprep.subr.mxu0 0.0
    %885 = vmatpush1.msra.mxu0 0.0
    %886 = vmatprep.subr.mxu0 0.0
    %887 = vmatpush1.msra.mxu0 0.0
    %888 = vmatprep.subr.mxu0 0.0
    %889 = vmatpush1.msra.mxu0 0.0
    %890 = vmatprep.subr.mxu0 0.0
    %891 = vmatpush1.msra.mxu0 0.0
    %892 = vmatprep.subr.mxu0 0.0
    %893 = vmatpush1.msra.mxu0 0.0
    %894 = vmatprep.subr.mxu0 0.0
    %895 = vmatpush1.msra.mxu0 0.0
    %896 = vmatprep.subr.mxu0 0.0
    %897 = vmatpush1.msra.mxu0 0.0
    %898 = vmatprep.subr.mxu0 0.0
    %899 = vmatpush1.msra.mxu0 0.0
    %900 = vmatprep.subr.mxu0 0.0
    %901 = vmatpush1.msra.mxu0 0.0
    %902 = vmatprep.subr.mxu0 0.0
    %903 = vmatpush1.msra.mxu0 0.0
    %904 = vmatprep.subr.mxu0 0.0
    %905 = vmatpush1.msra.mxu0 0.0
    %906 = vmatprep.subr.mxu0 0.0
    %907 = vmatpush1.msra.mxu0 0.0
    %908 = vmatprep.subr.mxu0 0.0
    %909 = vmatpush1.msra.mxu0 0.0
    %910 = vmatprep.subr.mxu0 0.0
    %911 = vmatpush1.msra.mxu0 0.0
    %912 = vmatprep.subr.mxu0 0.0
    %913 = vmatpush1.msra.mxu0 0.0
    %914 = vmatprep.mubr.f32.mxu0 0.0
    %915 = vmatmul.mubr.f32.gmra.mrb[0].mxu0 %v224
    %v916 = vpop.f32.mrb[0].mxu0
    %v917 = vadd.f32 0.0, %v916
    %v918 = vpop.f32.mrb[0].mxu0
    %919 = vdwg.mxu0
    %s920 = scalar_lea.vmem %s3, 1024
    %v921 = vld [vmem:[%s920] sm:$0xff]
    %v922 = vld [vmem:[%s920 + $0x8] sm:$0xff]
    %v923 = vld [vmem:[%s920 + $0x10] sm:$0xff]
    %v924 = vld [vmem:[%s920 + $0x18] sm:$0xff]
    %v925 = vld [vmem:[%s920 + $0x20] sm:$0xff]
    %v926 = vld [vmem:[%s920 + $0x28] sm:$0xff]
    %v927 = vld [vmem:[%s920 + $0x30] sm:$0xff]
    %v928 = vld [vmem:[%s920 + $0x38] sm:$0xff]
    %v929 = vld [vmem:[%s920 + $0x40] sm:$0xff]
    %v930 = vld [vmem:[%s920 + $0x48] sm:$0xff]
    %v931 = vld [vmem:[%s920 + $0x50] sm:$0xff]
    %v932 = vld [vmem:[%s920 + $0x58] sm:$0xff]
    %v933 = vld [vmem:[%s920 + $0x60] sm:$0xff]
    %v934 = vld [vmem:[%s920 + $0x68] sm:$0xff]
    %v935 = vld [vmem:[%s920 + $0x70] sm:$0xff]
    %v936 = vld [vmem:[%s920 + $0x78] sm:$0xff]
    %937 = vmatprep.subr.mxu0 0.0
    %938 = vmatpush1.msra.mxu0 %v921
    %939 = vmatprep.subr.mxu0 0.0
    %940 = vmatpush1.msra.mxu0 %v922
    %941 = vmatprep.subr.mxu0 0.0
    %942 = vmatpush1.msra.mxu0 %v923
    %943 = vmatprep.subr.mxu0 0.0
    %944 = vmatpush1.msra.mxu0 %v924
    %945 = vmatprep.subr.mxu0 0.0
    %946 = vmatpush1.msra.mxu0 %v925
    %947 = vmatprep.subr.mxu0 0.0
    %948 = vmatpush1.msra.mxu0 %v926
    %949 = vmatprep.subr.mxu0 0.0
    %950 = vmatpush1.msra.mxu0 %v927
    %951 = vmatprep.subr.mxu0 0.0
    %952 = vmatpush1.msra.mxu0 %v928
    %953 = vmatprep.subr.mxu0 0.0
    %954 = vmatpush1.msra.mxu0 %v929
    %955 = vmatprep.subr.mxu0 0.0
    %956 = vmatpush1.msra.mxu0 %v930
    %957 = vmatprep.subr.mxu0 0.0
    %958 = vmatpush1.msra.mxu0 %v931
    %959 = vmatprep.subr.mxu0 0.0
    %960 = vmatpush1.msra.mxu0 %v932
    %961 = vmatprep.subr.mxu0 0.0
    %962 = vmatpush1.msra.mxu0 %v933
    %963 = vmatprep.subr.mxu0 0.0
    %964 = vmatpush1.msra.mxu0 %v934
    %965 = vmatprep.subr.mxu0 0.0
    %966 = vmatpush1.msra.mxu0 %v935
    %967 = vmatprep.subr.mxu0 0.0
    %968 = vmatpush1.msra.mxu0 %v936
    %969 = vmatprep.subr.mxu0 0.0
    %970 = vmatpush1.msra.mxu0 0.0
    %971 = vmatprep.subr.mxu0 0.0
    %972 = vmatpush1.msra.mxu0 0.0
    %973 = vmatprep.subr.mxu0 0.0
    %974 = vmatpush1.msra.mxu0 0.0
    %975 = vmatprep.subr.mxu0 0.0
    %976 = vmatpush1.msra.mxu0 0.0
    %977 = vmatprep.subr.mxu0 0.0
    %978 = vmatpush1.msra.mxu0 0.0
    %979 = vmatprep.subr.mxu0 0.0
    %980 = vmatpush1.msra.mxu0 0.0
    %981 = vmatprep.subr.mxu0 0.0
    %982 = vmatpush1.msra.mxu0 0.0
    %983 = vmatprep.subr.mxu0 0.0
    %984 = vmatpush1.msra.mxu0 0.0
    %985 = vmatprep.subr.mxu0 0.0
    %986 = vmatpush1.msra.mxu0 0.0
    %987 = vmatprep.subr.mxu0 0.0
    %988 = vmatpush1.msra.mxu0 0.0
    %989 = vmatprep.subr.mxu0 0.0
    %990 = vmatpush1.msra.mxu0 0.0
    %991 = vmatprep.subr.mxu0 0.0
    %992 = vmatpush1.msra.mxu0 0.0
    %993 = vmatprep.subr.mxu0 0.0
    %994 = vmatpush1.msra.mxu0 0.0
    %995 = vmatprep.subr.mxu0 0.0
    %996 = vmatpush1.msra.mxu0 0.0
    %997 = vmatprep.subr.mxu0 0.0
    %998 = vmatpush1.msra.mxu0 0.0
    %999 = vmatprep.subr.mxu0 0.0
    %1000 = vmatpush1.msra.mxu0 0.0
    %1001 = vmatprep.mubr.f32.mxu0 0.0
    %1002 = vmatmul.mubr.f32.gmra.mrb[0].mxu0 %v224
    %v1003 = vpop.f32.mrb[0].mxu0
    %v1004 = vadd.f32 0.0, %v1003
    %v1005 = vpop.f32.mrb[0].mxu0
    %1006 = vdwg.mxu0
    %s1007 = scalar_lea.vmem %s3, 1152
    %v1008 = vld [vmem:[%s1007] sm:$0xff]
    %v1009 = vld [vmem:[%s1007 + $0x8] sm:$0xff]
    %v1010 = vld [vmem:[%s1007 + $0x10] sm:$0xff]
    %v1011 = vld [vmem:[%s1007 + $0x18] sm:$0xff]
    %v1012 = vld [vmem:[%s1007 + $0x20] sm:$0xff]
    %v1013 = vld [vmem:[%s1007 + $0x28] sm:$0xff]
    %v1014 = vld [vmem:[%s1007 + $0x30] sm:$0xff]
    %v1015 = vld [vmem:[%s1007 + $0x38] sm:$0xff]
    %v1016 = vld [vmem:[%s1007 + $0x40] sm:$0xff]
    %v1017 = vld [vmem:[%s1007 + $0x48] sm:$0xff]
    %v1018 = vld [vmem:[%s1007 + $0x50] sm:$0xff]
    %v1019 = vld [vmem:[%s1007 + $0x58] sm:$0xff]
    %v1020 = vld [vmem:[%s1007 + $0x60] sm:$0xff]
    %v1021 = vld [vmem:[%s1007 + $0x68] sm:$0xff]
    %v1022 = vld [vmem:[%s1007 + $0x70] sm:$0xff]
    %v1023 = vld [vmem:[%s1007 + $0x78] sm:$0xff]
    %1024 = vmatprep.subr.mxu0 0.0
    %1025 = vmatpush1.msra.mxu0 %v1008
    %1026 = vmatprep.subr.mxu0 0.0
    %1027 = vmatpush1.msra.mxu0 %v1009
    %1028 = vmatprep.subr.mxu0 0.0
    %1029 = vmatpush1.msra.mxu0 %v1010
    %1030 = vmatprep.subr.mxu0 0.0
    %1031 = vmatpush1.msra.mxu0 %v1011
    %1032 = vmatprep.subr.mxu0 0.0
    %1033 = vmatpush1.msra.mxu0 %v1012
    %1034 = vmatprep.subr.mxu0 0.0
    %1035 = vmatpush1.msra.mxu0 %v1013
    %1036 = vmatprep.subr.mxu0 0.0
    %1037 = vmatpush1.msra.mxu0 %v1014
    %1038 = vmatprep.subr.mxu0 0.0
    %1039 = vmatpush1.msra.mxu0 %v1015
    %1040 = vmatprep.subr.mxu0 0.0
    %1041 = vmatpush1.msra.mxu0 %v1016
    %1042 = vmatprep.subr.mxu0 0.0
    %1043 = vmatpush1.msra.mxu0 %v1017
    %1044 = vmatprep.subr.mxu0 0.0
    %1045 = vmatpush1.msra.mxu0 %v1018
    %1046 = vmatprep.subr.mxu0 0.0
    %1047 = vmatpush1.msra.mxu0 %v1019
    %1048 = vmatprep.subr.mxu0 0.0
    %1049 = vmatpush1.msra.mxu0 %v1020
    %1050 = vmatprep.subr.mxu0 0.0
    %1051 = vmatpush1.msra.mxu0 %v1021
    %1052 = vmatprep.subr.mxu0 0.0
    %1053 = vmatpush1.msra.mxu0 %v1022
    %1054 = vmatprep.subr.mxu0 0.0
    %1055 = vmatpush1.msra.mxu0 %v1023
    %1056 = vmatprep.subr.mxu0 0.0
    %1057 = vmatpush1.msra.mxu0 0.0
    %1058 = vmatprep.subr.mxu0 0.0
    %1059 = vmatpush1.msra.mxu0 0.0
    %1060 = vmatprep.subr.mxu0 0.0
    %1061 = vmatpush1.msra.mxu0 0.0
    %1062 = vmatprep.subr.mxu0 0.0
    %1063 = vmatpush1.msra.mxu0 0.0
    %1064 = vmatprep.subr.mxu0 0.0
    %1065 = vmatpush1.msra.mxu0 0.0
    %1066 = vmatprep.subr.mxu0 0.0
    %1067 = vmatpush1.msra.mxu0 0.0
    %1068 = vmatprep.subr.mxu0 0.0
    %1069 = vmatpush1.msra.mxu0 0.0
    %1070 = vmatprep.subr.mxu0 0.0
    %1071 = vmatpush1.msra.mxu0 0.0
    %1072 = vmatprep.subr.mxu0 0.0
    %1073 = vmatpush1.msra.mxu0 0.0
    %1074 = vmatprep.subr.mxu0 0.0
    %1075 = vmatpush1.msra.mxu0 0.0
    %1076 = vmatprep.subr.mxu0 0.0
    %1077 = vmatpush1.msra.mxu0 0.0
    %1078 = vmatprep.subr.mxu0 0.0
    %1079 = vmatpush1.msra.mxu0 0.0
    %1080 = vmatprep.subr.mxu0 0.0
    %1081 = vmatpush1.msra.mxu0 0.0
    %1082 = vmatprep.subr.mxu0 0.0
    %1083 = vmatpush1.msra.mxu0 0.0
    %1084 = vmatprep.subr.mxu0 0.0
    %1085 = vmatpush1.msra.mxu0 0.0
    %1086 = vmatprep.subr.mxu0 0.0
    %1087 = vmatpush1.msra.mxu0 0.0
    %1088 = vmatprep.mubr.f32.mxu0 0.0
    %1089 = vmatmul.mubr.f32.gmra.mrb[0].mxu0 %v224
    %v1090 = vpop.f32.mrb[0].mxu0
    %v1091 = vadd.f32 0.0, %v1090
    %v1092 = vpop.f32.mrb[0].mxu0
    %1093 = vdwg.mxu0
    %s1094 = scalar_lea.vmem %s3, 1280
    %v1095 = vld [vmem:[%s1094] sm:$0xff]
    %v1096 = vld [vmem:[%s1094 + $0x8] sm:$0xff]
    %v1097 = vld [vmem:[%s1094 + $0x10] sm:$0xff]
    %v1098 = vld [vmem:[%s1094 + $0x18] sm:$0xff]
    %v1099 = vld [vmem:[%s1094 + $0x20] sm:$0xff]
    %v1100 = vld [vmem:[%s1094 + $0x28] sm:$0xff]
    %v1101 = vld [vmem:[%s1094 + $0x30] sm:$0xff]
    %v1102 = vld [vmem:[%s1094 + $0x38] sm:$0xff]
    %v1103 = vld [vmem:[%s1094 + $0x40] sm:$0xff]
    %v1104 = vld [vmem:[%s1094 + $0x48] sm:$0xff]
    %v1105 = vld [vmem:[%s1094 + $0x50] sm:$0xff]
    %v1106 = vld [vmem:[%s1094 + $0x58] sm:$0xff]
    %v1107 = vld [vmem:[%s1094 + $0x60] sm:$0xff]
    %v1108 = vld [vmem:[%s1094 + $0x68] sm:$0xff]
    %v1109 = vld [vmem:[%s1094 + $0x70] sm:$0xff]
    %v1110 = vld [vmem:[%s1094 + $0x78] sm:$0xff]
    %1111 = vmatprep.subr.mxu0 0.0
    %1112 = vmatpush1.msra.mxu0 %v1095
    %1113 = vmatprep.subr.mxu0 0.0
    %1114 = vmatpush1.msra.mxu0 %v1096
    %1115 = vmatprep.subr.mxu0 0.0
    %1116 = vmatpush1.msra.mxu0 %v1097
    %1117 = vmatprep.subr.mxu0 0.0
    %1118 = vmatpush1.msra.mxu0 %v1098
    %1119 = vmatprep.subr.mxu0 0.0
    %1120 = vmatpush1.msra.mxu0 %v1099
    %1121 = vmatprep.subr.mxu0 0.0
    %1122 = vmatpush1.msra.mxu0 %v1100
    %1123 = vmatprep.subr.mxu0 0.0
    %1124 = vmatpush1.msra.mxu0 %v1101
    %1125 = vmatprep.subr.mxu0 0.0
    %1126 = vmatpush1.msra.mxu0 %v1102
    %1127 = vmatprep.subr.mxu0 0.0
    %1128 = vmatpush1.msra.mxu0 %v1103
    %1129 = vmatprep.subr.mxu0 0.0
    %1130 = vmatpush1.msra.mxu0 %v1104
    %1131 = vmatprep.subr.mxu0 0.0
    %1132 = vmatpush1.msra.mxu0 %v1105
    %1133 = vmatprep.subr.mxu0 0.0
    %1134 = vmatpush1.msra.mxu0 %v1106
    %1135 = vmatprep.subr.mxu0 0.0
    %1136 = vmatpush1.msra.mxu0 %v1107
    %1137 = vmatprep.subr.mxu0 0.0
    %1138 = vmatpush1.msra.mxu0 %v1108
    %1139 = vmatprep.subr.mxu0 0.0
    %1140 = vmatpush1.msra.mxu0 %v1109
    %1141 = vmatprep.subr.mxu0 0.0
    %1142 = vmatpush1.msra.mxu0 %v1110
    %1143 = vmatprep.subr.mxu0 0.0
    %1144 = vmatpush1.msra.mxu0 0.0
    %1145 = vmatprep.subr.mxu0 0.0
    %1146 = vmatpush1.msra.mxu0 0.0
    %1147 = vmatprep.subr.mxu0 0.0
    %1148 = vmatpush1.msra.mxu0 0.0
    %1149 = vmatprep.subr.mxu0 0.0
    %1150 = vmatpush1.msra.mxu0 0.0
    %1151 = vmatprep.subr.mxu0 0.0
    %1152 = vmatpush1.msra.mxu0 0.0
    %1153 = vmatprep.subr.mxu0 0.0
    %1154 = vmatpush1.msra.mxu0 0.0
    %1155 = vmatprep.subr.mxu0 0.0
    %1156 = vmatpush1.msra.mxu0 0.0
    %1157 = vmatprep.subr.mxu0 0.0
    %1158 = vmatpush1.msra.mxu0 0.0
    %1159 = vmatprep.subr.mxu0 0.0
    %1160 = vmatpush1.msra.mxu0 0.0
    %1161 = vmatprep.subr.mxu0 0.0
    %1162 = vmatpush1.msra.mxu0 0.0
    %1163 = vmatprep.subr.mxu0 0.0
    %1164 = vmatpush1.msra.mxu0 0.0
    %1165 = vmatprep.subr.mxu0 0.0
    %1166 = vmatpush1.msra.mxu0 0.0
    %1167 = vmatprep.subr.mxu0 0.0
    %1168 = vmatpush1.msra.mxu0 0.0
    %1169 = vmatprep.subr.mxu0 0.0
    %1170 = vmatpush1.msra.mxu0 0.0
    %1171 = vmatprep.subr.mxu0 0.0
    %1172 = vmatpush1.msra.mxu0 0.0
    %1173 = vmatprep.subr.mxu0 0.0
    %1174 = vmatpush1.msra.mxu0 0.0
    %1175 = vmatprep.mubr.f32.mxu0 0.0
    %1176 = vmatmul.mubr.f32.gmra.mrb[0].mxu0 %v224
    %v1177 = vpop.f32.mrb[0].mxu0
    %v1178 = vadd.f32 0.0, %v1177
    %v1179 = vpop.f32.mrb[0].mxu0
    %1180 = vdwg.mxu0
    %v1182 = vrot.slane %v395, 7
    %v1185 = vrot.slane %v482, 6
    %v1188 = vrot.slane %v569, 5
    %v1191 = vrot.slane %v656, 4
    %v1194 = vrot.slane %v743, 3
    %v1197 = vrot.slane %v830, 2
    %v1200 = vrot.slane %v917, 1
    %v1203 = vrot.slane %v1091, 7
    %v1206 = vrot.slane %v1178, 6
    %vm1208 = vcmask 1040384
    %v1209 = vsel %vm1208, %v308, %v1182
    %vm1210 = vcmask 1041408
    %v1211 = vsel %vm1210, %v1209, %v1185
    %vm1212 = vcmask 1042432
    %v1213 = vsel %vm1212, %v1211, %v1188
    %vm1214 = vcmask 1043456
    %v1215 = vsel %vm1214, %v1213, %v1191
    %vm1216 = vcmask 1044480
    %v1217 = vsel %vm1216, %v1215, %v1194
    %vm1218 = vcmask 1045504
    %v1219 = vsel %vm1218, %v1217, %v1197
    %vm1220 = vcmask 1046528
    %v1221 = vsel %vm1220, %v1219, %v1200
    %v1222 = vsel %vm1208, %v1004, %v1203
    %v1223 = vsel %vm1210, %v1222, %v1206
    %v1224 = vld [vmem:[%s23] sm:$0xf]
    %vm1225 = vcmask 89088
    %v1227 = vsel %vm1225, %v1224, 0
    %v1230 = vsel %vm1212, %v1223, 0
    %1232 = vmatprep.subr.mxu0 0.0
    %1233 = vmatpush1.msra.mxu0 %v1221
    %1234 = vmatprep.subr.mxu0 0.0
    %1235 = vmatpush1.msra.mxu0 %v1230
    %1236 = vmatprep.subr.mxu0 0.0
    %1237 = vmatpush1.msra.mxu0 0.0
    %1238 = vmatprep.subr.mxu0 0.0
    %1239 = vmatpush1.msra.mxu0 0.0
    %1240 = vmatprep.subr.mxu0 0.0
    %1241 = vmatpush1.msra.mxu0 0.0
    %1242 = vmatprep.subr.mxu0 0.0
    %1243 = vmatpush1.msra.mxu0 0.0
    %1244 = vmatprep.subr.mxu0 0.0
    %1245 = vmatpush1.msra.mxu0 0.0
    %1246 = vmatprep.subr.mxu0 0.0
    %1247 = vmatpush1.msra.mxu0 0.0
    %1248 = vmatprep.subr.mxu0 0.0
    %1249 = vmatpush1.msra.mxu0 0.0
    %1250 = vmatprep.subr.mxu0 0.0
    %1251 = vmatpush1.msra.mxu0 0.0
    %1252 = vmatprep.subr.mxu0 0.0
    %1253 = vmatpush1.msra.mxu0 0.0
    %1254 = vmatprep.subr.mxu0 0.0
    %1255 = vmatpush1.msra.mxu0 0.0
    %1256 = vmatprep.subr.mxu0 0.0
    %1257 = vmatpush1.msra.mxu0 0.0
    %1258 = vmatprep.subr.mxu0 0.0
    %1259 = vmatpush1.msra.mxu0 0.0
    %1260 = vmatprep.subr.mxu0 0.0
    %1261 = vmatpush1.msra.mxu0 0.0
    %1262 = vmatprep.subr.mxu0 0.0
    %1263 = vmatpush1.msra.mxu0 0.0
    %1264 = vmatprep.subr.mxu0 0.0
    %1265 = vmatpush1.msra.mxu0 0.0
    %1266 = vmatprep.subr.mxu0 0.0
    %1267 = vmatpush1.msra.mxu0 0.0
    %1268 = vmatprep.subr.mxu0 0.0
    %1269 = vmatpush1.msra.mxu0 0.0
    %1270 = vmatprep.subr.mxu0 0.0
    %1271 = vmatpush1.msra.mxu0 0.0
    %1272 = vmatprep.subr.mxu0 0.0
    %1273 = vmatpush1.msra.mxu0 0.0
    %1274 = vmatprep.subr.mxu0 0.0
    %1275 = vmatpush1.msra.mxu0 0.0
    %1276 = vmatprep.subr.mxu0 0.0
    %1277 = vmatpush1.msra.mxu0 0.0
    %1278 = vmatprep.subr.mxu0 0.0
    %1279 = vmatpush1.msra.mxu0 0.0
    %1280 = vmatprep.subr.mxu0 0.0
    %1281 = vmatpush1.msra.mxu0 0.0
    %1282 = vmatprep.subr.mxu0 0.0
    %1283 = vmatpush1.msra.mxu0 0.0
    %1284 = vmatprep.subr.mxu0 0.0
    %1285 = vmatpush1.msra.mxu0 0.0
    %1286 = vmatprep.subr.mxu0 0.0
    %1287 = vmatpush1.msra.mxu0 0.0
    %1288 = vmatprep.subr.mxu0 0.0
    %1289 = vmatpush1.msra.mxu0 0.0
    %1290 = vmatprep.subr.mxu0 0.0
    %1291 = vmatpush1.msra.mxu0 0.0
    %1292 = vmatprep.subr.mxu0 0.0
    %1293 = vmatpush1.msra.mxu0 0.0
    %1294 = vmatprep.subr.mxu0 0.0
    %1295 = vmatpush1.msra.mxu0 0.0
    %1296 = vmatprep.mubr.f32.mxu0 0.0
    %1297 = vmatmul.mubr.f32.gmra.mrb[0].mxu0 %v1227
    %v1298 = vpop.f32.mrb[0].mxu0
    %v1299 = vadd.f32 0.0, %v1298
    %v1300 = vpop.f32.mrb[0].mxu0
    %1301 = vdwg.mxu0
    %v1302 = vsel %vm1214, %v1299, 0.0
    %1303 = vadd.xlane.f32.xlu0 %v1302
    %v1304 = vpop.xlane.xlu0 %1303
    %v1305 = vrcp.pop 128.0
    %v1306 = vmul.f32 %v1304, %v1305
    %v1307 = vmul.f32 %v1299, %v1299
    %v1308 = vsel %vm1214, %v1307, 0.0
    %1309 = vadd.xlane.f32.xlu0 %v1308
    %v1310 = vpop.xlane.xlu0 %1309
    %v1311 = vmul.f32 %v1310, %v1305
    %v1312 = vmul.f32 %v1306, %v1306
    %v1313 = vsub.f32 %v1311, %v1312
    %v1314 = vsub.f32 %v1299, %v1306
    %v1315 = vadd.f32 %v1313, 1e-05
    %v1316 = vrsqrt.pop %v1315
    %v1317 = vmul.f32 %v1314, %v1316
    %v1318 = vld [vmem:[%s25] sm:$0xf]
    %1320 = vset.pattern.permute.xlu0 0
    %1321 = vperm.xlu0 %1320, %v1318
    %v1322 = vpop.permute.xlu0 %1321
    %v1324 = vmul.f32 %v1317, %v1322
    %v1325 = vld [vmem:[%s27] sm:$0xf]
    %1327 = vset.pattern.permute.xlu0 0
    %1328 = vperm.xlu0 %1327, %v1325
    %v1329 = vpop.permute.xlu0 %1328
    %v1331 = vadd.f32 %v1324, %v1329
    %vm1332 = vcmp.ge.f32.partialorder %v1331, 0.0
    %v1333 = vmul.f32 %v1331, 0.1
    %v1334 = vsel %vm1332, %v1331, %v1333
    %v1335 = vld [vmem:[%s11] sm:$0xff]
    %v1336 = vld [vmem:[%s11 + $0x8] sm:$0xff]
    %v1337 = vld [vmem:[%s11 + $0x10] sm:$0xff]
    %v1338 = vld [vmem:[%s11 + $0x18] sm:$0xff]
    %v1339 = vld [vmem:[%s11 + $0x20] sm:$0xff]
    %v1340 = vld [vmem:[%s11 + $0x28] sm:$0xff]
    %v1341 = vld [vmem:[%s11 + $0x30] sm:$0xff]
    %v1342 = vld [vmem:[%s11 + $0x38] sm:$0xff]
    %v1343 = vld [vmem:[%s11 + $0x40] sm:$0xff]
    %v1344 = vld [vmem:[%s11 + $0x48] sm:$0xff]
    %v1345 = vld [vmem:[%s11 + $0x50] sm:$0xff]
    %v1346 = vld [vmem:[%s11 + $0x58] sm:$0xff]
    %v1347 = vld [vmem:[%s11 + $0x60] sm:$0xff]
    %v1348 = vld [vmem:[%s11 + $0x68] sm:$0xff]
    %v1349 = vld [vmem:[%s11 + $0x70] sm:$0xff]
    %v1350 = vld [vmem:[%s11 + $0x78] sm:$0xff]
    %1351 = vmatprep.subr.mxu0 0.0
    %1352 = vmatpush1.msra.mxu0 %v1335
    %1353 = vmatprep.subr.mxu0 0.0
    %1354 = vmatpush1.msra.mxu0 %v1336
    %1355 = vmatprep.subr.mxu0 0.0
    %1356 = vmatpush1.msra.mxu0 %v1337
    %1357 = vmatprep.subr.mxu0 0.0
    %1358 = vmatpush1.msra.mxu0 %v1338
    %1359 = vmatprep.subr.mxu0 0.0
    %1360 = vmatpush1.msra.mxu0 %v1339
    %1361 = vmatprep.subr.mxu0 0.0
    %1362 = vmatpush1.msra.mxu0 %v1340
    %1363 = vmatprep.subr.mxu0 0.0
    %1364 = vmatpush1.msra.mxu0 %v1341
    %1365 = vmatprep.subr.mxu0 0.0
    %1366 = vmatpush1.msra.mxu0 %v1342
    %1367 = vmatprep.subr.mxu0 0.0
    %1368 = vmatpush1.msra.mxu0 %v1343
    %1369 = vmatprep.subr.mxu0 0.0
    %1370 = vmatpush1.msra.mxu0 %v1344
    %1371 = vmatprep.subr.mxu0 0.0
    %1372 = vmatpush1.msra.mxu0 %v1345
    %1373 = vmatprep.subr.mxu0 0.0
    %1374 = vmatpush1.msra.mxu0 %v1346
    %1375 = vmatprep.subr.mxu0 0.0
    %1376 = vmatpush1.msra.mxu0 %v1347
    %1377 = vmatprep.subr.mxu0 0.0
    %1378 = vmatpush1.msra.mxu0 %v1348
    %1379 = vmatprep.subr.mxu0 0.0
    %1380 = vmatpush1.msra.mxu0 %v1349
    %1381 = vmatprep.subr.mxu0 0.0
    %1382 = vmatpush1.msra.mxu0 %v1350
    %1383 = vmatprep.subr.mxu0 0.0
    %1384 = vmatpush1.msra.mxu0 0.0
    %1385 = vmatprep.subr.mxu0 0.0
    %1386 = vmatpush1.msra.mxu0 0.0
    %1387 = vmatprep.subr.mxu0 0.0
    %1388 = vmatpush1.msra.mxu0 0.0
    %1389 = vmatprep.subr.mxu0 0.0
    %1390 = vmatpush1.msra.mxu0 0.0
    %1391 = vmatprep.subr.mxu0 0.0
    %1392 = vmatpush1.msra.mxu0 0.0
    %1393 = vmatprep.subr.mxu0 0.0
    %1394 = vmatpush1.msra.mxu0 0.0
    %1395 = vmatprep.subr.mxu0 0.0
    %1396 = vmatpush1.msra.mxu0 0.0
    %1397 = vmatprep.subr.mxu0 0.0
    %1398 = vmatpush1.msra.mxu0 0.0
    %1399 = vmatprep.subr.mxu0 0.0
    %1400 = vmatpush1.msra.mxu0 0.0
    %1401 = vmatprep.subr.mxu0 0.0
    %1402 = vmatpush1.msra.mxu0 0.0
    %1403 = vmatprep.subr.mxu0 0.0
    %1404 = vmatpush1.msra.mxu0 0.0
    %1405 = vmatprep.subr.mxu0 0.0
    %1406 = vmatpush1.msra.mxu0 0.0
    %1407 = vmatprep.subr.mxu0 0.0
    %1408 = vmatpush1.msra.mxu0 0.0
    %1409 = vmatprep.subr.mxu0 0.0
    %1410 = vmatpush1.msra.mxu0 0.0
    %1411 = vmatprep.subr.mxu0 0.0
    %1412 = vmatpush1.msra.mxu0 0.0
    %1413 = vmatprep.subr.mxu0 0.0
    %1414 = vmatpush1.msra.mxu0 0.0
    %1415 = vmatprep.mubr.f32.mxu0 0.0
    %1416 = vmatmul.mubr.f32.gmra.mrb[0].mxu0 %v1334
    %v1417 = vpop.f32.mrb[0].mxu0
    %v1418 = vadd.f32 0.0, %v1417
    %v1419 = vpop.f32.mrb[0].mxu0
    %1420 = vdwg.mxu0
    %v1421 = vld [vmem:[%s5] sm:$0xff]
    %v1422 = vld [vmem:[%s5 + $0x8] sm:$0xff]
    %v1423 = vld [vmem:[%s5 + $0x10] sm:$0xff]
    %v1424 = vld [vmem:[%s5 + $0x18] sm:$0xff]
    %v1425 = vld [vmem:[%s5 + $0x20] sm:$0xff]
    %v1426 = vld [vmem:[%s5 + $0x28] sm:$0xff]
    %v1427 = vld [vmem:[%s5 + $0x30] sm:$0xff]
    %v1428 = vld [vmem:[%s5 + $0x38] sm:$0xff]
    %vm1429 = vcmask 523264
    %v1431 = vsel %vm1429, %v1418, 0
    %1433 = vmatprep.subr.mxu0 0.0
    %1434 = vmatpush1.msra.mxu0 %v1421
    %1435 = vmatprep.subr.mxu0 0.0
    %1436 = vmatpush1.msra.mxu0 %v1422
    %1437 = vmatprep.subr.mxu0 0.0
    %1438 = vmatpush1.msra.mxu0 %v1423
    %1439 = vmatprep.subr.mxu0 0.0
    %1440 = vmatpush1.msra.mxu0 %v1424
    %1441 = vmatprep.subr.mxu0 0.0
    %1442 = vmatpush1.msra.mxu0 %v1425
    %1443 = vmatprep.subr.mxu0 0.0
    %1444 = vmatpush1.msra.mxu0 %v1426
    %1445 = vmatprep.subr.mxu0 0.0
    %1446 = vmatpush1.msra.mxu0 %v1427
    %1447 = vmatprep.subr.mxu0 0.0
    %1448 = vmatpush1.msra.mxu0 %v1428
    %1449 = vmatprep.subr.mxu0 0.0
    %1450 = vmatpush1.msra.mxu0 0.0
    %1451 = vmatprep.subr.mxu0 0.0
    %1452 = vmatpush1.msra.mxu0 0.0
    %1453 = vmatprep.subr.mxu0 0.0
    %1454 = vmatpush1.msra.mxu0 0.0
    %1455 = vmatprep.subr.mxu0 0.0
    %1456 = vmatpush1.msra.mxu0 0.0
    %1457 = vmatprep.subr.mxu0 0.0
    %1458 = vmatpush1.msra.mxu0 0.0
    %1459 = vmatprep.subr.mxu0 0.0
    %1460 = vmatpush1.msra.mxu0 0.0
    %1461 = vmatprep.subr.mxu0 0.0
    %1462 = vmatpush1.msra.mxu0 0.0
    %1463 = vmatprep.subr.mxu0 0.0
    %1464 = vmatpush1.msra.mxu0 0.0
    %1465 = vmatprep.subr.mxu0 0.0
    %1466 = vmatpush1.msra.mxu0 0.0
    %1467 = vmatprep.subr.mxu0 0.0
    %1468 = vmatpush1.msra.mxu0 0.0
    %1469 = vmatprep.subr.mxu0 0.0
    %1470 = vmatpush1.msra.mxu0 0.0
    %1471 = vmatprep.subr.mxu0 0.0
    %1472 = vmatpush1.msra.mxu0 0.0
    %1473 = vmatprep.subr.mxu0 0.0
    %1474 = vmatpush1.msra.mxu0 0.0
    %1475 = vmatprep.subr.mxu0 0.0
    %1476 = vmatpush1.msra.mxu0 0.0
    %1477 = vmatprep.subr.mxu0 0.0
    %1478 = vmatpush1.msra.mxu0 0.0
    %1479 = vmatprep.subr.mxu0 0.0
    %1480 = vmatpush1.msra.mxu0 0.0
    %1481 = vmatprep.subr.mxu0 0.0
    %1482 = vmatpush1.msra.mxu0 0.0
    %1483 = vmatprep.subr.mxu0 0.0
    %1484 = vmatpush1.msra.mxu0 0.0
    %1485 = vmatprep.subr.mxu0 0.0
    %1486 = vmatpush1.msra.mxu0 0.0
    %1487 = vmatprep.subr.mxu0 0.0
    %1488 = vmatpush1.msra.mxu0 0.0
    %1489 = vmatprep.subr.mxu0 0.0
    %1490 = vmatpush1.msra.mxu0 0.0
    %1491 = vmatprep.subr.mxu0 0.0
    %1492 = vmatpush1.msra.mxu0 0.0
    %1493 = vmatprep.subr.mxu0 0.0
    %1494 = vmatpush1.msra.mxu0 0.0
    %1495 = vmatprep.subr.mxu0 0.0
    %1496 = vmatpush1.msra.mxu0 0.0
    %1497 = vmatprep.mubr.f32.mxu0 0.0
    %1498 = vmatmul.mubr.f32.gmra.mrb[0].mxu0 %v1431
    %v1499 = vpop.f32.mrb[0].mxu0
    %v1500 = vadd.f32 0.0, %v1499
    %v1501 = vpop.f32.mrb[0].mxu0
    %1502 = vdwg.mxu0
    %s1503 = scalar_lea.vmem %s5, 64
    %v1504 = vld [vmem:[%s1503] sm:$0xff]
    %v1505 = vld [vmem:[%s1503 + $0x8] sm:$0xff]
    %v1506 = vld [vmem:[%s1503 + $0x10] sm:$0xff]
    %v1507 = vld [vmem:[%s1503 + $0x18] sm:$0xff]
    %v1508 = vld [vmem:[%s1503 + $0x20] sm:$0xff]
    %v1509 = vld [vmem:[%s1503 + $0x28] sm:$0xff]
    %v1510 = vld [vmem:[%s1503 + $0x30] sm:$0xff]
    %v1511 = vld [vmem:[%s1503 + $0x38] sm:$0xff]
    %1512 = vmatprep.subr.mxu0 0.0
    %1513 = vmatpush1.msra.mxu0 %v1504
    %1514 = vmatprep.subr.mxu0 0.0
    %1515 = vmatpush1.msra.mxu0 %v1505
    %1516 = vmatprep.subr.mxu0 0.0
    %1517 = vmatpush1.msra.mxu0 %v1506
    %1518 = vmatprep.subr.mxu0 0.0
    %1519 = vmatpush1.msra.mxu0 %v1507
    %1520 = vmatprep.subr.mxu0 0.0
    %1521 = vmatpush1.msra.mxu0 %v1508
    %1522 = vmatprep.subr.mxu0 0.0
    %1523 = vmatpush1.msra.mxu0 %v1509
    %1524 = vmatprep.subr.mxu0 0.0
    %1525 = vmatpush1.msra.mxu0 %v1510
    %1526 = vmatprep.subr.mxu0 0.0
    %1527 = vmatpush1.msra.mxu0 %v1511
    %1528 = vmatprep.subr.mxu0 0.0
    %1529 = vmatpush1.msra.mxu0 0.0
    %1530 = vmatprep.subr.mxu0 0.0
    %1531 = vmatpush1.msra.mxu0 0.0
    %1532 = vmatprep.subr.mxu0 0.0
    %1533 = vmatpush1.msra.mxu0 0.0
    %1534 = vmatprep.subr.mxu0 0.0
    %1535 = vmatpush1.msra.mxu0 0.0
    %1536 = vmatprep.subr.mxu0 0.0
    %1537 = vmatpush1.msra.mxu0 0.0
    %1538 = vmatprep.subr.mxu0 0.0
    %1539 = vmatpush1.msra.mxu0 0.0
    %1540 = vmatprep.subr.mxu0 0.0
    %1541 = vmatpush1.msra.mxu0 0.0
    %1542 = vmatprep.subr.mxu0 0.0
    %1543 = vmatpush1.msra.mxu0 0.0
    %1544 = vmatprep.subr.mxu0 0.0
    %1545 = vmatpush1.msra.mxu0 0.0
    %1546 = vmatprep.subr.mxu0 0.0
    %1547 = vmatpush1.msra.mxu0 0.0
    %1548 = vmatprep.subr.mxu0 0.0
    %1549 = vmatpush1.msra.mxu0 0.0
    %1550 = vmatprep.subr.mxu0 0.0
    %1551 = vmatpush1.msra.mxu0 0.0
    %1552 = vmatprep.subr.mxu0 0.0
    %1553 = vmatpush1.msra.mxu0 0.0
    %1554 = vmatprep.subr.mxu0 0.0
    %1555 = vmatpush1.msra.mxu0 0.0
    %1556 = vmatprep.subr.mxu0 0.0
    %1557 = vmatpush1.msra.mxu0 0.0
    %1558 = vmatprep.subr.mxu0 0.0
    %1559 = vmatpush1.msra.mxu0 0.0
    %1560 = vmatprep.subr.mxu0 0.0
    %1561 = vmatpush1.msra.mxu0 0.0
    %1562 = vmatprep.subr.mxu0 0.0
    %1563 = vmatpush1.msra.mxu0 0.0
    %1564 = vmatprep.subr.mxu0 0.0
    %1565 = vmatpush1.msra.mxu0 0.0
    %1566 = vmatprep.subr.mxu0 0.0
    %1567 = vmatpush1.msra.mxu0 0.0
    %1568 = vmatprep.subr.mxu0 0.0
    %1569 = vmatpush1.msra.mxu0 0.0
    %1570 = vmatprep.subr.mxu0 0.0
    %1571 = vmatpush1.msra.mxu0 0.0
    %1572 = vmatprep.subr.mxu0 0.0
    %1573 = vmatpush1.msra.mxu0 0.0
    %1574 = vmatprep.subr.mxu0 0.0
    %1575 = vmatpush1.msra.mxu0 0.0
    %1576 = vmatprep.mubr.f32.mxu0 0.0
    %1577 = vmatmul.mubr.f32.gmra.mrb[0].mxu0 %v1431
    %v1578 = vpop.f32.mrb[0].mxu0
    %v1579 = vadd.f32 0.0, %v1578
    %v1580 = vpop.f32.mrb[0].mxu0
    %1581 = vdwg.mxu0
    %s1582 = scalar_lea.vmem %s5, 128
    %v1583 = vld [vmem:[%s1582] sm:$0xff]
    %v1584 = vld [vmem:[%s1582 + $0x8] sm:$0xff]
    %v1585 = vld [vmem:[%s1582 + $0x10] sm:$0xff]
    %v1586 = vld [vmem:[%s1582 + $0x18] sm:$0xff]
    %v1587 = vld [vmem:[%s1582 + $0x20] sm:$0xff]
    %v1588 = vld [vmem:[%s1582 + $0x28] sm:$0xff]
    %v1589 = vld [vmem:[%s1582 + $0x30] sm:$0xff]
    %v1590 = vld [vmem:[%s1582 + $0x38] sm:$0xff]
    %1591 = vmatprep.subr.mxu0 0.0
    %1592 = vmatpush1.msra.mxu0 %v1583
    %1593 = vmatprep.subr.mxu0 0.0
    %1594 = vmatpush1.msra.mxu0 %v1584
    %1595 = vmatprep.subr.mxu0 0.0
    %1596 = vmatpush1.msra.mxu0 %v1585
    %1597 = vmatprep.subr.mxu0 0.0
    %1598 = vmatpush1.msra.mxu0 %v1586
    %1599 = vmatprep.subr.mxu0 0.0
    %1600 = vmatpush1.msra.mxu0 %v1587
    %1601 = vmatprep.subr.mxu0 0.0
    %1602 = vmatpush1.msra.mxu0 %v1588
    %1603 = vmatprep.subr.mxu0 0.0
    %1604 = vmatpush1.msra.mxu0 %v1589
    %1605 = vmatprep.subr.mxu0 0.0
    %1606 = vmatpush1.msra.mxu0 %v1590
    %1607 = vmatprep.subr.mxu0 0.0
    %1608 = vmatpush1.msra.mxu0 0.0
    %1609 = vmatprep.subr.mxu0 0.0
    %1610 = vmatpush1.msra.mxu0 0.0
    %1611 = vmatprep.subr.mxu0 0.0
    %1612 = vmatpush1.msra.mxu0 0.0
    %1613 = vmatprep.subr.mxu0 0.0
    %1614 = vmatpush1.msra.mxu0 0.0
    %1615 = vmatprep.subr.mxu0 0.0
    %1616 = vmatpush1.msra.mxu0 0.0
    %1617 = vmatprep.subr.mxu0 0.0
    %1618 = vmatpush1.msra.mxu0 0.0
    %1619 = vmatprep.subr.mxu0 0.0
    %1620 = vmatpush1.msra.mxu0 0.0
    %1621 = vmatprep.subr.mxu0 0.0
    %1622 = vmatpush1.msra.mxu0 0.0
    %1623 = vmatprep.subr.mxu0 0.0
    %1624 = vmatpush1.msra.mxu0 0.0
    %1625 = vmatprep.subr.mxu0 0.0
    %1626 = vmatpush1.msra.mxu0 0.0
    %1627 = vmatprep.subr.mxu0 0.0
    %1628 = vmatpush1.msra.mxu0 0.0
    %1629 = vmatprep.subr.mxu0 0.0
    %1630 = vmatpush1.msra.mxu0 0.0
    %1631 = vmatprep.subr.mxu0 0.0
    %1632 = vmatpush1.msra.mxu0 0.0
    %1633 = vmatprep.subr.mxu0 0.0
    %1634 = vmatpush1.msra.mxu0 0.0
    %1635 = vmatprep.subr.mxu0 0.0
    %1636 = vmatpush1.msra.mxu0 0.0
    %1637 = vmatprep.subr.mxu0 0.0
    %1638 = vmatpush1.msra.mxu0 0.0
    %1639 = vmatprep.subr.mxu0 0.0
    %1640 = vmatpush1.msra.mxu0 0.0
    %1641 = vmatprep.subr.mxu0 0.0
    %1642 = vmatpush1.msra.mxu0 0.0
    %1643 = vmatprep.subr.mxu0 0.0
    %1644 = vmatpush1.msra.mxu0 0.0
    %1645 = vmatprep.subr.mxu0 0.0
    %1646 = vmatpush1.msra.mxu0 0.0
    %1647 = vmatprep.subr.mxu0 0.0
    %1648 = vmatpush1.msra.mxu0 0.0
    %1649 = vmatprep.subr.mxu0 0.0
    %1650 = vmatpush1.msra.mxu0 0.0
    %1651 = vmatprep.subr.mxu0 0.0
    %1652 = vmatpush1.msra.mxu0 0.0
    %1653 = vmatprep.subr.mxu0 0.0
    %1654 = vmatpush1.msra.mxu0 0.0
    %1655 = vmatprep.mubr.f32.mxu0 0.0
    %1656 = vmatmul.mubr.f32.gmra.mrb[0].mxu0 %v1431
    %v1657 = vpop.f32.mrb[0].mxu0
    %v1658 = vadd.f32 0.0, %v1657
    %v1659 = vpop.f32.mrb[0].mxu0
    %1660 = vdwg.mxu0
    %s1661 = scalar_lea.vmem %s5, 192
    %v1662 = vld [vmem:[%s1661] sm:$0xff]
    %v1663 = vld [vmem:[%s1661 + $0x8] sm:$0xff]
    %v1664 = vld [vmem:[%s1661 + $0x10] sm:$0xff]
    %v1665 = vld [vmem:[%s1661 + $0x18] sm:$0xff]
    %v1666 = vld [vmem:[%s1661 + $0x20] sm:$0xff]
    %v1667 = vld [vmem:[%s1661 + $0x28] sm:$0xff]
    %v1668 = vld [vmem:[%s1661 + $0x30] sm:$0xff]
    %v1669 = vld [vmem:[%s1661 + $0x38] sm:$0xff]
    %1670 = vmatprep.subr.mxu0 0.0
    %1671 = vmatpush1.msra.mxu0 %v1662
    %1672 = vmatprep.subr.mxu0 0.0
    %1673 = vmatpush1.msra.mxu0 %v1663
    %1674 = vmatprep.subr.mxu0 0.0
    %1675 = vmatpush1.msra.mxu0 %v1664
    %1676 = vmatprep.subr.mxu0 0.0
    %1677 = vmatpush1.msra.mxu0 %v1665
    %1678 = vmatprep.subr.mxu0 0.0
    %1679 = vmatpush1.msra.mxu0 %v1666
    %1680 = vmatprep.subr.mxu0 0.0
    %1681 = vmatpush1.msra.mxu0 %v1667
    %1682 = vmatprep.subr.mxu0 0.0
    %1683 = vmatpush1.msra.mxu0 %v1668
    %1684 = vmatprep.subr.mxu0 0.0
    %1685 = vmatpush1.msra.mxu0 %v1669
    %1686 = vmatprep.subr.mxu0 0.0
    %1687 = vmatpush1.msra.mxu0 0.0
    %1688 = vmatprep.subr.mxu0 0.0
    %1689 = vmatpush1.msra.mxu0 0.0
    %1690 = vmatprep.subr.mxu0 0.0
    %1691 = vmatpush1.msra.mxu0 0.0
    %1692 = vmatprep.subr.mxu0 0.0
    %1693 = vmatpush1.msra.mxu0 0.0
    %1694 = vmatprep.subr.mxu0 0.0
    %1695 = vmatpush1.msra.mxu0 0.0
    %1696 = vmatprep.subr.mxu0 0.0
    %1697 = vmatpush1.msra.mxu0 0.0
    %1698 = vmatprep.subr.mxu0 0.0
    %1699 = vmatpush1.msra.mxu0 0.0
    %1700 = vmatprep.subr.mxu0 0.0
    %1701 = vmatpush1.msra.mxu0 0.0
    %1702 = vmatprep.subr.mxu0 0.0
    %1703 = vmatpush1.msra.mxu0 0.0
    %1704 = vmatprep.subr.mxu0 0.0
    %1705 = vmatpush1.msra.mxu0 0.0
    %1706 = vmatprep.subr.mxu0 0.0
    %1707 = vmatpush1.msra.mxu0 0.0
    %1708 = vmatprep.subr.mxu0 0.0
    %1709 = vmatpush1.msra.mxu0 0.0
    %1710 = vmatprep.subr.mxu0 0.0
    %1711 = vmatpush1.msra.mxu0 0.0
    %1712 = vmatprep.subr.mxu0 0.0
    %1713 = vmatpush1.msra.mxu0 0.0
    %1714 = vmatprep.subr.mxu0 0.0
    %1715 = vmatpush1.msra.mxu0 0.0
    %1716 = vmatprep.subr.mxu0 0.0
    %1717 = vmatpush1.msra.mxu0 0.0
    %1718 = vmatprep.subr.mxu0 0.0
    %1719 = vmatpush1.msra.mxu0 0.0
    %1720 = vmatprep.subr.mxu0 0.0
    %1721 = vmatpush1.msra.mxu0 0.0
    %1722 = vmatprep.subr.mxu0 0.0
    %1723 = vmatpush1.msra.mxu0 0.0
    %1724 = vmatprep.subr.mxu0 0.0
    %1725 = vmatpush1.msra.mxu0 0.0
    %1726 = vmatprep.subr.mxu0 0.0
    %1727 = vmatpush1.msra.mxu0 0.0
    %1728 = vmatprep.subr.mxu0 0.0
    %1729 = vmatpush1.msra.mxu0 0.0
    %1730 = vmatprep.subr.mxu0 0.0
    %1731 = vmatpush1.msra.mxu0 0.0
    %1732 = vmatprep.subr.mxu0 0.0
    %1733 = vmatpush1.msra.mxu0 0.0
    %1734 = vmatprep.mubr.f32.mxu0 0.0
    %1735 = vmatmul.mubr.f32.gmra.mrb[0].mxu0 %v1431
    %v1736 = vpop.f32.mrb[0].mxu0
    %v1737 = vadd.f32 0.0, %v1736
    %v1738 = vpop.f32.mrb[0].mxu0
    %1739 = vdwg.mxu0
    %s1740 = scalar_lea.vmem %s5, 256
    %v1741 = vld [vmem:[%s1740] sm:$0xff]
    %v1742 = vld [vmem:[%s1740 + $0x8] sm:$0xff]
    %v1743 = vld [vmem:[%s1740 + $0x10] sm:$0xff]
    %v1744 = vld [vmem:[%s1740 + $0x18] sm:$0xff]
    %v1745 = vld [vmem:[%s1740 + $0x20] sm:$0xff]
    %v1746 = vld [vmem:[%s1740 + $0x28] sm:$0xff]
    %v1747 = vld [vmem:[%s1740 + $0x30] sm:$0xff]
    %v1748 = vld [vmem:[%s1740 + $0x38] sm:$0xff]
    %1749 = vmatprep.subr.mxu0 0.0
    %1750 = vmatpush1.msra.mxu0 %v1741
    %1751 = vmatprep.subr.mxu0 0.0
    %1752 = vmatpush1.msra.mxu0 %v1742
    %1753 = vmatprep.subr.mxu0 0.0
    %1754 = vmatpush1.msra.mxu0 %v1743
    %1755 = vmatprep.subr.mxu0 0.0
    %1756 = vmatpush1.msra.mxu0 %v1744
    %1757 = vmatprep.subr.mxu0 0.0
    %1758 = vmatpush1.msra.mxu0 %v1745
    %1759 = vmatprep.subr.mxu0 0.0
    %1760 = vmatpush1.msra.mxu0 %v1746
    %1761 = vmatprep.subr.mxu0 0.0
    %1762 = vmatpush1.msra.mxu0 %v1747
    %1763 = vmatprep.subr.mxu0 0.0
    %1764 = vmatpush1.msra.mxu0 %v1748
    %1765 = vmatprep.subr.mxu0 0.0
    %1766 = vmatpush1.msra.mxu0 0.0
    %1767 = vmatprep.subr.mxu0 0.0
    %1768 = vmatpush1.msra.mxu0 0.0
    %1769 = vmatprep.subr.mxu0 0.0
    %1770 = vmatpush1.msra.mxu0 0.0
    %1771 = vmatprep.subr.mxu0 0.0
    %1772 = vmatpush1.msra.mxu0 0.0
    %1773 = vmatprep.subr.mxu0 0.0
    %1774 = vmatpush1.msra.mxu0 0.0
    %1775 = vmatprep.subr.mxu0 0.0
    %1776 = vmatpush1.msra.mxu0 0.0
    %1777 = vmatprep.subr.mxu0 0.0
    %1778 = vmatpush1.msra.mxu0 0.0
    %1779 = vmatprep.subr.mxu0 0.0
    %1780 = vmatpush1.msra.mxu0 0.0
    %1781 = vmatprep.subr.mxu0 0.0
    %1782 = vmatpush1.msra.mxu0 0.0
    %1783 = vmatprep.subr.mxu0 0.0
    %1784 = vmatpush1.msra.mxu0 0.0
    %1785 = vmatprep.subr.mxu0 0.0
    %1786 = vmatpush1.msra.mxu0 0.0
    %1787 = vmatprep.subr.mxu0 0.0
    %1788 = vmatpush1.msra.mxu0 0.0
    %1789 = vmatprep.subr.mxu0 0.0
    %1790 = vmatpush1.msra.mxu0 0.0
    %1791 = vmatprep.subr.mxu0 0.0
    %1792 = vmatpush1.msra.mxu0 0.0
    %1793 = vmatprep.subr.mxu0 0.0
    %1794 = vmatpush1.msra.mxu0 0.0
    %1795 = vmatprep.subr.mxu0 0.0
    %1796 = vmatpush1.msra.mxu0 0.0
    %1797 = vmatprep.subr.mxu0 0.0
    %1798 = vmatpush1.msra.mxu0 0.0
    %1799 = vmatprep.subr.mxu0 0.0
    %1800 = vmatpush1.msra.mxu0 0.0
    %1801 = vmatprep.subr.mxu0 0.0
    %1802 = vmatpush1.msra.mxu0 0.0
    %1803 = vmatprep.subr.mxu0 0.0
    %1804 = vmatpush1.msra.mxu0 0.0
    %1805 = vmatprep.subr.mxu0 0.0
    %1806 = vmatpush1.msra.mxu0 0.0
    %1807 = vmatprep.subr.mxu0 0.0
    %1808 = vmatpush1.msra.mxu0 0.0
    %1809 = vmatprep.subr.mxu0 0.0
    %1810 = vmatpush1.msra.mxu0 0.0
    %1811 = vmatprep.subr.mxu0 0.0
    %1812 = vmatpush1.msra.mxu0 0.0
    %1813 = vmatprep.mubr.f32.mxu0 0.0
    %1814 = vmatmul.mubr.f32.gmra.mrb[0].mxu0 %v1431
    %v1815 = vpop.f32.mrb[0].mxu0
    %v1816 = vadd.f32 0.0, %v1815
    %v1817 = vpop.f32.mrb[0].mxu0
    %1818 = vdwg.mxu0
    %s1819 = scalar_lea.vmem %s5, 320
    %v1820 = vld [vmem:[%s1819] sm:$0xff]
    %v1821 = vld [vmem:[%s1819 + $0x8] sm:$0xff]
    %v1822 = vld [vmem:[%s1819 + $0x10] sm:$0xff]
    %v1823 = vld [vmem:[%s1819 + $0x18] sm:$0xff]
    %v1824 = vld [vmem:[%s1819 + $0x20] sm:$0xff]
    %v1825 = vld [vmem:[%s1819 + $0x28] sm:$0xff]
    %v1826 = vld [vmem:[%s1819 + $0x30] sm:$0xff]
    %v1827 = vld [vmem:[%s1819 + $0x38] sm:$0xff]
    %1828 = vmatprep.subr.mxu0 0.0
    %1829 = vmatpush1.msra.mxu0 %v1820
    %1830 = vmatprep.subr.mxu0 0.0
    %1831 = vmatpush1.msra.mxu0 %v1821
    %1832 = vmatprep.subr.mxu0 0.0
    %1833 = vmatpush1.msra.mxu0 %v1822
    %1834 = vmatprep.subr.mxu0 0.0
    %1835 = vmatpush1.msra.mxu0 %v1823
    %1836 = vmatprep.subr.mxu0 0.0
    %1837 = vmatpush1.msra.mxu0 %v1824
    %1838 = vmatprep.subr.mxu0 0.0
    %1839 = vmatpush1.msra.mxu0 %v1825
    %1840 = vmatprep.subr.mxu0 0.0
    %1841 = vmatpush1.msra.mxu0 %v1826
    %1842 = vmatprep.subr.mxu0 0.0
    %1843 = vmatpush1.msra.mxu0 %v1827
    %1844 = vmatprep.subr.mxu0 0.0
    %1845 = vmatpush1.msra.mxu0 0.0
    %1846 = vmatprep.subr.mxu0 0.0
    %1847 = vmatpush1.msra.mxu0 0.0
    %1848 = vmatprep.subr.mxu0 0.0
    %1849 = vmatpush1.msra.mxu0 0.0
    %1850 = vmatprep.subr.mxu0 0.0
    %1851 = vmatpush1.msra.mxu0 0.0
    %1852 = vmatprep.subr.mxu0 0.0
    %1853 = vmatpush1.msra.mxu0 0.0
    %1854 = vmatprep.subr.mxu0 0.0
    %1855 = vmatpush1.msra.mxu0 0.0
    %1856 = vmatprep.subr.mxu0 0.0
    %1857 = vmatpush1.msra.mxu0 0.0
    %1858 = vmatprep.subr.mxu0 0.0
    %1859 = vmatpush1.msra.mxu0 0.0
    %1860 = vmatprep.subr.mxu0 0.0
    %1861 = vmatpush1.msra.mxu0 0.0
    %1862 = vmatprep.subr.mxu0 0.0
    %1863 = vmatpush1.msra.mxu0 0.0
    %1864 = vmatprep.subr.mxu0 0.0
    %1865 = vmatpush1.msra.mxu0 0.0
    %1866 = vmatprep.subr.mxu0 0.0
    %1867 = vmatpush1.msra.mxu0 0.0
    %1868 = vmatprep.subr.mxu0 0.0
    %1869 = vmatpush1.msra.mxu0 0.0
    %1870 = vmatprep.subr.mxu0 0.0
    %1871 = vmatpush1.msra.mxu0 0.0
    %1872 = vmatprep.subr.mxu0 0.0
    %1873 = vmatpush1.msra.mxu0 0.0
    %1874 = vmatprep.subr.mxu0 0.0
    %1875 = vmatpush1.msra.mxu0 0.0
    %1876 = vmatprep.subr.mxu0 0.0
    %1877 = vmatpush1.msra.mxu0 0.0
    %1878 = vmatprep.subr.mxu0 0.0
    %1879 = vmatpush1.msra.mxu0 0.0
    %1880 = vmatprep.subr.mxu0 0.0
    %1881 = vmatpush1.msra.mxu0 0.0
    %1882 = vmatprep.subr.mxu0 0.0
    %1883 = vmatpush1.msra.mxu0 0.0
    %1884 = vmatprep.subr.mxu0 0.0
    %1885 = vmatpush1.msra.mxu0 0.0
    %1886 = vmatprep.subr.mxu0 0.0
    %1887 = vmatpush1.msra.mxu0 0.0
    %1888 = vmatprep.subr.mxu0 0.0
    %1889 = vmatpush1.msra.mxu0 0.0
    %1890 = vmatprep.subr.mxu0 0.0
    %1891 = vmatpush1.msra.mxu0 0.0
    %1892 = vmatprep.mubr.f32.mxu0 0.0
    %1893 = vmatmul.mubr.f32.gmra.mrb[0].mxu0 %v1431
    %v1894 = vpop.f32.mrb[0].mxu0
    %v1895 = vadd.f32 0.0, %v1894
    %v1896 = vpop.f32.mrb[0].mxu0
    %1897 = vdwg.mxu0
    %s1898 = scalar_lea.vmem %s5, 384
    %v1899 = vld [vmem:[%s1898] sm:$0xff]
    %v1900 = vld [vmem:[%s1898 + $0x8] sm:$0xff]
    %v1901 = vld [vmem:[%s1898 + $0x10] sm:$0xff]
    %v1902 = vld [vmem:[%s1898 + $0x18] sm:$0xff]
    %v1903 = vld [vmem:[%s1898 + $0x20] sm:$0xff]
    %v1904 = vld [vmem:[%s1898 + $0x28] sm:$0xff]
    %v1905 = vld [vmem:[%s1898 + $0x30] sm:$0xff]
    %v1906 = vld [vmem:[%s1898 + $0x38] sm:$0xff]
    %1907 = vmatprep.subr.mxu0 0.0
    %1908 = vmatpush1.msra.mxu0 %v1899
    %1909 = vmatprep.subr.mxu0 0.0
    %1910 = vmatpush1.msra.mxu0 %v1900
    %1911 = vmatprep.subr.mxu0 0.0
    %1912 = vmatpush1.msra.mxu0 %v1901
    %1913 = vmatprep.subr.mxu0 0.0
    %1914 = vmatpush1.msra.mxu0 %v1902
    %1915 = vmatprep.subr.mxu0 0.0
    %1916 = vmatpush1.msra.mxu0 %v1903
    %1917 = vmatprep.subr.mxu0 0.0
    %1918 = vmatpush1.msra.mxu0 %v1904
    %1919 = vmatprep.subr.mxu0 0.0
    %1920 = vmatpush1.msra.mxu0 %v1905
    %1921 = vmatprep.subr.mxu0 0.0
    %1922 = vmatpush1.msra.mxu0 %v1906
    %1923 = vmatprep.subr.mxu0 0.0
    %1924 = vmatpush1.msra.mxu0 0.0
    %1925 = vmatprep.subr.mxu0 0.0
    %1926 = vmatpush1.msra.mxu0 0.0
    %1927 = vmatprep.subr.mxu0 0.0
    %1928 = vmatpush1.msra.mxu0 0.0
    %1929 = vmatprep.subr.mxu0 0.0
    %1930 = vmatpush1.msra.mxu0 0.0
    %1931 = vmatprep.subr.mxu0 0.0
    %1932 = vmatpush1.msra.mxu0 0.0
    %1933 = vmatprep.subr.mxu0 0.0
    %1934 = vmatpush1.msra.mxu0 0.0
    %1935 = vmatprep.subr.mxu0 0.0
    %1936 = vmatpush1.msra.mxu0 0.0
    %1937 = vmatprep.subr.mxu0 0.0
    %1938 = vmatpush1.msra.mxu0 0.0
    %1939 = vmatprep.subr.mxu0 0.0
    %1940 = vmatpush1.msra.mxu0 0.0
    %1941 = vmatprep.subr.mxu0 0.0
    %1942 = vmatpush1.msra.mxu0 0.0
    %1943 = vmatprep.subr.mxu0 0.0
    %1944 = vmatpush1.msra.mxu0 0.0
    %1945 = vmatprep.subr.mxu0 0.0
    %1946 = vmatpush1.msra.mxu0 0.0
    %1947 = vmatprep.subr.mxu0 0.0
    %1948 = vmatpush1.msra.mxu0 0.0
    %1949 = vmatprep.subr.mxu0 0.0
    %1950 = vmatpush1.msra.mxu0 0.0
    %1951 = vmatprep.subr.mxu0 0.0
    %1952 = vmatpush1.msra.mxu0 0.0
    %1953 = vmatprep.subr.mxu0 0.0
    %1954 = vmatpush1.msra.mxu0 0.0
    %1955 = vmatprep.subr.mxu0 0.0
    %1956 = vmatpush1.msra.mxu0 0.0
    %1957 = vmatprep.subr.mxu0 0.0
    %1958 = vmatpush1.msra.mxu0 0.0
    %1959 = vmatprep.subr.mxu0 0.0
    %1960 = vmatpush1.msra.mxu0 0.0
    %1961 = vmatprep.subr.mxu0 0.0
    %1962 = vmatpush1.msra.mxu0 0.0
    %1963 = vmatprep.subr.mxu0 0.0
    %1964 = vmatpush1.msra.mxu0 0.0
    %1965 = vmatprep.subr.mxu0 0.0
    %1966 = vmatpush1.msra.mxu0 0.0
    %1967 = vmatprep.subr.mxu0 0.0
    %1968 = vmatpush1.msra.mxu0 0.0
    %1969 = vmatprep.subr.mxu0 0.0
    %1970 = vmatpush1.msra.mxu0 0.0
    %1971 = vmatprep.mubr.f32.mxu0 0.0
    %1972 = vmatmul.mubr.f32.gmra.mrb[0].mxu0 %v1431
    %v1973 = vpop.f32.mrb[0].mxu0
    %v1974 = vadd.f32 0.0, %v1973
    %v1975 = vpop.f32.mrb[0].mxu0
    %1976 = vdwg.mxu0
    %s1977 = scalar_lea.vmem %s5, 448
    %v1978 = vld [vmem:[%s1977] sm:$0xff]
    %v1979 = vld [vmem:[%s1977 + $0x8] sm:$0xff]
    %v1980 = vld [vmem:[%s1977 + $0x10] sm:$0xff]
    %v1981 = vld [vmem:[%s1977 + $0x18] sm:$0xff]
    %v1982 = vld [vmem:[%s1977 + $0x20] sm:$0xff]
    %v1983 = vld [vmem:[%s1977 + $0x28] sm:$0xff]
    %v1984 = vld [vmem:[%s1977 + $0x30] sm:$0xff]
    %v1985 = vld [vmem:[%s1977 + $0x38] sm:$0xff]
    %1986 = vmatprep.subr.mxu0 0.0
    %1987 = vmatpush1.msra.mxu0 %v1978
    %1988 = vmatprep.subr.mxu0 0.0
    %1989 = vmatpush1.msra.mxu0 %v1979
    %1990 = vmatprep.subr.mxu0 0.0
    %1991 = vmatpush1.msra.mxu0 %v1980
    %1992 = vmatprep.subr.mxu0 0.0
    %1993 = vmatpush1.msra.mxu0 %v1981
    %1994 = vmatprep.subr.mxu0 0.0
    %1995 = vmatpush1.msra.mxu0 %v1982
    %1996 = vmatprep.subr.mxu0 0.0
    %1997 = vmatpush1.msra.mxu0 %v1983
    %1998 = vmatprep.subr.mxu0 0.0
    %1999 = vmatpush1.msra.mxu0 %v1984
    %2000 = vmatprep.subr.mxu0 0.0
    %2001 = vmatpush1.msra.mxu0 %v1985
    %2002 = vmatprep.subr.mxu0 0.0
    %2003 = vmatpush1.msra.mxu0 0.0
    %2004 = vmatprep.subr.mxu0 0.0
    %2005 = vmatpush1.msra.mxu0 0.0
    %2006 = vmatprep.subr.mxu0 0.0
    %2007 = vmatpush1.msra.mxu0 0.0
    %2008 = vmatprep.subr.mxu0 0.0
    %2009 = vmatpush1.msra.mxu0 0.0
    %2010 = vmatprep.subr.mxu0 0.0
    %2011 = vmatpush1.msra.mxu0 0.0
    %2012 = vmatprep.subr.mxu0 0.0
    %2013 = vmatpush1.msra.mxu0 0.0
    %2014 = vmatprep.subr.mxu0 0.0
    %2015 = vmatpush1.msra.mxu0 0.0
    %2016 = vmatprep.subr.mxu0 0.0
    %2017 = vmatpush1.msra.mxu0 0.0
    %2018 = vmatprep.subr.mxu0 0.0
    %2019 = vmatpush1.msra.mxu0 0.0
    %2020 = vmatprep.subr.mxu0 0.0
    %2021 = vmatpush1.msra.mxu0 0.0
    %2022 = vmatprep.subr.mxu0 0.0
    %2023 = vmatpush1.msra.mxu0 0.0
    %2024 = vmatprep.subr.mxu0 0.0
    %2025 = vmatpush1.msra.mxu0 0.0
    %2026 = vmatprep.subr.mxu0 0.0
    %2027 = vmatpush1.msra.mxu0 0.0
    %2028 = vmatprep.subr.mxu0 0.0
    %2029 = vmatpush1.msra.mxu0 0.0
    %2030 = vmatprep.subr.mxu0 0.0
    %2031 = vmatpush1.msra.mxu0 0.0
    %2032 = vmatprep.subr.mxu0 0.0
    %2033 = vmatpush1.msra.mxu0 0.0
    %2034 = vmatprep.subr.mxu0 0.0
    %2035 = vmatpush1.msra.mxu0 0.0
    %2036 = vmatprep.subr.mxu0 0.0
    %2037 = vmatpush1.msra.mxu0 0.0
    %2038 = vmatprep.subr.mxu0 0.0
    %2039 = vmatpush1.msra.mxu0 0.0
    %2040 = vmatprep.subr.mxu0 0.0
    %2041 = vmatpush1.msra.mxu0 0.0
    %2042 = vmatprep.subr.mxu0 0.0
    %2043 = vmatpush1.msra.mxu0 0.0
    %2044 = vmatprep.subr.mxu0 0.0
    %2045 = vmatpush1.msra.mxu0 0.0
    %2046 = vmatprep.subr.mxu0 0.0
    %2047 = vmatpush1.msra.mxu0 0.0
    %2048 = vmatprep.subr.mxu0 0.0
    %2049 = vmatpush1.msra.mxu0 0.0
    %2050 = vmatprep.mubr.f32.mxu0 0.0
    %2051 = vmatmul.mubr.f32.gmra.mrb[0].mxu0 %v1431
    %v2052 = vpop.f32.mrb[0].mxu0
    %v2053 = vadd.f32 0.0, %v2052
    %v2054 = vpop.f32.mrb[0].mxu0
    %2055 = vdwg.mxu0
    %s2056 = scalar_lea.vmem %s5, 512
    %v2057 = vld [vmem:[%s2056] sm:$0xff]
    %v2058 = vld [vmem:[%s2056 + $0x8] sm:$0xff]
    %v2059 = vld [vmem:[%s2056 + $0x10] sm:$0xff]
    %v2060 = vld [vmem:[%s2056 + $0x18] sm:$0xff]
    %v2061 = vld [vmem:[%s2056 + $0x20] sm:$0xff]
    %v2062 = vld [vmem:[%s2056 + $0x28] sm:$0xff]
    %v2063 = vld [vmem:[%s2056 + $0x30] sm:$0xff]
    %v2064 = vld [vmem:[%s2056 + $0x38] sm:$0xff]
    %2065 = vmatprep.subr.mxu0 0.0
    %2066 = vmatpush1.msra.mxu0 %v2057
    %2067 = vmatprep.subr.mxu0 0.0
    %2068 = vmatpush1.msra.mxu0 %v2058
    %2069 = vmatprep.subr.mxu0 0.0
    %2070 = vmatpush1.msra.mxu0 %v2059
    %2071 = vmatprep.subr.mxu0 0.0
    %2072 = vmatpush1.msra.mxu0 %v2060
    %2073 = vmatprep.subr.mxu0 0.0
    %2074 = vmatpush1.msra.mxu0 %v2061
    %2075 = vmatprep.subr.mxu0 0.0
    %2076 = vmatpush1.msra.mxu0 %v2062
    %2077 = vmatprep.subr.mxu0 0.0
    %2078 = vmatpush1.msra.mxu0 %v2063
    %2079 = vmatprep.subr.mxu0 0.0
    %2080 = vmatpush1.msra.mxu0 %v2064
    %2081 = vmatprep.subr.mxu0 0.0
    %2082 = vmatpush1.msra.mxu0 0.0
    %2083 = vmatprep.subr.mxu0 0.0
    %2084 = vmatpush1.msra.mxu0 0.0
    %2085 = vmatprep.subr.mxu0 0.0
    %2086 = vmatpush1.msra.mxu0 0.0
    %2087 = vmatprep.subr.mxu0 0.0
    %2088 = vmatpush1.msra.mxu0 0.0
    %2089 = vmatprep.subr.mxu0 0.0
    %2090 = vmatpush1.msra.mxu0 0.0
    %2091 = vmatprep.subr.mxu0 0.0
    %2092 = vmatpush1.msra.mxu0 0.0
    %2093 = vmatprep.subr.mxu0 0.0
    %2094 = vmatpush1.msra.mxu0 0.0
    %2095 = vmatprep.subr.mxu0 0.0
    %2096 = vmatpush1.msra.mxu0 0.0
    %2097 = vmatprep.subr.mxu0 0.0
    %2098 = vmatpush1.msra.mxu0 0.0
    %2099 = vmatprep.subr.mxu0 0.0
    %2100 = vmatpush1.msra.mxu0 0.0
    %2101 = vmatprep.subr.mxu0 0.0
    %2102 = vmatpush1.msra.mxu0 0.0
    %2103 = vmatprep.subr.mxu0 0.0
    %2104 = vmatpush1.msra.mxu0 0.0
    %2105 = vmatprep.subr.mxu0 0.0
    %2106 = vmatpush1.msra.mxu0 0.0
    %2107 = vmatprep.subr.mxu0 0.0
    %2108 = vmatpush1.msra.mxu0 0.0
    %2109 = vmatprep.subr.mxu0 0.0
    %2110 = vmatpush1.msra.mxu0 0.0
    %2111 = vmatprep.subr.mxu0 0.0
    %2112 = vmatpush1.msra.mxu0 0.0
    %2113 = vmatprep.subr.mxu0 0.0
    %2114 = vmatpush1.msra.mxu0 0.0
    %2115 = vmatprep.subr.mxu0 0.0
    %2116 = vmatpush1.msra.mxu0 0.0
    %2117 = vmatprep.subr.mxu0 0.0
    %2118 = vmatpush1.msra.mxu0 0.0
    %2119 = vmatprep.subr.mxu0 0.0
    %2120 = vmatpush1.msra.mxu0 0.0
    %2121 = vmatprep.subr.mxu0 0.0
    %2122 = vmatpush1.msra.mxu0 0.0
    %2123 = vmatprep.subr.mxu0 0.0
    %2124 = vmatpush1.msra.mxu0 0.0
    %2125 = vmatprep.subr.mxu0 0.0
    %2126 = vmatpush1.msra.mxu0 0.0
    %2127 = vmatprep.subr.mxu0 0.0
    %2128 = vmatpush1.msra.mxu0 0.0
    %2129 = vmatprep.mubr.f32.mxu0 0.0
    %2130 = vmatmul.mubr.f32.gmra.mrb[0].mxu0 %v1431
    %v2131 = vpop.f32.mrb[0].mxu0
    %v2132 = vadd.f32 0.0, %v2131
    %v2133 = vpop.f32.mrb[0].mxu0
    %2134 = vdwg.mxu0
    %s2135 = scalar_lea.vmem %s5, 576
    %v2136 = vld [vmem:[%s2135] sm:$0xff]
    %v2137 = vld [vmem:[%s2135 + $0x8] sm:$0xff]
    %v2138 = vld [vmem:[%s2135 + $0x10] sm:$0xff]
    %v2139 = vld [vmem:[%s2135 + $0x18] sm:$0xff]
    %v2140 = vld [vmem:[%s2135 + $0x20] sm:$0xff]
    %v2141 = vld [vmem:[%s2135 + $0x28] sm:$0xff]
    %v2142 = vld [vmem:[%s2135 + $0x30] sm:$0xff]
    %v2143 = vld [vmem:[%s2135 + $0x38] sm:$0xff]
    %2144 = vmatprep.subr.mxu0 0.0
    %2145 = vmatpush1.msra.mxu0 %v2136
    %2146 = vmatprep.subr.mxu0 0.0
    %2147 = vmatpush1.msra.mxu0 %v2137
    %2148 = vmatprep.subr.mxu0 0.0
    %2149 = vmatpush1.msra.mxu0 %v2138
    %2150 = vmatprep.subr.mxu0 0.0
    %2151 = vmatpush1.msra.mxu0 %v2139
    %2152 = vmatprep.subr.mxu0 0.0
    %2153 = vmatpush1.msra.mxu0 %v2140
    %2154 = vmatprep.subr.mxu0 0.0
    %2155 = vmatpush1.msra.mxu0 %v2141
    %2156 = vmatprep.subr.mxu0 0.0
    %2157 = vmatpush1.msra.mxu0 %v2142
    %2158 = vmatprep.subr.mxu0 0.0
    %2159 = vmatpush1.msra.mxu0 %v2143
    %2160 = vmatprep.subr.mxu0 0.0
    %2161 = vmatpush1.msra.mxu0 0.0
    %2162 = vmatprep.subr.mxu0 0.0
    %2163 = vmatpush1.msra.mxu0 0.0
    %2164 = vmatprep.subr.mxu0 0.0
    %2165 = vmatpush1.msra.mxu0 0.0
    %2166 = vmatprep.subr.mxu0 0.0
    %2167 = vmatpush1.msra.mxu0 0.0
    %2168 = vmatprep.subr.mxu0 0.0
    %2169 = vmatpush1.msra.mxu0 0.0
    %2170 = vmatprep.subr.mxu0 0.0
    %2171 = vmatpush1.msra.mxu0 0.0
    %2172 = vmatprep.subr.mxu0 0.0
    %2173 = vmatpush1.msra.mxu0 0.0
    %2174 = vmatprep.subr.mxu0 0.0
    %2175 = vmatpush1.msra.mxu0 0.0
    %2176 = vmatprep.subr.mxu0 0.0
    %2177 = vmatpush1.msra.mxu0 0.0
    %2178 = vmatprep.subr.mxu0 0.0
    %2179 = vmatpush1.msra.mxu0 0.0
    %2180 = vmatprep.subr.mxu0 0.0
    %2181 = vmatpush1.msra.mxu0 0.0
    %2182 = vmatprep.subr.mxu0 0.0
    %2183 = vmatpush1.msra.mxu0 0.0
    %2184 = vmatprep.subr.mxu0 0.0
    %2185 = vmatpush1.msra.mxu0 0.0
    %2186 = vmatprep.subr.mxu0 0.0
    %2187 = vmatpush1.msra.mxu0 0.0
    %2188 = vmatprep.subr.mxu0 0.0
    %2189 = vmatpush1.msra.mxu0 0.0
    %2190 = vmatprep.subr.mxu0 0.0
    %2191 = vmatpush1.msra.mxu0 0.0
    %2192 = vmatprep.subr.mxu0 0.0
    %2193 = vmatpush1.msra.mxu0 0.0
    %2194 = vmatprep.subr.mxu0 0.0
    %2195 = vmatpush1.msra.mxu0 0.0
    %2196 = vmatprep.subr.mxu0 0.0
    %2197 = vmatpush1.msra.mxu0 0.0
    %2198 = vmatprep.subr.mxu0 0.0
    %2199 = vmatpush1.msra.mxu0 0.0
    %2200 = vmatprep.subr.mxu0 0.0
    %2201 = vmatpush1.msra.mxu0 0.0
    %2202 = vmatprep.subr.mxu0 0.0
    %2203 = vmatpush1.msra.mxu0 0.0
    %2204 = vmatprep.subr.mxu0 0.0
    %2205 = vmatpush1.msra.mxu0 0.0
    %2206 = vmatprep.subr.mxu0 0.0
    %2207 = vmatpush1.msra.mxu0 0.0
    %2208 = vmatprep.mubr.f32.mxu0 0.0
    %2209 = vmatmul.mubr.f32.gmra.mrb[0].mxu0 %v1431
    %v2210 = vpop.f32.mrb[0].mxu0
    %v2211 = vadd.f32 0.0, %v2210
    %v2212 = vpop.f32.mrb[0].mxu0
    %2213 = vdwg.mxu0
    %s2214 = scalar_lea.vmem %s5, 640
    %v2215 = vld [vmem:[%s2214] sm:$0xff]
    %v2216 = vld [vmem:[%s2214 + $0x8] sm:$0xff]
    %v2217 = vld [vmem:[%s2214 + $0x10] sm:$0xff]
    %v2218 = vld [vmem:[%s2214 + $0x18] sm:$0xff]
    %v2219 = vld [vmem:[%s2214 + $0x20] sm:$0xff]
    %v2220 = vld [vmem:[%s2214 + $0x28] sm:$0xff]
    %v2221 = vld [vmem:[%s2214 + $0x30] sm:$0xff]
    %v2222 = vld [vmem:[%s2214 + $0x38] sm:$0xff]
    %2223 = vmatprep.subr.mxu0 0.0
    %2224 = vmatpush1.msra.mxu0 %v2215
    %2225 = vmatprep.subr.mxu0 0.0
    %2226 = vmatpush1.msra.mxu0 %v2216
    %2227 = vmatprep.subr.mxu0 0.0
    %2228 = vmatpush1.msra.mxu0 %v2217
    %2229 = vmatprep.subr.mxu0 0.0
    %2230 = vmatpush1.msra.mxu0 %v2218
    %2231 = vmatprep.subr.mxu0 0.0
    %2232 = vmatpush1.msra.mxu0 %v2219
    %2233 = vmatprep.subr.mxu0 0.0
    %2234 = vmatpush1.msra.mxu0 %v2220
    %2235 = vmatprep.subr.mxu0 0.0
    %2236 = vmatpush1.msra.mxu0 %v2221
    %2237 = vmatprep.subr.mxu0 0.0
    %2238 = vmatpush1.msra.mxu0 %v2222
    %2239 = vmatprep.subr.mxu0 0.0
    %2240 = vmatpush1.msra.mxu0 0.0
    %2241 = vmatprep.subr.mxu0 0.0
    %2242 = vmatpush1.msra.mxu0 0.0
    %2243 = vmatprep.subr.mxu0 0.0
    %2244 = vmatpush1.msra.mxu0 0.0
    %2245 = vmatprep.subr.mxu0 0.0
    %2246 = vmatpush1.msra.mxu0 0.0
    %2247 = vmatprep.subr.mxu0 0.0
    %2248 = vmatpush1.msra.mxu0 0.0
    %2249 = vmatprep.subr.mxu0 0.0
    %2250 = vmatpush1.msra.mxu0 0.0
    %2251 = vmatprep.subr.mxu0 0.0
    %2252 = vmatpush1.msra.mxu0 0.0
    %2253 = vmatprep.subr.mxu0 0.0
    %2254 = vmatpush1.msra.mxu0 0.0
    %2255 = vmatprep.subr.mxu0 0.0
    %2256 = vmatpush1.msra.mxu0 0.0
    %2257 = vmatprep.subr.mxu0 0.0
    %2258 = vmatpush1.msra.mxu0 0.0
    %2259 = vmatprep.subr.mxu0 0.0
    %2260 = vmatpush1.msra.mxu0 0.0
    %2261 = vmatprep.subr.mxu0 0.0
    %2262 = vmatpush1.msra.mxu0 0.0
    %2263 = vmatprep.subr.mxu0 0.0
    %2264 = vmatpush1.msra.mxu0 0.0
    %2265 = vmatprep.subr.mxu0 0.0
    %2266 = vmatpush1.msra.mxu0 0.0
    %2267 = vmatprep.subr.mxu0 0.0
    %2268 = vmatpush1.msra.mxu0 0.0
    %2269 = vmatprep.subr.mxu0 0.0
    %2270 = vmatpush1.msra.mxu0 0.0
    %2271 = vmatprep.subr.mxu0 0.0
    %2272 = vmatpush1.msra.mxu0 0.0
    %2273 = vmatprep.subr.mxu0 0.0
    %2274 = vmatpush1.msra.mxu0 0.0
    %2275 = vmatprep.subr.mxu0 0.0
    %2276 = vmatpush1.msra.mxu0 0.0
    %2277 = vmatprep.subr.mxu0 0.0
    %2278 = vmatpush1.msra.mxu0 0.0
    %2279 = vmatprep.subr.mxu0 0.0
    %2280 = vmatpush1.msra.mxu0 0.0
    %2281 = vmatprep.subr.mxu0 0.0
    %2282 = vmatpush1.msra.mxu0 0.0
    %2283 = vmatprep.subr.mxu0 0.0
    %2284 = vmatpush1.msra.mxu0 0.0
    %2285 = vmatprep.subr.mxu0 0.0
    %2286 = vmatpush1.msra.mxu0 0.0
    %2287 = vmatprep.mubr.f32.mxu0 0.0
    %2288 = vmatmul.mubr.f32.gmra.mrb[0].mxu0 %v1431
    %v2289 = vpop.f32.mrb[0].mxu0
    %v2290 = vadd.f32 0.0, %v2289
    %v2291 = vpop.f32.mrb[0].mxu0
    %2292 = vdwg.mxu0
    %v2294 = vrot.slane %v1579, 4
    %v2297 = vrot.slane %v1737, 4
    %v2300 = vrot.slane %v1895, 4
    %v2303 = vrot.slane %v2053, 4
    %v2306 = vrot.slane %v2211, 4
    %v2308 = vsel %vm1214, %v1500, %v2294
    %v2309 = vsel %vm1214, %v1658, %v2297
    %v2310 = vsel %vm1214, %v1816, %v2300
    %v2311 = vsel %vm1214, %v1974, %v2303
    %v2312 = vsel %vm1214, %v2132, %v2306
    %v2313 = vld [vmem:[%s29] sm:$0xff]
    %vm2314 = vcmask 359424
    %v2316 = vsel %vm2314, %v2313, 0
    %v2319 = vsel %vm1214, %v2290, 0
    %2321 = vmatprep.subr.mxu0 0.0
    %2322 = vmatpush1.msra.mxu0 %v2308
    %2323 = vmatprep.subr.mxu0 0.0
    %2324 = vmatpush1.msra.mxu0 %v2309
    %2325 = vmatprep.subr.mxu0 0.0
    %2326 = vmatpush1.msra.mxu0 %v2310
    %2327 = vmatprep.subr.mxu0 0.0
    %2328 = vmatpush1.msra.mxu0 %v2311
    %2329 = vmatprep.subr.mxu0 0.0
    %2330 = vmatpush1.msra.mxu0 %v2312
    %2331 = vmatprep.subr.mxu0 0.0
    %2332 = vmatpush1.msra.mxu0 %v2319
    %2333 = vmatprep.subr.mxu0 0.0
    %2334 = vmatpush1.msra.mxu0 0.0
    %2335 = vmatprep.subr.mxu0 0.0
    %2336 = vmatpush1.msra.mxu0 0.0
    %2337 = vmatprep.subr.mxu0 0.0
    %2338 = vmatpush1.msra.mxu0 0.0
    %2339 = vmatprep.subr.mxu0 0.0
    %2340 = vmatpush1.msra.mxu0 0.0
    %2341 = vmatprep.subr.mxu0 0.0
    %2342 = vmatpush1.msra.mxu0 0.0
    %2343 = vmatprep.subr.mxu0 0.0
    %2344 = vmatpush1.msra.mxu0 0.0
    %2345 = vmatprep.subr.mxu0 0.0
    %2346 = vmatpush1.msra.mxu0 0.0
    %2347 = vmatprep.subr.mxu0 0.0
    %2348 = vmatpush1.msra.mxu0 0.0
    %2349 = vmatprep.subr.mxu0 0.0
    %2350 = vmatpush1.msra.mxu0 0.0
    %2351 = vmatprep.subr.mxu0 0.0
    %2352 = vmatpush1.msra.mxu0 0.0
    %2353 = vmatprep.subr.mxu0 0.0
    %2354 = vmatpush1.msra.mxu0 0.0
    %2355 = vmatprep.subr.mxu0 0.0
    %2356 = vmatpush1.msra.mxu0 0.0
    %2357 = vmatprep.subr.mxu0 0.0
    %2358 = vmatpush1.msra.mxu0 0.0
    %2359 = vmatprep.subr.mxu0 0.0
    %2360 = vmatpush1.msra.mxu0 0.0
    %2361 = vmatprep.subr.mxu0 0.0
    %2362 = vmatpush1.msra.mxu0 0.0
    %2363 = vmatprep.subr.mxu0 0.0
    %2364 = vmatpush1.msra.mxu0 0.0
    %2365 = vmatprep.subr.mxu0 0.0
    %2366 = vmatpush1.msra.mxu0 0.0
    %2367 = vmatprep.subr.mxu0 0.0
    %2368 = vmatpush1.msra.mxu0 0.0
    %2369 = vmatprep.subr.mxu0 0.0
    %2370 = vmatpush1.msra.mxu0 0.0
    %2371 = vmatprep.subr.mxu0 0.0
    %2372 = vmatpush1.msra.mxu0 0.0
    %2373 = vmatprep.subr.mxu0 0.0
    %2374 = vmatpush1.msra.mxu0 0.0
    %2375 = vmatprep.subr.mxu0 0.0
    %2376 = vmatpush1.msra.mxu0 0.0
    %2377 = vmatprep.subr.mxu0 0.0
    %2378 = vmatpush1.msra.mxu0 0.0
    %2379 = vmatprep.subr.mxu0 0.0
    %2380 = vmatpush1.msra.mxu0 0.0
    %2381 = vmatprep.subr.mxu0 0.0
    %2382 = vmatpush1.msra.mxu0 0.0
    %2383 = vmatprep.subr.mxu0 0.0
    %2384 = vmatpush1.msra.mxu0 0.0
    %2385 = vmatprep.mubr.f32.mxu0 0.0
    %2386 = vmatmul.mubr.f32.gmra.mrb[0].mxu0 %v2316
    %v2387 = vpop.f32.mrb[0].mxu0
    %v2388 = vadd.f32 0.0, %v2387
    %v2389 = vpop.f32.mrb[0].mxu0
    %2390 = vdwg.mxu0
    %v2391 = vsel %vm1429, %v2388, 0.0
    %2392 = vadd.xlane.f32.xlu0 %v2391
    %v2393 = vpop.xlane.xlu0 %2392
    %v2394 = vrcp.pop 64.0
    %v2395 = vmul.f32 %v2393, %v2394
    %v2396 = vmul.f32 %v2388, %v2388
    %v2397 = vsel %vm1429, %v2396, 0.0
    %2398 = vadd.xlane.f32.xlu0 %v2397
    %v2399 = vpop.xlane.xlu0 %2398
    %v2400 = vmul.f32 %v2399, %v2394
    %v2401 = vmul.f32 %v2395, %v2395
    %v2402 = vsub.f32 %v2400, %v2401
    %v2403 = vsub.f32 %v2388, %v2395
    %v2404 = vadd.f32 %v2402, 1e-05
    %v2405 = vrsqrt.pop %v2404
    %v2406 = vmul.f32 %v2403, %v2405
    %v2407 = vld [vmem:[%s31] sm:$0xff]
    %2409 = vset.pattern.permute.xlu0 0
    %2410 = vperm.xlu0 %2409, %v2407
    %v2411 = vpop.permute.xlu0 %2410
    %v2413 = vmul.f32 %v2406, %v2411
    %v2414 = vld [vmem:[%s33] sm:$0xff]
    %2416 = vset.pattern.permute.xlu0 0
    %2417 = vperm.xlu0 %2416, %v2414
    %v2418 = vpop.permute.xlu0 %2417
    %v2420 = vadd.f32 %v2413, %v2418
    %vm2421 = vcmp.ge.f32.partialorder %v2420, 0.0
    %v2422 = vmul.f32 %v2420, 0.1
    %v2423 = vsel %vm2421, %v2420, %v2422
    %v2424 = vld [vmem:[#allocation5] sm:$0xff]
    %v2425 = vld [vmem:[#allocation5 + $0x8] sm:$0xff]
    %v2426 = vld [vmem:[#allocation5 + $0x10] sm:$0xff]
    %v2427 = vld [vmem:[#allocation5 + $0x18] sm:$0xff]
    %v2428 = vld [vmem:[#allocation5 + $0x20] sm:$0xff]
    %v2429 = vld [vmem:[#allocation5 + $0x28] sm:$0xff]
    %v2430 = vld [vmem:[#allocation5 + $0x30] sm:$0xff]
    %v2431 = vld [vmem:[#allocation5 + $0x38] sm:$0xff]
    %v2433 = vsel %vm1429, %v2423, 0
    %2435 = vmatprep.subr.mxu0 0.0
    %2436 = vmatpush1.msra.mxu0 %v2424
    %2437 = vmatprep.subr.mxu0 0.0
    %2438 = vmatpush1.msra.mxu0 %v2425
    %2439 = vmatprep.subr.mxu0 0.0
    %2440 = vmatpush1.msra.mxu0 %v2426
    %2441 = vmatprep.subr.mxu0 0.0
    %2442 = vmatpush1.msra.mxu0 %v2427
    %2443 = vmatprep.subr.mxu0 0.0
    %2444 = vmatpush1.msra.mxu0 %v2428
    %2445 = vmatprep.subr.mxu0 0.0
    %2446 = vmatpush1.msra.mxu0 %v2429
    %2447 = vmatprep.subr.mxu0 0.0
    %2448 = vmatpush1.msra.mxu0 %v2430
    %2449 = vmatprep.subr.mxu0 0.0
    %2450 = vmatpush1.msra.mxu0 %v2431
    %2451 = vmatprep.subr.mxu0 0.0
    %2452 = vmatpush1.msra.mxu0 0.0
    %2453 = vmatprep.subr.mxu0 0.0
    %2454 = vmatpush1.msra.mxu0 0.0
    %2455 = vmatprep.subr.mxu0 0.0
    %2456 = vmatpush1.msra.mxu0 0.0
    %2457 = vmatprep.subr.mxu0 0.0
    %2458 = vmatpush1.msra.mxu0 0.0
    %2459 = vmatprep.subr.mxu0 0.0
    %2460 = vmatpush1.msra.mxu0 0.0
    %2461 = vmatprep.subr.mxu0 0.0
    %2462 = vmatpush1.msra.mxu0 0.0
    %2463 = vmatprep.subr.mxu0 0.0
    %2464 = vmatpush1.msra.mxu0 0.0
    %2465 = vmatprep.subr.mxu0 0.0
    %2466 = vmatpush1.msra.mxu0 0.0
    %2467 = vmatprep.subr.mxu0 0.0
    %2468 = vmatpush1.msra.mxu0 0.0
    %2469 = vmatprep.subr.mxu0 0.0
    %2470 = vmatpush1.msra.mxu0 0.0
    %2471 = vmatprep.subr.mxu0 0.0
    %2472 = vmatpush1.msra.mxu0 0.0
    %2473 = vmatprep.subr.mxu0 0.0
    %2474 = vmatpush1.msra.mxu0 0.0
    %2475 = vmatprep.subr.mxu0 0.0
    %2476 = vmatpush1.msra.mxu0 0.0
    %2477 = vmatprep.subr.mxu0 0.0
    %2478 = vmatpush1.msra.mxu0 0.0
    %2479 = vmatprep.subr.mxu0 0.0
    %2480 = vmatpush1.msra.mxu0 0.0
    %2481 = vmatprep.subr.mxu0 0.0
    %2482 = vmatpush1.msra.mxu0 0.0
    %2483 = vmatprep.subr.mxu0 0.0
    %2484 = vmatpush1.msra.mxu0 0.0
    %2485 = vmatprep.subr.mxu0 0.0
    %2486 = vmatpush1.msra.mxu0 0.0
    %2487 = vmatprep.subr.mxu0 0.0
    %2488 = vmatpush1.msra.mxu0 0.0
    %2489 = vmatprep.subr.mxu0 0.0
    %2490 = vmatpush1.msra.mxu0 0.0
    %2491 = vmatprep.subr.mxu0 0.0
    %2492 = vmatpush1.msra.mxu0 0.0
    %2493 = vmatprep.subr.mxu0 0.0
    %2494 = vmatpush1.msra.mxu0 0.0
    %2495 = vmatprep.subr.mxu0 0.0
    %2496 = vmatpush1.msra.mxu0 0.0
    %2497 = vmatprep.subr.mxu0 0.0
    %2498 = vmatpush1.msra.mxu0 0.0
    %2499 = vmatprep.mubr.f32.mxu0 0.0
    %2500 = vmatmul.mubr.f32.gmra.mrb[0].mxu0 %v2433
    %v2501 = vpop.f32.mrb[0].mxu0
    %v2502 = vadd.f32 0.0, %v2501
    %v2503 = vpop.f32.mrb[0].mxu0
    %2504 = vdwg.mxu0
    %v2505 = vld [vmem:[#allocation3] sm:$0xff]
    %v2506 = vld [vmem:[#allocation3 + $0x8] sm:$0xff]
    %v2507 = vld [vmem:[#allocation3 + $0x10] sm:$0xff]
    %v2508 = vld [vmem:[#allocation3 + $0x18] sm:$0xff]
    %vm2509 = vcmask 261120
    %v2511 = vsel %vm2509, %v2502, 0
    %2513 = vmatprep.subr.mxu0 0.0
    %2514 = vmatpush1.msra.mxu0 %v2505
    %2515 = vmatprep.subr.mxu0 0.0
    %2516 = vmatpush1.msra.mxu0 %v2506
    %2517 = vmatprep.subr.mxu0 0.0
    %2518 = vmatpush1.msra.mxu0 %v2507
    %2519 = vmatprep.subr.mxu0 0.0
    %2520 = vmatpush1.msra.mxu0 %v2508
    %2521 = vmatprep.subr.mxu0 0.0
    %2522 = vmatpush1.msra.mxu0 0.0
    %2523 = vmatprep.subr.mxu0 0.0
    %2524 = vmatpush1.msra.mxu0 0.0
    %2525 = vmatprep.subr.mxu0 0.0
    %2526 = vmatpush1.msra.mxu0 0.0
    %2527 = vmatprep.subr.mxu0 0.0
    %2528 = vmatpush1.msra.mxu0 0.0
    %2529 = vmatprep.subr.mxu0 0.0
    %2530 = vmatpush1.msra.mxu0 0.0
    %2531 = vmatprep.subr.mxu0 0.0
    %2532 = vmatpush1.msra.mxu0 0.0
    %2533 = vmatprep.subr.mxu0 0.0
    %2534 = vmatpush1.msra.mxu0 0.0
    %2535 = vmatprep.subr.mxu0 0.0
    %2536 = vmatpush1.msra.mxu0 0.0
    %2537 = vmatprep.subr.mxu0 0.0
    %2538 = vmatpush1.msra.mxu0 0.0
    %2539 = vmatprep.subr.mxu0 0.0
    %2540 = vmatpush1.msra.mxu0 0.0
    %2541 = vmatprep.subr.mxu0 0.0
    %2542 = vmatpush1.msra.mxu0 0.0
    %2543 = vmatprep.subr.mxu0 0.0
    %2544 = vmatpush1.msra.mxu0 0.0
    %2545 = vmatprep.subr.mxu0 0.0
    %2546 = vmatpush1.msra.mxu0 0.0
    %2547 = vmatprep.subr.mxu0 0.0
    %2548 = vmatpush1.msra.mxu0 0.0
    %2549 = vmatprep.subr.mxu0 0.0
    %2550 = vmatpush1.msra.mxu0 0.0
    %2551 = vmatprep.subr.mxu0 0.0
    %2552 = vmatpush1.msra.mxu0 0.0
    %2553 = vmatprep.subr.mxu0 0.0
    %2554 = vmatpush1.msra.mxu0 0.0
    %2555 = vmatprep.subr.mxu0 0.0
    %2556 = vmatpush1.msra.mxu0 0.0
    %2557 = vmatprep.subr.mxu0 0.0
    %2558 = vmatpush1.msra.mxu0 0.0
    %2559 = vmatprep.subr.mxu0 0.0
    %2560 = vmatpush1.msra.mxu0 0.0
    %2561 = vmatprep.subr.mxu0 0.0
    %2562 = vmatpush1.msra.mxu0 0.0
    %2563 = vmatprep.subr.mxu0 0.0
    %2564 = vmatpush1.msra.mxu0 0.0
    %2565 = vmatprep.subr.mxu0 0.0
    %2566 = vmatpush1.msra.mxu0 0.0
    %2567 = vmatprep.subr.mxu0 0.0
    %2568 = vmatpush1.msra.mxu0 0.0
    %2569 = vmatprep.subr.mxu0 0.0
    %2570 = vmatpush1.msra.mxu0 0.0
    %2571 = vmatprep.subr.mxu0 0.0
    %2572 = vmatpush1.msra.mxu0 0.0
    %2573 = vmatprep.subr.mxu0 0.0
    %2574 = vmatpush1.msra.mxu0 0.0
    %2575 = vmatprep.subr.mxu0 0.0
    %2576 = vmatpush1.msra.mxu0 0.0
    %2577 = vmatprep.mubr.f32.mxu0 0.0
    %2578 = vmatmul.mubr.f32.gmra.mrb[0].mxu0 %v2511
    %v2579 = vpop.f32.mrb[0].mxu0
    %v2580 = vadd.f32 0.0, %v2579
    %v2581 = vpop.f32.mrb[0].mxu0
    %2582 = vdwg.mxu0
    %s2583 = scalar_lea.vmem [#allocation3], 32
    %v2584 = vld [vmem:[%s2583] sm:$0xff]
    %v2585 = vld [vmem:[%s2583 + $0x8] sm:$0xff]
    %v2586 = vld [vmem:[%s2583 + $0x10] sm:$0xff]
    %v2587 = vld [vmem:[%s2583 + $0x18] sm:$0xff]
    %2588 = vmatprep.subr.mxu0 0.0
    %2589 = vmatpush1.msra.mxu0 %v2584
    %2590 = vmatprep.subr.mxu0 0.0
    %2591 = vmatpush1.msra.mxu0 %v2585
    %2592 = vmatprep.subr.mxu0 0.0
    %2593 = vmatpush1.msra.mxu0 %v2586
    %2594 = vmatprep.subr.mxu0 0.0
    %2595 = vmatpush1.msra.mxu0 %v2587
    %2596 = vmatprep.subr.mxu0 0.0
    %2597 = vmatpush1.msra.mxu0 0.0
    %2598 = vmatprep.subr.mxu0 0.0
    %2599 = vmatpush1.msra.mxu0 0.0
    %2600 = vmatprep.subr.mxu0 0.0
    %2601 = vmatpush1.msra.mxu0 0.0
    %2602 = vmatprep.subr.mxu0 0.0
    %2603 = vmatpush1.msra.mxu0 0.0
    %2604 = vmatprep.subr.mxu0 0.0
    %2605 = vmatpush1.msra.mxu0 0.0
    %2606 = vmatprep.subr.mxu0 0.0
    %2607 = vmatpush1.msra.mxu0 0.0
    %2608 = vmatprep.subr.mxu0 0.0
    %2609 = vmatpush1.msra.mxu0 0.0
    %2610 = vmatprep.subr.mxu0 0.0
    %2611 = vmatpush1.msra.mxu0 0.0
    %2612 = vmatprep.subr.mxu0 0.0
    %2613 = vmatpush1.msra.mxu0 0.0
    %2614 = vmatprep.subr.mxu0 0.0
    %2615 = vmatpush1.msra.mxu0 0.0
    %2616 = vmatprep.subr.mxu0 0.0
    %2617 = vmatpush1.msra.mxu0 0.0
    %2618 = vmatprep.subr.mxu0 0.0
    %2619 = vmatpush1.msra.mxu0 0.0
    %2620 = vmatprep.subr.mxu0 0.0
    %2621 = vmatpush1.msra.mxu0 0.0
    %2622 = vmatprep.subr.mxu0 0.0
    %2623 = vmatpush1.msra.mxu0 0.0
    %2624 = vmatprep.subr.mxu0 0.0
    %2625 = vmatpush1.msra.mxu0 0.0
    %2626 = vmatprep.subr.mxu0 0.0
    %2627 = vmatpush1.msra.mxu0 0.0
    %2628 = vmatprep.subr.mxu0 0.0
    %2629 = vmatpush1.msra.mxu0 0.0
    %2630 = vmatprep.subr.mxu0 0.0
    %2631 = vmatpush1.msra.mxu0 0.0
    %2632 = vmatprep.subr.mxu0 0.0
    %2633 = vmatpush1.msra.mxu0 0.0
    %2634 = vmatprep.subr.mxu0 0.0
    %2635 = vmatpush1.msra.mxu0 0.0
    %2636 = vmatprep.subr.mxu0 0.0
    %2637 = vmatpush1.msra.mxu0 0.0
    %2638 = vmatprep.subr.mxu0 0.0
    %2639 = vmatpush1.msra.mxu0 0.0
    %2640 = vmatprep.subr.mxu0 0.0
    %2641 = vmatpush1.msra.mxu0 0.0
    %2642 = vmatprep.subr.mxu0 0.0
    %2643 = vmatpush1.msra.mxu0 0.0
    %2644 = vmatprep.subr.mxu0 0.0
    %2645 = vmatpush1.msra.mxu0 0.0
    %2646 = vmatprep.subr.mxu0 0.0
    %2647 = vmatpush1.msra.mxu0 0.0
    %2648 = vmatprep.subr.mxu0 0.0
    %2649 = vmatpush1.msra.mxu0 0.0
    %2650 = vmatprep.subr.mxu0 0.0
    %2651 = vmatpush1.msra.mxu0 0.0
    %2652 = vmatprep.mubr.f32.mxu0 0.0
    %2653 = vmatmul.mubr.f32.gmra.mrb[0].mxu0 %v2511
    %v2654 = vpop.f32.mrb[0].mxu0
    %v2655 = vadd.f32 0.0, %v2654
    %v2656 = vpop.f32.mrb[0].mxu0
    %2657 = vdwg.mxu0
    %s2658 = scalar_lea.vmem [#allocation3], 64
    %v2659 = vld [vmem:[%s2658] sm:$0xff]
    %v2660 = vld [vmem:[%s2658 + $0x8] sm:$0xff]
    %v2661 = vld [vmem:[%s2658 + $0x10] sm:$0xff]
    %v2662 = vld [vmem:[%s2658 + $0x18] sm:$0xff]
    %2663 = vmatprep.subr.mxu0 0.0
    %2664 = vmatpush1.msra.mxu0 %v2659
    %2665 = vmatprep.subr.mxu0 0.0
    %2666 = vmatpush1.msra.mxu0 %v2660
    %2667 = vmatprep.subr.mxu0 0.0
    %2668 = vmatpush1.msra.mxu0 %v2661
    %2669 = vmatprep.subr.mxu0 0.0
    %2670 = vmatpush1.msra.mxu0 %v2662
    %2671 = vmatprep.subr.mxu0 0.0
    %2672 = vmatpush1.msra.mxu0 0.0
    %2673 = vmatprep.subr.mxu0 0.0
    %2674 = vmatpush1.msra.mxu0 0.0
    %2675 = vmatprep.subr.mxu0 0.0
    %2676 = vmatpush1.msra.mxu0 0.0
    %2677 = vmatprep.subr.mxu0 0.0
    %2678 = vmatpush1.msra.mxu0 0.0
    %2679 = vmatprep.subr.mxu0 0.0
    %2680 = vmatpush1.msra.mxu0 0.0
    %2681 = vmatprep.subr.mxu0 0.0
    %2682 = vmatpush1.msra.mxu0 0.0
    %2683 = vmatprep.subr.mxu0 0.0
    %2684 = vmatpush1.msra.mxu0 0.0
    %2685 = vmatprep.subr.mxu0 0.0
    %2686 = vmatpush1.msra.mxu0 0.0
    %2687 = vmatprep.subr.mxu0 0.0
    %2688 = vmatpush1.msra.mxu0 0.0
    %2689 = vmatprep.subr.mxu0 0.0
    %2690 = vmatpush1.msra.mxu0 0.0
    %2691 = vmatprep.subr.mxu0 0.0
    %2692 = vmatpush1.msra.mxu0 0.0
    %2693 = vmatprep.subr.mxu0 0.0
    %2694 = vmatpush1.msra.mxu0 0.0
    %2695 = vmatprep.subr.mxu0 0.0
    %2696 = vmatpush1.msra.mxu0 0.0
    %2697 = vmatprep.subr.mxu0 0.0
    %2698 = vmatpush1.msra.mxu0 0.0
    %2699 = vmatprep.subr.mxu0 0.0
    %2700 = vmatpush1.msra.mxu0 0.0
    %2701 = vmatprep.subr.mxu0 0.0
    %2702 = vmatpush1.msra.mxu0 0.0
    %2703 = vmatprep.subr.mxu0 0.0
    %2704 = vmatpush1.msra.mxu0 0.0
    %2705 = vmatprep.subr.mxu0 0.0
    %2706 = vmatpush1.msra.mxu0 0.0
    %2707 = vmatprep.subr.mxu0 0.0
    %2708 = vmatpush1.msra.mxu0 0.0
    %2709 = vmatprep.subr.mxu0 0.0
    %2710 = vmatpush1.msra.mxu0 0.0
    %2711 = vmatprep.subr.mxu0 0.0
    %2712 = vmatpush1.msra.mxu0 0.0
    %2713 = vmatprep.subr.mxu0 0.0
    %2714 = vmatpush1.msra.mxu0 0.0
    %2715 = vmatprep.subr.mxu0 0.0
    %2716 = vmatpush1.msra.mxu0 0.0
    %2717 = vmatprep.subr.mxu0 0.0
    %2718 = vmatpush1.msra.mxu0 0.0
    %2719 = vmatprep.subr.mxu0 0.0
    %2720 = vmatpush1.msra.mxu0 0.0
    %2721 = vmatprep.subr.mxu0 0.0
    %2722 = vmatpush1.msra.mxu0 0.0
    %2723 = vmatprep.subr.mxu0 0.0
    %2724 = vmatpush1.msra.mxu0 0.0
    %2725 = vmatprep.subr.mxu0 0.0
    %2726 = vmatpush1.msra.mxu0 0.0
    %2727 = vmatprep.mubr.f32.mxu0 0.0
    %2728 = vmatmul.mubr.f32.gmra.mrb[0].mxu0 %v2511
    %v2729 = vpop.f32.mrb[0].mxu0
    %v2730 = vadd.f32 0.0, %v2729
    %v2731 = vpop.f32.mrb[0].mxu0
    %2732 = vdwg.mxu0
    %s2733 = scalar_lea.vmem [#allocation3], 96
    %v2734 = vld [vmem:[%s2733] sm:$0xff]
    %v2735 = vld [vmem:[%s2733 + $0x8] sm:$0xff]
    %v2736 = vld [vmem:[%s2733 + $0x10] sm:$0xff]
    %v2737 = vld [vmem:[%s2733 + $0x18] sm:$0xff]
    %2738 = vmatprep.subr.mxu0 0.0
    %2739 = vmatpush1.msra.mxu0 %v2734
    %2740 = vmatprep.subr.mxu0 0.0
    %2741 = vmatpush1.msra.mxu0 %v2735
    %2742 = vmatprep.subr.mxu0 0.0
    %2743 = vmatpush1.msra.mxu0 %v2736
    %2744 = vmatprep.subr.mxu0 0.0
    %2745 = vmatpush1.msra.mxu0 %v2737
    %2746 = vmatprep.subr.mxu0 0.0
    %2747 = vmatpush1.msra.mxu0 0.0
    %2748 = vmatprep.subr.mxu0 0.0
    %2749 = vmatpush1.msra.mxu0 0.0
    %2750 = vmatprep.subr.mxu0 0.0
    %2751 = vmatpush1.msra.mxu0 0.0
    %2752 = vmatprep.subr.mxu0 0.0
    %2753 = vmatpush1.msra.mxu0 0.0
    %2754 = vmatprep.subr.mxu0 0.0
    %2755 = vmatpush1.msra.mxu0 0.0
    %2756 = vmatprep.subr.mxu0 0.0
    %2757 = vmatpush1.msra.mxu0 0.0
    %2758 = vmatprep.subr.mxu0 0.0
    %2759 = vmatpush1.msra.mxu0 0.0
    %2760 = vmatprep.subr.mxu0 0.0
    %2761 = vmatpush1.msra.mxu0 0.0
    %2762 = vmatprep.subr.mxu0 0.0
    %2763 = vmatpush1.msra.mxu0 0.0
    %2764 = vmatprep.subr.mxu0 0.0
    %2765 = vmatpush1.msra.mxu0 0.0
    %2766 = vmatprep.subr.mxu0 0.0
    %2767 = vmatpush1.msra.mxu0 0.0
    %2768 = vmatprep.subr.mxu0 0.0
    %2769 = vmatpush1.msra.mxu0 0.0
    %2770 = vmatprep.subr.mxu0 0.0
    %2771 = vmatpush1.msra.mxu0 0.0
    %2772 = vmatprep.subr.mxu0 0.0
    %2773 = vmatpush1.msra.mxu0 0.0
    %2774 = vmatprep.subr.mxu0 0.0
    %2775 = vmatpush1.msra.mxu0 0.0
    %2776 = vmatprep.subr.mxu0 0.0
    %2777 = vmatpush1.msra.mxu0 0.0
    %2778 = vmatprep.subr.mxu0 0.0
    %2779 = vmatpush1.msra.mxu0 0.0
    %2780 = vmatprep.subr.mxu0 0.0
    %2781 = vmatpush1.msra.mxu0 0.0
    %2782 = vmatprep.subr.mxu0 0.0
    %2783 = vmatpush1.msra.mxu0 0.0
    %2784 = vmatprep.subr.mxu0 0.0
    %2785 = vmatpush1.msra.mxu0 0.0
    %2786 = vmatprep.subr.mxu0 0.0
    %2787 = vmatpush1.msra.mxu0 0.0
    %2788 = vmatprep.subr.mxu0 0.0
    %2789 = vmatpush1.msra.mxu0 0.0
    %2790 = vmatprep.subr.mxu0 0.0
    %2791 = vmatpush1.msra.mxu0 0.0
    %2792 = vmatprep.subr.mxu0 0.0
    %2793 = vmatpush1.msra.mxu0 0.0
    %2794 = vmatprep.subr.mxu0 0.0
    %2795 = vmatpush1.msra.mxu0 0.0
    %2796 = vmatprep.subr.mxu0 0.0
    %2797 = vmatpush1.msra.mxu0 0.0
    %2798 = vmatprep.subr.mxu0 0.0
    %2799 = vmatpush1.msra.mxu0 0.0
    %2800 = vmatprep.subr.mxu0 0.0
    %2801 = vmatpush1.msra.mxu0 0.0
    %2802 = vmatprep.mubr.f32.mxu0 0.0
    %2803 = vmatmul.mubr.f32.gmra.mrb[0].mxu0 %v2511
    %v2804 = vpop.f32.mrb[0].mxu0
    %v2805 = vadd.f32 0.0, %v2804
    %v2806 = vpop.f32.mrb[0].mxu0
    %2807 = vdwg.mxu0
    %s2808 = scalar_lea.vmem [#allocation3], 128
    %v2809 = vld [vmem:[%s2808] sm:$0xff]
    %v2810 = vld [vmem:[%s2808 + $0x8] sm:$0xff]
    %v2811 = vld [vmem:[%s2808 + $0x10] sm:$0xff]
    %v2812 = vld [vmem:[%s2808 + $0x18] sm:$0xff]
    %2813 = vmatprep.subr.mxu0 0.0
    %2814 = vmatpush1.msra.mxu0 %v2809
    %2815 = vmatprep.subr.mxu0 0.0
    %2816 = vmatpush1.msra.mxu0 %v2810
    %2817 = vmatprep.subr.mxu0 0.0
    %2818 = vmatpush1.msra.mxu0 %v2811
    %2819 = vmatprep.subr.mxu0 0.0
    %2820 = vmatpush1.msra.mxu0 %v2812
    %2821 = vmatprep.subr.mxu0 0.0
    %2822 = vmatpush1.msra.mxu0 0.0
    %2823 = vmatprep.subr.mxu0 0.0
    %2824 = vmatpush1.msra.mxu0 0.0
    %2825 = vmatprep.subr.mxu0 0.0
    %2826 = vmatpush1.msra.mxu0 0.0
    %2827 = vmatprep.subr.mxu0 0.0
    %2828 = vmatpush1.msra.mxu0 0.0
    %2829 = vmatprep.subr.mxu0 0.0
    %2830 = vmatpush1.msra.mxu0 0.0
    %2831 = vmatprep.subr.mxu0 0.0
    %2832 = vmatpush1.msra.mxu0 0.0
    %2833 = vmatprep.subr.mxu0 0.0
    %2834 = vmatpush1.msra.mxu0 0.0
    %2835 = vmatprep.subr.mxu0 0.0
    %2836 = vmatpush1.msra.mxu0 0.0
    %2837 = vmatprep.subr.mxu0 0.0
    %2838 = vmatpush1.msra.mxu0 0.0
    %2839 = vmatprep.subr.mxu0 0.0
    %2840 = vmatpush1.msra.mxu0 0.0
    %2841 = vmatprep.subr.mxu0 0.0
    %2842 = vmatpush1.msra.mxu0 0.0
    %2843 = vmatprep.subr.mxu0 0.0
    %2844 = vmatpush1.msra.mxu0 0.0
    %2845 = vmatprep.subr.mxu0 0.0
    %2846 = vmatpush1.msra.mxu0 0.0
    %2847 = vmatprep.subr.mxu0 0.0
    %2848 = vmatpush1.msra.mxu0 0.0
    %2849 = vmatprep.subr.mxu0 0.0
    %2850 = vmatpush1.msra.mxu0 0.0
    %2851 = vmatprep.subr.mxu0 0.0
    %2852 = vmatpush1.msra.mxu0 0.0
    %2853 = vmatprep.subr.mxu0 0.0
    %2854 = vmatpush1.msra.mxu0 0.0
    %2855 = vmatprep.subr.mxu0 0.0
    %2856 = vmatpush1.msra.mxu0 0.0
    %2857 = vmatprep.subr.mxu0 0.0
    %2858 = vmatpush1.msra.mxu0 0.0
    %2859 = vmatprep.subr.mxu0 0.0
    %2860 = vmatpush1.msra.mxu0 0.0
    %2861 = vmatprep.subr.mxu0 0.0
    %2862 = vmatpush1.msra.mxu0 0.0
    %2863 = vmatprep.subr.mxu0 0.0
    %2864 = vmatpush1.msra.mxu0 0.0
    %2865 = vmatprep.subr.mxu0 0.0
    %2866 = vmatpush1.msra.mxu0 0.0
    %2867 = vmatprep.subr.mxu0 0.0
    %2868 = vmatpush1.msra.mxu0 0.0
    %2869 = vmatprep.subr.mxu0 0.0
    %2870 = vmatpush1.msra.mxu0 0.0
    %2871 = vmatprep.subr.mxu0 0.0
    %2872 = vmatpush1.msra.mxu0 0.0
    %2873 = vmatprep.subr.mxu0 0.0
    %2874 = vmatpush1.msra.mxu0 0.0
    %2875 = vmatprep.subr.mxu0 0.0
    %2876 = vmatpush1.msra.mxu0 0.0
    %2877 = vmatprep.mubr.f32.mxu0 0.0
    %2878 = vmatmul.mubr.f32.gmra.mrb[0].mxu0 %v2511
    %v2879 = vpop.f32.mrb[0].mxu0
    %v2880 = vadd.f32 0.0, %v2879
    %v2881 = vpop.f32.mrb[0].mxu0
    %2882 = vdwg.mxu0
    %s2883 = scalar_lea.vmem [#allocation3], 160
    %v2884 = vld [vmem:[%s2883] sm:$0xff]
    %v2885 = vld [vmem:[%s2883 + $0x8] sm:$0xff]
    %v2886 = vld [vmem:[%s2883 + $0x10] sm:$0xff]
    %v2887 = vld [vmem:[%s2883 + $0x18] sm:$0xff]
    %2888 = vmatprep.subr.mxu0 0.0
    %2889 = vmatpush1.msra.mxu0 %v2884
    %2890 = vmatprep.subr.mxu0 0.0
    %2891 = vmatpush1.msra.mxu0 %v2885
    %2892 = vmatprep.subr.mxu0 0.0
    %2893 = vmatpush1.msra.mxu0 %v2886
    %2894 = vmatprep.subr.mxu0 0.0
    %2895 = vmatpush1.msra.mxu0 %v2887
    %2896 = vmatprep.subr.mxu0 0.0
    %2897 = vmatpush1.msra.mxu0 0.0
    %2898 = vmatprep.subr.mxu0 0.0
    %2899 = vmatpush1.msra.mxu0 0.0
    %2900 = vmatprep.subr.mxu0 0.0
    %2901 = vmatpush1.msra.mxu0 0.0
    %2902 = vmatprep.subr.mxu0 0.0
    %2903 = vmatpush1.msra.mxu0 0.0
    %2904 = vmatprep.subr.mxu0 0.0
    %2905 = vmatpush1.msra.mxu0 0.0
    %2906 = vmatprep.subr.mxu0 0.0
    %2907 = vmatpush1.msra.mxu0 0.0
    %2908 = vmatprep.subr.mxu0 0.0
    %2909 = vmatpush1.msra.mxu0 0.0
    %2910 = vmatprep.subr.mxu0 0.0
    %2911 = vmatpush1.msra.mxu0 0.0
    %2912 = vmatprep.subr.mxu0 0.0
    %2913 = vmatpush1.msra.mxu0 0.0
    %2914 = vmatprep.subr.mxu0 0.0
    %2915 = vmatpush1.msra.mxu0 0.0
    %2916 = vmatprep.subr.mxu0 0.0
    %2917 = vmatpush1.msra.mxu0 0.0
    %2918 = vmatprep.subr.mxu0 0.0
    %2919 = vmatpush1.msra.mxu0 0.0
    %2920 = vmatprep.subr.mxu0 0.0
    %2921 = vmatpush1.msra.mxu0 0.0
    %2922 = vmatprep.subr.mxu0 0.0
    %2923 = vmatpush1.msra.mxu0 0.0
    %2924 = vmatprep.subr.mxu0 0.0
    %2925 = vmatpush1.msra.mxu0 0.0
    %2926 = vmatprep.subr.mxu0 0.0
    %2927 = vmatpush1.msra.mxu0 0.0
    %2928 = vmatprep.subr.mxu0 0.0
    %2929 = vmatpush1.msra.mxu0 0.0
    %2930 = vmatprep.subr.mxu0 0.0
    %2931 = vmatpush1.msra.mxu0 0.0
    %2932 = vmatprep.subr.mxu0 0.0
    %2933 = vmatpush1.msra.mxu0 0.0
    %2934 = vmatprep.subr.mxu0 0.0
    %2935 = vmatpush1.msra.mxu0 0.0
    %2936 = vmatprep.subr.mxu0 0.0
    %2937 = vmatpush1.msra.mxu0 0.0
    %2938 = vmatprep.subr.mxu0 0.0
    %2939 = vmatpush1.msra.mxu0 0.0
    %2940 = vmatprep.subr.mxu0 0.0
    %2941 = vmatpush1.msra.mxu0 0.0
    %2942 = vmatprep.subr.mxu0 0.0
    %2943 = vmatpush1.msra.mxu0 0.0
    %2944 = vmatprep.subr.mxu0 0.0
    %2945 = vmatpush1.msra.mxu0 0.0
    %2946 = vmatprep.subr.mxu0 0.0
    %2947 = vmatpush1.msra.mxu0 0.0
    %2948 = vmatprep.subr.mxu0 0.0
    %2949 = vmatpush1.msra.mxu0 0.0
    %2950 = vmatprep.subr.mxu0 0.0
    %2951 = vmatpush1.msra.mxu0 0.0
    %2952 = vmatprep.mubr.f32.mxu0 0.0
    %2953 = vmatmul.mubr.f32.gmra.mrb[0].mxu0 %v2511
    %v2954 = vpop.f32.mrb[0].mxu0
    %v2955 = vadd.f32 0.0, %v2954
    %v2956 = vpop.f32.mrb[0].mxu0
    %2957 = vdwg.mxu0
    %s2958 = scalar_lea.vmem [#allocation3], 192
    %v2959 = vld [vmem:[%s2958] sm:$0xff]
    %v2960 = vld [vmem:[%s2958 + $0x8] sm:$0xff]
    %v2961 = vld [vmem:[%s2958 + $0x10] sm:$0xff]
    %v2962 = vld [vmem:[%s2958 + $0x18] sm:$0xff]
    %2963 = vmatprep.subr.mxu0 0.0
    %2964 = vmatpush1.msra.mxu0 %v2959
    %2965 = vmatprep.subr.mxu0 0.0
    %2966 = vmatpush1.msra.mxu0 %v2960
    %2967 = vmatprep.subr.mxu0 0.0
    %2968 = vmatpush1.msra.mxu0 %v2961
    %2969 = vmatprep.subr.mxu0 0.0
    %2970 = vmatpush1.msra.mxu0 %v2962
    %2971 = vmatprep.subr.mxu0 0.0
    %2972 = vmatpush1.msra.mxu0 0.0
    %2973 = vmatprep.subr.mxu0 0.0
    %2974 = vmatpush1.msra.mxu0 0.0
    %2975 = vmatprep.subr.mxu0 0.0
    %2976 = vmatpush1.msra.mxu0 0.0
    %2977 = vmatprep.subr.mxu0 0.0
    %2978 = vmatpush1.msra.mxu0 0.0
    %2979 = vmatprep.subr.mxu0 0.0
    %2980 = vmatpush1.msra.mxu0 0.0
    %2981 = vmatprep.subr.mxu0 0.0
    %2982 = vmatpush1.msra.mxu0 0.0
    %2983 = vmatprep.subr.mxu0 0.0
    %2984 = vmatpush1.msra.mxu0 0.0
    %2985 = vmatprep.subr.mxu0 0.0
    %2986 = vmatpush1.msra.mxu0 0.0
    %2987 = vmatprep.subr.mxu0 0.0
    %2988 = vmatpush1.msra.mxu0 0.0
    %2989 = vmatprep.subr.mxu0 0.0
    %2990 = vmatpush1.msra.mxu0 0.0
    %2991 = vmatprep.subr.mxu0 0.0
    %2992 = vmatpush1.msra.mxu0 0.0
    %2993 = vmatprep.subr.mxu0 0.0
    %2994 = vmatpush1.msra.mxu0 0.0
    %2995 = vmatprep.subr.mxu0 0.0
    %2996 = vmatpush1.msra.mxu0 0.0
    %2997 = vmatprep.subr.mxu0 0.0
    %2998 = vmatpush1.msra.mxu0 0.0
    %2999 = vmatprep.subr.mxu0 0.0
    %3000 = vmatpush1.msra.mxu0 0.0
    %3001 = vmatprep.subr.mxu0 0.0
    %3002 = vmatpush1.msra.mxu0 0.0
    %3003 = vmatprep.subr.mxu0 0.0
    %3004 = vmatpush1.msra.mxu0 0.0
    %3005 = vmatprep.subr.mxu0 0.0
    %3006 = vmatpush1.msra.mxu0 0.0
    %3007 = vmatprep.subr.mxu0 0.0
    %3008 = vmatpush1.msra.mxu0 0.0
    %3009 = vmatprep.subr.mxu0 0.0
    %3010 = vmatpush1.msra.mxu0 0.0
    %3011 = vmatprep.subr.mxu0 0.0
    %3012 = vmatpush1.msra.mxu0 0.0
    %3013 = vmatprep.subr.mxu0 0.0
    %3014 = vmatpush1.msra.mxu0 0.0
    %3015 = vmatprep.subr.mxu0 0.0
    %3016 = vmatpush1.msra.mxu0 0.0
    %3017 = vmatprep.subr.mxu0 0.0
    %3018 = vmatpush1.msra.mxu0 0.0
    %3019 = vmatprep.subr.mxu0 0.0
    %3020 = vmatpush1.msra.mxu0 0.0
    %3021 = vmatprep.subr.mxu0 0.0
    %3022 = vmatpush1.msra.mxu0 0.0
    %3023 = vmatprep.subr.mxu0 0.0
    %3024 = vmatpush1.msra.mxu0 0.0
    %3025 = vmatprep.subr.mxu0 0.0
    %3026 = vmatpush1.msra.mxu0 0.0
    %3027 = vmatprep.mubr.f32.mxu0 0.0
    %3028 = vmatmul.mubr.f32.gmra.mrb[0].mxu0 %v2511
    %v3029 = vpop.f32.mrb[0].mxu0
    %v3030 = vadd.f32 0.0, %v3029
    %v3031 = vpop.f32.mrb[0].mxu0
    %3032 = vdwg.mxu0
    %s3033 = scalar_lea.vmem [#allocation3], 224
    %v3034 = vld [vmem:[%s3033] sm:$0xff]
    %v3035 = vld [vmem:[%s3033 + $0x8] sm:$0xff]
    %v3036 = vld [vmem:[%s3033 + $0x10] sm:$0xff]
    %v3037 = vld [vmem:[%s3033 + $0x18] sm:$0xff]
    %3038 = vmatprep.subr.mxu0 0.0
    %3039 = vmatpush1.msra.mxu0 %v3034
    %3040 = vmatprep.subr.mxu0 0.0
    %3041 = vmatpush1.msra.mxu0 %v3035
    %3042 = vmatprep.subr.mxu0 0.0
    %3043 = vmatpush1.msra.mxu0 %v3036
    %3044 = vmatprep.subr.mxu0 0.0
    %3045 = vmatpush1.msra.mxu0 %v3037
    %3046 = vmatprep.subr.mxu0 0.0
    %3047 = vmatpush1.msra.mxu0 0.0
    %3048 = vmatprep.subr.mxu0 0.0
    %3049 = vmatpush1.msra.mxu0 0.0
    %3050 = vmatprep.subr.mxu0 0.0
    %3051 = vmatpush1.msra.mxu0 0.0
    %3052 = vmatprep.subr.mxu0 0.0
    %3053 = vmatpush1.msra.mxu0 0.0
    %3054 = vmatprep.subr.mxu0 0.0
    %3055 = vmatpush1.msra.mxu0 0.0
    %3056 = vmatprep.subr.mxu0 0.0
    %3057 = vmatpush1.msra.mxu0 0.0
    %3058 = vmatprep.subr.mxu0 0.0
    %3059 = vmatpush1.msra.mxu0 0.0
    %3060 = vmatprep.subr.mxu0 0.0
    %3061 = vmatpush1.msra.mxu0 0.0
    %3062 = vmatprep.subr.mxu0 0.0
    %3063 = vmatpush1.msra.mxu0 0.0
    %3064 = vmatprep.subr.mxu0 0.0
    %3065 = vmatpush1.msra.mxu0 0.0
    %3066 = vmatprep.subr.mxu0 0.0
    %3067 = vmatpush1.msra.mxu0 0.0
    %3068 = vmatprep.subr.mxu0 0.0
    %3069 = vmatpush1.msra.mxu0 0.0
    %3070 = vmatprep.subr.mxu0 0.0
    %3071 = vmatpush1.msra.mxu0 0.0
    %3072 = vmatprep.subr.mxu0 0.0
    %3073 = vmatpush1.msra.mxu0 0.0
    %3074 = vmatprep.subr.mxu0 0.0
    %3075 = vmatpush1.msra.mxu0 0.0
    %3076 = vmatprep.subr.mxu0 0.0
    %3077 = vmatpush1.msra.mxu0 0.0
    %3078 = vmatprep.subr.mxu0 0.0
    %3079 = vmatpush1.msra.mxu0 0.0
    %3080 = vmatprep.subr.mxu0 0.0
    %3081 = vmatpush1.msra.mxu0 0.0
    %3082 = vmatprep.subr.mxu0 0.0
    %3083 = vmatpush1.msra.mxu0 0.0
    %3084 = vmatprep.subr.mxu0 0.0
    %3085 = vmatpush1.msra.mxu0 0.0
    %3086 = vmatprep.subr.mxu0 0.0
    %3087 = vmatpush1.msra.mxu0 0.0
    %3088 = vmatprep.subr.mxu0 0.0
    %3089 = vmatpush1.msra.mxu0 0.0
    %3090 = vmatprep.subr.mxu0 0.0
    %3091 = vmatpush1.msra.mxu0 0.0
    %3092 = vmatprep.subr.mxu0 0.0
    %3093 = vmatpush1.msra.mxu0 0.0
    %3094 = vmatprep.subr.mxu0 0.0
    %3095 = vmatpush1.msra.mxu0 0.0
    %3096 = vmatprep.subr.mxu0 0.0
    %3097 = vmatpush1.msra.mxu0 0.0
    %3098 = vmatprep.subr.mxu0 0.0
    %3099 = vmatpush1.msra.mxu0 0.0
    %3100 = vmatprep.subr.mxu0 0.0
    %3101 = vmatpush1.msra.mxu0 0.0
    %3102 = vmatprep.mubr.f32.mxu0 0.0
    %3103 = vmatmul.mubr.f32.gmra.mrb[0].mxu0 %v2511
    %v3104 = vpop.f32.mrb[0].mxu0
    %v3105 = vadd.f32 0.0, %v3104
    %v3106 = vpop.f32.mrb[0].mxu0
    %3107 = vdwg.mxu0
    %s3108 = scalar_lea.vmem [#allocation3], 256
    %v3109 = vld [vmem:[%s3108] sm:$0xff]
    %v3110 = vld [vmem:[%s3108 + $0x8] sm:$0xff]
    %v3111 = vld [vmem:[%s3108 + $0x10] sm:$0xff]
    %v3112 = vld [vmem:[%s3108 + $0x18] sm:$0xff]
    %3113 = vmatprep.subr.mxu0 0.0
    %3114 = vmatpush1.msra.mxu0 %v3109
    %3115 = vmatprep.subr.mxu0 0.0
    %3116 = vmatpush1.msra.mxu0 %v3110
    %3117 = vmatprep.subr.mxu0 0.0
    %3118 = vmatpush1.msra.mxu0 %v3111
    %3119 = vmatprep.subr.mxu0 0.0
    %3120 = vmatpush1.msra.mxu0 %v3112
    %3121 = vmatprep.subr.mxu0 0.0
    %3122 = vmatpush1.msra.mxu0 0.0
    %3123 = vmatprep.subr.mxu0 0.0
    %3124 = vmatpush1.msra.mxu0 0.0
    %3125 = vmatprep.subr.mxu0 0.0
    %3126 = vmatpush1.msra.mxu0 0.0
    %3127 = vmatprep.subr.mxu0 0.0
    %3128 = vmatpush1.msra.mxu0 0.0
    %3129 = vmatprep.subr.mxu0 0.0
    %3130 = vmatpush1.msra.mxu0 0.0
    %3131 = vmatprep.subr.mxu0 0.0
    %3132 = vmatpush1.msra.mxu0 0.0
    %3133 = vmatprep.subr.mxu0 0.0
    %3134 = vmatpush1.msra.mxu0 0.0
    %3135 = vmatprep.subr.mxu0 0.0
    %3136 = vmatpush1.msra.mxu0 0.0
    %3137 = vmatprep.subr.mxu0 0.0
    %3138 = vmatpush1.msra.mxu0 0.0
    %3139 = vmatprep.subr.mxu0 0.0
    %3140 = vmatpush1.msra.mxu0 0.0
    %3141 = vmatprep.subr.mxu0 0.0
    %3142 = vmatpush1.msra.mxu0 0.0
    %3143 = vmatprep.subr.mxu0 0.0
    %3144 = vmatpush1.msra.mxu0 0.0
    %3145 = vmatprep.subr.mxu0 0.0
    %3146 = vmatpush1.msra.mxu0 0.0
    %3147 = vmatprep.subr.mxu0 0.0
    %3148 = vmatpush1.msra.mxu0 0.0
    %3149 = vmatprep.subr.mxu0 0.0
    %3150 = vmatpush1.msra.mxu0 0.0
    %3151 = vmatprep.subr.mxu0 0.0
    %3152 = vmatpush1.msra.mxu0 0.0
    %3153 = vmatprep.subr.mxu0 0.0
    %3154 = vmatpush1.msra.mxu0 0.0
    %3155 = vmatprep.subr.mxu0 0.0
    %3156 = vmatpush1.msra.mxu0 0.0
    %3157 = vmatprep.subr.mxu0 0.0
    %3158 = vmatpush1.msra.mxu0 0.0
    %3159 = vmatprep.subr.mxu0 0.0
    %3160 = vmatpush1.msra.mxu0 0.0
    %3161 = vmatprep.subr.mxu0 0.0
    %3162 = vmatpush1.msra.mxu0 0.0
    %3163 = vmatprep.subr.mxu0 0.0
    %3164 = vmatpush1.msra.mxu0 0.0
    %3165 = vmatprep.subr.mxu0 0.0
    %3166 = vmatpush1.msra.mxu0 0.0
    %3167 = vmatprep.subr.mxu0 0.0
    %3168 = vmatpush1.msra.mxu0 0.0
    %3169 = vmatprep.subr.mxu0 0.0
    %3170 = vmatpush1.msra.mxu0 0.0
    %3171 = vmatprep.subr.mxu0 0.0
    %3172 = vmatpush1.msra.mxu0 0.0
    %3173 = vmatprep.subr.mxu0 0.0
    %3174 = vmatpush1.msra.mxu0 0.0
    %3175 = vmatprep.subr.mxu0 0.0
    %3176 = vmatpush1.msra.mxu0 0.0
    %3177 = vmatprep.mubr.f32.mxu0 0.0
    %3178 = vmatmul.mubr.f32.gmra.mrb[0].mxu0 %v2511
    %v3179 = vpop.f32.mrb[0].mxu0
    %v3180 = vadd.f32 0.0, %v3179
    %v3181 = vpop.f32.mrb[0].mxu0
    %3182 = vdwg.mxu0
    %s3183 = scalar_lea.vmem [#allocation3], 288
    %v3184 = vld [vmem:[%s3183] sm:$0xff]
    %v3185 = vld [vmem:[%s3183 + $0x8] sm:$0xff]
    %v3186 = vld [vmem:[%s3183 + $0x10] sm:$0xff]
    %v3187 = vld [vmem:[%s3183 + $0x18] sm:$0xff]
    %3188 = vmatprep.subr.mxu0 0.0
    %3189 = vmatpush1.msra.mxu0 %v3184
    %3190 = vmatprep.subr.mxu0 0.0
    %3191 = vmatpush1.msra.mxu0 %v3185
    %3192 = vmatprep.subr.mxu0 0.0
    %3193 = vmatpush1.msra.mxu0 %v3186
    %3194 = vmatprep.subr.mxu0 0.0
    %3195 = vmatpush1.msra.mxu0 %v3187
    %3196 = vmatprep.subr.mxu0 0.0
    %3197 = vmatpush1.msra.mxu0 0.0
    %3198 = vmatprep.subr.mxu0 0.0
    %3199 = vmatpush1.msra.mxu0 0.0
    %3200 = vmatprep.subr.mxu0 0.0
    %3201 = vmatpush1.msra.mxu0 0.0
    %3202 = vmatprep.subr.mxu0 0.0
    %3203 = vmatpush1.msra.mxu0 0.0
    %3204 = vmatprep.subr.mxu0 0.0
    %3205 = vmatpush1.msra.mxu0 0.0
    %3206 = vmatprep.subr.mxu0 0.0
    %3207 = vmatpush1.msra.mxu0 0.0
    %3208 = vmatprep.subr.mxu0 0.0
    %3209 = vmatpush1.msra.mxu0 0.0
    %3210 = vmatprep.subr.mxu0 0.0
    %3211 = vmatpush1.msra.mxu0 0.0
    %3212 = vmatprep.subr.mxu0 0.0
    %3213 = vmatpush1.msra.mxu0 0.0
    %3214 = vmatprep.subr.mxu0 0.0
    %3215 = vmatpush1.msra.mxu0 0.0
    %3216 = vmatprep.subr.mxu0 0.0
    %3217 = vmatpush1.msra.mxu0 0.0
    %3218 = vmatprep.subr.mxu0 0.0
    %3219 = vmatpush1.msra.mxu0 0.0
    %3220 = vmatprep.subr.mxu0 0.0
    %3221 = vmatpush1.msra.mxu0 0.0
    %3222 = vmatprep.subr.mxu0 0.0
    %3223 = vmatpush1.msra.mxu0 0.0
    %3224 = vmatprep.subr.mxu0 0.0
    %3225 = vmatpush1.msra.mxu0 0.0
    %3226 = vmatprep.subr.mxu0 0.0
    %3227 = vmatpush1.msra.mxu0 0.0
    %3228 = vmatprep.subr.mxu0 0.0
    %3229 = vmatpush1.msra.mxu0 0.0
    %3230 = vmatprep.subr.mxu0 0.0
    %3231 = vmatpush1.msra.mxu0 0.0
    %3232 = vmatprep.subr.mxu0 0.0
    %3233 = vmatpush1.msra.mxu0 0.0
    %3234 = vmatprep.subr.mxu0 0.0
    %3235 = vmatpush1.msra.mxu0 0.0
    %3236 = vmatprep.subr.mxu0 0.0
    %3237 = vmatpush1.msra.mxu0 0.0
    %3238 = vmatprep.subr.mxu0 0.0
    %3239 = vmatpush1.msra.mxu0 0.0
    %3240 = vmatprep.subr.mxu0 0.0
    %3241 = vmatpush1.msra.mxu0 0.0
    %3242 = vmatprep.subr.mxu0 0.0
    %3243 = vmatpush1.msra.mxu0 0.0
    %3244 = vmatprep.subr.mxu0 0.0
    %3245 = vmatpush1.msra.mxu0 0.0
    %3246 = vmatprep.subr.mxu0 0.0
    %3247 = vmatpush1.msra.mxu0 0.0
    %3248 = vmatprep.subr.mxu0 0.0
    %3249 = vmatpush1.msra.mxu0 0.0
    %3250 = vmatprep.subr.mxu0 0.0
    %3251 = vmatpush1.msra.mxu0 0.0
    %3252 = vmatprep.mubr.f32.mxu0 0.0
    %3253 = vmatmul.mubr.f32.gmra.mrb[0].mxu0 %v2511
    %v3254 = vpop.f32.mrb[0].mxu0
    %v3255 = vadd.f32 0.0, %v3254
    %v3256 = vpop.f32.mrb[0].mxu0
    %3257 = vdwg.mxu0
    %s3258 = scalar_lea.vmem [#allocation3], 320
    %v3259 = vld [vmem:[%s3258] sm:$0xff]
    %v3260 = vld [vmem:[%s3258 + $0x8] sm:$0xff]
    %v3261 = vld [vmem:[%s3258 + $0x10] sm:$0xff]
    %v3262 = vld [vmem:[%s3258 + $0x18] sm:$0xff]
    %3263 = vmatprep.subr.mxu0 0.0
    %3264 = vmatpush1.msra.mxu0 %v3259
    %3265 = vmatprep.subr.mxu0 0.0
    %3266 = vmatpush1.msra.mxu0 %v3260
    %3267 = vmatprep.subr.mxu0 0.0
    %3268 = vmatpush1.msra.mxu0 %v3261
    %3269 = vmatprep.subr.mxu0 0.0
    %3270 = vmatpush1.msra.mxu0 %v3262
    %3271 = vmatprep.subr.mxu0 0.0
    %3272 = vmatpush1.msra.mxu0 0.0
    %3273 = vmatprep.subr.mxu0 0.0
    %3274 = vmatpush1.msra.mxu0 0.0
    %3275 = vmatprep.subr.mxu0 0.0
    %3276 = vmatpush1.msra.mxu0 0.0
    %3277 = vmatprep.subr.mxu0 0.0
    %3278 = vmatpush1.msra.mxu0 0.0
    %3279 = vmatprep.subr.mxu0 0.0
    %3280 = vmatpush1.msra.mxu0 0.0
    %3281 = vmatprep.subr.mxu0 0.0
    %3282 = vmatpush1.msra.mxu0 0.0
    %3283 = vmatprep.subr.mxu0 0.0
    %3284 = vmatpush1.msra.mxu0 0.0
    %3285 = vmatprep.subr.mxu0 0.0
    %3286 = vmatpush1.msra.mxu0 0.0
    %3287 = vmatprep.subr.mxu0 0.0
    %3288 = vmatpush1.msra.mxu0 0.0
    %3289 = vmatprep.subr.mxu0 0.0
    %3290 = vmatpush1.msra.mxu0 0.0
    %3291 = vmatprep.subr.mxu0 0.0
    %3292 = vmatpush1.msra.mxu0 0.0
    %3293 = vmatprep.subr.mxu0 0.0
    %3294 = vmatpush1.msra.mxu0 0.0
    %3295 = vmatprep.subr.mxu0 0.0
    %3296 = vmatpush1.msra.mxu0 0.0
    %3297 = vmatprep.subr.mxu0 0.0
    %3298 = vmatpush1.msra.mxu0 0.0
    %3299 = vmatprep.subr.mxu0 0.0
    %3300 = vmatpush1.msra.mxu0 0.0
    %3301 = vmatprep.subr.mxu0 0.0
    %3302 = vmatpush1.msra.mxu0 0.0
    %3303 = vmatprep.subr.mxu0 0.0
    %3304 = vmatpush1.msra.mxu0 0.0
    %3305 = vmatprep.subr.mxu0 0.0
    %3306 = vmatpush1.msra.mxu0 0.0
    %3307 = vmatprep.subr.mxu0 0.0
    %3308 = vmatpush1.msra.mxu0 0.0
    %3309 = vmatprep.subr.mxu0 0.0
    %3310 = vmatpush1.msra.mxu0 0.0
    %3311 = vmatprep.subr.mxu0 0.0
    %3312 = vmatpush1.msra.mxu0 0.0
    %3313 = vmatprep.subr.mxu0 0.0
    %3314 = vmatpush1.msra.mxu0 0.0
    %3315 = vmatprep.subr.mxu0 0.0
    %3316 = vmatpush1.msra.mxu0 0.0
    %3317 = vmatprep.subr.mxu0 0.0
    %3318 = vmatpush1.msra.mxu0 0.0
    %3319 = vmatprep.subr.mxu0 0.0
    %3320 = vmatpush1.msra.mxu0 0.0
    %3321 = vmatprep.subr.mxu0 0.0
    %3322 = vmatpush1.msra.mxu0 0.0
    %3323 = vmatprep.subr.mxu0 0.0
    %3324 = vmatpush1.msra.mxu0 0.0
    %3325 = vmatprep.subr.mxu0 0.0
    %3326 = vmatpush1.msra.mxu0 0.0
    %3327 = vmatprep.mubr.f32.mxu0 0.0
    %3328 = vmatmul.mubr.f32.gmra.mrb[0].mxu0 %v2511
    %v3329 = vpop.f32.mrb[0].mxu0
    %v3330 = vadd.f32 0.0, %v3329
    %v3331 = vpop.f32.mrb[0].mxu0
    %3332 = vdwg.mxu0
    %v3333 = vld [vmem:[%s35] sm:$0xff]
    %v3334 = vld [vmem:[%s35 + $0x8] sm:$0xf]
    %vm3335 = vcmask 719872
    %v3337 = vsel %vm3335, %v3333, 0
    %v3340 = vsel %vm3335, %v3334, 0
    %3342 = vmatprep.subr.mxu0 0.0
    %3343 = vmatpush1.msra.mxu0 %v2580
    %3344 = vmatprep.subr.mxu0 0.0
    %3345 = vmatpush1.msra.mxu0 %v2655
    %3346 = vmatprep.subr.mxu0 0.0
    %3347 = vmatpush1.msra.mxu0 %v2730
    %3348 = vmatprep.subr.mxu0 0.0
    %3349 = vmatpush1.msra.mxu0 %v2805
    %3350 = vmatprep.subr.mxu0 0.0
    %3351 = vmatpush1.msra.mxu0 %v2880
    %3352 = vmatprep.subr.mxu0 0.0
    %3353 = vmatpush1.msra.mxu0 %v2955
    %3354 = vmatprep.subr.mxu0 0.0
    %3355 = vmatpush1.msra.mxu0 %v3030
    %3356 = vmatprep.subr.mxu0 0.0
    %3357 = vmatpush1.msra.mxu0 %v3105
    %3358 = vmatprep.subr.mxu0 0.0
    %3359 = vmatpush1.msra.mxu0 %v3180
    %3360 = vmatprep.subr.mxu0 0.0
    %3361 = vmatpush1.msra.mxu0 %v3255
    %3362 = vmatprep.subr.mxu0 0.0
    %3363 = vmatpush1.msra.mxu0 %v3330
    %3364 = vmatprep.subr.mxu0 0.0
    %3365 = vmatpush1.msra.mxu0 0.0
    %3366 = vmatprep.subr.mxu0 0.0
    %3367 = vmatpush1.msra.mxu0 0.0
    %3368 = vmatprep.subr.mxu0 0.0
    %3369 = vmatpush1.msra.mxu0 0.0
    %3370 = vmatprep.subr.mxu0 0.0
    %3371 = vmatpush1.msra.mxu0 0.0
    %3372 = vmatprep.subr.mxu0 0.0
    %3373 = vmatpush1.msra.mxu0 0.0
    %3374 = vmatprep.subr.mxu0 0.0
    %3375 = vmatpush1.msra.mxu0 0.0
    %3376 = vmatprep.subr.mxu0 0.0
    %3377 = vmatpush1.msra.mxu0 0.0
    %3378 = vmatprep.subr.mxu0 0.0
    %3379 = vmatpush1.msra.mxu0 0.0
    %3380 = vmatprep.subr.mxu0 0.0
    %3381 = vmatpush1.msra.mxu0 0.0
    %3382 = vmatprep.subr.mxu0 0.0
    %3383 = vmatpush1.msra.mxu0 0.0
    %3384 = vmatprep.subr.mxu0 0.0
    %3385 = vmatpush1.msra.mxu0 0.0
    %3386 = vmatprep.subr.mxu0 0.0
    %3387 = vmatpush1.msra.mxu0 0.0
    %3388 = vmatprep.subr.mxu0 0.0
    %3389 = vmatpush1.msra.mxu0 0.0
    %3390 = vmatprep.subr.mxu0 0.0
    %3391 = vmatpush1.msra.mxu0 0.0
    %3392 = vmatprep.subr.mxu0 0.0
    %3393 = vmatpush1.msra.mxu0 0.0
    %3394 = vmatprep.subr.mxu0 0.0
    %3395 = vmatpush1.msra.mxu0 0.0
    %3396 = vmatprep.subr.mxu0 0.0
    %3397 = vmatpush1.msra.mxu0 0.0
    %3398 = vmatprep.subr.mxu0 0.0
    %3399 = vmatpush1.msra.mxu0 0.0
    %3400 = vmatprep.subr.mxu0 0.0
    %3401 = vmatpush1.msra.mxu0 0.0
    %3402 = vmatprep.subr.mxu0 0.0
    %3403 = vmatpush1.msra.mxu0 0.0
    %3404 = vmatprep.subr.mxu0 0.0
    %3405 = vmatpush1.msra.mxu0 0.0
    %3406 = vmatprep.mubr.f32.mxu0 0.0
    %3407 = vmatmul.mubr.f32.gmra.mrb[0].mxu0 %v3337
    %v3408 = vpop.f32.mrb[0].mxu0
    %v3409 = vadd.f32 0.0, %v3408
    %v3410 = vpop.f32.mrb[0].mxu0
    %3411 = vmatprep.mubr.f32.mxu0 0.0
    %3412 = vmatmul.mubr.f32.gmra.mrb[0].mxu0 %v3340
    %v3413 = vpop.f32.mrb[0].mxu0
    %v3414 = vadd.f32 0.0, %v3413
    %v3415 = vpop.f32.mrb[0].mxu0
    %3416 = vdwg.mxu0
    %v3417 = vsel %vm2509, %v3409, 0.0
    %3418 = vadd.xlane.f32.xlu0 %v3417
    %v3419 = vpop.xlane.xlu0 %3418
    %vm3420 = vcmask 257024
    %v3421 = vsel %vm3420, %v3414, 0.0
    %3422 = vadd.xlane.f32.xlu0 %v3421
    %v3423 = vpop.xlane.xlu0 %3422
    %v3424 = vrcp.pop 32.0
    %v3425 = vmul.f32 %v3419, %v3424
    %v3426 = vmul.f32 %v3423, %v3424
    %v3427 = vmul.f32 %v3409, %v3409
    %v3428 = vmul.f32 %v3414, %v3414
    %v3429 = vsel %vm2509, %v3427, 0.0
    %3430 = vadd.xlane.f32.xlu0 %v3429
    %v3431 = vpop.xlane.xlu0 %3430
    %v3432 = vsel %vm3420, %v3428, 0.0
    %3433 = vadd.xlane.f32.xlu0 %v3432
    %v3434 = vpop.xlane.xlu0 %3433
    %v3435 = vmul.f32 %v3431, %v3424
    %v3436 = vmul.f32 %v3434, %v3424
    %v3437 = vmul.f32 %v3425, %v3425
    %v3438 = vmul.f32 %v3426, %v3426
    %v3439 = vsub.f32 %v3435, %v3437
    %v3440 = vsub.f32 %v3436, %v3438
    %v3441 = vsub.f32 %v3409, %v3425
    %v3442 = vsub.f32 %v3414, %v3426
    %v3443 = vadd.f32 %v3439, 1e-05
    %v3444 = vadd.f32 %v3440, 1e-05
    %v3445 = vrsqrt.pop %v3443
    %v3446 = vrsqrt.pop %v3444
    %v3447 = vmul.f32 %v3441, %v3445
    %v3448 = vmul.f32 %v3442, %v3446
    %v3449 = vld [vmem:[%s37] sm:$0xff]
    %v3450 = vld [vmem:[%s37 + $0x8] sm:$0xf]
    %3452 = vset.pattern.permute.xlu0 0
    %3453 = vperm.xlu0 %3452, %v3449
    %v3454 = vpop.permute.xlu0 %3453
    %3457 = vset.pattern.permute.xlu0 0
    %3458 = vperm.xlu0 %3457, %v3450
    %v3459 = vpop.permute.xlu0 %3458
    %v3461 = vmul.f32 %v3447, %v3454
    %v3462 = vmul.f32 %v3448, %v3459
    %v3463 = vld [vmem:[%s39] sm:$0xff]
    %v3464 = vld [vmem:[%s39 + $0x8] sm:$0xf]
    %3466 = vset.pattern.permute.xlu0 0
    %3467 = vperm.xlu0 %3466, %v3463
    %v3468 = vpop.permute.xlu0 %3467
    %3471 = vset.pattern.permute.xlu0 0
    %3472 = vperm.xlu0 %3471, %v3464
    %v3473 = vpop.permute.xlu0 %3472
    %v3475 = vadd.f32 %v3461, %v3468
    %v3476 = vadd.f32 %v3462, %v3473
    %vm3477 = vcmp.ge.f32.partialorder %v3475, 0.0
    %vm3478 = vcmp.ge.f32.partialorder %v3476, 0.0
    %v3479 = vmul.f32 %v3475, 0.1
    %v3480 = vmul.f32 %v3476, 0.1
    %v3481 = vsel %vm3477, %v3475, %v3479
    %v3482 = vsel %vm3478, %v3476, %v3480
    %v3483 = vld [vmem:[%s15] sm:$0xff]
    %v3484 = vld [vmem:[%s15 + $0x8] sm:$0xff]
    %v3485 = vld [vmem:[%s15 + $0x10] sm:$0xff]
    %v3486 = vld [vmem:[%s15 + $0x18] sm:$0xff]
    %v3488 = vsel %vm2509, %v3481, 0
    %v3491 = vsel %vm2509, %v3482, 0
    %3493 = vmatprep.subr.mxu0 0.0
    %3494 = vmatpush1.msra.mxu0 %v3483
    %3495 = vmatprep.subr.mxu0 0.0
    %3496 = vmatpush1.msra.mxu0 %v3484
    %3497 = vmatprep.subr.mxu0 0.0
    %3498 = vmatpush1.msra.mxu0 %v3485
    %3499 = vmatprep.subr.mxu0 0.0
    %3500 = vmatpush1.msra.mxu0 %v3486
    %3501 = vmatprep.subr.mxu0 0.0
    %3502 = vmatpush1.msra.mxu0 0.0
    %3503 = vmatprep.subr.mxu0 0.0
    %3504 = vmatpush1.msra.mxu0 0.0
    %3505 = vmatprep.subr.mxu0 0.0
    %3506 = vmatpush1.msra.mxu0 0.0
    %3507 = vmatprep.subr.mxu0 0.0
    %3508 = vmatpush1.msra.mxu0 0.0
    %3509 = vmatprep.subr.mxu0 0.0
    %3510 = vmatpush1.msra.mxu0 0.0
    %3511 = vmatprep.subr.mxu0 0.0
    %3512 = vmatpush1.msra.mxu0 0.0
    %3513 = vmatprep.subr.mxu0 0.0
    %3514 = vmatpush1.msra.mxu0 0.0
    %3515 = vmatprep.subr.mxu0 0.0
    %3516 = vmatpush1.msra.mxu0 0.0
    %3517 = vmatprep.subr.mxu0 0.0
    %3518 = vmatpush1.msra.mxu0 0.0
    %3519 = vmatprep.subr.mxu0 0.0
    %3520 = vmatpush1.msra.mxu0 0.0
    %3521 = vmatprep.subr.mxu0 0.0
    %3522 = vmatpush1.msra.mxu0 0.0
    %3523 = vmatprep.subr.mxu0 0.0
    %3524 = vmatpush1.msra.mxu0 0.0
    %3525 = vmatprep.subr.mxu0 0.0
    %3526 = vmatpush1.msra.mxu0 0.0
    %3527 = vmatprep.subr.mxu0 0.0
    %3528 = vmatpush1.msra.mxu0 0.0
    %3529 = vmatprep.subr.mxu0 0.0
    %3530 = vmatpush1.msra.mxu0 0.0
    %3531 = vmatprep.subr.mxu0 0.0
    %3532 = vmatpush1.msra.mxu0 0.0
    %3533 = vmatprep.subr.mxu0 0.0
    %3534 = vmatpush1.msra.mxu0 0.0
    %3535 = vmatprep.subr.mxu0 0.0
    %3536 = vmatpush1.msra.mxu0 0.0
    %3537 = vmatprep.subr.mxu0 0.0
    %3538 = vmatpush1.msra.mxu0 0.0
    %3539 = vmatprep.subr.mxu0 0.0
    %3540 = vmatpush1.msra.mxu0 0.0
    %3541 = vmatprep.subr.mxu0 0.0
    %3542 = vmatpush1.msra.mxu0 0.0
    %3543 = vmatprep.subr.mxu0 0.0
    %3544 = vmatpush1.msra.mxu0 0.0
    %3545 = vmatprep.subr.mxu0 0.0
    %3546 = vmatpush1.msra.mxu0 0.0
    %3547 = vmatprep.subr.mxu0 0.0
    %3548 = vmatpush1.msra.mxu0 0.0
    %3549 = vmatprep.subr.mxu0 0.0
    %3550 = vmatpush1.msra.mxu0 0.0
    %3551 = vmatprep.subr.mxu0 0.0
    %3552 = vmatpush1.msra.mxu0 0.0
    %3553 = vmatprep.subr.mxu0 0.0
    %3554 = vmatpush1.msra.mxu0 0.0
    %3555 = vmatprep.subr.mxu0 0.0
    %3556 = vmatpush1.msra.mxu0 0.0
    %3557 = vmatprep.mubr.f32.mxu0 0.0
    %3558 = vmatmul.mubr.f32.gmra.mrb[0].mxu0 %v3488
    %v3559 = vpop.f32.mrb[0].mxu0
    %v3560 = vadd.f32 0.0, %v3559
    %v3561 = vpop.f32.mrb[0].mxu0
    %3562 = vmatprep.mubr.f32.mxu0 0.0
    %3563 = vmatmul.mubr.f32.gmra.mrb[0].mxu0 %v3491
    %v3564 = vpop.f32.mrb[0].mxu0
    %v3565 = vadd.f32 0.0, %v3564
    %v3566 = vpop.f32.mrb[0].mxu0
    %3567 = vdwg.mxu0
    %v3568 = vld [vmem:[%s9] sm:$0xff]
    %v3569 = vld [vmem:[%s9 + $0x8] sm:$0xff]
    %vm3570 = vcmask 130048
    %v3572 = vsel %vm3570, %v3560, 0
    %v3575 = vsel %vm3570, %v3565, 0
    %3577 = vmatprep.subr.mxu0 0.0
    %3578 = vmatpush1.msra.mxu0 %v3568
    %3579 = vmatprep.subr.mxu0 0.0
    %3580 = vmatpush1.msra.mxu0 %v3569
    %3581 = vmatprep.subr.mxu0 0.0
    %3582 = vmatpush1.msra.mxu0 0.0
    %3583 = vmatprep.subr.mxu0 0.0
    %3584 = vmatpush1.msra.mxu0 0.0
    %3585 = vmatprep.subr.mxu0 0.0
    %3586 = vmatpush1.msra.mxu0 0.0
    %3587 = vmatprep.subr.mxu0 0.0
    %3588 = vmatpush1.msra.mxu0 0.0
    %3589 = vmatprep.subr.mxu0 0.0
    %3590 = vmatpush1.msra.mxu0 0.0
    %3591 = vmatprep.subr.mxu0 0.0
    %3592 = vmatpush1.msra.mxu0 0.0
    %3593 = vmatprep.subr.mxu0 0.0
    %3594 = vmatpush1.msra.mxu0 0.0
    %3595 = vmatprep.subr.mxu0 0.0
    %3596 = vmatpush1.msra.mxu0 0.0
    %3597 = vmatprep.subr.mxu0 0.0
    %3598 = vmatpush1.msra.mxu0 0.0
    %3599 = vmatprep.subr.mxu0 0.0
    %3600 = vmatpush1.msra.mxu0 0.0
    %3601 = vmatprep.subr.mxu0 0.0
    %3602 = vmatpush1.msra.mxu0 0.0
    %3603 = vmatprep.subr.mxu0 0.0
    %3604 = vmatpush1.msra.mxu0 0.0
    %3605 = vmatprep.subr.mxu0 0.0
    %3606 = vmatpush1.msra.mxu0 0.0
    %3607 = vmatprep.subr.mxu0 0.0
    %3608 = vmatpush1.msra.mxu0 0.0
    %3609 = vmatprep.subr.mxu0 0.0
    %3610 = vmatpush1.msra.mxu0 0.0
    %3611 = vmatprep.subr.mxu0 0.0
    %3612 = vmatpush1.msra.mxu0 0.0
    %3613 = vmatprep.subr.mxu0 0.0
    %3614 = vmatpush1.msra.mxu0 0.0
    %3615 = vmatprep.subr.mxu0 0.0
    %3616 = vmatpush1.msra.mxu0 0.0
    %3617 = vmatprep.subr.mxu0 0.0
    %3618 = vmatpush1.msra.mxu0 0.0
    %3619 = vmatprep.subr.mxu0 0.0
    %3620 = vmatpush1.msra.mxu0 0.0
    %3621 = vmatprep.subr.mxu0 0.0
    %3622 = vmatpush1.msra.mxu0 0.0
    %3623 = vmatprep.subr.mxu0 0.0
    %3624 = vmatpush1.msra.mxu0 0.0
    %3625 = vmatprep.subr.mxu0 0.0
    %3626 = vmatpush1.msra.mxu0 0.0
    %3627 = vmatprep.subr.mxu0 0.0
    %3628 = vmatpush1.msra.mxu0 0.0
    %3629 = vmatprep.subr.mxu0 0.0
    %3630 = vmatpush1.msra.mxu0 0.0
    %3631 = vmatprep.subr.mxu0 0.0
    %3632 = vmatpush1.msra.mxu0 0.0
    %3633 = vmatprep.subr.mxu0 0.0
    %3634 = vmatpush1.msra.mxu0 0.0
    %3635 = vmatprep.subr.mxu0 0.0
    %3636 = vmatpush1.msra.mxu0 0.0
    %3637 = vmatprep.subr.mxu0 0.0
    %3638 = vmatpush1.msra.mxu0 0.0
    %3639 = vmatprep.subr.mxu0 0.0
    %3640 = vmatpush1.msra.mxu0 0.0
    %3641 = vmatprep.mubr.f32.mxu0 0.0
    %3642 = vmatmul.mubr.f32.gmra.mrb[0].mxu0 %v3572
    %v3643 = vpop.f32.mrb[0].mxu0
    %v3644 = vadd.f32 0.0, %v3643
    %v3645 = vpop.f32.mrb[0].mxu0
    %3646 = vmatprep.mubr.f32.mxu0 0.0
    %3647 = vmatmul.mubr.f32.gmra.mrb[0].mxu0 %v3575
    %v3648 = vpop.f32.mrb[0].mxu0
    %v3649 = vadd.f32 0.0, %v3648
    %v3650 = vpop.f32.mrb[0].mxu0
    %3651 = vdwg.mxu0
    %s3652 = scalar_lea.vmem %s9, 16
    %v3653 = vld [vmem:[%s3652] sm:$0xff]
    %v3654 = vld [vmem:[%s3652 + $0x8] sm:$0xff]
    %3655 = vmatprep.subr.mxu0 0.0
    %3656 = vmatpush1.msra.mxu0 %v3653
    %3657 = vmatprep.subr.mxu0 0.0
    %3658 = vmatpush1.msra.mxu0 %v3654
    %3659 = vmatprep.subr.mxu0 0.0
    %3660 = vmatpush1.msra.mxu0 0.0
    %3661 = vmatprep.subr.mxu0 0.0
    %3662 = vmatpush1.msra.mxu0 0.0
    %3663 = vmatprep.subr.mxu0 0.0
    %3664 = vmatpush1.msra.mxu0 0.0
    %3665 = vmatprep.subr.mxu0 0.0
    %3666 = vmatpush1.msra.mxu0 0.0
    %3667 = vmatprep.subr.mxu0 0.0
    %3668 = vmatpush1.msra.mxu0 0.0
    %3669 = vmatprep.subr.mxu0 0.0
    %3670 = vmatpush1.msra.mxu0 0.0
    %3671 = vmatprep.subr.mxu0 0.0
    %3672 = vmatpush1.msra.mxu0 0.0
    %3673 = vmatprep.subr.mxu0 0.0
    %3674 = vmatpush1.msra.mxu0 0.0
    %3675 = vmatprep.subr.mxu0 0.0
    %3676 = vmatpush1.msra.mxu0 0.0
    %3677 = vmatprep.subr.mxu0 0.0
    %3678 = vmatpush1.msra.mxu0 0.0
    %3679 = vmatprep.subr.mxu0 0.0
    %3680 = vmatpush1.msra.mxu0 0.0
    %3681 = vmatprep.subr.mxu0 0.0
    %3682 = vmatpush1.msra.mxu0 0.0
    %3683 = vmatprep.subr.mxu0 0.0
    %3684 = vmatpush1.msra.mxu0 0.0
    %3685 = vmatprep.subr.mxu0 0.0
    %3686 = vmatpush1.msra.mxu0 0.0
    %3687 = vmatprep.subr.mxu0 0.0
    %3688 = vmatpush1.msra.mxu0 0.0
    %3689 = vmatprep.subr.mxu0 0.0
    %3690 = vmatpush1.msra.mxu0 0.0
    %3691 = vmatprep.subr.mxu0 0.0
    %3692 = vmatpush1.msra.mxu0 0.0
    %3693 = vmatprep.subr.mxu0 0.0
    %3694 = vmatpush1.msra.mxu0 0.0
    %3695 = vmatprep.subr.mxu0 0.0
    %3696 = vmatpush1.msra.mxu0 0.0
    %3697 = vmatprep.subr.mxu0 0.0
    %3698 = vmatpush1.msra.mxu0 0.0
    %3699 = vmatprep.subr.mxu0 0.0
    %3700 = vmatpush1.msra.mxu0 0.0
    %3701 = vmatprep.subr.mxu0 0.0
    %3702 = vmatpush1.msra.mxu0 0.0
    %3703 = vmatprep.subr.mxu0 0.0
    %3704 = vmatpush1.msra.mxu0 0.0
    %3705 = vmatprep.subr.mxu0 0.0
    %3706 = vmatpush1.msra.mxu0 0.0
    %3707 = vmatprep.subr.mxu0 0.0
    %3708 = vmatpush1.msra.mxu0 0.0
    %3709 = vmatprep.subr.mxu0 0.0
    %3710 = vmatpush1.msra.mxu0 0.0
    %3711 = vmatprep.subr.mxu0 0.0
    %3712 = vmatpush1.msra.mxu0 0.0
    %3713 = vmatprep.subr.mxu0 0.0
    %3714 = vmatpush1.msra.mxu0 0.0
    %3715 = vmatprep.subr.mxu0 0.0
    %3716 = vmatpush1.msra.mxu0 0.0
    %3717 = vmatprep.subr.mxu0 0.0
    %3718 = vmatpush1.msra.mxu0 0.0
    %3719 = vmatprep.mubr.f32.mxu0 0.0
    %3720 = vmatmul.mubr.f32.gmra.mrb[0].mxu0 %v3572
    %v3721 = vpop.f32.mrb[0].mxu0
    %v3722 = vadd.f32 0.0, %v3721
    %v3723 = vpop.f32.mrb[0].mxu0
    %3724 = vmatprep.mubr.f32.mxu0 0.0
    %3725 = vmatmul.mubr.f32.gmra.mrb[0].mxu0 %v3575
    %v3726 = vpop.f32.mrb[0].mxu0
    %v3727 = vadd.f32 0.0, %v3726
    %v3728 = vpop.f32.mrb[0].mxu0
    %3729 = vdwg.mxu0
    %s3730 = scalar_lea.vmem %s9, 32
    %v3731 = vld [vmem:[%s3730] sm:$0xff]
    %v3732 = vld [vmem:[%s3730 + $0x8] sm:$0xff]
    %3733 = vmatprep.subr.mxu0 0.0
    %3734 = vmatpush1.msra.mxu0 %v3731
    %3735 = vmatprep.subr.mxu0 0.0
    %3736 = vmatpush1.msra.mxu0 %v3732
    %3737 = vmatprep.subr.mxu0 0.0
    %3738 = vmatpush1.msra.mxu0 0.0
    %3739 = vmatprep.subr.mxu0 0.0
    %3740 = vmatpush1.msra.mxu0 0.0
    %3741 = vmatprep.subr.mxu0 0.0
    %3742 = vmatpush1.msra.mxu0 0.0
    %3743 = vmatprep.subr.mxu0 0.0
    %3744 = vmatpush1.msra.mxu0 0.0
    %3745 = vmatprep.subr.mxu0 0.0
    %3746 = vmatpush1.msra.mxu0 0.0
    %3747 = vmatprep.subr.mxu0 0.0
    %3748 = vmatpush1.msra.mxu0 0.0
    %3749 = vmatprep.subr.mxu0 0.0
    %3750 = vmatpush1.msra.mxu0 0.0
    %3751 = vmatprep.subr.mxu0 0.0
    %3752 = vmatpush1.msra.mxu0 0.0
    %3753 = vmatprep.subr.mxu0 0.0
    %3754 = vmatpush1.msra.mxu0 0.0
    %3755 = vmatprep.subr.mxu0 0.0
    %3756 = vmatpush1.msra.mxu0 0.0
    %3757 = vmatprep.subr.mxu0 0.0
    %3758 = vmatpush1.msra.mxu0 0.0
    %3759 = vmatprep.subr.mxu0 0.0
    %3760 = vmatpush1.msra.mxu0 0.0
    %3761 = vmatprep.subr.mxu0 0.0
    %3762 = vmatpush1.msra.mxu0 0.0
    %3763 = vmatprep.subr.mxu0 0.0
    %3764 = vmatpush1.msra.mxu0 0.0
    %3765 = vmatprep.subr.mxu0 0.0
    %3766 = vmatpush1.msra.mxu0 0.0
    %3767 = vmatprep.subr.mxu0 0.0
    %3768 = vmatpush1.msra.mxu0 0.0
    %3769 = vmatprep.subr.mxu0 0.0
    %3770 = vmatpush1.msra.mxu0 0.0
    %3771 = vmatprep.subr.mxu0 0.0
    %3772 = vmatpush1.msra.mxu0 0.0
    %3773 = vmatprep.subr.mxu0 0.0
    %3774 = vmatpush1.msra.mxu0 0.0
    %3775 = vmatprep.subr.mxu0 0.0
    %3776 = vmatpush1.msra.mxu0 0.0
    %3777 = vmatprep.subr.mxu0 0.0
    %3778 = vmatpush1.msra.mxu0 0.0
    %3779 = vmatprep.subr.mxu0 0.0
    %3780 = vmatpush1.msra.mxu0 0.0
    %3781 = vmatprep.subr.mxu0 0.0
    %3782 = vmatpush1.msra.mxu0 0.0
    %3783 = vmatprep.subr.mxu0 0.0
    %3784 = vmatpush1.msra.mxu0 0.0
    %3785 = vmatprep.subr.mxu0 0.0
    %3786 = vmatpush1.msra.mxu0 0.0
    %3787 = vmatprep.subr.mxu0 0.0
    %3788 = vmatpush1.msra.mxu0 0.0
    %3789 = vmatprep.subr.mxu0 0.0
    %3790 = vmatpush1.msra.mxu0 0.0
    %3791 = vmatprep.subr.mxu0 0.0
    %3792 = vmatpush1.msra.mxu0 0.0
    %3793 = vmatprep.subr.mxu0 0.0
    %3794 = vmatpush1.msra.mxu0 0.0
    %3795 = vmatprep.subr.mxu0 0.0
    %3796 = vmatpush1.msra.mxu0 0.0
    %3797 = vmatprep.mubr.f32.mxu0 0.0
    %3798 = vmatmul.mubr.f32.gmra.mrb[0].mxu0 %v3572
    %v3799 = vpop.f32.mrb[0].mxu0
    %v3800 = vadd.f32 0.0, %v3799
    %v3801 = vpop.f32.mrb[0].mxu0
    %3802 = vmatprep.mubr.f32.mxu0 0.0
    %3803 = vmatmul.mubr.f32.gmra.mrb[0].mxu0 %v3575
    %v3804 = vpop.f32.mrb[0].mxu0
    %v3805 = vadd.f32 0.0, %v3804
    %v3806 = vpop.f32.mrb[0].mxu0
    %3807 = vdwg.mxu0
    %s3808 = scalar_lea.vmem %s9, 48
    %v3809 = vld [vmem:[%s3808] sm:$0xff]
    %v3810 = vld [vmem:[%s3808 + $0x8] sm:$0xff]
    %3811 = vmatprep.subr.mxu0 0.0
    %3812 = vmatpush1.msra.mxu0 %v3809
    %3813 = vmatprep.subr.mxu0 0.0
    %3814 = vmatpush1.msra.mxu0 %v3810
    %3815 = vmatprep.subr.mxu0 0.0
    %3816 = vmatpush1.msra.mxu0 0.0
    %3817 = vmatprep.subr.mxu0 0.0
    %3818 = vmatpush1.msra.mxu0 0.0
    %3819 = vmatprep.subr.mxu0 0.0
    %3820 = vmatpush1.msra.mxu0 0.0
    %3821 = vmatprep.subr.mxu0 0.0
    %3822 = vmatpush1.msra.mxu0 0.0
    %3823 = vmatprep.subr.mxu0 0.0
    %3824 = vmatpush1.msra.mxu0 0.0
    %3825 = vmatprep.subr.mxu0 0.0
    %3826 = vmatpush1.msra.mxu0 0.0
    %3827 = vmatprep.subr.mxu0 0.0
    %3828 = vmatpush1.msra.mxu0 0.0
    %3829 = vmatprep.subr.mxu0 0.0
    %3830 = vmatpush1.msra.mxu0 0.0
    %3831 = vmatprep.subr.mxu0 0.0
    %3832 = vmatpush1.msra.mxu0 0.0
    %3833 = vmatprep.subr.mxu0 0.0
    %3834 = vmatpush1.msra.mxu0 0.0
    %3835 = vmatprep.subr.mxu0 0.0
    %3836 = vmatpush1.msra.mxu0 0.0
    %3837 = vmatprep.subr.mxu0 0.0
    %3838 = vmatpush1.msra.mxu0 0.0
    %3839 = vmatprep.subr.mxu0 0.0
    %3840 = vmatpush1.msra.mxu0 0.0
    %3841 = vmatprep.subr.mxu0 0.0
    %3842 = vmatpush1.msra.mxu0 0.0
    %3843 = vmatprep.subr.mxu0 0.0
    %3844 = vmatpush1.msra.mxu0 0.0
    %3845 = vmatprep.subr.mxu0 0.0
    %3846 = vmatpush1.msra.mxu0 0.0
    %3847 = vmatprep.subr.mxu0 0.0
    %3848 = vmatpush1.msra.mxu0 0.0
    %3849 = vmatprep.subr.mxu0 0.0
    %3850 = vmatpush1.msra.mxu0 0.0
    %3851 = vmatprep.subr.mxu0 0.0
    %3852 = vmatpush1.msra.mxu0 0.0
    %3853 = vmatprep.subr.mxu0 0.0
    %3854 = vmatpush1.msra.mxu0 0.0
    %3855 = vmatprep.subr.mxu0 0.0
    %3856 = vmatpush1.msra.mxu0 0.0
    %3857 = vmatprep.subr.mxu0 0.0
    %3858 = vmatpush1.msra.mxu0 0.0
    %3859 = vmatprep.subr.mxu0 0.0
    %3860 = vmatpush1.msra.mxu0 0.0
    %3861 = vmatprep.subr.mxu0 0.0
    %3862 = vmatpush1.msra.mxu0 0.0
    %3863 = vmatprep.subr.mxu0 0.0
    %3864 = vmatpush1.msra.mxu0 0.0
    %3865 = vmatprep.subr.mxu0 0.0
    %3866 = vmatpush1.msra.mxu0 0.0
    %3867 = vmatprep.subr.mxu0 0.0
    %3868 = vmatpush1.msra.mxu0 0.0
    %3869 = vmatprep.subr.mxu0 0.0
    %3870 = vmatpush1.msra.mxu0 0.0
    %3871 = vmatprep.subr.mxu0 0.0
    %3872 = vmatpush1.msra.mxu0 0.0
    %3873 = vmatprep.subr.mxu0 0.0
    %3874 = vmatpush1.msra.mxu0 0.0
    %3875 = vmatprep.mubr.f32.mxu0 0.0
    %3876 = vmatmul.mubr.f32.gmra.mrb[0].mxu0 %v3572
    %v3877 = vpop.f32.mrb[0].mxu0
    %v3878 = vadd.f32 0.0, %v3877
    %v3879 = vpop.f32.mrb[0].mxu0
    %3880 = vmatprep.mubr.f32.mxu0 0.0
    %3881 = vmatmul.mubr.f32.gmra.mrb[0].mxu0 %v3575
    %v3882 = vpop.f32.mrb[0].mxu0
    %v3883 = vadd.f32 0.0, %v3882
    %v3884 = vpop.f32.mrb[0].mxu0
    %3885 = vdwg.mxu0
    %s3886 = scalar_lea.vmem %s9, 64
    %v3887 = vld [vmem:[%s3886] sm:$0xff]
    %v3888 = vld [vmem:[%s3886 + $0x8] sm:$0xff]
    %3889 = vmatprep.subr.mxu0 0.0
    %3890 = vmatpush1.msra.mxu0 %v3887
    %3891 = vmatprep.subr.mxu0 0.0
    %3892 = vmatpush1.msra.mxu0 %v3888
    %3893 = vmatprep.subr.mxu0 0.0
    %3894 = vmatpush1.msra.mxu0 0.0
    %3895 = vmatprep.subr.mxu0 0.0
    %3896 = vmatpush1.msra.mxu0 0.0
    %3897 = vmatprep.subr.mxu0 0.0
    %3898 = vmatpush1.msra.mxu0 0.0
    %3899 = vmatprep.subr.mxu0 0.0
    %3900 = vmatpush1.msra.mxu0 0.0
    %3901 = vmatprep.subr.mxu0 0.0
    %3902 = vmatpush1.msra.mxu0 0.0
    %3903 = vmatprep.subr.mxu0 0.0
    %3904 = vmatpush1.msra.mxu0 0.0
    %3905 = vmatprep.subr.mxu0 0.0
    %3906 = vmatpush1.msra.mxu0 0.0
    %3907 = vmatprep.subr.mxu0 0.0
    %3908 = vmatpush1.msra.mxu0 0.0
    %3909 = vmatprep.subr.mxu0 0.0
    %3910 = vmatpush1.msra.mxu0 0.0
    %3911 = vmatprep.subr.mxu0 0.0
    %3912 = vmatpush1.msra.mxu0 0.0
    %3913 = vmatprep.subr.mxu0 0.0
    %3914 = vmatpush1.msra.mxu0 0.0
    %3915 = vmatprep.subr.mxu0 0.0
    %3916 = vmatpush1.msra.mxu0 0.0
    %3917 = vmatprep.subr.mxu0 0.0
    %3918 = vmatpush1.msra.mxu0 0.0
    %3919 = vmatprep.subr.mxu0 0.0
    %3920 = vmatpush1.msra.mxu0 0.0
    %3921 = vmatprep.subr.mxu0 0.0
    %3922 = vmatpush1.msra.mxu0 0.0
    %3923 = vmatprep.subr.mxu0 0.0
    %3924 = vmatpush1.msra.mxu0 0.0
    %3925 = vmatprep.subr.mxu0 0.0
    %3926 = vmatpush1.msra.mxu0 0.0
    %3927 = vmatprep.subr.mxu0 0.0
    %3928 = vmatpush1.msra.mxu0 0.0
    %3929 = vmatprep.subr.mxu0 0.0
    %3930 = vmatpush1.msra.mxu0 0.0
    %3931 = vmatprep.subr.mxu0 0.0
    %3932 = vmatpush1.msra.mxu0 0.0
    %3933 = vmatprep.subr.mxu0 0.0
    %3934 = vmatpush1.msra.mxu0 0.0
    %3935 = vmatprep.subr.mxu0 0.0
    %3936 = vmatpush1.msra.mxu0 0.0
    %3937 = vmatprep.subr.mxu0 0.0
    %3938 = vmatpush1.msra.mxu0 0.0
    %3939 = vmatprep.subr.mxu0 0.0
    %3940 = vmatpush1.msra.mxu0 0.0
    %3941 = vmatprep.subr.mxu0 0.0
    %3942 = vmatpush1.msra.mxu0 0.0
    %3943 = vmatprep.subr.mxu0 0.0
    %3944 = vmatpush1.msra.mxu0 0.0
    %3945 = vmatprep.subr.mxu0 0.0
    %3946 = vmatpush1.msra.mxu0 0.0
    %3947 = vmatprep.subr.mxu0 0.0
    %3948 = vmatpush1.msra.mxu0 0.0
    %3949 = vmatprep.subr.mxu0 0.0
    %3950 = vmatpush1.msra.mxu0 0.0
    %3951 = vmatprep.subr.mxu0 0.0
    %3952 = vmatpush1.msra.mxu0 0.0
    %3953 = vmatprep.mubr.f32.mxu0 0.0
    %3954 = vmatmul.mubr.f32.gmra.mrb[0].mxu0 %v3572
    %v3955 = vpop.f32.mrb[0].mxu0
    %v3956 = vadd.f32 0.0, %v3955
    %v3957 = vpop.f32.mrb[0].mxu0
    %3958 = vmatprep.mubr.f32.mxu0 0.0
    %3959 = vmatmul.mubr.f32.gmra.mrb[0].mxu0 %v3575
    %v3960 = vpop.f32.mrb[0].mxu0
    %v3961 = vadd.f32 0.0, %v3960
    %v3962 = vpop.f32.mrb[0].mxu0
    %3963 = vdwg.mxu0
    %s3964 = scalar_lea.vmem %s9, 80
    %v3965 = vld [vmem:[%s3964] sm:$0xff]
    %v3966 = vld [vmem:[%s3964 + $0x8] sm:$0xff]
    %3967 = vmatprep.subr.mxu0 0.0
    %3968 = vmatpush1.msra.mxu0 %v3965
    %3969 = vmatprep.subr.mxu0 0.0
    %3970 = vmatpush1.msra.mxu0 %v3966
    %3971 = vmatprep.subr.mxu0 0.0
    %3972 = vmatpush1.msra.mxu0 0.0
    %3973 = vmatprep.subr.mxu0 0.0
    %3974 = vmatpush1.msra.mxu0 0.0
    %3975 = vmatprep.subr.mxu0 0.0
    %3976 = vmatpush1.msra.mxu0 0.0
    %3977 = vmatprep.subr.mxu0 0.0
    %3978 = vmatpush1.msra.mxu0 0.0
    %3979 = vmatprep.subr.mxu0 0.0
    %3980 = vmatpush1.msra.mxu0 0.0
    %3981 = vmatprep.subr.mxu0 0.0
    %3982 = vmatpush1.msra.mxu0 0.0
    %3983 = vmatprep.subr.mxu0 0.0
    %3984 = vmatpush1.msra.mxu0 0.0
    %3985 = vmatprep.subr.mxu0 0.0
    %3986 = vmatpush1.msra.mxu0 0.0
    %3987 = vmatprep.subr.mxu0 0.0
    %3988 = vmatpush1.msra.mxu0 0.0
    %3989 = vmatprep.subr.mxu0 0.0
    %3990 = vmatpush1.msra.mxu0 0.0
    %3991 = vmatprep.subr.mxu0 0.0
    %3992 = vmatpush1.msra.mxu0 0.0
    %3993 = vmatprep.subr.mxu0 0.0
    %3994 = vmatpush1.msra.mxu0 0.0
    %3995 = vmatprep.subr.mxu0 0.0
    %3996 = vmatpush1.msra.mxu0 0.0
    %3997 = vmatprep.subr.mxu0 0.0
    %3998 = vmatpush1.msra.mxu0 0.0
    %3999 = vmatprep.subr.mxu0 0.0
    %4000 = vmatpush1.msra.mxu0 0.0
    %4001 = vmatprep.subr.mxu0 0.0
    %4002 = vmatpush1.msra.mxu0 0.0
    %4003 = vmatprep.subr.mxu0 0.0
    %4004 = vmatpush1.msra.mxu0 0.0
    %4005 = vmatprep.subr.mxu0 0.0
    %4006 = vmatpush1.msra.mxu0 0.0
    %4007 = vmatprep.subr.mxu0 0.0
    %4008 = vmatpush1.msra.mxu0 0.0
    %4009 = vmatprep.subr.mxu0 0.0
    %4010 = vmatpush1.msra.mxu0 0.0
    %4011 = vmatprep.subr.mxu0 0.0
    %4012 = vmatpush1.msra.mxu0 0.0
    %4013 = vmatprep.subr.mxu0 0.0
    %4014 = vmatpush1.msra.mxu0 0.0
    %4015 = vmatprep.subr.mxu0 0.0
    %4016 = vmatpush1.msra.mxu0 0.0
    %4017 = vmatprep.subr.mxu0 0.0
    %4018 = vmatpush1.msra.mxu0 0.0
    %4019 = vmatprep.subr.mxu0 0.0
    %4020 = vmatpush1.msra.mxu0 0.0
    %4021 = vmatprep.subr.mxu0 0.0
    %4022 = vmatpush1.msra.mxu0 0.0
    %4023 = vmatprep.subr.mxu0 0.0
    %4024 = vmatpush1.msra.mxu0 0.0
    %4025 = vmatprep.subr.mxu0 0.0
    %4026 = vmatpush1.msra.mxu0 0.0
    %4027 = vmatprep.subr.mxu0 0.0
    %4028 = vmatpush1.msra.mxu0 0.0
    %4029 = vmatprep.subr.mxu0 0.0
    %4030 = vmatpush1.msra.mxu0 0.0
    %4031 = vmatprep.mubr.f32.mxu0 0.0
    %4032 = vmatmul.mubr.f32.gmra.mrb[0].mxu0 %v3572
    %v4033 = vpop.f32.mrb[0].mxu0
    %v4034 = vadd.f32 0.0, %v4033
    %v4035 = vpop.f32.mrb[0].mxu0
    %4036 = vmatprep.mubr.f32.mxu0 0.0
    %4037 = vmatmul.mubr.f32.gmra.mrb[0].mxu0 %v3575
    %v4038 = vpop.f32.mrb[0].mxu0
    %v4039 = vadd.f32 0.0, %v4038
    %v4040 = vpop.f32.mrb[0].mxu0
    %4041 = vdwg.mxu0
    %s4042 = scalar_lea.vmem %s9, 96
    %v4043 = vld [vmem:[%s4042] sm:$0xff]
    %v4044 = vld [vmem:[%s4042 + $0x8] sm:$0xff]
    %4045 = vmatprep.subr.mxu0 0.0
    %4046 = vmatpush1.msra.mxu0 %v4043
    %4047 = vmatprep.subr.mxu0 0.0
    %4048 = vmatpush1.msra.mxu0 %v4044
    %4049 = vmatprep.subr.mxu0 0.0
    %4050 = vmatpush1.msra.mxu0 0.0
    %4051 = vmatprep.subr.mxu0 0.0
    %4052 = vmatpush1.msra.mxu0 0.0
    %4053 = vmatprep.subr.mxu0 0.0
    %4054 = vmatpush1.msra.mxu0 0.0
    %4055 = vmatprep.subr.mxu0 0.0
    %4056 = vmatpush1.msra.mxu0 0.0
    %4057 = vmatprep.subr.mxu0 0.0
    %4058 = vmatpush1.msra.mxu0 0.0
    %4059 = vmatprep.subr.mxu0 0.0
    %4060 = vmatpush1.msra.mxu0 0.0
    %4061 = vmatprep.subr.mxu0 0.0
    %4062 = vmatpush1.msra.mxu0 0.0
    %4063 = vmatprep.subr.mxu0 0.0
    %4064 = vmatpush1.msra.mxu0 0.0
    %4065 = vmatprep.subr.mxu0 0.0
    %4066 = vmatpush1.msra.mxu0 0.0
    %4067 = vmatprep.subr.mxu0 0.0
    %4068 = vmatpush1.msra.mxu0 0.0
    %4069 = vmatprep.subr.mxu0 0.0
    %4070 = vmatpush1.msra.mxu0 0.0
    %4071 = vmatprep.subr.mxu0 0.0
    %4072 = vmatpush1.msra.mxu0 0.0
    %4073 = vmatprep.subr.mxu0 0.0
    %4074 = vmatpush1.msra.mxu0 0.0
    %4075 = vmatprep.subr.mxu0 0.0
    %4076 = vmatpush1.msra.mxu0 0.0
    %4077 = vmatprep.subr.mxu0 0.0
    %4078 = vmatpush1.msra.mxu0 0.0
    %4079 = vmatprep.subr.mxu0 0.0
    %4080 = vmatpush1.msra.mxu0 0.0
    %4081 = vmatprep.subr.mxu0 0.0
    %4082 = vmatpush1.msra.mxu0 0.0
    %4083 = vmatprep.subr.mxu0 0.0
    %4084 = vmatpush1.msra.mxu0 0.0
    %4085 = vmatprep.subr.mxu0 0.0
    %4086 = vmatpush1.msra.mxu0 0.0
    %4087 = vmatprep.subr.mxu0 0.0
    %4088 = vmatpush1.msra.mxu0 0.0
    %4089 = vmatprep.subr.mxu0 0.0
    %4090 = vmatpush1.msra.mxu0 0.0
    %4091 = vmatprep.subr.mxu0 0.0
    %4092 = vmatpush1.msra.mxu0 0.0
    %4093 = vmatprep.subr.mxu0 0.0
    %4094 = vmatpush1.msra.mxu0 0.0
    %4095 = vmatprep.subr.mxu0 0.0
    %4096 = vmatpush1.msra.mxu0 0.0
    %4097 = vmatprep.subr.mxu0 0.0
    %4098 = vmatpush1.msra.mxu0 0.0
    %4099 = vmatprep.subr.mxu0 0.0
    %4100 = vmatpush1.msra.mxu0 0.0
    %4101 = vmatprep.subr.mxu0 0.0
    %4102 = vmatpush1.msra.mxu0 0.0
    %4103 = vmatprep.subr.mxu0 0.0
    %4104 = vmatpush1.msra.mxu0 0.0
    %4105 = vmatprep.subr.mxu0 0.0
    %4106 = vmatpush1.msra.mxu0 0.0
    %4107 = vmatprep.subr.mxu0 0.0
    %4108 = vmatpush1.msra.mxu0 0.0
    %4109 = vmatprep.mubr.f32.mxu0 0.0
    %4110 = vmatmul.mubr.f32.gmra.mrb[0].mxu0 %v3572
    %v4111 = vpop.f32.mrb[0].mxu0
    %v4112 = vadd.f32 0.0, %v4111
    %v4113 = vpop.f32.mrb[0].mxu0
    %4114 = vmatprep.mubr.f32.mxu0 0.0
    %4115 = vmatmul.mubr.f32.gmra.mrb[0].mxu0 %v3575
    %v4116 = vpop.f32.mrb[0].mxu0
    %v4117 = vadd.f32 0.0, %v4116
    %v4118 = vpop.f32.mrb[0].mxu0
    %4119 = vdwg.mxu0
    %s4120 = scalar_lea.vmem %s9, 112
    %v4121 = vld [vmem:[%s4120] sm:$0xff]
    %v4122 = vld [vmem:[%s4120 + $0x8] sm:$0xff]
    %4123 = vmatprep.subr.mxu0 0.0
    %4124 = vmatpush1.msra.mxu0 %v4121
    %4125 = vmatprep.subr.mxu0 0.0
    %4126 = vmatpush1.msra.mxu0 %v4122
    %4127 = vmatprep.subr.mxu0 0.0
    %4128 = vmatpush1.msra.mxu0 0.0
    %4129 = vmatprep.subr.mxu0 0.0
    %4130 = vmatpush1.msra.mxu0 0.0
    %4131 = vmatprep.subr.mxu0 0.0
    %4132 = vmatpush1.msra.mxu0 0.0
    %4133 = vmatprep.subr.mxu0 0.0
    %4134 = vmatpush1.msra.mxu0 0.0
    %4135 = vmatprep.subr.mxu0 0.0
    %4136 = vmatpush1.msra.mxu0 0.0
    %4137 = vmatprep.subr.mxu0 0.0
    %4138 = vmatpush1.msra.mxu0 0.0
    %4139 = vmatprep.subr.mxu0 0.0
    %4140 = vmatpush1.msra.mxu0 0.0
    %4141 = vmatprep.subr.mxu0 0.0
    %4142 = vmatpush1.msra.mxu0 0.0
    %4143 = vmatprep.subr.mxu0 0.0
    %4144 = vmatpush1.msra.mxu0 0.0
    %4145 = vmatprep.subr.mxu0 0.0
    %4146 = vmatpush1.msra.mxu0 0.0
    %4147 = vmatprep.subr.mxu0 0.0
    %4148 = vmatpush1.msra.mxu0 0.0
    %4149 = vmatprep.subr.mxu0 0.0
    %4150 = vmatpush1.msra.mxu0 0.0
    %4151 = vmatprep.subr.mxu0 0.0
    %4152 = vmatpush1.msra.mxu0 0.0
    %4153 = vmatprep.subr.mxu0 0.0
    %4154 = vmatpush1.msra.mxu0 0.0
    %4155 = vmatprep.subr.mxu0 0.0
    %4156 = vmatpush1.msra.mxu0 0.0
    %4157 = vmatprep.subr.mxu0 0.0
    %4158 = vmatpush1.msra.mxu0 0.0
    %4159 = vmatprep.subr.mxu0 0.0
    %4160 = vmatpush1.msra.mxu0 0.0
    %4161 = vmatprep.subr.mxu0 0.0
    %4162 = vmatpush1.msra.mxu0 0.0
    %4163 = vmatprep.subr.mxu0 0.0
    %4164 = vmatpush1.msra.mxu0 0.0
    %4165 = vmatprep.subr.mxu0 0.0
    %4166 = vmatpush1.msra.mxu0 0.0
    %4167 = vmatprep.subr.mxu0 0.0
    %4168 = vmatpush1.msra.mxu0 0.0
    %4169 = vmatprep.subr.mxu0 0.0
    %4170 = vmatpush1.msra.mxu0 0.0
    %4171 = vmatprep.subr.mxu0 0.0
    %4172 = vmatpush1.msra.mxu0 0.0
    %4173 = vmatprep.subr.mxu0 0.0
    %4174 = vmatpush1.msra.mxu0 0.0
    %4175 = vmatprep.subr.mxu0 0.0
    %4176 = vmatpush1.msra.mxu0 0.0
    %4177 = vmatprep.subr.mxu0 0.0
    %4178 = vmatpush1.msra.mxu0 0.0
    %4179 = vmatprep.subr.mxu0 0.0
    %4180 = vmatpush1.msra.mxu0 0.0
    %4181 = vmatprep.subr.mxu0 0.0
    %4182 = vmatpush1.msra.mxu0 0.0
    %4183 = vmatprep.subr.mxu0 0.0
    %4184 = vmatpush1.msra.mxu0 0.0
    %4185 = vmatprep.subr.mxu0 0.0
    %4186 = vmatpush1.msra.mxu0 0.0
    %4187 = vmatprep.mubr.f32.mxu0 0.0
    %4188 = vmatmul.mubr.f32.gmra.mrb[0].mxu0 %v3572
    %v4189 = vpop.f32.mrb[0].mxu0
    %v4190 = vadd.f32 0.0, %v4189
    %v4191 = vpop.f32.mrb[0].mxu0
    %4192 = vmatprep.mubr.f32.mxu0 0.0
    %4193 = vmatmul.mubr.f32.gmra.mrb[0].mxu0 %v3575
    %v4194 = vpop.f32.mrb[0].mxu0
    %v4195 = vadd.f32 0.0, %v4194
    %v4196 = vpop.f32.mrb[0].mxu0
    %4197 = vdwg.mxu0
    %s4198 = scalar_lea.vmem %s9, 128
    %v4199 = vld [vmem:[%s4198] sm:$0xff]
    %v4200 = vld [vmem:[%s4198 + $0x8] sm:$0xff]
    %4201 = vmatprep.subr.mxu0 0.0
    %4202 = vmatpush1.msra.mxu0 %v4199
    %4203 = vmatprep.subr.mxu0 0.0
    %4204 = vmatpush1.msra.mxu0 %v4200
    %4205 = vmatprep.subr.mxu0 0.0
    %4206 = vmatpush1.msra.mxu0 0.0
    %4207 = vmatprep.subr.mxu0 0.0
    %4208 = vmatpush1.msra.mxu0 0.0
    %4209 = vmatprep.subr.mxu0 0.0
    %4210 = vmatpush1.msra.mxu0 0.0
    %4211 = vmatprep.subr.mxu0 0.0
    %4212 = vmatpush1.msra.mxu0 0.0
    %4213 = vmatprep.subr.mxu0 0.0
    %4214 = vmatpush1.msra.mxu0 0.0
    %4215 = vmatprep.subr.mxu0 0.0
    %4216 = vmatpush1.msra.mxu0 0.0
    %4217 = vmatprep.subr.mxu0 0.0
    %4218 = vmatpush1.msra.mxu0 0.0
    %4219 = vmatprep.subr.mxu0 0.0
    %4220 = vmatpush1.msra.mxu0 0.0
    %4221 = vmatprep.subr.mxu0 0.0
    %4222 = vmatpush1.msra.mxu0 0.0
    %4223 = vmatprep.subr.mxu0 0.0
    %4224 = vmatpush1.msra.mxu0 0.0
    %4225 = vmatprep.subr.mxu0 0.0
    %4226 = vmatpush1.msra.mxu0 0.0
    %4227 = vmatprep.subr.mxu0 0.0
    %4228 = vmatpush1.msra.mxu0 0.0
    %4229 = vmatprep.subr.mxu0 0.0
    %4230 = vmatpush1.msra.mxu0 0.0
    %4231 = vmatprep.subr.mxu0 0.0
    %4232 = vmatpush1.msra.mxu0 0.0
    %4233 = vmatprep.subr.mxu0 0.0
    %4234 = vmatpush1.msra.mxu0 0.0
    %4235 = vmatprep.subr.mxu0 0.0
    %4236 = vmatpush1.msra.mxu0 0.0
    %4237 = vmatprep.subr.mxu0 0.0
    %4238 = vmatpush1.msra.mxu0 0.0
    %4239 = vmatprep.subr.mxu0 0.0
    %4240 = vmatpush1.msra.mxu0 0.0
    %4241 = vmatprep.subr.mxu0 0.0
    %4242 = vmatpush1.msra.mxu0 0.0
    %4243 = vmatprep.subr.mxu0 0.0
    %4244 = vmatpush1.msra.mxu0 0.0
    %4245 = vmatprep.subr.mxu0 0.0
    %4246 = vmatpush1.msra.mxu0 0.0
    %4247 = vmatprep.subr.mxu0 0.0
    %4248 = vmatpush1.msra.mxu0 0.0
    %4249 = vmatprep.subr.mxu0 0.0
    %4250 = vmatpush1.msra.mxu0 0.0
    %4251 = vmatprep.subr.mxu0 0.0
    %4252 = vmatpush1.msra.mxu0 0.0
    %4253 = vmatprep.subr.mxu0 0.0
    %4254 = vmatpush1.msra.mxu0 0.0
    %4255 = vmatprep.subr.mxu0 0.0
    %4256 = vmatpush1.msra.mxu0 0.0
    %4257 = vmatprep.subr.mxu0 0.0
    %4258 = vmatpush1.msra.mxu0 0.0
    %4259 = vmatprep.subr.mxu0 0.0
    %4260 = vmatpush1.msra.mxu0 0.0
    %4261 = vmatprep.subr.mxu0 0.0
    %4262 = vmatpush1.msra.mxu0 0.0
    %4263 = vmatprep.subr.mxu0 0.0
    %4264 = vmatpush1.msra.mxu0 0.0
    %4265 = vmatprep.mubr.f32.mxu0 0.0
    %4266 = vmatmul.mubr.f32.gmra.mrb[0].mxu0 %v3572
    %v4267 = vpop.f32.mrb[0].mxu0
    %v4268 = vadd.f32 0.0, %v4267
    %v4269 = vpop.f32.mrb[0].mxu0
    %4270 = vmatprep.mubr.f32.mxu0 0.0
    %4271 = vmatmul.mubr.f32.gmra.mrb[0].mxu0 %v3575
    %v4272 = vpop.f32.mrb[0].mxu0
    %v4273 = vadd.f32 0.0, %v4272
    %v4274 = vpop.f32.mrb[0].mxu0
    %4275 = vdwg.mxu0
    %s4276 = scalar_lea.vmem %s9, 144
    %v4277 = vld [vmem:[%s4276] sm:$0xff]
    %v4278 = vld [vmem:[%s4276 + $0x8] sm:$0xff]
    %4279 = vmatprep.subr.mxu0 0.0
    %4280 = vmatpush1.msra.mxu0 %v4277
    %4281 = vmatprep.subr.mxu0 0.0
    %4282 = vmatpush1.msra.mxu0 %v4278
    %4283 = vmatprep.subr.mxu0 0.0
    %4284 = vmatpush1.msra.mxu0 0.0
    %4285 = vmatprep.subr.mxu0 0.0
    %4286 = vmatpush1.msra.mxu0 0.0
    %4287 = vmatprep.subr.mxu0 0.0
    %4288 = vmatpush1.msra.mxu0 0.0
    %4289 = vmatprep.subr.mxu0 0.0
    %4290 = vmatpush1.msra.mxu0 0.0
    %4291 = vmatprep.subr.mxu0 0.0
    %4292 = vmatpush1.msra.mxu0 0.0
    %4293 = vmatprep.subr.mxu0 0.0
    %4294 = vmatpush1.msra.mxu0 0.0
    %4295 = vmatprep.subr.mxu0 0.0
    %4296 = vmatpush1.msra.mxu0 0.0
    %4297 = vmatprep.subr.mxu0 0.0
    %4298 = vmatpush1.msra.mxu0 0.0
    %4299 = vmatprep.subr.mxu0 0.0
    %4300 = vmatpush1.msra.mxu0 0.0
    %4301 = vmatprep.subr.mxu0 0.0
    %4302 = vmatpush1.msra.mxu0 0.0
    %4303 = vmatprep.subr.mxu0 0.0
    %4304 = vmatpush1.msra.mxu0 0.0
    %4305 = vmatprep.subr.mxu0 0.0
    %4306 = vmatpush1.msra.mxu0 0.0
    %4307 = vmatprep.subr.mxu0 0.0
    %4308 = vmatpush1.msra.mxu0 0.0
    %4309 = vmatprep.subr.mxu0 0.0
    %4310 = vmatpush1.msra.mxu0 0.0
    %4311 = vmatprep.subr.mxu0 0.0
    %4312 = vmatpush1.msra.mxu0 0.0
    %4313 = vmatprep.subr.mxu0 0.0
    %4314 = vmatpush1.msra.mxu0 0.0
    %4315 = vmatprep.subr.mxu0 0.0
    %4316 = vmatpush1.msra.mxu0 0.0
    %4317 = vmatprep.subr.mxu0 0.0
    %4318 = vmatpush1.msra.mxu0 0.0
    %4319 = vmatprep.subr.mxu0 0.0
    %4320 = vmatpush1.msra.mxu0 0.0
    %4321 = vmatprep.subr.mxu0 0.0
    %4322 = vmatpush1.msra.mxu0 0.0
    %4323 = vmatprep.subr.mxu0 0.0
    %4324 = vmatpush1.msra.mxu0 0.0
    %4325 = vmatprep.subr.mxu0 0.0
    %4326 = vmatpush1.msra.mxu0 0.0
    %4327 = vmatprep.subr.mxu0 0.0
    %4328 = vmatpush1.msra.mxu0 0.0
    %4329 = vmatprep.subr.mxu0 0.0
    %4330 = vmatpush1.msra.mxu0 0.0
    %4331 = vmatprep.subr.mxu0 0.0
    %4332 = vmatpush1.msra.mxu0 0.0
    %4333 = vmatprep.subr.mxu0 0.0
    %4334 = vmatpush1.msra.mxu0 0.0
    %4335 = vmatprep.subr.mxu0 0.0
    %4336 = vmatpush1.msra.mxu0 0.0
    %4337 = vmatprep.subr.mxu0 0.0
    %4338 = vmatpush1.msra.mxu0 0.0
    %4339 = vmatprep.subr.mxu0 0.0
    %4340 = vmatpush1.msra.mxu0 0.0
    %4341 = vmatprep.subr.mxu0 0.0
    %4342 = vmatpush1.msra.mxu0 0.0
    %4343 = vmatprep.mubr.f32.mxu0 0.0
    %4344 = vmatmul.mubr.f32.gmra.mrb[0].mxu0 %v3572
    %v4345 = vpop.f32.mrb[0].mxu0
    %v4346 = vadd.f32 0.0, %v4345
    %v4347 = vpop.f32.mrb[0].mxu0
    %4348 = vmatprep.mubr.f32.mxu0 0.0
    %4349 = vmatmul.mubr.f32.gmra.mrb[0].mxu0 %v3575
    %v4350 = vpop.f32.mrb[0].mxu0
    %v4351 = vadd.f32 0.0, %v4350
    %v4352 = vpop.f32.mrb[0].mxu0
    %4353 = vdwg.mxu0
    %s4354 = scalar_lea.vmem %s9, 160
    %v4355 = vld [vmem:[%s4354] sm:$0xff]
    %v4356 = vld [vmem:[%s4354 + $0x8] sm:$0xff]
    %4357 = vmatprep.subr.mxu0 0.0
    %4358 = vmatpush1.msra.mxu0 %v4355
    %4359 = vmatprep.subr.mxu0 0.0
    %4360 = vmatpush1.msra.mxu0 %v4356
    %4361 = vmatprep.subr.mxu0 0.0
    %4362 = vmatpush1.msra.mxu0 0.0
    %4363 = vmatprep.subr.mxu0 0.0
    %4364 = vmatpush1.msra.mxu0 0.0
    %4365 = vmatprep.subr.mxu0 0.0
    %4366 = vmatpush1.msra.mxu0 0.0
    %4367 = vmatprep.subr.mxu0 0.0
    %4368 = vmatpush1.msra.mxu0 0.0
    %4369 = vmatprep.subr.mxu0 0.0
    %4370 = vmatpush1.msra.mxu0 0.0
    %4371 = vmatprep.subr.mxu0 0.0
    %4372 = vmatpush1.msra.mxu0 0.0
    %4373 = vmatprep.subr.mxu0 0.0
    %4374 = vmatpush1.msra.mxu0 0.0
    %4375 = vmatprep.subr.mxu0 0.0
    %4376 = vmatpush1.msra.mxu0 0.0
    %4377 = vmatprep.subr.mxu0 0.0
    %4378 = vmatpush1.msra.mxu0 0.0
    %4379 = vmatprep.subr.mxu0 0.0
    %4380 = vmatpush1.msra.mxu0 0.0
    %4381 = vmatprep.subr.mxu0 0.0
    %4382 = vmatpush1.msra.mxu0 0.0
    %4383 = vmatprep.subr.mxu0 0.0
    %4384 = vmatpush1.msra.mxu0 0.0
    %4385 = vmatprep.subr.mxu0 0.0
    %4386 = vmatpush1.msra.mxu0 0.0
    %4387 = vmatprep.subr.mxu0 0.0
    %4388 = vmatpush1.msra.mxu0 0.0
    %4389 = vmatprep.subr.mxu0 0.0
    %4390 = vmatpush1.msra.mxu0 0.0
    %4391 = vmatprep.subr.mxu0 0.0
    %4392 = vmatpush1.msra.mxu0 0.0
    %4393 = vmatprep.subr.mxu0 0.0
    %4394 = vmatpush1.msra.mxu0 0.0
    %4395 = vmatprep.subr.mxu0 0.0
    %4396 = vmatpush1.msra.mxu0 0.0
    %4397 = vmatprep.subr.mxu0 0.0
    %4398 = vmatpush1.msra.mxu0 0.0
    %4399 = vmatprep.subr.mxu0 0.0
    %4400 = vmatpush1.msra.mxu0 0.0
    %4401 = vmatprep.subr.mxu0 0.0
    %4402 = vmatpush1.msra.mxu0 0.0
    %4403 = vmatprep.subr.mxu0 0.0
    %4404 = vmatpush1.msra.mxu0 0.0
    %4405 = vmatprep.subr.mxu0 0.0
    %4406 = vmatpush1.msra.mxu0 0.0
    %4407 = vmatprep.subr.mxu0 0.0
    %4408 = vmatpush1.msra.mxu0 0.0
    %4409 = vmatprep.subr.mxu0 0.0
    %4410 = vmatpush1.msra.mxu0 0.0
    %4411 = vmatprep.subr.mxu0 0.0
    %4412 = vmatpush1.msra.mxu0 0.0
    %4413 = vmatprep.subr.mxu0 0.0
    %4414 = vmatpush1.msra.mxu0 0.0
    %4415 = vmatprep.subr.mxu0 0.0
    %4416 = vmatpush1.msra.mxu0 0.0
    %4417 = vmatprep.subr.mxu0 0.0
    %4418 = vmatpush1.msra.mxu0 0.0
    %4419 = vmatprep.subr.mxu0 0.0
    %4420 = vmatpush1.msra.mxu0 0.0
    %4421 = vmatprep.mubr.f32.mxu0 0.0
    %4422 = vmatmul.mubr.f32.gmra.mrb[0].mxu0 %v3572
    %v4423 = vpop.f32.mrb[0].mxu0
    %v4424 = vadd.f32 0.0, %v4423
    %v4425 = vpop.f32.mrb[0].mxu0
    %4426 = vmatprep.mubr.f32.mxu0 0.0
    %4427 = vmatmul.mubr.f32.gmra.mrb[0].mxu0 %v3575
    %v4428 = vpop.f32.mrb[0].mxu0
    %v4429 = vadd.f32 0.0, %v4428
    %v4430 = vpop.f32.mrb[0].mxu0
    %4431 = vdwg.mxu0
    %v4434 = vrot.slane %v3722, 4
    %v4435 = vrot.slane %v3727, 4
    %v4436 = vsel %vm1214, %v4434, %v4435
    %v4441 = vrot.slane %v3878, 4
    %v4442 = vrot.slane %v3883, 4
    %v4443 = vsel %vm1214, %v4441, %v4442
    %v4448 = vrot.slane %v4034, 4
    %v4449 = vrot.slane %v4039, 4
    %v4450 = vsel %vm1214, %v4448, %v4449
    %v4455 = vrot.slane %v4190, 4
    %v4456 = vrot.slane %v4195, 4
    %v4457 = vsel %vm1214, %v4455, %v4456
    %v4462 = vrot.slane %v4346, 4
    %v4463 = vrot.slane %v4351, 4
    %v4464 = vsel %vm1214, %v4462, %v4463
    %v4467 = vsel %vm1214, %v3649, %v4434
    %v4468 = vsel %vm1214, %v3805, %v4441
    %v4469 = vsel %vm1214, %v3961, %v4448
    %v4470 = vsel %vm1214, %v4117, %v4455
    %v4471 = vsel %vm1214, %v4273, %v4462
    %v4472 = vld [vmem:[%s41] sm:$0xff]
    %v4473 = vld [vmem:[%s41 + $0x8] sm:$0xff]
    %v4474 = vld [vmem:[%s41 + $0x10] sm:$0xf]
    %v4475 = vld [vmem:[%s41 + $0x18] sm:$0xf]
    %vm4476 = vcmask 31744
    %v4478 = vsel %vm4476, %v4473, 0
    %v4481 = vsel %vm4476, %v4475, 0
    %v4484 = vsel %vm1214, %v4429, 0
    %4486 = vmatprep.subr.mxu0 0.0
    %4487 = vmatpush1.msra.mxu0 %v3644
    %4488 = vmatprep.subr.mxu0 0.0
    %4489 = vmatpush1.msra.mxu0 %v4467
    %4490 = vmatprep.subr.mxu0 0.0
    %4491 = vmatpush1.msra.mxu0 %v4436
    %4492 = vmatprep.subr.mxu0 0.0
    %4493 = vmatpush1.msra.mxu0 %v3800
    %4494 = vmatprep.subr.mxu0 0.0
    %4495 = vmatpush1.msra.mxu0 %v4468
    %4496 = vmatprep.subr.mxu0 0.0
    %4497 = vmatpush1.msra.mxu0 %v4443
    %4498 = vmatprep.subr.mxu0 0.0
    %4499 = vmatpush1.msra.mxu0 %v3956
    %4500 = vmatprep.subr.mxu0 0.0
    %4501 = vmatpush1.msra.mxu0 %v4469
    %4502 = vmatprep.subr.mxu0 0.0
    %4503 = vmatpush1.msra.mxu0 %v4450
    %4504 = vmatprep.subr.mxu0 0.0
    %4505 = vmatpush1.msra.mxu0 %v4112
    %4506 = vmatprep.subr.mxu0 0.0
    %4507 = vmatpush1.msra.mxu0 %v4470
    %4508 = vmatprep.subr.mxu0 0.0
    %4509 = vmatpush1.msra.mxu0 %v4457
    %4510 = vmatprep.subr.mxu0 0.0
    %4511 = vmatpush1.msra.mxu0 %v4268
    %4512 = vmatprep.subr.mxu0 0.0
    %4513 = vmatpush1.msra.mxu0 %v4471
    %4514 = vmatprep.subr.mxu0 0.0
    %4515 = vmatpush1.msra.mxu0 %v4464
    %4516 = vmatprep.subr.mxu0 0.0
    %4517 = vmatpush1.msra.mxu0 %v4424
    %4518 = vmatprep.subr.mxu0 0.0
    %4519 = vmatpush1.msra.mxu0 %v4484
    %4520 = vmatprep.subr.mxu0 0.0
    %4521 = vmatpush1.msra.mxu0 0.0
    %4522 = vmatprep.subr.mxu0 0.0
    %4523 = vmatpush1.msra.mxu0 0.0
    %4524 = vmatprep.subr.mxu0 0.0
    %4525 = vmatpush1.msra.mxu0 0.0
    %4526 = vmatprep.subr.mxu0 0.0
    %4527 = vmatpush1.msra.mxu0 0.0
    %4528 = vmatprep.subr.mxu0 0.0
    %4529 = vmatpush1.msra.mxu0 0.0
    %4530 = vmatprep.subr.mxu0 0.0
    %4531 = vmatpush1.msra.mxu0 0.0
    %4532 = vmatprep.subr.mxu0 0.0
    %4533 = vmatpush1.msra.mxu0 0.0
    %4534 = vmatprep.subr.mxu0 0.0
    %4535 = vmatpush1.msra.mxu0 0.0
    %4536 = vmatprep.subr.mxu0 0.0
    %4537 = vmatpush1.msra.mxu0 0.0
    %4538 = vmatprep.subr.mxu0 0.0
    %4539 = vmatpush1.msra.mxu0 0.0
    %4540 = vmatprep.subr.mxu0 0.0
    %4541 = vmatpush1.msra.mxu0 0.0
    %4542 = vmatprep.subr.mxu0 0.0
    %4543 = vmatpush1.msra.mxu0 0.0
    %4544 = vmatprep.subr.mxu0 0.0
    %4545 = vmatpush1.msra.mxu0 0.0
    %4546 = vmatprep.subr.mxu0 0.0
    %4547 = vmatpush1.msra.mxu0 0.0
    %4548 = vmatprep.subr.mxu0 0.0
    %4549 = vmatpush1.msra.mxu0 0.0
    %4550 = vmatprep.mubr.f32.mxu0 %v4478
    %4551 = vmatmul.mubr.f32.gmra.mrb[0].mxu0 %v4472
    %v4552 = vpop.f32.mrb[0].mxu0
    %v4553 = vadd.f32 0.0, %v4552
    %v4554 = vpop.f32.mrb[0].mxu0
    %4555 = vmatprep.mubr.f32.mxu0 %v4481
    %4556 = vmatmul.mubr.f32.gmra.mrb[0].mxu0 %v4474
    %v4557 = vpop.f32.mrb[0].mxu0
    %v4558 = vadd.f32 0.0, %v4557
    %v4559 = vpop.f32.mrb[0].mxu0
    %4560 = vdwg.mxu0
    %v4561 = vsel %vm3570, %v4553, 0.0
    %4562 = vadd.xlane.f32.xlu0 %v4561
    %v4563 = vpop.xlane.xlu0 %4562
    %vm4564 = vcmask 125952
    %v4565 = vsel %vm4564, %v4558, 0.0
    %4566 = vadd.xlane.f32.xlu0 %v4565
    %v4567 = vpop.xlane.xlu0 %4566
    %v4568 = vrcp.pop 16.0
    %v4569 = vmul.f32 %v4563, %v4568
    %v4570 = vmul.f32 %v4567, %v4568
    %v4571 = vmul.f32 %v4553, %v4553
    %v4572 = vmul.f32 %v4558, %v4558
    %v4573 = vsel %vm3570, %v4571, 0.0
    %4574 = vadd.xlane.f32.xlu0 %v4573
    %v4575 = vpop.xlane.xlu0 %4574
    %v4576 = vsel %vm4564, %v4572, 0.0
    %4577 = vadd.xlane.f32.xlu0 %v4576
    %v4578 = vpop.xlane.xlu0 %4577
    %v4579 = vmul.f32 %v4575, %v4568
    %v4580 = vmul.f32 %v4578, %v4568
    %v4581 = vmul.f32 %v4569, %v4569
    %v4582 = vmul.f32 %v4570, %v4570
    %v4583 = vsub.f32 %v4579, %v4581
    %v4584 = vsub.f32 %v4580, %v4582
    %v4585 = vsub.f32 %v4553, %v4569
    %v4586 = vsub.f32 %v4558, %v4570
    %v4587 = vadd.f32 %v4583, 1e-05
    %v4588 = vadd.f32 %v4584, 1e-05
    %v4589 = vrsqrt.pop %v4587
    %v4590 = vrsqrt.pop %v4588
    %v4591 = vmul.f32 %v4585, %v4589
    %v4592 = vmul.f32 %v4586, %v4590
    %v4593 = vld [vmem:[%s43] sm:$0xff]
    %v4594 = vld [vmem:[%s43 + $0x8] sm:$0xf]
    %4596 = vset.pattern.permute.xlu0 0
    %4597 = vperm.xlu0 %4596, %v4593
    %v4598 = vpop.permute.xlu0 %4597
    %4601 = vset.pattern.permute.xlu0 0
    %4602 = vperm.xlu0 %4601, %v4594
    %v4603 = vpop.permute.xlu0 %4602
    %v4605 = vmul.f32 %v4591, %v4598
    %v4606 = vmul.f32 %v4592, %v4603
    %v4607 = vld [vmem:[%s45] sm:$0xff]
    %v4608 = vld [vmem:[%s45 + $0x8] sm:$0xf]
    %4610 = vset.pattern.permute.xlu0 0
    %4611 = vperm.xlu0 %4610, %v4607
    %v4612 = vpop.permute.xlu0 %4611
    %4615 = vset.pattern.permute.xlu0 0
    %4616 = vperm.xlu0 %4615, %v4608
    %v4617 = vpop.permute.xlu0 %4616
    %v4619 = vadd.f32 %v4605, %v4612
    %v4620 = vadd.f32 %v4606, %v4617
    %vm4621 = vcmp.ge.f32.partialorder %v4619, 0.0
    %vm4622 = vcmp.ge.f32.partialorder %v4620, 0.0
    %v4623 = vmul.f32 %v4619, 0.1
    %v4624 = vmul.f32 %v4620, 0.1
    %v4625 = vsel %vm4621, %v4619, %v4623
    %v4626 = vsel %vm4622, %v4620, %v4624
    %v4627 = vld [vmem:[#allocation7] sm:$0xff]
    %v4628 = vld [vmem:[#allocation7 + $0x8] sm:$0xff]
    %v4630 = vsel %vm3570, %v4625, 0
    %v4633 = vsel %vm3570, %v4626, 0
    %4635 = vmatprep.subr.mxu0 0.0
    %4636 = vmatpush1.msra.mxu0 %v4627
    %4637 = vmatprep.subr.mxu0 0.0
    %4638 = vmatpush1.msra.mxu0 %v4628
    %4639 = vmatprep.subr.mxu0 0.0
    %4640 = vmatpush1.msra.mxu0 0.0
    %4641 = vmatprep.subr.mxu0 0.0
    %4642 = vmatpush1.msra.mxu0 0.0
    %4643 = vmatprep.subr.mxu0 0.0
    %4644 = vmatpush1.msra.mxu0 0.0
    %4645 = vmatprep.subr.mxu0 0.0
    %4646 = vmatpush1.msra.mxu0 0.0
    %4647 = vmatprep.subr.mxu0 0.0
    %4648 = vmatpush1.msra.mxu0 0.0
    %4649 = vmatprep.subr.mxu0 0.0
    %4650 = vmatpush1.msra.mxu0 0.0
    %4651 = vmatprep.subr.mxu0 0.0
    %4652 = vmatpush1.msra.mxu0 0.0
    %4653 = vmatprep.subr.mxu0 0.0
    %4654 = vmatpush1.msra.mxu0 0.0
    %4655 = vmatprep.subr.mxu0 0.0
    %4656 = vmatpush1.msra.mxu0 0.0
    %4657 = vmatprep.subr.mxu0 0.0
    %4658 = vmatpush1.msra.mxu0 0.0
    %4659 = vmatprep.subr.mxu0 0.0
    %4660 = vmatpush1.msra.mxu0 0.0
    %4661 = vmatprep.subr.mxu0 0.0
    %4662 = vmatpush1.msra.mxu0 0.0
    %4663 = vmatprep.subr.mxu0 0.0
    %4664 = vmatpush1.msra.mxu0 0.0
    %4665 = vmatprep.subr.mxu0 0.0
    %4666 = vmatpush1.msra.mxu0 0.0
    %4667 = vmatprep.subr.mxu0 0.0
    %4668 = vmatpush1.msra.mxu0 0.0
    %4669 = vmatprep.subr.mxu0 0.0
    %4670 = vmatpush1.msra.mxu0 0.0
    %4671 = vmatprep.subr.mxu0 0.0
    %4672 = vmatpush1.msra.mxu0 0.0
    %4673 = vmatprep.subr.mxu0 0.0
    %4674 = vmatpush1.msra.mxu0 0.0
    %4675 = vmatprep.subr.mxu0 0.0
    %4676 = vmatpush1.msra.mxu0 0.0
    %4677 = vmatprep.subr.mxu0 0.0
    %4678 = vmatpush1.msra.mxu0 0.0
    %4679 = vmatprep.subr.mxu0 0.0
    %4680 = vmatpush1.msra.mxu0 0.0
    %4681 = vmatprep.subr.mxu0 0.0
    %4682 = vmatpush1.msra.mxu0 0.0
    %4683 = vmatprep.subr.mxu0 0.0
    %4684 = vmatpush1.msra.mxu0 0.0
    %4685 = vmatprep.subr.mxu0 0.0
    %4686 = vmatpush1.msra.mxu0 0.0
    %4687 = vmatprep.subr.mxu0 0.0
    %4688 = vmatpush1.msra.mxu0 0.0
    %4689 = vmatprep.subr.mxu0 0.0
    %4690 = vmatpush1.msra.mxu0 0.0
    %4691 = vmatprep.subr.mxu0 0.0
    %4692 = vmatpush1.msra.mxu0 0.0
    %4693 = vmatprep.subr.mxu0 0.0
    %4694 = vmatpush1.msra.mxu0 0.0
    %4695 = vmatprep.subr.mxu0 0.0
    %4696 = vmatpush1.msra.mxu0 0.0
    %4697 = vmatprep.subr.mxu0 0.0
    %4698 = vmatpush1.msra.mxu0 0.0
    %4699 = vmatprep.mubr.f32.mxu0 0.0
    %4700 = vmatmul.mubr.f32.gmra.mrb[0].mxu0 %v4630
    %v4701 = vpop.f32.mrb[0].mxu0
    %v4702 = vadd.f32 0.0, %v4701
    %v4703 = vpop.f32.mrb[0].mxu0
    %4704 = vmatprep.mubr.f32.mxu0 0.0
    %4705 = vmatmul.mubr.f32.gmra.mrb[0].mxu0 %v4633
    %v4706 = vpop.f32.mrb[0].mxu0
    %v4707 = vadd.f32 0.0, %v4706
    %v4708 = vpop.f32.mrb[0].mxu0
    %4709 = vdwg.mxu0
    %v4710 = vrot.slane %v3481, 4
    %v4711 = vrot.slane %v3482, 4
    %v4712 = vsel %vm1214, %v4710, %v4711
    %v4714 = vsel %vm1214, %v4707, %v4710
    %v4716 = vsel %vm2509, %v4702, 0
    %v4719 = vsel %vm2509, %v4714, 0
    %v4721 = vsel %vm2509, %v4712, 0
    %4723 = vmatprep.subr.mxu0 0.0
    %4724 = vmatpush1.msra.mxu0 %v2505
    %4725 = vmatprep.subr.mxu0 0.0
    %4726 = vmatpush1.msra.mxu0 %v2506
    %4727 = vmatprep.subr.mxu0 0.0
    %4728 = vmatpush1.msra.mxu0 %v2507
    %4729 = vmatprep.subr.mxu0 0.0
    %4730 = vmatpush1.msra.mxu0 %v2508
    %4731 = vmatprep.subr.mxu0 0.0
    %4732 = vmatpush1.msra.mxu0 0.0
    %4733 = vmatprep.subr.mxu0 0.0
    %4734 = vmatpush1.msra.mxu0 0.0
    %4735 = vmatprep.subr.mxu0 0.0
    %4736 = vmatpush1.msra.mxu0 0.0
    %4737 = vmatprep.subr.mxu0 0.0
    %4738 = vmatpush1.msra.mxu0 0.0
    %4739 = vmatprep.subr.mxu0 0.0
    %4740 = vmatpush1.msra.mxu0 0.0
    %4741 = vmatprep.subr.mxu0 0.0
    %4742 = vmatpush1.msra.mxu0 0.0
    %4743 = vmatprep.subr.mxu0 0.0
    %4744 = vmatpush1.msra.mxu0 0.0
    %4745 = vmatprep.subr.mxu0 0.0
    %4746 = vmatpush1.msra.mxu0 0.0
    %4747 = vmatprep.subr.mxu0 0.0
    %4748 = vmatpush1.msra.mxu0 0.0
    %4749 = vmatprep.subr.mxu0 0.0
    %4750 = vmatpush1.msra.mxu0 0.0
    %4751 = vmatprep.subr.mxu0 0.0
    %4752 = vmatpush1.msra.mxu0 0.0
    %4753 = vmatprep.subr.mxu0 0.0
    %4754 = vmatpush1.msra.mxu0 0.0
    %4755 = vmatprep.subr.mxu0 0.0
    %4756 = vmatpush1.msra.mxu0 0.0
    %4757 = vmatprep.subr.mxu0 0.0
    %4758 = vmatpush1.msra.mxu0 0.0
    %4759 = vmatprep.subr.mxu0 0.0
    %4760 = vmatpush1.msra.mxu0 0.0
    %4761 = vmatprep.subr.mxu0 0.0
    %4762 = vmatpush1.msra.mxu0 0.0
    %4763 = vmatprep.subr.mxu0 0.0
    %4764 = vmatpush1.msra.mxu0 0.0
    %4765 = vmatprep.subr.mxu0 0.0
    %4766 = vmatpush1.msra.mxu0 0.0
    %4767 = vmatprep.subr.mxu0 0.0
    %4768 = vmatpush1.msra.mxu0 0.0
    %4769 = vmatprep.subr.mxu0 0.0
    %4770 = vmatpush1.msra.mxu0 0.0
    %4771 = vmatprep.subr.mxu0 0.0
    %4772 = vmatpush1.msra.mxu0 0.0
    %4773 = vmatprep.subr.mxu0 0.0
    %4774 = vmatpush1.msra.mxu0 0.0
    %4775 = vmatprep.subr.mxu0 0.0
    %4776 = vmatpush1.msra.mxu0 0.0
    %4777 = vmatprep.subr.mxu0 0.0
    %4778 = vmatpush1.msra.mxu0 0.0
    %4779 = vmatprep.subr.mxu0 0.0
    %4780 = vmatpush1.msra.mxu0 0.0
    %4781 = vmatprep.subr.mxu0 0.0
    %4782 = vmatpush1.msra.mxu0 0.0
    %4783 = vmatprep.subr.mxu0 0.0
    %4784 = vmatpush1.msra.mxu0 0.0
    %4785 = vmatprep.subr.mxu0 0.0
    %4786 = vmatpush1.msra.mxu0 0.0
    %4787 = vmatprep.mubr.f32.mxu0 0.0
    %4788 = vmatmul.mubr.f32.gmra.mrb[0].mxu0 %v4716
    %v4789 = vpop.f32.mrb[0].mxu0
    %v4790 = vadd.f32 0.0, %v4789
    %v4791 = vpop.f32.mrb[0].mxu0
    %4792 = vmatprep.mubr.f32.mxu0 0.0
    %4793 = vmatmul.mubr.f32.gmra.mrb[0].mxu0 %v4719
    %v4794 = vpop.f32.mrb[0].mxu0
    %v4795 = vadd.f32 0.0, %v4794
    %v4796 = vpop.f32.mrb[0].mxu0
    %4797 = vmatprep.mubr.f32.mxu0 0.0
    %4798 = vmatmul.mubr.f32.gmra.mrb[0].mxu0 %v4721
    %v4799 = vpop.f32.mrb[0].mxu0
    %v4800 = vadd.f32 0.0, %v4799
    %v4801 = vpop.f32.mrb[0].mxu0
    %4802 = vdwg.mxu0
    %4803 = vmatprep.subr.mxu0 0.0
    %4804 = vmatpush1.msra.mxu0 %v2584
    %4805 = vmatprep.subr.mxu0 0.0
    %4806 = vmatpush1.msra.mxu0 %v2585
    %4807 = vmatprep.subr.mxu0 0.0
    %4808 = vmatpush1.msra.mxu0 %v2586
    %4809 = vmatprep.subr.mxu0 0.0
    %4810 = vmatpush1.msra.mxu0 %v2587
    %4811 = vmatprep.subr.mxu0 0.0
    %4812 = vmatpush1.msra.mxu0 0.0
    %4813 = vmatprep.subr.mxu0 0.0
    %4814 = vmatpush1.msra.mxu0 0.0
    %4815 = vmatprep.subr.mxu0 0.0
    %4816 = vmatpush1.msra.mxu0 0.0
    %4817 = vmatprep.subr.mxu0 0.0
    %4818 = vmatpush1.msra.mxu0 0.0
    %4819 = vmatprep.subr.mxu0 0.0
    %4820 = vmatpush1.msra.mxu0 0.0
    %4821 = vmatprep.subr.mxu0 0.0
    %4822 = vmatpush1.msra.mxu0 0.0
    %4823 = vmatprep.subr.mxu0 0.0
    %4824 = vmatpush1.msra.mxu0 0.0
    %4825 = vmatprep.subr.mxu0 0.0
    %4826 = vmatpush1.msra.mxu0 0.0
    %4827 = vmatprep.subr.mxu0 0.0
    %4828 = vmatpush1.msra.mxu0 0.0
    %4829 = vmatprep.subr.mxu0 0.0
    %4830 = vmatpush1.msra.mxu0 0.0
    %4831 = vmatprep.subr.mxu0 0.0
    %4832 = vmatpush1.msra.mxu0 0.0
    %4833 = vmatprep.subr.mxu0 0.0
    %4834 = vmatpush1.msra.mxu0 0.0
    %4835 = vmatprep.subr.mxu0 0.0
    %4836 = vmatpush1.msra.mxu0 0.0
    %4837 = vmatprep.subr.mxu0 0.0
    %4838 = vmatpush1.msra.mxu0 0.0
    %4839 = vmatprep.subr.mxu0 0.0
    %4840 = vmatpush1.msra.mxu0 0.0
    %4841 = vmatprep.subr.mxu0 0.0
    %4842 = vmatpush1.msra.mxu0 0.0
    %4843 = vmatprep.subr.mxu0 0.0
    %4844 = vmatpush1.msra.mxu0 0.0
    %4845 = vmatprep.subr.mxu0 0.0
    %4846 = vmatpush1.msra.mxu0 0.0
    %4847 = vmatprep.subr.mxu0 0.0
    %4848 = vmatpush1.msra.mxu0 0.0
    %4849 = vmatprep.subr.mxu0 0.0
    %4850 = vmatpush1.msra.mxu0 0.0
    %4851 = vmatprep.subr.mxu0 0.0
    %4852 = vmatpush1.msra.mxu0 0.0
    %4853 = vmatprep.subr.mxu0 0.0
    %4854 = vmatpush1.msra.mxu0 0.0
    %4855 = vmatprep.subr.mxu0 0.0
    %4856 = vmatpush1.msra.mxu0 0.0
    %4857 = vmatprep.subr.mxu0 0.0
    %4858 = vmatpush1.msra.mxu0 0.0
    %4859 = vmatprep.subr.mxu0 0.0
    %4860 = vmatpush1.msra.mxu0 0.0
    %4861 = vmatprep.subr.mxu0 0.0
    %4862 = vmatpush1.msra.mxu0 0.0
    %4863 = vmatprep.subr.mxu0 0.0
    %4864 = vmatpush1.msra.mxu0 0.0
    %4865 = vmatprep.subr.mxu0 0.0
    %4866 = vmatpush1.msra.mxu0 0.0
    %4867 = vmatprep.mubr.f32.mxu0 0.0
    %4868 = vmatmul.mubr.f32.gmra.mrb[0].mxu0 %v4716
    %v4869 = vpop.f32.mrb[0].mxu0
    %v4870 = vadd.f32 0.0, %v4869
    %v4871 = vpop.f32.mrb[0].mxu0
    %4872 = vmatprep.mubr.f32.mxu0 0.0
    %4873 = vmatmul.mubr.f32.gmra.mrb[0].mxu0 %v4719
    %v4874 = vpop.f32.mrb[0].mxu0
    %v4875 = vadd.f32 0.0, %v4874
    %v4876 = vpop.f32.mrb[0].mxu0
    %4877 = vmatprep.mubr.f32.mxu0 0.0
    %4878 = vmatmul.mubr.f32.gmra.mrb[0].mxu0 %v4721
    %v4879 = vpop.f32.mrb[0].mxu0
    %v4880 = vadd.f32 0.0, %v4879
    %v4881 = vpop.f32.mrb[0].mxu0
    %4882 = vdwg.mxu0
    %4883 = vmatprep.subr.mxu0 0.0
    %4884 = vmatpush1.msra.mxu0 %v2659
    %4885 = vmatprep.subr.mxu0 0.0
    %4886 = vmatpush1.msra.mxu0 %v2660
    %4887 = vmatprep.subr.mxu0 0.0
    %4888 = vmatpush1.msra.mxu0 %v2661
    %4889 = vmatprep.subr.mxu0 0.0
    %4890 = vmatpush1.msra.mxu0 %v2662
    %4891 = vmatprep.subr.mxu0 0.0
    %4892 = vmatpush1.msra.mxu0 0.0
    %4893 = vmatprep.subr.mxu0 0.0
    %4894 = vmatpush1.msra.mxu0 0.0
    %4895 = vmatprep.subr.mxu0 0.0
    %4896 = vmatpush1.msra.mxu0 0.0
    %4897 = vmatprep.subr.mxu0 0.0
    %4898 = vmatpush1.msra.mxu0 0.0
    %4899 = vmatprep.subr.mxu0 0.0
    %4900 = vmatpush1.msra.mxu0 0.0
    %4901 = vmatprep.subr.mxu0 0.0
    %4902 = vmatpush1.msra.mxu0 0.0
    %4903 = vmatprep.subr.mxu0 0.0
    %4904 = vmatpush1.msra.mxu0 0.0
    %4905 = vmatprep.subr.mxu0 0.0
    %4906 = vmatpush1.msra.mxu0 0.0
    %4907 = vmatprep.subr.mxu0 0.0
    %4908 = vmatpush1.msra.mxu0 0.0
    %4909 = vmatprep.subr.mxu0 0.0
    %4910 = vmatpush1.msra.mxu0 0.0
    %4911 = vmatprep.subr.mxu0 0.0
    %4912 = vmatpush1.msra.mxu0 0.0
    %4913 = vmatprep.subr.mxu0 0.0
    %4914 = vmatpush1.msra.mxu0 0.0
    %4915 = vmatprep.subr.mxu0 0.0
    %4916 = vmatpush1.msra.mxu0 0.0
    %4917 = vmatprep.subr.mxu0 0.0
    %4918 = vmatpush1.msra.mxu0 0.0
    %4919 = vmatprep.subr.mxu0 0.0
    %4920 = vmatpush1.msra.mxu0 0.0
    %4921 = vmatprep.subr.mxu0 0.0
    %4922 = vmatpush1.msra.mxu0 0.0
    %4923 = vmatprep.subr.mxu0 0.0
    %4924 = vmatpush1.msra.mxu0 0.0
    %4925 = vmatprep.subr.mxu0 0.0
    %4926 = vmatpush1.msra.mxu0 0.0
    %4927 = vmatprep.subr.mxu0 0.0
    %4928 = vmatpush1.msra.mxu0 0.0
    %4929 = vmatprep.subr.mxu0 0.0
    %4930 = vmatpush1.msra.mxu0 0.0
    %4931 = vmatprep.subr.mxu0 0.0
    %4932 = vmatpush1.msra.mxu0 0.0
    %4933 = vmatprep.subr.mxu0 0.0
    %4934 = vmatpush1.msra.mxu0 0.0
    %4935 = vmatprep.subr.mxu0 0.0
    %4936 = vmatpush1.msra.mxu0 0.0
    %4937 = vmatprep.subr.mxu0 0.0
    %4938 = vmatpush1.msra.mxu0 0.0
    %4939 = vmatprep.subr.mxu0 0.0
    %4940 = vmatpush1.msra.mxu0 0.0
    %4941 = vmatprep.subr.mxu0 0.0
    %4942 = vmatpush1.msra.mxu0 0.0
    %4943 = vmatprep.subr.mxu0 0.0
    %4944 = vmatpush1.msra.mxu0 0.0
    %4945 = vmatprep.subr.mxu0 0.0
    %4946 = vmatpush1.msra.mxu0 0.0
    %4947 = vmatprep.mubr.f32.mxu0 0.0
    %4948 = vmatmul.mubr.f32.gmra.mrb[0].mxu0 %v4716
    %v4949 = vpop.f32.mrb[0].mxu0
    %v4950 = vadd.f32 0.0, %v4949
    %v4951 = vpop.f32.mrb[0].mxu0
    %4952 = vmatprep.mubr.f32.mxu0 0.0
    %4953 = vmatmul.mubr.f32.gmra.mrb[0].mxu0 %v4719
    %v4954 = vpop.f32.mrb[0].mxu0
    %v4955 = vadd.f32 0.0, %v4954
    %v4956 = vpop.f32.mrb[0].mxu0
    %4957 = vmatprep.mubr.f32.mxu0 0.0
    %4958 = vmatmul.mubr.f32.gmra.mrb[0].mxu0 %v4721
    %v4959 = vpop.f32.mrb[0].mxu0
    %v4960 = vadd.f32 0.0, %v4959
    %v4961 = vpop.f32.mrb[0].mxu0
    %4962 = vdwg.mxu0
    %4963 = vmatprep.subr.mxu0 0.0
    %4964 = vmatpush1.msra.mxu0 %v2734
    %4965 = vmatprep.subr.mxu0 0.0
    %4966 = vmatpush1.msra.mxu0 %v2735
    %4967 = vmatprep.subr.mxu0 0.0
    %4968 = vmatpush1.msra.mxu0 %v2736
    %4969 = vmatprep.subr.mxu0 0.0
    %4970 = vmatpush1.msra.mxu0 %v2737
    %4971 = vmatprep.subr.mxu0 0.0
    %4972 = vmatpush1.msra.mxu0 0.0
    %4973 = vmatprep.subr.mxu0 0.0
    %4974 = vmatpush1.msra.mxu0 0.0
    %4975 = vmatprep.subr.mxu0 0.0
    %4976 = vmatpush1.msra.mxu0 0.0
    %4977 = vmatprep.subr.mxu0 0.0
    %4978 = vmatpush1.msra.mxu0 0.0
    %4979 = vmatprep.subr.mxu0 0.0
    %4980 = vmatpush1.msra.mxu0 0.0
    %4981 = vmatprep.subr.mxu0 0.0
    %4982 = vmatpush1.msra.mxu0 0.0
    %4983 = vmatprep.subr.mxu0 0.0
    %4984 = vmatpush1.msra.mxu0 0.0
    %4985 = vmatprep.subr.mxu0 0.0
    %4986 = vmatpush1.msra.mxu0 0.0
    %4987 = vmatprep.subr.mxu0 0.0
    %4988 = vmatpush1.msra.mxu0 0.0
    %4989 = vmatprep.subr.mxu0 0.0
    %4990 = vmatpush1.msra.mxu0 0.0
    %4991 = vmatprep.subr.mxu0 0.0
    %4992 = vmatpush1.msra.mxu0 0.0
    %4993 = vmatprep.subr.mxu0 0.0
    %4994 = vmatpush1.msra.mxu0 0.0
    %4995 = vmatprep.subr.mxu0 0.0
    %4996 = vmatpush1.msra.mxu0 0.0
    %4997 = vmatprep.subr.mxu0 0.0
    %4998 = vmatpush1.msra.mxu0 0.0
    %4999 = vmatprep.subr.mxu0 0.0
    %5000 = vmatpush1.msra.mxu0 0.0
    %5001 = vmatprep.subr.mxu0 0.0
    %5002 = vmatpush1.msra.mxu0 0.0
    %5003 = vmatprep.subr.mxu0 0.0
    %5004 = vmatpush1.msra.mxu0 0.0
    %5005 = vmatprep.subr.mxu0 0.0
    %5006 = vmatpush1.msra.mxu0 0.0
    %5007 = vmatprep.subr.mxu0 0.0
    %5008 = vmatpush1.msra.mxu0 0.0
    %5009 = vmatprep.subr.mxu0 0.0
    %5010 = vmatpush1.msra.mxu0 0.0
    %5011 = vmatprep.subr.mxu0 0.0
    %5012 = vmatpush1.msra.mxu0 0.0
    %5013 = vmatprep.subr.mxu0 0.0
    %5014 = vmatpush1.msra.mxu0 0.0
    %5015 = vmatprep.subr.mxu0 0.0
    %5016 = vmatpush1.msra.mxu0 0.0
    %5017 = vmatprep.subr.mxu0 0.0
    %5018 = vmatpush1.msra.mxu0 0.0
    %5019 = vmatprep.subr.mxu0 0.0
    %5020 = vmatpush1.msra.mxu0 0.0
    %5021 = vmatprep.subr.mxu0 0.0
    %5022 = vmatpush1.msra.mxu0 0.0
    %5023 = vmatprep.subr.mxu0 0.0
    %5024 = vmatpush1.msra.mxu0 0.0
    %5025 = vmatprep.subr.mxu0 0.0
    %5026 = vmatpush1.msra.mxu0 0.0
    %5027 = vmatprep.mubr.f32.mxu0 0.0
    %5028 = vmatmul.mubr.f32.gmra.mrb[0].mxu0 %v4716
    %v5029 = vpop.f32.mrb[0].mxu0
    %v5030 = vadd.f32 0.0, %v5029
    %v5031 = vpop.f32.mrb[0].mxu0
    %5032 = vmatprep.mubr.f32.mxu0 0.0
    %5033 = vmatmul.mubr.f32.gmra.mrb[0].mxu0 %v4719
    %v5034 = vpop.f32.mrb[0].mxu0
    %v5035 = vadd.f32 0.0, %v5034
    %v5036 = vpop.f32.mrb[0].mxu0
    %5037 = vmatprep.mubr.f32.mxu0 0.0
    %5038 = vmatmul.mubr.f32.gmra.mrb[0].mxu0 %v4721
    %v5039 = vpop.f32.mrb[0].mxu0
    %v5040 = vadd.f32 0.0, %v5039
    %v5041 = vpop.f32.mrb[0].mxu0
    %5042 = vdwg.mxu0
    %5043 = vmatprep.subr.mxu0 0.0
    %5044 = vmatpush1.msra.mxu0 %v2809
    %5045 = vmatprep.subr.mxu0 0.0
    %5046 = vmatpush1.msra.mxu0 %v2810
    %5047 = vmatprep.subr.mxu0 0.0
    %5048 = vmatpush1.msra.mxu0 %v2811
    %5049 = vmatprep.subr.mxu0 0.0
    %5050 = vmatpush1.msra.mxu0 %v2812
    %5051 = vmatprep.subr.mxu0 0.0
    %5052 = vmatpush1.msra.mxu0 0.0
    %5053 = vmatprep.subr.mxu0 0.0
    %5054 = vmatpush1.msra.mxu0 0.0
    %5055 = vmatprep.subr.mxu0 0.0
    %5056 = vmatpush1.msra.mxu0 0.0
    %5057 = vmatprep.subr.mxu0 0.0
    %5058 = vmatpush1.msra.mxu0 0.0
    %5059 = vmatprep.subr.mxu0 0.0
    %5060 = vmatpush1.msra.mxu0 0.0
    %5061 = vmatprep.subr.mxu0 0.0
    %5062 = vmatpush1.msra.mxu0 0.0
    %5063 = vmatprep.subr.mxu0 0.0
    %5064 = vmatpush1.msra.mxu0 0.0
    %5065 = vmatprep.subr.mxu0 0.0
    %5066 = vmatpush1.msra.mxu0 0.0
    %5067 = vmatprep.subr.mxu0 0.0
    %5068 = vmatpush1.msra.mxu0 0.0
    %5069 = vmatprep.subr.mxu0 0.0
    %5070 = vmatpush1.msra.mxu0 0.0
    %5071 = vmatprep.subr.mxu0 0.0
    %5072 = vmatpush1.msra.mxu0 0.0
    %5073 = vmatprep.subr.mxu0 0.0
    %5074 = vmatpush1.msra.mxu0 0.0
    %5075 = vmatprep.subr.mxu0 0.0
    %5076 = vmatpush1.msra.mxu0 0.0
    %5077 = vmatprep.subr.mxu0 0.0
    %5078 = vmatpush1.msra.mxu0 0.0
    %5079 = vmatprep.subr.mxu0 0.0
    %5080 = vmatpush1.msra.mxu0 0.0
    %5081 = vmatprep.subr.mxu0 0.0
    %5082 = vmatpush1.msra.mxu0 0.0
    %5083 = vmatprep.subr.mxu0 0.0
    %5084 = vmatpush1.msra.mxu0 0.0
    %5085 = vmatprep.subr.mxu0 0.0
    %5086 = vmatpush1.msra.mxu0 0.0
    %5087 = vmatprep.subr.mxu0 0.0
    %5088 = vmatpush1.msra.mxu0 0.0
    %5089 = vmatprep.subr.mxu0 0.0
    %5090 = vmatpush1.msra.mxu0 0.0
    %5091 = vmatprep.subr.mxu0 0.0
    %5092 = vmatpush1.msra.mxu0 0.0
    %5093 = vmatprep.subr.mxu0 0.0
    %5094 = vmatpush1.msra.mxu0 0.0
    %5095 = vmatprep.subr.mxu0 0.0
    %5096 = vmatpush1.msra.mxu0 0.0
    %5097 = vmatprep.subr.mxu0 0.0
    %5098 = vmatpush1.msra.mxu0 0.0
    %5099 = vmatprep.subr.mxu0 0.0
    %5100 = vmatpush1.msra.mxu0 0.0
    %5101 = vmatprep.subr.mxu0 0.0
    %5102 = vmatpush1.msra.mxu0 0.0
    %5103 = vmatprep.subr.mxu0 0.0
    %5104 = vmatpush1.msra.mxu0 0.0
    %5105 = vmatprep.subr.mxu0 0.0
    %5106 = vmatpush1.msra.mxu0 0.0
    %5107 = vmatprep.mubr.f32.mxu0 0.0
    %5108 = vmatmul.mubr.f32.gmra.mrb[0].mxu0 %v4716
    %v5109 = vpop.f32.mrb[0].mxu0
    %v5110 = vadd.f32 0.0, %v5109
    %v5111 = vpop.f32.mrb[0].mxu0
    %5112 = vmatprep.mubr.f32.mxu0 0.0
    %5113 = vmatmul.mubr.f32.gmra.mrb[0].mxu0 %v4719
    %v5114 = vpop.f32.mrb[0].mxu0
    %v5115 = vadd.f32 0.0, %v5114
    %v5116 = vpop.f32.mrb[0].mxu0
    %5117 = vmatprep.mubr.f32.mxu0 0.0
    %5118 = vmatmul.mubr.f32.gmra.mrb[0].mxu0 %v4721
    %v5119 = vpop.f32.mrb[0].mxu0
    %v5120 = vadd.f32 0.0, %v5119
    %v5121 = vpop.f32.mrb[0].mxu0
    %5122 = vdwg.mxu0
    %5123 = vmatprep.subr.mxu0 0.0
    %5124 = vmatpush1.msra.mxu0 %v2884
    %5125 = vmatprep.subr.mxu0 0.0
    %5126 = vmatpush1.msra.mxu0 %v2885
    %5127 = vmatprep.subr.mxu0 0.0
    %5128 = vmatpush1.msra.mxu0 %v2886
    %5129 = vmatprep.subr.mxu0 0.0
    %5130 = vmatpush1.msra.mxu0 %v2887
    %5131 = vmatprep.subr.mxu0 0.0
    %5132 = vmatpush1.msra.mxu0 0.0
    %5133 = vmatprep.subr.mxu0 0.0
    %5134 = vmatpush1.msra.mxu0 0.0
    %5135 = vmatprep.subr.mxu0 0.0
    %5136 = vmatpush1.msra.mxu0 0.0
    %5137 = vmatprep.subr.mxu0 0.0
    %5138 = vmatpush1.msra.mxu0 0.0
    %5139 = vmatprep.subr.mxu0 0.0
    %5140 = vmatpush1.msra.mxu0 0.0
    %5141 = vmatprep.subr.mxu0 0.0
    %5142 = vmatpush1.msra.mxu0 0.0
    %5143 = vmatprep.subr.mxu0 0.0
    %5144 = vmatpush1.msra.mxu0 0.0
    %5145 = vmatprep.subr.mxu0 0.0
    %5146 = vmatpush1.msra.mxu0 0.0
    %5147 = vmatprep.subr.mxu0 0.0
    %5148 = vmatpush1.msra.mxu0 0.0
    %5149 = vmatprep.subr.mxu0 0.0
    %5150 = vmatpush1.msra.mxu0 0.0
    %5151 = vmatprep.subr.mxu0 0.0
    %5152 = vmatpush1.msra.mxu0 0.0
    %5153 = vmatprep.subr.mxu0 0.0
    %5154 = vmatpush1.msra.mxu0 0.0
    %5155 = vmatprep.subr.mxu0 0.0
    %5156 = vmatpush1.msra.mxu0 0.0
    %5157 = vmatprep.subr.mxu0 0.0
    %5158 = vmatpush1.msra.mxu0 0.0
    %5159 = vmatprep.subr.mxu0 0.0
    %5160 = vmatpush1.msra.mxu0 0.0
    %5161 = vmatprep.subr.mxu0 0.0
    %5162 = vmatpush1.msra.mxu0 0.0
    %5163 = vmatprep.subr.mxu0 0.0
    %5164 = vmatpush1.msra.mxu0 0.0
    %5165 = vmatprep.subr.mxu0 0.0
    %5166 = vmatpush1.msra.mxu0 0.0
    %5167 = vmatprep.subr.mxu0 0.0
    %5168 = vmatpush1.msra.mxu0 0.0
    %5169 = vmatprep.subr.mxu0 0.0
    %5170 = vmatpush1.msra.mxu0 0.0
    %5171 = vmatprep.subr.mxu0 0.0
    %5172 = vmatpush1.msra.mxu0 0.0
    %5173 = vmatprep.subr.mxu0 0.0
    %5174 = vmatpush1.msra.mxu0 0.0
    %5175 = vmatprep.subr.mxu0 0.0
    %5176 = vmatpush1.msra.mxu0 0.0
    %5177 = vmatprep.subr.mxu0 0.0
    %5178 = vmatpush1.msra.mxu0 0.0
    %5179 = vmatprep.subr.mxu0 0.0
    %5180 = vmatpush1.msra.mxu0 0.0
    %5181 = vmatprep.subr.mxu0 0.0
    %5182 = vmatpush1.msra.mxu0 0.0
    %5183 = vmatprep.subr.mxu0 0.0
    %5184 = vmatpush1.msra.mxu0 0.0
    %5185 = vmatprep.subr.mxu0 0.0
    %5186 = vmatpush1.msra.mxu0 0.0
    %5187 = vmatprep.mubr.f32.mxu0 0.0
    %5188 = vmatmul.mubr.f32.gmra.mrb[0].mxu0 %v4716
    %v5189 = vpop.f32.mrb[0].mxu0
    %v5190 = vadd.f32 0.0, %v5189
    %v5191 = vpop.f32.mrb[0].mxu0
    %5192 = vmatprep.mubr.f32.mxu0 0.0
    %5193 = vmatmul.mubr.f32.gmra.mrb[0].mxu0 %v4719
    %v5194 = vpop.f32.mrb[0].mxu0
    %v5195 = vadd.f32 0.0, %v5194
    %v5196 = vpop.f32.mrb[0].mxu0
    %5197 = vmatprep.mubr.f32.mxu0 0.0
    %5198 = vmatmul.mubr.f32.gmra.mrb[0].mxu0 %v4721
    %v5199 = vpop.f32.mrb[0].mxu0
    %v5200 = vadd.f32 0.0, %v5199
    %v5201 = vpop.f32.mrb[0].mxu0
    %5202 = vdwg.mxu0
    %5203 = vmatprep.subr.mxu0 0.0
    %5204 = vmatpush1.msra.mxu0 %v2959
    %5205 = vmatprep.subr.mxu0 0.0
    %5206 = vmatpush1.msra.mxu0 %v2960
    %5207 = vmatprep.subr.mxu0 0.0
    %5208 = vmatpush1.msra.mxu0 %v2961
    %5209 = vmatprep.subr.mxu0 0.0
    %5210 = vmatpush1.msra.mxu0 %v2962
    %5211 = vmatprep.subr.mxu0 0.0
    %5212 = vmatpush1.msra.mxu0 0.0
    %5213 = vmatprep.subr.mxu0 0.0
    %5214 = vmatpush1.msra.mxu0 0.0
    %5215 = vmatprep.subr.mxu0 0.0
    %5216 = vmatpush1.msra.mxu0 0.0
    %5217 = vmatprep.subr.mxu0 0.0
    %5218 = vmatpush1.msra.mxu0 0.0
    %5219 = vmatprep.subr.mxu0 0.0
    %5220 = vmatpush1.msra.mxu0 0.0
    %5221 = vmatprep.subr.mxu0 0.0
    %5222 = vmatpush1.msra.mxu0 0.0
    %5223 = vmatprep.subr.mxu0 0.0
    %5224 = vmatpush1.msra.mxu0 0.0
    %5225 = vmatprep.subr.mxu0 0.0
    %5226 = vmatpush1.msra.mxu0 0.0
    %5227 = vmatprep.subr.mxu0 0.0
    %5228 = vmatpush1.msra.mxu0 0.0
    %5229 = vmatprep.subr.mxu0 0.0
    %5230 = vmatpush1.msra.mxu0 0.0
    %5231 = vmatprep.subr.mxu0 0.0
    %5232 = vmatpush1.msra.mxu0 0.0
    %5233 = vmatprep.subr.mxu0 0.0
    %5234 = vmatpush1.msra.mxu0 0.0
    %5235 = vmatprep.subr.mxu0 0.0
    %5236 = vmatpush1.msra.mxu0 0.0
    %5237 = vmatprep.subr.mxu0 0.0
    %5238 = vmatpush1.msra.mxu0 0.0
    %5239 = vmatprep.subr.mxu0 0.0
    %5240 = vmatpush1.msra.mxu0 0.0
    %5241 = vmatprep.subr.mxu0 0.0
    %5242 = vmatpush1.msra.mxu0 0.0
    %5243 = vmatprep.subr.mxu0 0.0
    %5244 = vmatpush1.msra.mxu0 0.0
    %5245 = vmatprep.subr.mxu0 0.0
    %5246 = vmatpush1.msra.mxu0 0.0
    %5247 = vmatprep.subr.mxu0 0.0
    %5248 = vmatpush1.msra.mxu0 0.0
    %5249 = vmatprep.subr.mxu0 0.0
    %5250 = vmatpush1.msra.mxu0 0.0
    %5251 = vmatprep.subr.mxu0 0.0
    %5252 = vmatpush1.msra.mxu0 0.0
    %5253 = vmatprep.subr.mxu0 0.0
    %5254 = vmatpush1.msra.mxu0 0.0
    %5255 = vmatprep.subr.mxu0 0.0
    %5256 = vmatpush1.msra.mxu0 0.0
    %5257 = vmatprep.subr.mxu0 0.0
    %5258 = vmatpush1.msra.mxu0 0.0
    %5259 = vmatprep.subr.mxu0 0.0
    %5260 = vmatpush1.msra.mxu0 0.0
    %5261 = vmatprep.subr.mxu0 0.0
    %5262 = vmatpush1.msra.mxu0 0.0
    %5263 = vmatprep.subr.mxu0 0.0
    %5264 = vmatpush1.msra.mxu0 0.0
    %5265 = vmatprep.subr.mxu0 0.0
    %5266 = vmatpush1.msra.mxu0 0.0
    %5267 = vmatprep.mubr.f32.mxu0 0.0
    %5268 = vmatmul.mubr.f32.gmra.mrb[0].mxu0 %v4716
    %v5269 = vpop.f32.mrb[0].mxu0
    %v5270 = vadd.f32 0.0, %v5269
    %v5271 = vpop.f32.mrb[0].mxu0
    %5272 = vmatprep.mubr.f32.mxu0 0.0
    %5273 = vmatmul.mubr.f32.gmra.mrb[0].mxu0 %v4719
    %v5274 = vpop.f32.mrb[0].mxu0
    %v5275 = vadd.f32 0.0, %v5274
    %v5276 = vpop.f32.mrb[0].mxu0
    %5277 = vmatprep.mubr.f32.mxu0 0.0
    %5278 = vmatmul.mubr.f32.gmra.mrb[0].mxu0 %v4721
    %v5279 = vpop.f32.mrb[0].mxu0
    %v5280 = vadd.f32 0.0, %v5279
    %v5281 = vpop.f32.mrb[0].mxu0
    %5282 = vdwg.mxu0
    %5283 = vmatprep.subr.mxu0 0.0
    %5284 = vmatpush1.msra.mxu0 %v3034
    %5285 = vmatprep.subr.mxu0 0.0
    %5286 = vmatpush1.msra.mxu0 %v3035
    %5287 = vmatprep.subr.mxu0 0.0
    %5288 = vmatpush1.msra.mxu0 %v3036
    %5289 = vmatprep.subr.mxu0 0.0
    %5290 = vmatpush1.msra.mxu0 %v3037
    %5291 = vmatprep.subr.mxu0 0.0
    %5292 = vmatpush1.msra.mxu0 0.0
    %5293 = vmatprep.subr.mxu0 0.0
    %5294 = vmatpush1.msra.mxu0 0.0
    %5295 = vmatprep.subr.mxu0 0.0
    %5296 = vmatpush1.msra.mxu0 0.0
    %5297 = vmatprep.subr.mxu0 0.0
    %5298 = vmatpush1.msra.mxu0 0.0
    %5299 = vmatprep.subr.mxu0 0.0
    %5300 = vmatpush1.msra.mxu0 0.0
    %5301 = vmatprep.subr.mxu0 0.0
    %5302 = vmatpush1.msra.mxu0 0.0
    %5303 = vmatprep.subr.mxu0 0.0
    %5304 = vmatpush1.msra.mxu0 0.0
    %5305 = vmatprep.subr.mxu0 0.0
    %5306 = vmatpush1.msra.mxu0 0.0
    %5307 = vmatprep.subr.mxu0 0.0
    %5308 = vmatpush1.msra.mxu0 0.0
    %5309 = vmatprep.subr.mxu0 0.0
    %5310 = vmatpush1.msra.mxu0 0.0
    %5311 = vmatprep.subr.mxu0 0.0
    %5312 = vmatpush1.msra.mxu0 0.0
    %5313 = vmatprep.subr.mxu0 0.0
    %5314 = vmatpush1.msra.mxu0 0.0
    %5315 = vmatprep.subr.mxu0 0.0
    %5316 = vmatpush1.msra.mxu0 0.0
    %5317 = vmatprep.subr.mxu0 0.0
    %5318 = vmatpush1.msra.mxu0 0.0
    %5319 = vmatprep.subr.mxu0 0.0
    %5320 = vmatpush1.msra.mxu0 0.0
    %5321 = vmatprep.subr.mxu0 0.0
    %5322 = vmatpush1.msra.mxu0 0.0
    %5323 = vmatprep.subr.mxu0 0.0
    %5324 = vmatpush1.msra.mxu0 0.0
    %5325 = vmatprep.subr.mxu0 0.0
    %5326 = vmatpush1.msra.mxu0 0.0
    %5327 = vmatprep.subr.mxu0 0.0
    %5328 = vmatpush1.msra.mxu0 0.0
    %5329 = vmatprep.subr.mxu0 0.0
    %5330 = vmatpush1.msra.mxu0 0.0
    %5331 = vmatprep.subr.mxu0 0.0
    %5332 = vmatpush1.msra.mxu0 0.0
    %5333 = vmatprep.subr.mxu0 0.0
    %5334 = vmatpush1.msra.mxu0 0.0
    %5335 = vmatprep.subr.mxu0 0.0
    %5336 = vmatpush1.msra.mxu0 0.0
    %5337 = vmatprep.subr.mxu0 0.0
    %5338 = vmatpush1.msra.mxu0 0.0
    %5339 = vmatprep.subr.mxu0 0.0
    %5340 = vmatpush1.msra.mxu0 0.0
    %5341 = vmatprep.subr.mxu0 0.0
    %5342 = vmatpush1.msra.mxu0 0.0
    %5343 = vmatprep.subr.mxu0 0.0
    %5344 = vmatpush1.msra.mxu0 0.0
    %5345 = vmatprep.subr.mxu0 0.0
    %5346 = vmatpush1.msra.mxu0 0.0
    %5347 = vmatprep.mubr.f32.mxu0 0.0
    %5348 = vmatmul.mubr.f32.gmra.mrb[0].mxu0 %v4716
    %v5349 = vpop.f32.mrb[0].mxu0
    %v5350 = vadd.f32 0.0, %v5349
    %v5351 = vpop.f32.mrb[0].mxu0
    %5352 = vmatprep.mubr.f32.mxu0 0.0
    %5353 = vmatmul.mubr.f32.gmra.mrb[0].mxu0 %v4719
    %v5354 = vpop.f32.mrb[0].mxu0
    %v5355 = vadd.f32 0.0, %v5354
    %v5356 = vpop.f32.mrb[0].mxu0
    %5357 = vmatprep.mubr.f32.mxu0 0.0
    %5358 = vmatmul.mubr.f32.gmra.mrb[0].mxu0 %v4721
    %v5359 = vpop.f32.mrb[0].mxu0
    %v5360 = vadd.f32 0.0, %v5359
    %v5361 = vpop.f32.mrb[0].mxu0
    %5362 = vdwg.mxu0
    %5363 = vmatprep.subr.mxu0 0.0
    %5364 = vmatpush1.msra.mxu0 %v3109
    %5365 = vmatprep.subr.mxu0 0.0
    %5366 = vmatpush1.msra.mxu0 %v3110
    %5367 = vmatprep.subr.mxu0 0.0
    %5368 = vmatpush1.msra.mxu0 %v3111
    %5369 = vmatprep.subr.mxu0 0.0
    %5370 = vmatpush1.msra.mxu0 %v3112
    %5371 = vmatprep.subr.mxu0 0.0
    %5372 = vmatpush1.msra.mxu0 0.0
    %5373 = vmatprep.subr.mxu0 0.0
    %5374 = vmatpush1.msra.mxu0 0.0
    %5375 = vmatprep.subr.mxu0 0.0
    %5376 = vmatpush1.msra.mxu0 0.0
    %5377 = vmatprep.subr.mxu0 0.0
    %5378 = vmatpush1.msra.mxu0 0.0
    %5379 = vmatprep.subr.mxu0 0.0
    %5380 = vmatpush1.msra.mxu0 0.0
    %5381 = vmatprep.subr.mxu0 0.0
    %5382 = vmatpush1.msra.mxu0 0.0
    %5383 = vmatprep.subr.mxu0 0.0
    %5384 = vmatpush1.msra.mxu0 0.0
    %5385 = vmatprep.subr.mxu0 0.0
    %5386 = vmatpush1.msra.mxu0 0.0
    %5387 = vmatprep.subr.mxu0 0.0
    %5388 = vmatpush1.msra.mxu0 0.0
    %5389 = vmatprep.subr.mxu0 0.0
    %5390 = vmatpush1.msra.mxu0 0.0
    %5391 = vmatprep.subr.mxu0 0.0
    %5392 = vmatpush1.msra.mxu0 0.0
    %5393 = vmatprep.subr.mxu0 0.0
    %5394 = vmatpush1.msra.mxu0 0.0
    %5395 = vmatprep.subr.mxu0 0.0
    %5396 = vmatpush1.msra.mxu0 0.0
    %5397 = vmatprep.subr.mxu0 0.0
    %5398 = vmatpush1.msra.mxu0 0.0
    %5399 = vmatprep.subr.mxu0 0.0
    %5400 = vmatpush1.msra.mxu0 0.0
    %5401 = vmatprep.subr.mxu0 0.0
    %5402 = vmatpush1.msra.mxu0 0.0
    %5403 = vmatprep.subr.mxu0 0.0
    %5404 = vmatpush1.msra.mxu0 0.0
    %5405 = vmatprep.subr.mxu0 0.0
    %5406 = vmatpush1.msra.mxu0 0.0
    %5407 = vmatprep.subr.mxu0 0.0
    %5408 = vmatpush1.msra.mxu0 0.0
    %5409 = vmatprep.subr.mxu0 0.0
    %5410 = vmatpush1.msra.mxu0 0.0
    %5411 = vmatprep.subr.mxu0 0.0
    %5412 = vmatpush1.msra.mxu0 0.0
    %5413 = vmatprep.subr.mxu0 0.0
    %5414 = vmatpush1.msra.mxu0 0.0
    %5415 = vmatprep.subr.mxu0 0.0
    %5416 = vmatpush1.msra.mxu0 0.0
    %5417 = vmatprep.subr.mxu0 0.0
    %5418 = vmatpush1.msra.mxu0 0.0
    %5419 = vmatprep.subr.mxu0 0.0
    %5420 = vmatpush1.msra.mxu0 0.0
    %5421 = vmatprep.subr.mxu0 0.0
    %5422 = vmatpush1.msra.mxu0 0.0
    %5423 = vmatprep.subr.mxu0 0.0
    %5424 = vmatpush1.msra.mxu0 0.0
    %5425 = vmatprep.subr.mxu0 0.0
    %5426 = vmatpush1.msra.mxu0 0.0
    %5427 = vmatprep.mubr.f32.mxu0 0.0
    %5428 = vmatmul.mubr.f32.gmra.mrb[0].mxu0 %v4716
    %v5429 = vpop.f32.mrb[0].mxu0
    %v5430 = vadd.f32 0.0, %v5429
    %v5431 = vpop.f32.mrb[0].mxu0
    %5432 = vmatprep.mubr.f32.mxu0 0.0
    %5433 = vmatmul.mubr.f32.gmra.mrb[0].mxu0 %v4719
    %v5434 = vpop.f32.mrb[0].mxu0
    %v5435 = vadd.f32 0.0, %v5434
    %v5436 = vpop.f32.mrb[0].mxu0
    %5437 = vmatprep.mubr.f32.mxu0 0.0
    %5438 = vmatmul.mubr.f32.gmra.mrb[0].mxu0 %v4721
    %v5439 = vpop.f32.mrb[0].mxu0
    %v5440 = vadd.f32 0.0, %v5439
    %v5441 = vpop.f32.mrb[0].mxu0
    %5442 = vdwg.mxu0
    %5443 = vmatprep.subr.mxu0 0.0
    %5444 = vmatpush1.msra.mxu0 %v3184
    %5445 = vmatprep.subr.mxu0 0.0
    %5446 = vmatpush1.msra.mxu0 %v3185
    %5447 = vmatprep.subr.mxu0 0.0
    %5448 = vmatpush1.msra.mxu0 %v3186
    %5449 = vmatprep.subr.mxu0 0.0
    %5450 = vmatpush1.msra.mxu0 %v3187
    %5451 = vmatprep.subr.mxu0 0.0
    %5452 = vmatpush1.msra.mxu0 0.0
    %5453 = vmatprep.subr.mxu0 0.0
    %5454 = vmatpush1.msra.mxu0 0.0
    %5455 = vmatprep.subr.mxu0 0.0
    %5456 = vmatpush1.msra.mxu0 0.0
    %5457 = vmatprep.subr.mxu0 0.0
    %5458 = vmatpush1.msra.mxu0 0.0
    %5459 = vmatprep.subr.mxu0 0.0
    %5460 = vmatpush1.msra.mxu0 0.0
    %5461 = vmatprep.subr.mxu0 0.0
    %5462 = vmatpush1.msra.mxu0 0.0
    %5463 = vmatprep.subr.mxu0 0.0
    %5464 = vmatpush1.msra.mxu0 0.0
    %5465 = vmatprep.subr.mxu0 0.0
    %5466 = vmatpush1.msra.mxu0 0.0
    %5467 = vmatprep.subr.mxu0 0.0
    %5468 = vmatpush1.msra.mxu0 0.0
    %5469 = vmatprep.subr.mxu0 0.0
    %5470 = vmatpush1.msra.mxu0 0.0
    %5471 = vmatprep.subr.mxu0 0.0
    %5472 = vmatpush1.msra.mxu0 0.0
    %5473 = vmatprep.subr.mxu0 0.0
    %5474 = vmatpush1.msra.mxu0 0.0
    %5475 = vmatprep.subr.mxu0 0.0
    %5476 = vmatpush1.msra.mxu0 0.0
    %5477 = vmatprep.subr.mxu0 0.0
    %5478 = vmatpush1.msra.mxu0 0.0
    %5479 = vmatprep.subr.mxu0 0.0
    %5480 = vmatpush1.msra.mxu0 0.0
    %5481 = vmatprep.subr.mxu0 0.0
    %5482 = vmatpush1.msra.mxu0 0.0
    %5483 = vmatprep.subr.mxu0 0.0
    %5484 = vmatpush1.msra.mxu0 0.0
    %5485 = vmatprep.subr.mxu0 0.0
    %5486 = vmatpush1.msra.mxu0 0.0
    %5487 = vmatprep.subr.mxu0 0.0
    %5488 = vmatpush1.msra.mxu0 0.0
    %5489 = vmatprep.subr.mxu0 0.0
    %5490 = vmatpush1.msra.mxu0 0.0
    %5491 = vmatprep.subr.mxu0 0.0
    %5492 = vmatpush1.msra.mxu0 0.0
    %5493 = vmatprep.subr.mxu0 0.0
    %5494 = vmatpush1.msra.mxu0 0.0
    %5495 = vmatprep.subr.mxu0 0.0
    %5496 = vmatpush1.msra.mxu0 0.0
    %5497 = vmatprep.subr.mxu0 0.0
    %5498 = vmatpush1.msra.mxu0 0.0
    %5499 = vmatprep.subr.mxu0 0.0
    %5500 = vmatpush1.msra.mxu0 0.0
    %5501 = vmatprep.subr.mxu0 0.0
    %5502 = vmatpush1.msra.mxu0 0.0
    %5503 = vmatprep.subr.mxu0 0.0
    %5504 = vmatpush1.msra.mxu0 0.0
    %5505 = vmatprep.subr.mxu0 0.0
    %5506 = vmatpush1.msra.mxu0 0.0
    %5507 = vmatprep.mubr.f32.mxu0 0.0
    %5508 = vmatmul.mubr.f32.gmra.mrb[0].mxu0 %v4716
    %v5509 = vpop.f32.mrb[0].mxu0
    %v5510 = vadd.f32 0.0, %v5509
    %v5511 = vpop.f32.mrb[0].mxu0
    %5512 = vmatprep.mubr.f32.mxu0 0.0
    %5513 = vmatmul.mubr.f32.gmra.mrb[0].mxu0 %v4719
    %v5514 = vpop.f32.mrb[0].mxu0
    %v5515 = vadd.f32 0.0, %v5514
    %v5516 = vpop.f32.mrb[0].mxu0
    %5517 = vmatprep.mubr.f32.mxu0 0.0
    %5518 = vmatmul.mubr.f32.gmra.mrb[0].mxu0 %v4721
    %v5519 = vpop.f32.mrb[0].mxu0
    %v5520 = vadd.f32 0.0, %v5519
    %v5521 = vpop.f32.mrb[0].mxu0
    %5522 = vdwg.mxu0
    %5523 = vmatprep.subr.mxu0 0.0
    %5524 = vmatpush1.msra.mxu0 %v3259
    %5525 = vmatprep.subr.mxu0 0.0
    %5526 = vmatpush1.msra.mxu0 %v3260
    %5527 = vmatprep.subr.mxu0 0.0
    %5528 = vmatpush1.msra.mxu0 %v3261
    %5529 = vmatprep.subr.mxu0 0.0
    %5530 = vmatpush1.msra.mxu0 %v3262
    %5531 = vmatprep.subr.mxu0 0.0
    %5532 = vmatpush1.msra.mxu0 0.0
    %5533 = vmatprep.subr.mxu0 0.0
    %5534 = vmatpush1.msra.mxu0 0.0
    %5535 = vmatprep.subr.mxu0 0.0
    %5536 = vmatpush1.msra.mxu0 0.0
    %5537 = vmatprep.subr.mxu0 0.0
    %5538 = vmatpush1.msra.mxu0 0.0
    %5539 = vmatprep.subr.mxu0 0.0
    %5540 = vmatpush1.msra.mxu0 0.0
    %5541 = vmatprep.subr.mxu0 0.0
    %5542 = vmatpush1.msra.mxu0 0.0
    %5543 = vmatprep.subr.mxu0 0.0
    %5544 = vmatpush1.msra.mxu0 0.0
    %5545 = vmatprep.subr.mxu0 0.0
    %5546 = vmatpush1.msra.mxu0 0.0
    %5547 = vmatprep.subr.mxu0 0.0
    %5548 = vmatpush1.msra.mxu0 0.0
    %5549 = vmatprep.subr.mxu0 0.0
    %5550 = vmatpush1.msra.mxu0 0.0
    %5551 = vmatprep.subr.mxu0 0.0
    %5552 = vmatpush1.msra.mxu0 0.0
    %5553 = vmatprep.subr.mxu0 0.0
    %5554 = vmatpush1.msra.mxu0 0.0
    %5555 = vmatprep.subr.mxu0 0.0
    %5556 = vmatpush1.msra.mxu0 0.0
    %5557 = vmatprep.subr.mxu0 0.0
    %5558 = vmatpush1.msra.mxu0 0.0
    %5559 = vmatprep.subr.mxu0 0.0
    %5560 = vmatpush1.msra.mxu0 0.0
    %5561 = vmatprep.subr.mxu0 0.0
    %5562 = vmatpush1.msra.mxu0 0.0
    %5563 = vmatprep.subr.mxu0 0.0
    %5564 = vmatpush1.msra.mxu0 0.0
    %5565 = vmatprep.subr.mxu0 0.0
    %5566 = vmatpush1.msra.mxu0 0.0
    %5567 = vmatprep.subr.mxu0 0.0
    %5568 = vmatpush1.msra.mxu0 0.0
    %5569 = vmatprep.subr.mxu0 0.0
    %5570 = vmatpush1.msra.mxu0 0.0
    %5571 = vmatprep.subr.mxu0 0.0
    %5572 = vmatpush1.msra.mxu0 0.0
    %5573 = vmatprep.subr.mxu0 0.0
    %5574 = vmatpush1.msra.mxu0 0.0
    %5575 = vmatprep.subr.mxu0 0.0
    %5576 = vmatpush1.msra.mxu0 0.0
    %5577 = vmatprep.subr.mxu0 0.0
    %5578 = vmatpush1.msra.mxu0 0.0
    %5579 = vmatprep.subr.mxu0 0.0
    %5580 = vmatpush1.msra.mxu0 0.0
    %5581 = vmatprep.subr.mxu0 0.0
    %5582 = vmatpush1.msra.mxu0 0.0
    %5583 = vmatprep.subr.mxu0 0.0
    %5584 = vmatpush1.msra.mxu0 0.0
    %5585 = vmatprep.subr.mxu0 0.0
    %5586 = vmatpush1.msra.mxu0 0.0
    %5587 = vmatprep.mubr.f32.mxu0 0.0
    %5588 = vmatmul.mubr.f32.gmra.mrb[0].mxu0 %v4716
    %v5589 = vpop.f32.mrb[0].mxu0
    %v5590 = vadd.f32 0.0, %v5589
    %v5591 = vpop.f32.mrb[0].mxu0
    %5592 = vmatprep.mubr.f32.mxu0 0.0
    %5593 = vmatmul.mubr.f32.gmra.mrb[0].mxu0 %v4719
    %v5594 = vpop.f32.mrb[0].mxu0
    %v5595 = vadd.f32 0.0, %v5594
    %v5596 = vpop.f32.mrb[0].mxu0
    %5597 = vmatprep.mubr.f32.mxu0 0.0
    %5598 = vmatmul.mubr.f32.gmra.mrb[0].mxu0 %v4721
    %v5599 = vpop.f32.mrb[0].mxu0
    %v5600 = vadd.f32 0.0, %v5599
    %v5601 = vpop.f32.mrb[0].mxu0
    %5602 = vdwg.mxu0
    %v5603 = vld [vmem:[%s47] sm:$0xff]
    %v5604 = vld [vmem:[%s47 + $0x8] sm:$0xff]
    %v5605 = vld [vmem:[%s47 + $0x10] sm:$0xff]
    %v5606 = vld [vmem:[%s47 + $0x18] sm:$0xf]
    %v5607 = vld [vmem:[%s47 + $0x20] sm:$0xf]
    %v5608 = vld [vmem:[%s47 + $0x28] sm:$0xf]
    %vm5609 = vcmask 64512
    %v5611 = vsel %vm5609, %v5605, 0
    %v5614 = vsel %vm5609, %v5608, 0
    %5616 = vmatprep.subr.mxu0 0.0
    %5617 = vmatpush1.msra.mxu0 %v4790
    %5618 = vmatprep.subr.mxu0 0.0
    %5619 = vmatpush1.msra.mxu0 %v4795
    %5620 = vmatprep.subr.mxu0 0.0
    %5621 = vmatpush1.msra.mxu0 %v4800
    %5622 = vmatprep.subr.mxu0 0.0
    %5623 = vmatpush1.msra.mxu0 %v4870
    %5624 = vmatprep.subr.mxu0 0.0
    %5625 = vmatpush1.msra.mxu0 %v4875
    %5626 = vmatprep.subr.mxu0 0.0
    %5627 = vmatpush1.msra.mxu0 %v4880
    %5628 = vmatprep.subr.mxu0 0.0
    %5629 = vmatpush1.msra.mxu0 %v4950
    %5630 = vmatprep.subr.mxu0 0.0
    %5631 = vmatpush1.msra.mxu0 %v4955
    %5632 = vmatprep.subr.mxu0 0.0
    %5633 = vmatpush1.msra.mxu0 %v4960
    %5634 = vmatprep.subr.mxu0 0.0
    %5635 = vmatpush1.msra.mxu0 %v5030
    %5636 = vmatprep.subr.mxu0 0.0
    %5637 = vmatpush1.msra.mxu0 %v5035
    %5638 = vmatprep.subr.mxu0 0.0
    %5639 = vmatpush1.msra.mxu0 %v5040
    %5640 = vmatprep.subr.mxu0 0.0
    %5641 = vmatpush1.msra.mxu0 %v5110
    %5642 = vmatprep.subr.mxu0 0.0
    %5643 = vmatpush1.msra.mxu0 %v5115
    %5644 = vmatprep.subr.mxu0 0.0
    %5645 = vmatpush1.msra.mxu0 %v5120
    %5646 = vmatprep.subr.mxu0 0.0
    %5647 = vmatpush1.msra.mxu0 %v5190
    %5648 = vmatprep.subr.mxu0 0.0
    %5649 = vmatpush1.msra.mxu0 %v5195
    %5650 = vmatprep.subr.mxu0 0.0
    %5651 = vmatpush1.msra.mxu0 %v5200
    %5652 = vmatprep.subr.mxu0 0.0
    %5653 = vmatpush1.msra.mxu0 %v5270
    %5654 = vmatprep.subr.mxu0 0.0
    %5655 = vmatpush1.msra.mxu0 %v5275
    %5656 = vmatprep.subr.mxu0 0.0
    %5657 = vmatpush1.msra.mxu0 %v5280
    %5658 = vmatprep.subr.mxu0 0.0
    %5659 = vmatpush1.msra.mxu0 %v5350
    %5660 = vmatprep.subr.mxu0 0.0
    %5661 = vmatpush1.msra.mxu0 %v5355
    %5662 = vmatprep.subr.mxu0 0.0
    %5663 = vmatpush1.msra.mxu0 %v5360
    %5664 = vmatprep.subr.mxu0 0.0
    %5665 = vmatpush1.msra.mxu0 %v5430
    %5666 = vmatprep.subr.mxu0 0.0
    %5667 = vmatpush1.msra.mxu0 %v5435
    %5668 = vmatprep.subr.mxu0 0.0
    %5669 = vmatpush1.msra.mxu0 %v5440
    %5670 = vmatprep.subr.mxu0 0.0
    %5671 = vmatpush1.msra.mxu0 %v5510
    %5672 = vmatprep.subr.mxu0 0.0
    %5673 = vmatpush1.msra.mxu0 %v5515
    %5674 = vmatprep.subr.mxu0 0.0
    %5675 = vmatpush1.msra.mxu0 %v5520
    %5676 = vmatprep.subr.mxu0 0.0
    %5677 = vmatpush1.msra.mxu0 %v5590
    %5678 = vmatprep.subr.mxu0 0.0
    %5679 = vmatpush1.msra.mxu0 %v5595
    %5680 = vmatprep.mubr.f32.mxu0 %v5604
    %5681 = vmatmul.mubr.f32.gmra.mrb[0].mxu0 %v5603
    %v5682 = vpop.f32.mrb[0].mxu0
    %v5683 = vadd.f32 0.0, %v5682
    %v5684 = vpop.f32.mrb[0].mxu0
    %5685 = vmatprep.mubr.f32.mxu0 %v5607
    %5686 = vmatmul.mubr.f32.gmra.mrb[0].mxu0 %v5606
    %v5687 = vpop.f32.mrb[0].mxu0
    %v5688 = vadd.f32 0.0, %v5687
    %v5689 = vpop.f32.mrb[0].mxu0
    %5690 = vdwg.mxu0
    %5691 = vmatprep.subr.mxu0 0.0
    %5692 = vmatpush1.msra.mxu0 %v5600
    %5693 = vmatprep.subr.mxu0 0.0
    %5694 = vmatpush1.msra.mxu0 0.0
    %5695 = vmatprep.subr.mxu0 0.0
    %5696 = vmatpush1.msra.mxu0 0.0
    %5697 = vmatprep.subr.mxu0 0.0
    %5698 = vmatpush1.msra.mxu0 0.0
    %5699 = vmatprep.subr.mxu0 0.0
    %5700 = vmatpush1.msra.mxu0 0.0
    %5701 = vmatprep.subr.mxu0 0.0
    %5702 = vmatpush1.msra.mxu0 0.0
    %5703 = vmatprep.subr.mxu0 0.0
    %5704 = vmatpush1.msra.mxu0 0.0
    %5705 = vmatprep.subr.mxu0 0.0
    %5706 = vmatpush1.msra.mxu0 0.0
    %5707 = vmatprep.subr.mxu0 0.0
    %5708 = vmatpush1.msra.mxu0 0.0
    %5709 = vmatprep.subr.mxu0 0.0
    %5710 = vmatpush1.msra.mxu0 0.0
    %5711 = vmatprep.subr.mxu0 0.0
    %5712 = vmatpush1.msra.mxu0 0.0
    %5713 = vmatprep.subr.mxu0 0.0
    %5714 = vmatpush1.msra.mxu0 0.0
    %5715 = vmatprep.subr.mxu0 0.0
    %5716 = vmatpush1.msra.mxu0 0.0
    %5717 = vmatprep.subr.mxu0 0.0
    %5718 = vmatpush1.msra.mxu0 0.0
    %5719 = vmatprep.subr.mxu0 0.0
    %5720 = vmatpush1.msra.mxu0 0.0
    %5721 = vmatprep.subr.mxu0 0.0
    %5722 = vmatpush1.msra.mxu0 0.0
    %5723 = vmatprep.subr.mxu0 0.0
    %5724 = vmatpush1.msra.mxu0 0.0
    %5725 = vmatprep.subr.mxu0 0.0
    %5726 = vmatpush1.msra.mxu0 0.0
    %5727 = vmatprep.subr.mxu0 0.0
    %5728 = vmatpush1.msra.mxu0 0.0
    %5729 = vmatprep.subr.mxu0 0.0
    %5730 = vmatpush1.msra.mxu0 0.0
    %5731 = vmatprep.subr.mxu0 0.0
    %5732 = vmatpush1.msra.mxu0 0.0
    %5733 = vmatprep.subr.mxu0 0.0
    %5734 = vmatpush1.msra.mxu0 0.0
    %5735 = vmatprep.subr.mxu0 0.0
    %5736 = vmatpush1.msra.mxu0 0.0
    %5737 = vmatprep.subr.mxu0 0.0
    %5738 = vmatpush1.msra.mxu0 0.0
    %5739 = vmatprep.subr.mxu0 0.0
    %5740 = vmatpush1.msra.mxu0 0.0
    %5741 = vmatprep.subr.mxu0 0.0
    %5742 = vmatpush1.msra.mxu0 0.0
    %5743 = vmatprep.subr.mxu0 0.0
    %5744 = vmatpush1.msra.mxu0 0.0
    %5745 = vmatprep.subr.mxu0 0.0
    %5746 = vmatpush1.msra.mxu0 0.0
    %5747 = vmatprep.subr.mxu0 0.0
    %5748 = vmatpush1.msra.mxu0 0.0
    %5749 = vmatprep.subr.mxu0 0.0
    %5750 = vmatpush1.msra.mxu0 0.0
    %5751 = vmatprep.subr.mxu0 0.0
    %5752 = vmatpush1.msra.mxu0 0.0
    %5753 = vmatprep.subr.mxu0 0.0
    %5754 = vmatpush1.msra.mxu0 0.0
    %5755 = vmatprep.mubr.f32.mxu0 0.0
    %5756 = vmatmul.mubr.f32.gmra.mrb[0].mxu0 %v5611
    %v5757 = vpop.f32.mrb[0].mxu0
    %v5758 = vadd.f32 %v5683, %v5757
    %v5759 = vpop.f32.mrb[0].mxu0
    %5760 = vmatprep.mubr.f32.mxu0 0.0
    %5761 = vmatmul.mubr.f32.gmra.mrb[0].mxu0 %v5614
    %v5762 = vpop.f32.mrb[0].mxu0
    %v5763 = vadd.f32 %v5688, %v5762
    %v5764 = vpop.f32.mrb[0].mxu0
    %5765 = vdwg.mxu0
    %v5766 = vsel %vm2509, %v5758, 0.0
    %5767 = vadd.xlane.f32.xlu0 %v5766
    %v5768 = vpop.xlane.xlu0 %5767
    %v5769 = vsel %vm3420, %v5763, 0.0
    %5770 = vadd.xlane.f32.xlu0 %v5769
    %v5771 = vpop.xlane.xlu0 %5770
    %v5772 = vmul.f32 %v5768, %v3424
    %v5773 = vmul.f32 %v5771, %v3424
    %v5774 = vmul.f32 %v5758, %v5758
    %v5775 = vmul.f32 %v5763, %v5763
    %v5776 = vsel %vm2509, %v5774, 0.0
    %5777 = vadd.xlane.f32.xlu0 %v5776
    %v5778 = vpop.xlane.xlu0 %5777
    %v5779 = vsel %vm3420, %v5775, 0.0
    %5780 = vadd.xlane.f32.xlu0 %v5779
    %v5781 = vpop.xlane.xlu0 %5780
    %v5782 = vmul.f32 %v5778, %v3424
    %v5783 = vmul.f32 %v5781, %v3424
    %v5784 = vmul.f32 %v5772, %v5772
    %v5785 = vmul.f32 %v5773, %v5773
    %v5786 = vsub.f32 %v5782, %v5784
    %v5787 = vsub.f32 %v5783, %v5785
    %v5788 = vsub.f32 %v5758, %v5772
    %v5789 = vsub.f32 %v5763, %v5773
    %v5790 = vadd.f32 %v5786, 1e-05
    %v5791 = vadd.f32 %v5787, 1e-05
    %v5792 = vrsqrt.pop %v5790
    %v5793 = vrsqrt.pop %v5791
    %v5794 = vmul.f32 %v5788, %v5792
    %v5795 = vmul.f32 %v5789, %v5793
    %v5796 = vld [vmem:[%s49] sm:$0xff]
    %v5797 = vld [vmem:[%s49 + $0x8] sm:$0xf]
    %5799 = vset.pattern.permute.xlu0 0
    %5800 = vperm.xlu0 %5799, %v5796
    %v5801 = vpop.permute.xlu0 %5800
    %5804 = vset.pattern.permute.xlu0 0
    %5805 = vperm.xlu0 %5804, %v5797
    %v5806 = vpop.permute.xlu0 %5805
    %v5808 = vmul.f32 %v5794, %v5801
    %v5809 = vmul.f32 %v5795, %v5806
    %v5810 = vld [vmem:[%s51] sm:$0xff]
    %v5811 = vld [vmem:[%s51 + $0x8] sm:$0xf]
    %5813 = vset.pattern.permute.xlu0 0
    %5814 = vperm.xlu0 %5813, %v5810
    %v5815 = vpop.permute.xlu0 %5814
    %5818 = vset.pattern.permute.xlu0 0
    %5819 = vperm.xlu0 %5818, %v5811
    %v5820 = vpop.permute.xlu0 %5819
    %v5822 = vadd.f32 %v5808, %v5815
    %v5823 = vadd.f32 %v5809, %v5820
    %vm5824 = vcmp.ge.f32.partialorder %v5822, 0.0
    %vm5825 = vcmp.ge.f32.partialorder %v5823, 0.0
    %v5826 = vmul.f32 %v5822, 0.1
    %v5827 = vmul.f32 %v5823, 0.1
    %v5828 = vsel %vm5824, %v5822, %v5826
    %v5829 = vsel %vm5825, %v5823, %v5827
    %v5830 = vld [vmem:[#allocation8] sm:$0xff]
    %v5831 = vld [vmem:[#allocation8 + $0x8] sm:$0xff]
    %v5832 = vld [vmem:[#allocation8 + $0x10] sm:$0xff]
    %v5833 = vld [vmem:[#allocation8 + $0x18] sm:$0xff]
    %v5835 = vsel %vm2509, %v5828, 0
    %v5838 = vsel %vm2509, %v5829, 0
    %5840 = vmatprep.subr.mxu0 0.0
    %5841 = vmatpush1.msra.mxu0 %v5830
    %5842 = vmatprep.subr.mxu0 0.0
    %5843 = vmatpush1.msra.mxu0 %v5831
    %5844 = vmatprep.subr.mxu0 0.0
    %5845 = vmatpush1.msra.mxu0 %v5832
    %5846 = vmatprep.subr.mxu0 0.0
    %5847 = vmatpush1.msra.mxu0 %v5833
    %5848 = vmatprep.subr.mxu0 0.0
    %5849 = vmatpush1.msra.mxu0 0.0
    %5850 = vmatprep.subr.mxu0 0.0
    %5851 = vmatpush1.msra.mxu0 0.0
    %5852 = vmatprep.subr.mxu0 0.0
    %5853 = vmatpush1.msra.mxu0 0.0
    %5854 = vmatprep.subr.mxu0 0.0
    %5855 = vmatpush1.msra.mxu0 0.0
    %5856 = vmatprep.subr.mxu0 0.0
    %5857 = vmatpush1.msra.mxu0 0.0
    %5858 = vmatprep.subr.mxu0 0.0
    %5859 = vmatpush1.msra.mxu0 0.0
    %5860 = vmatprep.subr.mxu0 0.0
    %5861 = vmatpush1.msra.mxu0 0.0
    %5862 = vmatprep.subr.mxu0 0.0
    %5863 = vmatpush1.msra.mxu0 0.0
    %5864 = vmatprep.subr.mxu0 0.0
    %5865 = vmatpush1.msra.mxu0 0.0
    %5866 = vmatprep.subr.mxu0 0.0
    %5867 = vmatpush1.msra.mxu0 0.0
    %5868 = vmatprep.subr.mxu0 0.0
    %5869 = vmatpush1.msra.mxu0 0.0
    %5870 = vmatprep.subr.mxu0 0.0
    %5871 = vmatpush1.msra.mxu0 0.0
    %5872 = vmatprep.subr.mxu0 0.0
    %5873 = vmatpush1.msra.mxu0 0.0
    %5874 = vmatprep.subr.mxu0 0.0
    %5875 = vmatpush1.msra.mxu0 0.0
    %5876 = vmatprep.subr.mxu0 0.0
    %5877 = vmatpush1.msra.mxu0 0.0
    %5878 = vmatprep.subr.mxu0 0.0
    %5879 = vmatpush1.msra.mxu0 0.0
    %5880 = vmatprep.subr.mxu0 0.0
    %5881 = vmatpush1.msra.mxu0 0.0
    %5882 = vmatprep.subr.mxu0 0.0
    %5883 = vmatpush1.msra.mxu0 0.0
    %5884 = vmatprep.subr.mxu0 0.0
    %5885 = vmatpush1.msra.mxu0 0.0
    %5886 = vmatprep.subr.mxu0 0.0
    %5887 = vmatpush1.msra.mxu0 0.0
    %5888 = vmatprep.subr.mxu0 0.0
    %5889 = vmatpush1.msra.mxu0 0.0
    %5890 = vmatprep.subr.mxu0 0.0
    %5891 = vmatpush1.msra.mxu0 0.0
    %5892 = vmatprep.subr.mxu0 0.0
    %5893 = vmatpush1.msra.mxu0 0.0
    %5894 = vmatprep.subr.mxu0 0.0
    %5895 = vmatpush1.msra.mxu0 0.0
    %5896 = vmatprep.subr.mxu0 0.0
    %5897 = vmatpush1.msra.mxu0 0.0
    %5898 = vmatprep.subr.mxu0 0.0
    %5899 = vmatpush1.msra.mxu0 0.0
    %5900 = vmatprep.subr.mxu0 0.0
    %5901 = vmatpush1.msra.mxu0 0.0
    %5902 = vmatprep.subr.mxu0 0.0
    %5903 = vmatpush1.msra.mxu0 0.0
    %5904 = vmatprep.mubr.f32.mxu0 0.0
    %5905 = vmatmul.mubr.f32.gmra.mrb[0].mxu0 %v5835
    %v5906 = vpop.f32.mrb[0].mxu0
    %v5907 = vadd.f32 0.0, %v5906
    %v5908 = vpop.f32.mrb[0].mxu0
    %5909 = vmatprep.mubr.f32.mxu0 0.0
    %5910 = vmatmul.mubr.f32.gmra.mrb[0].mxu0 %v5838
    %v5911 = vpop.f32.mrb[0].mxu0
    %v5912 = vadd.f32 0.0, %v5911
    %v5913 = vpop.f32.mrb[0].mxu0
    %5914 = vdwg.mxu0
    %v5915 = vrot.slane %v2423, 4
    %v5917 = vsel %vm1214, %v5912, %v5915
    %v5919 = vsel %vm1429, %v5907, 0
    %v5922 = vsel %vm1429, %v5917, 0
    %v5924 = vsel %vm1429, %v5915, 0
    %5926 = vmatprep.subr.mxu0 0.0
    %5927 = vmatpush1.msra.mxu0 %v1421
    %5928 = vmatprep.subr.mxu0 0.0
    %5929 = vmatpush1.msra.mxu0 %v1422
    %5930 = vmatprep.subr.mxu0 0.0
    %5931 = vmatpush1.msra.mxu0 %v1423
    %5932 = vmatprep.subr.mxu0 0.0
    %5933 = vmatpush1.msra.mxu0 %v1424
    %5934 = vmatprep.subr.mxu0 0.0
    %5935 = vmatpush1.msra.mxu0 %v1425
    %5936 = vmatprep.subr.mxu0 0.0
    %5937 = vmatpush1.msra.mxu0 %v1426
    %5938 = vmatprep.subr.mxu0 0.0
    %5939 = vmatpush1.msra.mxu0 %v1427
    %5940 = vmatprep.subr.mxu0 0.0
    %5941 = vmatpush1.msra.mxu0 %v1428
    %5942 = vmatprep.subr.mxu0 0.0
    %5943 = vmatpush1.msra.mxu0 0.0
    %5944 = vmatprep.subr.mxu0 0.0
    %5945 = vmatpush1.msra.mxu0 0.0
    %5946 = vmatprep.subr.mxu0 0.0
    %5947 = vmatpush1.msra.mxu0 0.0
    %5948 = vmatprep.subr.mxu0 0.0
    %5949 = vmatpush1.msra.mxu0 0.0
    %5950 = vmatprep.subr.mxu0 0.0
    %5951 = vmatpush1.msra.mxu0 0.0
    %5952 = vmatprep.subr.mxu0 0.0
    %5953 = vmatpush1.msra.mxu0 0.0
    %5954 = vmatprep.subr.mxu0 0.0
    %5955 = vmatpush1.msra.mxu0 0.0
    %5956 = vmatprep.subr.mxu0 0.0
    %5957 = vmatpush1.msra.mxu0 0.0
    %5958 = vmatprep.subr.mxu0 0.0
    %5959 = vmatpush1.msra.mxu0 0.0
    %5960 = vmatprep.subr.mxu0 0.0
    %5961 = vmatpush1.msra.mxu0 0.0
    %5962 = vmatprep.subr.mxu0 0.0
    %5963 = vmatpush1.msra.mxu0 0.0
    %5964 = vmatprep.subr.mxu0 0.0
    %5965 = vmatpush1.msra.mxu0 0.0
    %5966 = vmatprep.subr.mxu0 0.0
    %5967 = vmatpush1.msra.mxu0 0.0
    %5968 = vmatprep.subr.mxu0 0.0
    %5969 = vmatpush1.msra.mxu0 0.0
    %5970 = vmatprep.subr.mxu0 0.0
    %5971 = vmatpush1.msra.mxu0 0.0
    %5972 = vmatprep.subr.mxu0 0.0
    %5973 = vmatpush1.msra.mxu0 0.0
    %5974 = vmatprep.subr.mxu0 0.0
    %5975 = vmatpush1.msra.mxu0 0.0
    %5976 = vmatprep.subr.mxu0 0.0
    %5977 = vmatpush1.msra.mxu0 0.0
    %5978 = vmatprep.subr.mxu0 0.0
    %5979 = vmatpush1.msra.mxu0 0.0
    %5980 = vmatprep.subr.mxu0 0.0
    %5981 = vmatpush1.msra.mxu0 0.0
    %5982 = vmatprep.subr.mxu0 0.0
    %5983 = vmatpush1.msra.mxu0 0.0
    %5984 = vmatprep.subr.mxu0 0.0
    %5985 = vmatpush1.msra.mxu0 0.0
    %5986 = vmatprep.subr.mxu0 0.0
    %5987 = vmatpush1.msra.mxu0 0.0
    %5988 = vmatprep.subr.mxu0 0.0
    %5989 = vmatpush1.msra.mxu0 0.0
    %5990 = vmatprep.mubr.f32.mxu0 0.0
    %5991 = vmatmul.mubr.f32.gmra.mrb[0].mxu0 %v5919
    %v5992 = vpop.f32.mrb[0].mxu0
    %v5993 = vadd.f32 0.0, %v5992
    %v5994 = vpop.f32.mrb[0].mxu0
    %5995 = vmatprep.mubr.f32.mxu0 0.0
    %5996 = vmatmul.mubr.f32.gmra.mrb[0].mxu0 %v5922
    %v5997 = vpop.f32.mrb[0].mxu0
    %v5998 = vadd.f32 0.0, %v5997
    %v5999 = vpop.f32.mrb[0].mxu0
    %6000 = vmatprep.mubr.f32.mxu0 0.0
    %6001 = vmatmul.mubr.f32.gmra.mrb[0].mxu0 %v5924
    %v6002 = vpop.f32.mrb[0].mxu0
    %v6003 = vadd.f32 0.0, %v6002
    %v6004 = vpop.f32.mrb[0].mxu0
    %6005 = vdwg.mxu0
    %6006 = vmatprep.subr.mxu0 0.0
    %6007 = vmatpush1.msra.mxu0 %v1504
    %6008 = vmatprep.subr.mxu0 0.0
    %6009 = vmatpush1.msra.mxu0 %v1505
    %6010 = vmatprep.subr.mxu0 0.0
    %6011 = vmatpush1.msra.mxu0 %v1506
    %6012 = vmatprep.subr.mxu0 0.0
    %6013 = vmatpush1.msra.mxu0 %v1507
    %6014 = vmatprep.subr.mxu0 0.0
    %6015 = vmatpush1.msra.mxu0 %v1508
    %6016 = vmatprep.subr.mxu0 0.0
    %6017 = vmatpush1.msra.mxu0 %v1509
    %6018 = vmatprep.subr.mxu0 0.0
    %6019 = vmatpush1.msra.mxu0 %v1510
    %6020 = vmatprep.subr.mxu0 0.0
    %6021 = vmatpush1.msra.mxu0 %v1511
    %6022 = vmatprep.subr.mxu0 0.0
    %6023 = vmatpush1.msra.mxu0 0.0
    %6024 = vmatprep.subr.mxu0 0.0
    %6025 = vmatpush1.msra.mxu0 0.0
    %6026 = vmatprep.subr.mxu0 0.0
    %6027 = vmatpush1.msra.mxu0 0.0
    %6028 = vmatprep.subr.mxu0 0.0
    %6029 = vmatpush1.msra.mxu0 0.0
    %6030 = vmatprep.subr.mxu0 0.0
    %6031 = vmatpush1.msra.mxu0 0.0
    %6032 = vmatprep.subr.mxu0 0.0
    %6033 = vmatpush1.msra.mxu0 0.0
    %6034 = vmatprep.subr.mxu0 0.0
    %6035 = vmatpush1.msra.mxu0 0.0
    %6036 = vmatprep.subr.mxu0 0.0
    %6037 = vmatpush1.msra.mxu0 0.0
    %6038 = vmatprep.subr.mxu0 0.0
    %6039 = vmatpush1.msra.mxu0 0.0
    %6040 = vmatprep.subr.mxu0 0.0
    %6041 = vmatpush1.msra.mxu0 0.0
    %6042 = vmatprep.subr.mxu0 0.0
    %6043 = vmatpush1.msra.mxu0 0.0
    %6044 = vmatprep.subr.mxu0 0.0
    %6045 = vmatpush1.msra.mxu0 0.0
    %6046 = vmatprep.subr.mxu0 0.0
    %6047 = vmatpush1.msra.mxu0 0.0
    %6048 = vmatprep.subr.mxu0 0.0
    %6049 = vmatpush1.msra.mxu0 0.0
    %6050 = vmatprep.subr.mxu0 0.0
    %6051 = vmatpush1.msra.mxu0 0.0
    %6052 = vmatprep.subr.mxu0 0.0
    %6053 = vmatpush1.msra.mxu0 0.0
    %6054 = vmatprep.subr.mxu0 0.0
    %6055 = vmatpush1.msra.mxu0 0.0
    %6056 = vmatprep.subr.mxu0 0.0
    %6057 = vmatpush1.msra.mxu0 0.0
    %6058 = vmatprep.subr.mxu0 0.0
    %6059 = vmatpush1.msra.mxu0 0.0
    %6060 = vmatprep.subr.mxu0 0.0
    %6061 = vmatpush1.msra.mxu0 0.0
    %6062 = vmatprep.subr.mxu0 0.0
    %6063 = vmatpush1.msra.mxu0 0.0
    %6064 = vmatprep.subr.mxu0 0.0
    %6065 = vmatpush1.msra.mxu0 0.0
    %6066 = vmatprep.subr.mxu0 0.0
    %6067 = vmatpush1.msra.mxu0 0.0
    %6068 = vmatprep.subr.mxu0 0.0
    %6069 = vmatpush1.msra.mxu0 0.0
    %6070 = vmatprep.mubr.f32.mxu0 0.0
    %6071 = vmatmul.mubr.f32.gmra.mrb[0].mxu0 %v5919
    %v6072 = vpop.f32.mrb[0].mxu0
    %v6073 = vadd.f32 0.0, %v6072
    %v6074 = vpop.f32.mrb[0].mxu0
    %6075 = vmatprep.mubr.f32.mxu0 0.0
    %6076 = vmatmul.mubr.f32.gmra.mrb[0].mxu0 %v5922
    %v6077 = vpop.f32.mrb[0].mxu0
    %v6078 = vadd.f32 0.0, %v6077
    %v6079 = vpop.f32.mrb[0].mxu0
    %6080 = vmatprep.mubr.f32.mxu0 0.0
    %6081 = vmatmul.mubr.f32.gmra.mrb[0].mxu0 %v5924
    %v6082 = vpop.f32.mrb[0].mxu0
    %v6083 = vadd.f32 0.0, %v6082
    %v6084 = vpop.f32.mrb[0].mxu0
    %6085 = vdwg.mxu0
    %6086 = vmatprep.subr.mxu0 0.0
    %6087 = vmatpush1.msra.mxu0 %v1583
    %6088 = vmatprep.subr.mxu0 0.0
    %6089 = vmatpush1.msra.mxu0 %v1584
    %6090 = vmatprep.subr.mxu0 0.0
    %6091 = vmatpush1.msra.mxu0 %v1585
    %6092 = vmatprep.subr.mxu0 0.0
    %6093 = vmatpush1.msra.mxu0 %v1586
    %6094 = vmatprep.subr.mxu0 0.0
    %6095 = vmatpush1.msra.mxu0 %v1587
    %6096 = vmatprep.subr.mxu0 0.0
    %6097 = vmatpush1.msra.mxu0 %v1588
    %6098 = vmatprep.subr.mxu0 0.0
    %6099 = vmatpush1.msra.mxu0 %v1589
    %6100 = vmatprep.subr.mxu0 0.0
    %6101 = vmatpush1.msra.mxu0 %v1590
    %6102 = vmatprep.subr.mxu0 0.0
    %6103 = vmatpush1.msra.mxu0 0.0
    %6104 = vmatprep.subr.mxu0 0.0
    %6105 = vmatpush1.msra.mxu0 0.0
    %6106 = vmatprep.subr.mxu0 0.0
    %6107 = vmatpush1.msra.mxu0 0.0
    %6108 = vmatprep.subr.mxu0 0.0
    %6109 = vmatpush1.msra.mxu0 0.0
    %6110 = vmatprep.subr.mxu0 0.0
    %6111 = vmatpush1.msra.mxu0 0.0
    %6112 = vmatprep.subr.mxu0 0.0
    %6113 = vmatpush1.msra.mxu0 0.0
    %6114 = vmatprep.subr.mxu0 0.0
    %6115 = vmatpush1.msra.mxu0 0.0
    %6116 = vmatprep.subr.mxu0 0.0
    %6117 = vmatpush1.msra.mxu0 0.0
    %6118 = vmatprep.subr.mxu0 0.0
    %6119 = vmatpush1.msra.mxu0 0.0
    %6120 = vmatprep.subr.mxu0 0.0
    %6121 = vmatpush1.msra.mxu0 0.0
    %6122 = vmatprep.subr.mxu0 0.0
    %6123 = vmatpush1.msra.mxu0 0.0
    %6124 = vmatprep.subr.mxu0 0.0
    %6125 = vmatpush1.msra.mxu0 0.0
    %6126 = vmatprep.subr.mxu0 0.0
    %6127 = vmatpush1.msra.mxu0 0.0
    %6128 = vmatprep.subr.mxu0 0.0
    %6129 = vmatpush1.msra.mxu0 0.0
    %6130 = vmatprep.subr.mxu0 0.0
    %6131 = vmatpush1.msra.mxu0 0.0
    %6132 = vmatprep.subr.mxu0 0.0
    %6133 = vmatpush1.msra.mxu0 0.0
    %6134 = vmatprep.subr.mxu0 0.0
    %6135 = vmatpush1.msra.mxu0 0.0
    %6136 = vmatprep.subr.mxu0 0.0
    %6137 = vmatpush1.msra.mxu0 0.0
    %6138 = vmatprep.subr.mxu0 0.0
    %6139 = vmatpush1.msra.mxu0 0.0
    %6140 = vmatprep.subr.mxu0 0.0
    %6141 = vmatpush1.msra.mxu0 0.0
    %6142 = vmatprep.subr.mxu0 0.0
    %6143 = vmatpush1.msra.mxu0 0.0
    %6144 = vmatprep.subr.mxu0 0.0
    %6145 = vmatpush1.msra.mxu0 0.0
    %6146 = vmatprep.subr.mxu0 0.0
    %6147 = vmatpush1.msra.mxu0 0.0
    %6148 = vmatprep.subr.mxu0 0.0
    %6149 = vmatpush1.msra.mxu0 0.0
    %6150 = vmatprep.mubr.f32.mxu0 0.0
    %6151 = vmatmul.mubr.f32.gmra.mrb[0].mxu0 %v5919
    %v6152 = vpop.f32.mrb[0].mxu0
    %v6153 = vadd.f32 0.0, %v6152
    %v6154 = vpop.f32.mrb[0].mxu0
    %6155 = vmatprep.mubr.f32.mxu0 0.0
    %6156 = vmatmul.mubr.f32.gmra.mrb[0].mxu0 %v5922
    %v6157 = vpop.f32.mrb[0].mxu0
    %v6158 = vadd.f32 0.0, %v6157
    %v6159 = vpop.f32.mrb[0].mxu0
    %6160 = vmatprep.mubr.f32.mxu0 0.0
    %6161 = vmatmul.mubr.f32.gmra.mrb[0].mxu0 %v5924
    %v6162 = vpop.f32.mrb[0].mxu0
    %v6163 = vadd.f32 0.0, %v6162
    %v6164 = vpop.f32.mrb[0].mxu0
    %6165 = vdwg.mxu0
    %6166 = vmatprep.subr.mxu0 0.0
    %6167 = vmatpush1.msra.mxu0 %v1662
    %6168 = vmatprep.subr.mxu0 0.0
    %6169 = vmatpush1.msra.mxu0 %v1663
    %6170 = vmatprep.subr.mxu0 0.0
    %6171 = vmatpush1.msra.mxu0 %v1664
    %6172 = vmatprep.subr.mxu0 0.0
    %6173 = vmatpush1.msra.mxu0 %v1665
    %6174 = vmatprep.subr.mxu0 0.0
    %6175 = vmatpush1.msra.mxu0 %v1666
    %6176 = vmatprep.subr.mxu0 0.0
    %6177 = vmatpush1.msra.mxu0 %v1667
    %6178 = vmatprep.subr.mxu0 0.0
    %6179 = vmatpush1.msra.mxu0 %v1668
    %6180 = vmatprep.subr.mxu0 0.0
    %6181 = vmatpush1.msra.mxu0 %v1669
    %6182 = vmatprep.subr.mxu0 0.0
    %6183 = vmatpush1.msra.mxu0 0.0
    %6184 = vmatprep.subr.mxu0 0.0
    %6185 = vmatpush1.msra.mxu0 0.0
    %6186 = vmatprep.subr.mxu0 0.0
    %6187 = vmatpush1.msra.mxu0 0.0
    %6188 = vmatprep.subr.mxu0 0.0
    %6189 = vmatpush1.msra.mxu0 0.0
    %6190 = vmatprep.subr.mxu0 0.0
    %6191 = vmatpush1.msra.mxu0 0.0
    %6192 = vmatprep.subr.mxu0 0.0
    %6193 = vmatpush1.msra.mxu0 0.0
    %6194 = vmatprep.subr.mxu0 0.0
    %6195 = vmatpush1.msra.mxu0 0.0
    %6196 = vmatprep.subr.mxu0 0.0
    %6197 = vmatpush1.msra.mxu0 0.0
    %6198 = vmatprep.subr.mxu0 0.0
    %6199 = vmatpush1.msra.mxu0 0.0
    %6200 = vmatprep.subr.mxu0 0.0
    %6201 = vmatpush1.msra.mxu0 0.0
    %6202 = vmatprep.subr.mxu0 0.0
    %6203 = vmatpush1.msra.mxu0 0.0
    %6204 = vmatprep.subr.mxu0 0.0
    %6205 = vmatpush1.msra.mxu0 0.0
    %6206 = vmatprep.subr.mxu0 0.0
    %6207 = vmatpush1.msra.mxu0 0.0
    %6208 = vmatprep.subr.mxu0 0.0
    %6209 = vmatpush1.msra.mxu0 0.0
    %6210 = vmatprep.subr.mxu0 0.0
    %6211 = vmatpush1.msra.mxu0 0.0
    %6212 = vmatprep.subr.mxu0 0.0
    %6213 = vmatpush1.msra.mxu0 0.0
    %6214 = vmatprep.subr.mxu0 0.0
    %6215 = vmatpush1.msra.mxu0 0.0
    %6216 = vmatprep.subr.mxu0 0.0
    %6217 = vmatpush1.msra.mxu0 0.0
    %6218 = vmatprep.subr.mxu0 0.0
    %6219 = vmatpush1.msra.mxu0 0.0
    %6220 = vmatprep.subr.mxu0 0.0
    %6221 = vmatpush1.msra.mxu0 0.0
    %6222 = vmatprep.subr.mxu0 0.0
    %6223 = vmatpush1.msra.mxu0 0.0
    %6224 = vmatprep.subr.mxu0 0.0
    %6225 = vmatpush1.msra.mxu0 0.0
    %6226 = vmatprep.subr.mxu0 0.0
    %6227 = vmatpush1.msra.mxu0 0.0
    %6228 = vmatprep.subr.mxu0 0.0
    %6229 = vmatpush1.msra.mxu0 0.0
    %6230 = vmatprep.mubr.f32.mxu0 0.0
    %6231 = vmatmul.mubr.f32.gmra.mrb[0].mxu0 %v5919
    %v6232 = vpop.f32.mrb[0].mxu0
    %v6233 = vadd.f32 0.0, %v6232
    %v6234 = vpop.f32.mrb[0].mxu0
    %6235 = vmatprep.mubr.f32.mxu0 0.0
    %6236 = vmatmul.mubr.f32.gmra.mrb[0].mxu0 %v5922
    %v6237 = vpop.f32.mrb[0].mxu0
    %v6238 = vadd.f32 0.0, %v6237
    %v6239 = vpop.f32.mrb[0].mxu0
    %6240 = vmatprep.mubr.f32.mxu0 0.0
    %6241 = vmatmul.mubr.f32.gmra.mrb[0].mxu0 %v5924
    %v6242 = vpop.f32.mrb[0].mxu0
    %v6243 = vadd.f32 0.0, %v6242
    %v6244 = vpop.f32.mrb[0].mxu0
    %6245 = vdwg.mxu0
    %6246 = vmatprep.subr.mxu0 0.0
    %6247 = vmatpush1.msra.mxu0 %v1741
    %6248 = vmatprep.subr.mxu0 0.0
    %6249 = vmatpush1.msra.mxu0 %v1742
    %6250 = vmatprep.subr.mxu0 0.0
    %6251 = vmatpush1.msra.mxu0 %v1743
    %6252 = vmatprep.subr.mxu0 0.0
    %6253 = vmatpush1.msra.mxu0 %v1744
    %6254 = vmatprep.subr.mxu0 0.0
    %6255 = vmatpush1.msra.mxu0 %v1745
    %6256 = vmatprep.subr.mxu0 0.0
    %6257 = vmatpush1.msra.mxu0 %v1746
    %6258 = vmatprep.subr.mxu0 0.0
    %6259 = vmatpush1.msra.mxu0 %v1747
    %6260 = vmatprep.subr.mxu0 0.0
    %6261 = vmatpush1.msra.mxu0 %v1748
    %6262 = vmatprep.subr.mxu0 0.0
    %6263 = vmatpush1.msra.mxu0 0.0
    %6264 = vmatprep.subr.mxu0 0.0
    %6265 = vmatpush1.msra.mxu0 0.0
    %6266 = vmatprep.subr.mxu0 0.0
    %6267 = vmatpush1.msra.mxu0 0.0
    %6268 = vmatprep.subr.mxu0 0.0
    %6269 = vmatpush1.msra.mxu0 0.0
    %6270 = vmatprep.subr.mxu0 0.0
    %6271 = vmatpush1.msra.mxu0 0.0
    %6272 = vmatprep.subr.mxu0 0.0
    %6273 = vmatpush1.msra.mxu0 0.0
    %6274 = vmatprep.subr.mxu0 0.0
    %6275 = vmatpush1.msra.mxu0 0.0
    %6276 = vmatprep.subr.mxu0 0.0
    %6277 = vmatpush1.msra.mxu0 0.0
    %6278 = vmatprep.subr.mxu0 0.0
    %6279 = vmatpush1.msra.mxu0 0.0
    %6280 = vmatprep.subr.mxu0 0.0
    %6281 = vmatpush1.msra.mxu0 0.0
    %6282 = vmatprep.subr.mxu0 0.0
    %6283 = vmatpush1.msra.mxu0 0.0
    %6284 = vmatprep.subr.mxu0 0.0
    %6285 = vmatpush1.msra.mxu0 0.0
    %6286 = vmatprep.subr.mxu0 0.0
    %6287 = vmatpush1.msra.mxu0 0.0
    %6288 = vmatprep.subr.mxu0 0.0
    %6289 = vmatpush1.msra.mxu0 0.0
    %6290 = vmatprep.subr.mxu0 0.0
    %6291 = vmatpush1.msra.mxu0 0.0
    %6292 = vmatprep.subr.mxu0 0.0
    %6293 = vmatpush1.msra.mxu0 0.0
    %6294 = vmatprep.subr.mxu0 0.0
    %6295 = vmatpush1.msra.mxu0 0.0
    %6296 = vmatprep.subr.mxu0 0.0
    %6297 = vmatpush1.msra.mxu0 0.0
    %6298 = vmatprep.subr.mxu0 0.0
    %6299 = vmatpush1.msra.mxu0 0.0
    %6300 = vmatprep.subr.mxu0 0.0
    %6301 = vmatpush1.msra.mxu0 0.0
    %6302 = vmatprep.subr.mxu0 0.0
    %6303 = vmatpush1.msra.mxu0 0.0
    %6304 = vmatprep.subr.mxu0 0.0
    %6305 = vmatpush1.msra.mxu0 0.0
    %6306 = vmatprep.subr.mxu0 0.0
    %6307 = vmatpush1.msra.mxu0 0.0
    %6308 = vmatprep.subr.mxu0 0.0
    %6309 = vmatpush1.msra.mxu0 0.0
    %6310 = vmatprep.mubr.f32.mxu0 0.0
    %6311 = vmatmul.mubr.f32.gmra.mrb[0].mxu0 %v5919
    %v6312 = vpop.f32.mrb[0].mxu0
    %v6313 = vadd.f32 0.0, %v6312
    %v6314 = vpop.f32.mrb[0].mxu0
    %6315 = vmatprep.mubr.f32.mxu0 0.0
    %6316 = vmatmul.mubr.f32.gmra.mrb[0].mxu0 %v5922
    %v6317 = vpop.f32.mrb[0].mxu0
    %v6318 = vadd.f32 0.0, %v6317
    %v6319 = vpop.f32.mrb[0].mxu0
    %6320 = vmatprep.mubr.f32.mxu0 0.0
    %6321 = vmatmul.mubr.f32.gmra.mrb[0].mxu0 %v5924
    %v6322 = vpop.f32.mrb[0].mxu0
    %v6323 = vadd.f32 0.0, %v6322
    %v6324 = vpop.f32.mrb[0].mxu0
    %6325 = vdwg.mxu0
    %6326 = vmatprep.subr.mxu0 0.0
    %6327 = vmatpush1.msra.mxu0 %v1820
    %6328 = vmatprep.subr.mxu0 0.0
    %6329 = vmatpush1.msra.mxu0 %v1821
    %6330 = vmatprep.subr.mxu0 0.0
    %6331 = vmatpush1.msra.mxu0 %v1822
    %6332 = vmatprep.subr.mxu0 0.0
    %6333 = vmatpush1.msra.mxu0 %v1823
    %6334 = vmatprep.subr.mxu0 0.0
    %6335 = vmatpush1.msra.mxu0 %v1824
    %6336 = vmatprep.subr.mxu0 0.0
    %6337 = vmatpush1.msra.mxu0 %v1825
    %6338 = vmatprep.subr.mxu0 0.0
    %6339 = vmatpush1.msra.mxu0 %v1826
    %6340 = vmatprep.subr.mxu0 0.0
    %6341 = vmatpush1.msra.mxu0 %v1827
    %6342 = vmatprep.subr.mxu0 0.0
    %6343 = vmatpush1.msra.mxu0 0.0
    %6344 = vmatprep.subr.mxu0 0.0
    %6345 = vmatpush1.msra.mxu0 0.0
    %6346 = vmatprep.subr.mxu0 0.0
    %6347 = vmatpush1.msra.mxu0 0.0
    %6348 = vmatprep.subr.mxu0 0.0
    %6349 = vmatpush1.msra.mxu0 0.0
    %6350 = vmatprep.subr.mxu0 0.0
    %6351 = vmatpush1.msra.mxu0 0.0
    %6352 = vmatprep.subr.mxu0 0.0
    %6353 = vmatpush1.msra.mxu0 0.0
    %6354 = vmatprep.subr.mxu0 0.0
    %6355 = vmatpush1.msra.mxu0 0.0
    %6356 = vmatprep.subr.mxu0 0.0
    %6357 = vmatpush1.msra.mxu0 0.0
    %6358 = vmatprep.subr.mxu0 0.0
    %6359 = vmatpush1.msra.mxu0 0.0
    %6360 = vmatprep.subr.mxu0 0.0
    %6361 = vmatpush1.msra.mxu0 0.0
    %6362 = vmatprep.subr.mxu0 0.0
    %6363 = vmatpush1.msra.mxu0 0.0
    %6364 = vmatprep.subr.mxu0 0.0
    %6365 = vmatpush1.msra.mxu0 0.0
    %6366 = vmatprep.subr.mxu0 0.0
    %6367 = vmatpush1.msra.mxu0 0.0
    %6368 = vmatprep.subr.mxu0 0.0
    %6369 = vmatpush1.msra.mxu0 0.0
    %6370 = vmatprep.subr.mxu0 0.0
    %6371 = vmatpush1.msra.mxu0 0.0
    %6372 = vmatprep.subr.mxu0 0.0
    %6373 = vmatpush1.msra.mxu0 0.0
    %6374 = vmatprep.subr.mxu0 0.0
    %6375 = vmatpush1.msra.mxu0 0.0
    %6376 = vmatprep.subr.mxu0 0.0
    %6377 = vmatpush1.msra.mxu0 0.0
    %6378 = vmatprep.subr.mxu0 0.0
    %6379 = vmatpush1.msra.mxu0 0.0
    %6380 = vmatprep.subr.mxu0 0.0
    %6381 = vmatpush1.msra.mxu0 0.0
    %6382 = vmatprep.subr.mxu0 0.0
    %6383 = vmatpush1.msra.mxu0 0.0
    %6384 = vmatprep.subr.mxu0 0.0
    %6385 = vmatpush1.msra.mxu0 0.0
    %6386 = vmatprep.subr.mxu0 0.0
    %6387 = vmatpush1.msra.mxu0 0.0
    %6388 = vmatprep.subr.mxu0 0.0
    %6389 = vmatpush1.msra.mxu0 0.0
    %6390 = vmatprep.mubr.f32.mxu0 0.0
    %6391 = vmatmul.mubr.f32.gmra.mrb[0].mxu0 %v5919
    %v6392 = vpop.f32.mrb[0].mxu0
    %v6393 = vadd.f32 0.0, %v6392
    %v6394 = vpop.f32.mrb[0].mxu0
    %6395 = vmatprep.mubr.f32.mxu0 0.0
    %6396 = vmatmul.mubr.f32.gmra.mrb[0].mxu0 %v5922
    %v6397 = vpop.f32.mrb[0].mxu0
    %v6398 = vadd.f32 0.0, %v6397
    %v6399 = vpop.f32.mrb[0].mxu0
    %6400 = vmatprep.mubr.f32.mxu0 0.0
    %6401 = vmatmul.mubr.f32.gmra.mrb[0].mxu0 %v5924
    %v6402 = vpop.f32.mrb[0].mxu0
    %v6403 = vadd.f32 0.0, %v6402
    %v6404 = vpop.f32.mrb[0].mxu0
    %6405 = vdwg.mxu0
    %6406 = vmatprep.subr.mxu0 0.0
    %6407 = vmatpush1.msra.mxu0 %v1899
    %6408 = vmatprep.subr.mxu0 0.0
    %6409 = vmatpush1.msra.mxu0 %v1900
    %6410 = vmatprep.subr.mxu0 0.0
    %6411 = vmatpush1.msra.mxu0 %v1901
    %6412 = vmatprep.subr.mxu0 0.0
    %6413 = vmatpush1.msra.mxu0 %v1902
    %6414 = vmatprep.subr.mxu0 0.0
    %6415 = vmatpush1.msra.mxu0 %v1903
    %6416 = vmatprep.subr.mxu0 0.0
    %6417 = vmatpush1.msra.mxu0 %v1904
    %6418 = vmatprep.subr.mxu0 0.0
    %6419 = vmatpush1.msra.mxu0 %v1905
    %6420 = vmatprep.subr.mxu0 0.0
    %6421 = vmatpush1.msra.mxu0 %v1906
    %6422 = vmatprep.subr.mxu0 0.0
    %6423 = vmatpush1.msra.mxu0 0.0
    %6424 = vmatprep.subr.mxu0 0.0
    %6425 = vmatpush1.msra.mxu0 0.0
    %6426 = vmatprep.subr.mxu0 0.0
    %6427 = vmatpush1.msra.mxu0 0.0
    %6428 = vmatprep.subr.mxu0 0.0
    %6429 = vmatpush1.msra.mxu0 0.0
    %6430 = vmatprep.subr.mxu0 0.0
    %6431 = vmatpush1.msra.mxu0 0.0
    %6432 = vmatprep.subr.mxu0 0.0
    %6433 = vmatpush1.msra.mxu0 0.0
    %6434 = vmatprep.subr.mxu0 0.0
    %6435 = vmatpush1.msra.mxu0 0.0
    %6436 = vmatprep.subr.mxu0 0.0
    %6437 = vmatpush1.msra.mxu0 0.0
    %6438 = vmatprep.subr.mxu0 0.0
    %6439 = vmatpush1.msra.mxu0 0.0
    %6440 = vmatprep.subr.mxu0 0.0
    %6441 = vmatpush1.msra.mxu0 0.0
    %6442 = vmatprep.subr.mxu0 0.0
    %6443 = vmatpush1.msra.mxu0 0.0
    %6444 = vmatprep.subr.mxu0 0.0
    %6445 = vmatpush1.msra.mxu0 0.0
    %6446 = vmatprep.subr.mxu0 0.0
    %6447 = vmatpush1.msra.mxu0 0.0
    %6448 = vmatprep.subr.mxu0 0.0
    %6449 = vmatpush1.msra.mxu0 0.0
    %6450 = vmatprep.subr.mxu0 0.0
    %6451 = vmatpush1.msra.mxu0 0.0
    %6452 = vmatprep.subr.mxu0 0.0
    %6453 = vmatpush1.msra.mxu0 0.0
    %6454 = vmatprep.subr.mxu0 0.0
    %6455 = vmatpush1.msra.mxu0 0.0
    %6456 = vmatprep.subr.mxu0 0.0
    %6457 = vmatpush1.msra.mxu0 0.0
    %6458 = vmatprep.subr.mxu0 0.0
    %6459 = vmatpush1.msra.mxu0 0.0
    %6460 = vmatprep.subr.mxu0 0.0
    %6461 = vmatpush1.msra.mxu0 0.0
    %6462 = vmatprep.subr.mxu0 0.0
    %6463 = vmatpush1.msra.mxu0 0.0
    %6464 = vmatprep.subr.mxu0 0.0
    %6465 = vmatpush1.msra.mxu0 0.0
    %6466 = vmatprep.subr.mxu0 0.0
    %6467 = vmatpush1.msra.mxu0 0.0
    %6468 = vmatprep.subr.mxu0 0.0
    %6469 = vmatpush1.msra.mxu0 0.0
    %6470 = vmatprep.mubr.f32.mxu0 0.0
    %6471 = vmatmul.mubr.f32.gmra.mrb[0].mxu0 %v5919
    %v6472 = vpop.f32.mrb[0].mxu0
    %v6473 = vadd.f32 0.0, %v6472
    %v6474 = vpop.f32.mrb[0].mxu0
    %6475 = vmatprep.mubr.f32.mxu0 0.0
    %6476 = vmatmul.mubr.f32.gmra.mrb[0].mxu0 %v5922
    %v6477 = vpop.f32.mrb[0].mxu0
    %v6478 = vadd.f32 0.0, %v6477
    %v6479 = vpop.f32.mrb[0].mxu0
    %6480 = vmatprep.mubr.f32.mxu0 0.0
    %6481 = vmatmul.mubr.f32.gmra.mrb[0].mxu0 %v5924
    %v6482 = vpop.f32.mrb[0].mxu0
    %v6483 = vadd.f32 0.0, %v6482
    %v6484 = vpop.f32.mrb[0].mxu0
    %6485 = vdwg.mxu0
    %6486 = vmatprep.subr.mxu0 0.0
    %6487 = vmatpush1.msra.mxu0 %v1978
    %6488 = vmatprep.subr.mxu0 0.0
    %6489 = vmatpush1.msra.mxu0 %v1979
    %6490 = vmatprep.subr.mxu0 0.0
    %6491 = vmatpush1.msra.mxu0 %v1980
    %6492 = vmatprep.subr.mxu0 0.0
    %6493 = vmatpush1.msra.mxu0 %v1981
    %6494 = vmatprep.subr.mxu0 0.0
    %6495 = vmatpush1.msra.mxu0 %v1982
    %6496 = vmatprep.subr.mxu0 0.0
    %6497 = vmatpush1.msra.mxu0 %v1983
    %6498 = vmatprep.subr.mxu0 0.0
    %6499 = vmatpush1.msra.mxu0 %v1984
    %6500 = vmatprep.subr.mxu0 0.0
    %6501 = vmatpush1.msra.mxu0 %v1985
    %6502 = vmatprep.subr.mxu0 0.0
    %6503 = vmatpush1.msra.mxu0 0.0
    %6504 = vmatprep.subr.mxu0 0.0
    %6505 = vmatpush1.msra.mxu0 0.0
    %6506 = vmatprep.subr.mxu0 0.0
    %6507 = vmatpush1.msra.mxu0 0.0
    %6508 = vmatprep.subr.mxu0 0.0
    %6509 = vmatpush1.msra.mxu0 0.0
    %6510 = vmatprep.subr.mxu0 0.0
    %6511 = vmatpush1.msra.mxu0 0.0
    %6512 = vmatprep.subr.mxu0 0.0
    %6513 = vmatpush1.msra.mxu0 0.0
    %6514 = vmatprep.subr.mxu0 0.0
    %6515 = vmatpush1.msra.mxu0 0.0
    %6516 = vmatprep.subr.mxu0 0.0
    %6517 = vmatpush1.msra.mxu0 0.0
    %6518 = vmatprep.subr.mxu0 0.0
    %6519 = vmatpush1.msra.mxu0 0.0
    %6520 = vmatprep.subr.mxu0 0.0
    %6521 = vmatpush1.msra.mxu0 0.0
    %6522 = vmatprep.subr.mxu0 0.0
    %6523 = vmatpush1.msra.mxu0 0.0
    %6524 = vmatprep.subr.mxu0 0.0
    %6525 = vmatpush1.msra.mxu0 0.0
    %6526 = vmatprep.subr.mxu0 0.0
    %6527 = vmatpush1.msra.mxu0 0.0
    %6528 = vmatprep.subr.mxu0 0.0
    %6529 = vmatpush1.msra.mxu0 0.0
    %6530 = vmatprep.subr.mxu0 0.0
    %6531 = vmatpush1.msra.mxu0 0.0
    %6532 = vmatprep.subr.mxu0 0.0
    %6533 = vmatpush1.msra.mxu0 0.0
    %6534 = vmatprep.subr.mxu0 0.0
    %6535 = vmatpush1.msra.mxu0 0.0
    %6536 = vmatprep.subr.mxu0 0.0
    %6537 = vmatpush1.msra.mxu0 0.0
    %6538 = vmatprep.subr.mxu0 0.0
    %6539 = vmatpush1.msra.mxu0 0.0
    %6540 = vmatprep.subr.mxu0 0.0
    %6541 = vmatpush1.msra.mxu0 0.0
    %6542 = vmatprep.subr.mxu0 0.0
    %6543 = vmatpush1.msra.mxu0 0.0
    %6544 = vmatprep.subr.mxu0 0.0
    %6545 = vmatpush1.msra.mxu0 0.0
    %6546 = vmatprep.subr.mxu0 0.0
    %6547 = vmatpush1.msra.mxu0 0.0
    %6548 = vmatprep.subr.mxu0 0.0
    %6549 = vmatpush1.msra.mxu0 0.0
    %6550 = vmatprep.mubr.f32.mxu0 0.0
    %6551 = vmatmul.mubr.f32.gmra.mrb[0].mxu0 %v5919
    %v6552 = vpop.f32.mrb[0].mxu0
    %v6553 = vadd.f32 0.0, %v6552
    %v6554 = vpop.f32.mrb[0].mxu0
    %6555 = vmatprep.mubr.f32.mxu0 0.0
    %6556 = vmatmul.mubr.f32.gmra.mrb[0].mxu0 %v5922
    %v6557 = vpop.f32.mrb[0].mxu0
    %v6558 = vadd.f32 0.0, %v6557
    %v6559 = vpop.f32.mrb[0].mxu0
    %6560 = vmatprep.mubr.f32.mxu0 0.0
    %6561 = vmatmul.mubr.f32.gmra.mrb[0].mxu0 %v5924
    %v6562 = vpop.f32.mrb[0].mxu0
    %v6563 = vadd.f32 0.0, %v6562
    %v6564 = vpop.f32.mrb[0].mxu0
    %6565 = vdwg.mxu0
    %6566 = vmatprep.subr.mxu0 0.0
    %6567 = vmatpush1.msra.mxu0 %v2057
    %6568 = vmatprep.subr.mxu0 0.0
    %6569 = vmatpush1.msra.mxu0 %v2058
    %6570 = vmatprep.subr.mxu0 0.0
    %6571 = vmatpush1.msra.mxu0 %v2059
    %6572 = vmatprep.subr.mxu0 0.0
    %6573 = vmatpush1.msra.mxu0 %v2060
    %6574 = vmatprep.subr.mxu0 0.0
    %6575 = vmatpush1.msra.mxu0 %v2061
    %6576 = vmatprep.subr.mxu0 0.0
    %6577 = vmatpush1.msra.mxu0 %v2062
    %6578 = vmatprep.subr.mxu0 0.0
    %6579 = vmatpush1.msra.mxu0 %v2063
    %6580 = vmatprep.subr.mxu0 0.0
    %6581 = vmatpush1.msra.mxu0 %v2064
    %6582 = vmatprep.subr.mxu0 0.0
    %6583 = vmatpush1.msra.mxu0 0.0
    %6584 = vmatprep.subr.mxu0 0.0
    %6585 = vmatpush1.msra.mxu0 0.0
    %6586 = vmatprep.subr.mxu0 0.0
    %6587 = vmatpush1.msra.mxu0 0.0
    %6588 = vmatprep.subr.mxu0 0.0
    %6589 = vmatpush1.msra.mxu0 0.0
    %6590 = vmatprep.subr.mxu0 0.0
    %6591 = vmatpush1.msra.mxu0 0.0
    %6592 = vmatprep.subr.mxu0 0.0
    %6593 = vmatpush1.msra.mxu0 0.0
    %6594 = vmatprep.subr.mxu0 0.0
    %6595 = vmatpush1.msra.mxu0 0.0
    %6596 = vmatprep.subr.mxu0 0.0
    %6597 = vmatpush1.msra.mxu0 0.0
    %6598 = vmatprep.subr.mxu0 0.0
    %6599 = vmatpush1.msra.mxu0 0.0
    %6600 = vmatprep.subr.mxu0 0.0
    %6601 = vmatpush1.msra.mxu0 0.0
    %6602 = vmatprep.subr.mxu0 0.0
    %6603 = vmatpush1.msra.mxu0 0.0
    %6604 = vmatprep.subr.mxu0 0.0
    %6605 = vmatpush1.msra.mxu0 0.0
    %6606 = vmatprep.subr.mxu0 0.0
    %6607 = vmatpush1.msra.mxu0 0.0
    %6608 = vmatprep.subr.mxu0 0.0
    %6609 = vmatpush1.msra.mxu0 0.0
    %6610 = vmatprep.subr.mxu0 0.0
    %6611 = vmatpush1.msra.mxu0 0.0
    %6612 = vmatprep.subr.mxu0 0.0
    %6613 = vmatpush1.msra.mxu0 0.0
    %6614 = vmatprep.subr.mxu0 0.0
    %6615 = vmatpush1.msra.mxu0 0.0
    %6616 = vmatprep.subr.mxu0 0.0
    %6617 = vmatpush1.msra.mxu0 0.0
    %6618 = vmatprep.subr.mxu0 0.0
    %6619 = vmatpush1.msra.mxu0 0.0
    %6620 = vmatprep.subr.mxu0 0.0
    %6621 = vmatpush1.msra.mxu0 0.0
    %6622 = vmatprep.subr.mxu0 0.0
    %6623 = vmatpush1.msra.mxu0 0.0
    %6624 = vmatprep.subr.mxu0 0.0
    %6625 = vmatpush1.msra.mxu0 0.0
    %6626 = vmatprep.subr.mxu0 0.0
    %6627 = vmatpush1.msra.mxu0 0.0
    %6628 = vmatprep.subr.mxu0 0.0
    %6629 = vmatpush1.msra.mxu0 0.0
    %6630 = vmatprep.mubr.f32.mxu0 0.0
    %6631 = vmatmul.mubr.f32.gmra.mrb[0].mxu0 %v5919
    %v6632 = vpop.f32.mrb[0].mxu0
    %v6633 = vadd.f32 0.0, %v6632
    %v6634 = vpop.f32.mrb[0].mxu0
    %6635 = vmatprep.mubr.f32.mxu0 0.0
    %6636 = vmatmul.mubr.f32.gmra.mrb[0].mxu0 %v5922
    %v6637 = vpop.f32.mrb[0].mxu0
    %v6638 = vadd.f32 0.0, %v6637
    %v6639 = vpop.f32.mrb[0].mxu0
    %6640 = vmatprep.mubr.f32.mxu0 0.0
    %6641 = vmatmul.mubr.f32.gmra.mrb[0].mxu0 %v5924
    %v6642 = vpop.f32.mrb[0].mxu0
    %v6643 = vadd.f32 0.0, %v6642
    %v6644 = vpop.f32.mrb[0].mxu0
    %6645 = vdwg.mxu0
    %6646 = vmatprep.subr.mxu0 0.0
    %6647 = vmatpush1.msra.mxu0 %v2136
    %6648 = vmatprep.subr.mxu0 0.0
    %6649 = vmatpush1.msra.mxu0 %v2137
    %6650 = vmatprep.subr.mxu0 0.0
    %6651 = vmatpush1.msra.mxu0 %v2138
    %6652 = vmatprep.subr.mxu0 0.0
    %6653 = vmatpush1.msra.mxu0 %v2139
    %6654 = vmatprep.subr.mxu0 0.0
    %6655 = vmatpush1.msra.mxu0 %v2140
    %6656 = vmatprep.subr.mxu0 0.0
    %6657 = vmatpush1.msra.mxu0 %v2141
    %6658 = vmatprep.subr.mxu0 0.0
    %6659 = vmatpush1.msra.mxu0 %v2142
    %6660 = vmatprep.subr.mxu0 0.0
    %6661 = vmatpush1.msra.mxu0 %v2143
    %6662 = vmatprep.subr.mxu0 0.0
    %6663 = vmatpush1.msra.mxu0 0.0
    %6664 = vmatprep.subr.mxu0 0.0
    %6665 = vmatpush1.msra.mxu0 0.0
    %6666 = vmatprep.subr.mxu0 0.0
    %6667 = vmatpush1.msra.mxu0 0.0
    %6668 = vmatprep.subr.mxu0 0.0
    %6669 = vmatpush1.msra.mxu0 0.0
    %6670 = vmatprep.subr.mxu0 0.0
    %6671 = vmatpush1.msra.mxu0 0.0
    %6672 = vmatprep.subr.mxu0 0.0
    %6673 = vmatpush1.msra.mxu0 0.0
    %6674 = vmatprep.subr.mxu0 0.0
    %6675 = vmatpush1.msra.mxu0 0.0
    %6676 = vmatprep.subr.mxu0 0.0
    %6677 = vmatpush1.msra.mxu0 0.0
    %6678 = vmatprep.subr.mxu0 0.0
    %6679 = vmatpush1.msra.mxu0 0.0
    %6680 = vmatprep.subr.mxu0 0.0
    %6681 = vmatpush1.msra.mxu0 0.0
    %6682 = vmatprep.subr.mxu0 0.0
    %6683 = vmatpush1.msra.mxu0 0.0
    %6684 = vmatprep.subr.mxu0 0.0
    %6685 = vmatpush1.msra.mxu0 0.0
    %6686 = vmatprep.subr.mxu0 0.0
    %6687 = vmatpush1.msra.mxu0 0.0
    %6688 = vmatprep.subr.mxu0 0.0
    %6689 = vmatpush1.msra.mxu0 0.0
    %6690 = vmatprep.subr.mxu0 0.0
    %6691 = vmatpush1.msra.mxu0 0.0
    %6692 = vmatprep.subr.mxu0 0.0
    %6693 = vmatpush1.msra.mxu0 0.0
    %6694 = vmatprep.subr.mxu0 0.0
    %6695 = vmatpush1.msra.mxu0 0.0
    %6696 = vmatprep.subr.mxu0 0.0
    %6697 = vmatpush1.msra.mxu0 0.0
    %6698 = vmatprep.subr.mxu0 0.0
    %6699 = vmatpush1.msra.mxu0 0.0
    %6700 = vmatprep.subr.mxu0 0.0
    %6701 = vmatpush1.msra.mxu0 0.0
    %6702 = vmatprep.subr.mxu0 0.0
    %6703 = vmatpush1.msra.mxu0 0.0
    %6704 = vmatprep.subr.mxu0 0.0
    %6705 = vmatpush1.msra.mxu0 0.0
    %6706 = vmatprep.subr.mxu0 0.0
    %6707 = vmatpush1.msra.mxu0 0.0
    %6708 = vmatprep.subr.mxu0 0.0
    %6709 = vmatpush1.msra.mxu0 0.0
    %6710 = vmatprep.mubr.f32.mxu0 0.0
    %6711 = vmatmul.mubr.f32.gmra.mrb[0].mxu0 %v5919
    %v6712 = vpop.f32.mrb[0].mxu0
    %v6713 = vadd.f32 0.0, %v6712
    %v6714 = vpop.f32.mrb[0].mxu0
    %6715 = vmatprep.mubr.f32.mxu0 0.0
    %6716 = vmatmul.mubr.f32.gmra.mrb[0].mxu0 %v5922
    %v6717 = vpop.f32.mrb[0].mxu0
    %v6718 = vadd.f32 0.0, %v6717
    %v6719 = vpop.f32.mrb[0].mxu0
    %6720 = vmatprep.mubr.f32.mxu0 0.0
    %6721 = vmatmul.mubr.f32.gmra.mrb[0].mxu0 %v5924
    %v6722 = vpop.f32.mrb[0].mxu0
    %v6723 = vadd.f32 0.0, %v6722
    %v6724 = vpop.f32.mrb[0].mxu0
    %6725 = vdwg.mxu0
    %6726 = vmatprep.subr.mxu0 0.0
    %6727 = vmatpush1.msra.mxu0 %v2215
    %6728 = vmatprep.subr.mxu0 0.0
    %6729 = vmatpush1.msra.mxu0 %v2216
    %6730 = vmatprep.subr.mxu0 0.0
    %6731 = vmatpush1.msra.mxu0 %v2217
    %6732 = vmatprep.subr.mxu0 0.0
    %6733 = vmatpush1.msra.mxu0 %v2218
    %6734 = vmatprep.subr.mxu0 0.0
    %6735 = vmatpush1.msra.mxu0 %v2219
    %6736 = vmatprep.subr.mxu0 0.0
    %6737 = vmatpush1.msra.mxu0 %v2220
    %6738 = vmatprep.subr.mxu0 0.0
    %6739 = vmatpush1.msra.mxu0 %v2221
    %6740 = vmatprep.subr.mxu0 0.0
    %6741 = vmatpush1.msra.mxu0 %v2222
    %6742 = vmatprep.subr.mxu0 0.0
    %6743 = vmatpush1.msra.mxu0 0.0
    %6744 = vmatprep.subr.mxu0 0.0
    %6745 = vmatpush1.msra.mxu0 0.0
    %6746 = vmatprep.subr.mxu0 0.0
    %6747 = vmatpush1.msra.mxu0 0.0
    %6748 = vmatprep.subr.mxu0 0.0
    %6749 = vmatpush1.msra.mxu0 0.0
    %6750 = vmatprep.subr.mxu0 0.0
    %6751 = vmatpush1.msra.mxu0 0.0
    %6752 = vmatprep.subr.mxu0 0.0
    %6753 = vmatpush1.msra.mxu0 0.0
    %6754 = vmatprep.subr.mxu0 0.0
    %6755 = vmatpush1.msra.mxu0 0.0
    %6756 = vmatprep.subr.mxu0 0.0
    %6757 = vmatpush1.msra.mxu0 0.0
    %6758 = vmatprep.subr.mxu0 0.0
    %6759 = vmatpush1.msra.mxu0 0.0
    %6760 = vmatprep.subr.mxu0 0.0
    %6761 = vmatpush1.msra.mxu0 0.0
    %6762 = vmatprep.subr.mxu0 0.0
    %6763 = vmatpush1.msra.mxu0 0.0
    %6764 = vmatprep.subr.mxu0 0.0
    %6765 = vmatpush1.msra.mxu0 0.0
    %6766 = vmatprep.subr.mxu0 0.0
    %6767 = vmatpush1.msra.mxu0 0.0
    %6768 = vmatprep.subr.mxu0 0.0
    %6769 = vmatpush1.msra.mxu0 0.0
    %6770 = vmatprep.subr.mxu0 0.0
    %6771 = vmatpush1.msra.mxu0 0.0
    %6772 = vmatprep.subr.mxu0 0.0
    %6773 = vmatpush1.msra.mxu0 0.0
    %6774 = vmatprep.subr.mxu0 0.0
    %6775 = vmatpush1.msra.mxu0 0.0
    %6776 = vmatprep.subr.mxu0 0.0
    %6777 = vmatpush1.msra.mxu0 0.0
    %6778 = vmatprep.subr.mxu0 0.0
    %6779 = vmatpush1.msra.mxu0 0.0
    %6780 = vmatprep.subr.mxu0 0.0
    %6781 = vmatpush1.msra.mxu0 0.0
    %6782 = vmatprep.subr.mxu0 0.0
    %6783 = vmatpush1.msra.mxu0 0.0
    %6784 = vmatprep.subr.mxu0 0.0
    %6785 = vmatpush1.msra.mxu0 0.0
    %6786 = vmatprep.subr.mxu0 0.0
    %6787 = vmatpush1.msra.mxu0 0.0
    %6788 = vmatprep.subr.mxu0 0.0
    %6789 = vmatpush1.msra.mxu0 0.0
    %6790 = vmatprep.mubr.f32.mxu0 0.0
    %6791 = vmatmul.mubr.f32.gmra.mrb[0].mxu0 %v5919
    %v6792 = vpop.f32.mrb[0].mxu0
    %v6793 = vadd.f32 0.0, %v6792
    %v6794 = vpop.f32.mrb[0].mxu0
    %6795 = vmatprep.mubr.f32.mxu0 0.0
    %6796 = vmatmul.mubr.f32.gmra.mrb[0].mxu0 %v5922
    %v6797 = vpop.f32.mrb[0].mxu0
    %v6798 = vadd.f32 0.0, %v6797
    %v6799 = vpop.f32.mrb[0].mxu0
    %6800 = vmatprep.mubr.f32.mxu0 0.0
    %6801 = vmatmul.mubr.f32.gmra.mrb[0].mxu0 %v5924
    %v6802 = vpop.f32.mrb[0].mxu0
    %v6803 = vadd.f32 0.0, %v6802
    %v6804 = vpop.f32.mrb[0].mxu0
    %6805 = vdwg.mxu0
    %v6809 = vrot.slane %v6073, 4
    %v6810 = vrot.slane %v6078, 4
    %v6811 = vsel %vm1214, %v6809, %v6810
    %v6812 = vrot.slane %v6083, 4
    %v6813 = vsel %vm1214, %v6810, %v6812
    %v6820 = vrot.slane %v6233, 4
    %v6821 = vrot.slane %v6238, 4
    %v6822 = vsel %vm1214, %v6820, %v6821
    %v6823 = vrot.slane %v6243, 4
    %v6824 = vsel %vm1214, %v6821, %v6823
    %v6831 = vrot.slane %v6393, 4
    %v6832 = vrot.slane %v6398, 4
    %v6833 = vsel %vm1214, %v6831, %v6832
    %v6834 = vrot.slane %v6403, 4
    %v6835 = vsel %vm1214, %v6832, %v6834
    %v6842 = vrot.slane %v6553, 4
    %v6843 = vrot.slane %v6558, 4
    %v6844 = vsel %vm1214, %v6842, %v6843
    %v6845 = vrot.slane %v6563, 4
    %v6846 = vsel %vm1214, %v6843, %v6845
    %v6853 = vrot.slane %v6713, 4
    %v6854 = vrot.slane %v6718, 4
    %v6855 = vsel %vm1214, %v6853, %v6854
    %v6856 = vrot.slane %v6723, 4
    %v6857 = vsel %vm1214, %v6854, %v6856
    %v6861 = vsel %vm1214, %v6003, %v6809
    %v6862 = vsel %vm1214, %v6163, %v6820
    %v6863 = vsel %vm1214, %v6323, %v6831
    %v6864 = vsel %vm1214, %v6483, %v6842
    %v6865 = vsel %vm1214, %v6643, %v6853
    %v6866 = vld [vmem:[%s53] sm:$0xff]
    %v6867 = vld [vmem:[%s53 + $0x8] sm:$0xff]
    %vm6868 = vcmask 752640
    %v6870 = vsel %vm6868, %v6867, 0
    %v6873 = vsel %vm1214, %v6803, 0
    %6875 = vmatprep.subr.mxu0 0.0
    %6876 = vmatpush1.msra.mxu0 %v5993
    %6877 = vmatprep.subr.mxu0 0.0
    %6878 = vmatpush1.msra.mxu0 %v5998
    %6879 = vmatprep.subr.mxu0 0.0
    %6880 = vmatpush1.msra.mxu0 %v6861
    %6881 = vmatprep.subr.mxu0 0.0
    %6882 = vmatpush1.msra.mxu0 %v6811
    %6883 = vmatprep.subr.mxu0 0.0
    %6884 = vmatpush1.msra.mxu0 %v6813
    %6885 = vmatprep.subr.mxu0 0.0
    %6886 = vmatpush1.msra.mxu0 %v6153
    %6887 = vmatprep.subr.mxu0 0.0
    %6888 = vmatpush1.msra.mxu0 %v6158
    %6889 = vmatprep.subr.mxu0 0.0
    %6890 = vmatpush1.msra.mxu0 %v6862
    %6891 = vmatprep.subr.mxu0 0.0
    %6892 = vmatpush1.msra.mxu0 %v6822
    %6893 = vmatprep.subr.mxu0 0.0
    %6894 = vmatpush1.msra.mxu0 %v6824
    %6895 = vmatprep.subr.mxu0 0.0
    %6896 = vmatpush1.msra.mxu0 %v6313
    %6897 = vmatprep.subr.mxu0 0.0
    %6898 = vmatpush1.msra.mxu0 %v6318
    %6899 = vmatprep.subr.mxu0 0.0
    %6900 = vmatpush1.msra.mxu0 %v6863
    %6901 = vmatprep.subr.mxu0 0.0
    %6902 = vmatpush1.msra.mxu0 %v6833
    %6903 = vmatprep.subr.mxu0 0.0
    %6904 = vmatpush1.msra.mxu0 %v6835
    %6905 = vmatprep.subr.mxu0 0.0
    %6906 = vmatpush1.msra.mxu0 %v6473
    %6907 = vmatprep.subr.mxu0 0.0
    %6908 = vmatpush1.msra.mxu0 %v6478
    %6909 = vmatprep.subr.mxu0 0.0
    %6910 = vmatpush1.msra.mxu0 %v6864
    %6911 = vmatprep.subr.mxu0 0.0
    %6912 = vmatpush1.msra.mxu0 %v6844
    %6913 = vmatprep.subr.mxu0 0.0
    %6914 = vmatpush1.msra.mxu0 %v6846
    %6915 = vmatprep.subr.mxu0 0.0
    %6916 = vmatpush1.msra.mxu0 %v6633
    %6917 = vmatprep.subr.mxu0 0.0
    %6918 = vmatpush1.msra.mxu0 %v6638
    %6919 = vmatprep.subr.mxu0 0.0
    %6920 = vmatpush1.msra.mxu0 %v6865
    %6921 = vmatprep.subr.mxu0 0.0
    %6922 = vmatpush1.msra.mxu0 %v6855
    %6923 = vmatprep.subr.mxu0 0.0
    %6924 = vmatpush1.msra.mxu0 %v6857
    %6925 = vmatprep.subr.mxu0 0.0
    %6926 = vmatpush1.msra.mxu0 %v6793
    %6927 = vmatprep.subr.mxu0 0.0
    %6928 = vmatpush1.msra.mxu0 %v6798
    %6929 = vmatprep.subr.mxu0 0.0
    %6930 = vmatpush1.msra.mxu0 %v6873
    %6931 = vmatprep.subr.mxu0 0.0
    %6932 = vmatpush1.msra.mxu0 0.0
    %6933 = vmatprep.subr.mxu0 0.0
    %6934 = vmatpush1.msra.mxu0 0.0
    %6935 = vmatprep.subr.mxu0 0.0
    %6936 = vmatpush1.msra.mxu0 0.0
    %6937 = vmatprep.subr.mxu0 0.0
    %6938 = vmatpush1.msra.mxu0 0.0
    %6939 = vmatprep.mubr.f32.mxu0 %v6870
    %6940 = vmatmul.mubr.f32.gmra.mrb[0].mxu0 %v6866
    %v6941 = vpop.f32.mrb[0].mxu0
    %v6942 = vadd.f32 0.0, %v6941
    %v6943 = vpop.f32.mrb[0].mxu0
    %6944 = vdwg.mxu0
    %v6945 = vsel %vm1429, %v6942, 0.0
    %6946 = vadd.xlane.f32.xlu0 %v6945
    %v6947 = vpop.xlane.xlu0 %6946
    %v6948 = vmul.f32 %v6947, %v2394
    %v6949 = vmul.f32 %v6942, %v6942
    %v6950 = vsel %vm1429, %v6949, 0.0
    %6951 = vadd.xlane.f32.xlu0 %v6950
    %v6952 = vpop.xlane.xlu0 %6951
    %v6953 = vmul.f32 %v6952, %v2394
    %v6954 = vmul.f32 %v6948, %v6948
    %v6955 = vsub.f32 %v6953, %v6954
    %v6956 = vsub.f32 %v6942, %v6948
    %v6957 = vadd.f32 %v6955, 1e-05
    %v6958 = vrsqrt.pop %v6957
    %v6959 = vmul.f32 %v6956, %v6958
    %v6960 = vld [vmem:[%s55] sm:$0xff]
    %6962 = vset.pattern.permute.xlu0 0
    %6963 = vperm.xlu0 %6962, %v6960
    %v6964 = vpop.permute.xlu0 %6963
    %v6966 = vmul.f32 %v6959, %v6964
    %v6967 = vld [vmem:[%s57] sm:$0xff]
    %6969 = vset.pattern.permute.xlu0 0
    %6970 = vperm.xlu0 %6969, %v6967
    %v6971 = vpop.permute.xlu0 %6970
    %v6973 = vadd.f32 %v6966, %v6971
    %vm6974 = vcmp.ge.f32.partialorder %v6973, 0.0
    %v6975 = vmul.f32 %v6973, 0.1
    %v6976 = vsel %vm6974, %v6973, %v6975
    %v6977 = vld [vmem:[#allocation10] sm:$0xff]
    %v6978 = vld [vmem:[#allocation10 + $0x8] sm:$0xff]
    %v6979 = vld [vmem:[#allocation10 + $0x10] sm:$0xff]
    %v6980 = vld [vmem:[#allocation10 + $0x18] sm:$0xff]
    %v6981 = vld [vmem:[#allocation10 + $0x20] sm:$0xff]
    %v6982 = vld [vmem:[#allocation10 + $0x28] sm:$0xff]
    %v6983 = vld [vmem:[#allocation10 + $0x30] sm:$0xff]
    %v6984 = vld [vmem:[#allocation10 + $0x38] sm:$0xff]
    %v6986 = vsel %vm1429, %v6976, 0
    %6988 = vmatprep.subr.mxu0 0.0
    %6989 = vmatpush1.msra.mxu0 %v6977
    %6990 = vmatprep.subr.mxu0 0.0
    %6991 = vmatpush1.msra.mxu0 %v6978
    %6992 = vmatprep.subr.mxu0 0.0
    %6993 = vmatpush1.msra.mxu0 %v6979
    %6994 = vmatprep.subr.mxu0 0.0
    %6995 = vmatpush1.msra.mxu0 %v6980
    %6996 = vmatprep.subr.mxu0 0.0
    %6997 = vmatpush1.msra.mxu0 %v6981
    %6998 = vmatprep.subr.mxu0 0.0
    %6999 = vmatpush1.msra.mxu0 %v6982
    %7000 = vmatprep.subr.mxu0 0.0
    %7001 = vmatpush1.msra.mxu0 %v6983
    %7002 = vmatprep.subr.mxu0 0.0
    %7003 = vmatpush1.msra.mxu0 %v6984
    %7004 = vmatprep.subr.mxu0 0.0
    %7005 = vmatpush1.msra.mxu0 0.0
    %7006 = vmatprep.subr.mxu0 0.0
    %7007 = vmatpush1.msra.mxu0 0.0
    %7008 = vmatprep.subr.mxu0 0.0
    %7009 = vmatpush1.msra.mxu0 0.0
    %7010 = vmatprep.subr.mxu0 0.0
    %7011 = vmatpush1.msra.mxu0 0.0
    %7012 = vmatprep.subr.mxu0 0.0
    %7013 = vmatpush1.msra.mxu0 0.0
    %7014 = vmatprep.subr.mxu0 0.0
    %7015 = vmatpush1.msra.mxu0 0.0
    %7016 = vmatprep.subr.mxu0 0.0
    %7017 = vmatpush1.msra.mxu0 0.0
    %7018 = vmatprep.subr.mxu0 0.0
    %7019 = vmatpush1.msra.mxu0 0.0
    %7020 = vmatprep.subr.mxu0 0.0
    %7021 = vmatpush1.msra.mxu0 0.0
    %7022 = vmatprep.subr.mxu0 0.0
    %7023 = vmatpush1.msra.mxu0 0.0
    %7024 = vmatprep.subr.mxu0 0.0
    %7025 = vmatpush1.msra.mxu0 0.0
    %7026 = vmatprep.subr.mxu0 0.0
    %7027 = vmatpush1.msra.mxu0 0.0
    %7028 = vmatprep.subr.mxu0 0.0
    %7029 = vmatpush1.msra.mxu0 0.0
    %7030 = vmatprep.subr.mxu0 0.0
    %7031 = vmatpush1.msra.mxu0 0.0
    %7032 = vmatprep.subr.mxu0 0.0
    %7033 = vmatpush1.msra.mxu0 0.0
    %7034 = vmatprep.subr.mxu0 0.0
    %7035 = vmatpush1.msra.mxu0 0.0
    %7036 = vmatprep.subr.mxu0 0.0
    %7037 = vmatpush1.msra.mxu0 0.0
    %7038 = vmatprep.subr.mxu0 0.0
    %7039 = vmatpush1.msra.mxu0 0.0
    %7040 = vmatprep.subr.mxu0 0.0
    %7041 = vmatpush1.msra.mxu0 0.0
    %7042 = vmatprep.subr.mxu0 0.0
    %7043 = vmatpush1.msra.mxu0 0.0
    %7044 = vmatprep.subr.mxu0 0.0
    %7045 = vmatpush1.msra.mxu0 0.0
    %7046 = vmatprep.subr.mxu0 0.0
    %7047 = vmatpush1.msra.mxu0 0.0
    %7048 = vmatprep.subr.mxu0 0.0
    %7049 = vmatpush1.msra.mxu0 0.0
    %7050 = vmatprep.subr.mxu0 0.0
    %7051 = vmatpush1.msra.mxu0 0.0
    %7052 = vmatprep.mubr.f32.mxu0 0.0
    %7053 = vmatmul.mubr.f32.gmra.mrb[0].mxu0 %v6986
    %v7054 = vpop.f32.mrb[0].mxu0
    %v7055 = vadd.f32 0.0, %v7054
    %v7056 = vpop.f32.mrb[0].mxu0
    %7057 = vdwg.mxu0
    %7058 = vmatprep.subr.mxu0 0.0
    %7059 = vmatpush1.msra.mxu0 %v225
    %7060 = vmatprep.subr.mxu0 0.0
    %7061 = vmatpush1.msra.mxu0 %v226
    %7062 = vmatprep.subr.mxu0 0.0
    %7063 = vmatpush1.msra.mxu0 %v227
    %7064 = vmatprep.subr.mxu0 0.0
    %7065 = vmatpush1.msra.mxu0 %v228
    %7066 = vmatprep.subr.mxu0 0.0
    %7067 = vmatpush1.msra.mxu0 %v229
    %7068 = vmatprep.subr.mxu0 0.0
    %7069 = vmatpush1.msra.mxu0 %v230
    %7070 = vmatprep.subr.mxu0 0.0
    %7071 = vmatpush1.msra.mxu0 %v231
    %7072 = vmatprep.subr.mxu0 0.0
    %7073 = vmatpush1.msra.mxu0 %v232
    %7074 = vmatprep.subr.mxu0 0.0
    %7075 = vmatpush1.msra.mxu0 %v233
    %7076 = vmatprep.subr.mxu0 0.0
    %7077 = vmatpush1.msra.mxu0 %v234
    %7078 = vmatprep.subr.mxu0 0.0
    %7079 = vmatpush1.msra.mxu0 %v235
    %7080 = vmatprep.subr.mxu0 0.0
    %7081 = vmatpush1.msra.mxu0 %v236
    %7082 = vmatprep.subr.mxu0 0.0
    %7083 = vmatpush1.msra.mxu0 %v237
    %7084 = vmatprep.subr.mxu0 0.0
    %7085 = vmatpush1.msra.mxu0 %v238
    %7086 = vmatprep.subr.mxu0 0.0
    %7087 = vmatpush1.msra.mxu0 %v239
    %7088 = vmatprep.subr.mxu0 0.0
    %7089 = vmatpush1.msra.mxu0 %v240
    %7090 = vmatprep.subr.mxu0 0.0
    %7091 = vmatpush1.msra.mxu0 0.0
    %7092 = vmatprep.subr.mxu0 0.0
    %7093 = vmatpush1.msra.mxu0 0.0
    %7094 = vmatprep.subr.mxu0 0.0
    %7095 = vmatpush1.msra.mxu0 0.0
    %7096 = vmatprep.subr.mxu0 0.0
    %7097 = vmatpush1.msra.mxu0 0.0
    %7098 = vmatprep.subr.mxu0 0.0
    %7099 = vmatpush1.msra.mxu0 0.0
    %7100 = vmatprep.subr.mxu0 0.0
    %7101 = vmatpush1.msra.mxu0 0.0
    %7102 = vmatprep.subr.mxu0 0.0
    %7103 = vmatpush1.msra.mxu0 0.0
    %7104 = vmatprep.subr.mxu0 0.0
    %7105 = vmatpush1.msra.mxu0 0.0
    %7106 = vmatprep.subr.mxu0 0.0
    %7107 = vmatpush1.msra.mxu0 0.0
    %7108 = vmatprep.subr.mxu0 0.0
    %7109 = vmatpush1.msra.mxu0 0.0
    %7110 = vmatprep.subr.mxu0 0.0
    %7111 = vmatpush1.msra.mxu0 0.0
    %7112 = vmatprep.subr.mxu0 0.0
    %7113 = vmatpush1.msra.mxu0 0.0
    %7114 = vmatprep.subr.mxu0 0.0
    %7115 = vmatpush1.msra.mxu0 0.0
    %7116 = vmatprep.subr.mxu0 0.0
    %7117 = vmatpush1.msra.mxu0 0.0
    %7118 = vmatprep.subr.mxu0 0.0
    %7119 = vmatpush1.msra.mxu0 0.0
    %7120 = vmatprep.subr.mxu0 0.0
    %7121 = vmatpush1.msra.mxu0 0.0
    %7122 = vmatprep.mubr.f32.mxu0 0.0
    %7123 = vmatmul.mubr.f32.gmra.mrb[0].mxu0 %v7055
    %v7124 = vpop.f32.mrb[0].mxu0
    %v7125 = vadd.f32 0.0, %v7124
    %v7126 = vpop.f32.mrb[0].mxu0
    %7127 = vmatprep.mubr.f32.mxu0 0.0
    %7128 = vmatmul.mubr.f32.gmra.mrb[0].mxu0 %v1334
    %v7129 = vpop.f32.mrb[0].mxu0
    %v7130 = vadd.f32 0.0, %v7129
    %v7131 = vpop.f32.mrb[0].mxu0
    %7132 = vdwg.mxu0
    %7133 = vmatprep.subr.mxu0 0.0
    %7134 = vmatpush1.msra.mxu0 %v312
    %7135 = vmatprep.subr.mxu0 0.0
    %7136 = vmatpush1.msra.mxu0 %v313
    %7137 = vmatprep.subr.mxu0 0.0
    %7138 = vmatpush1.msra.mxu0 %v314
    %7139 = vmatprep.subr.mxu0 0.0
    %7140 = vmatpush1.msra.mxu0 %v315
    %7141 = vmatprep.subr.mxu0 0.0
    %7142 = vmatpush1.msra.mxu0 %v316
    %7143 = vmatprep.subr.mxu0 0.0
    %7144 = vmatpush1.msra.mxu0 %v317
    %7145 = vmatprep.subr.mxu0 0.0
    %7146 = vmatpush1.msra.mxu0 %v318
    %7147 = vmatprep.subr.mxu0 0.0
    %7148 = vmatpush1.msra.mxu0 %v319
    %7149 = vmatprep.subr.mxu0 0.0
    %7150 = vmatpush1.msra.mxu0 %v320
    %7151 = vmatprep.subr.mxu0 0.0
    %7152 = vmatpush1.msra.mxu0 %v321
    %7153 = vmatprep.subr.mxu0 0.0
    %7154 = vmatpush1.msra.mxu0 %v322
    %7155 = vmatprep.subr.mxu0 0.0
    %7156 = vmatpush1.msra.mxu0 %v323
    %7157 = vmatprep.subr.mxu0 0.0
    %7158 = vmatpush1.msra.mxu0 %v324
    %7159 = vmatprep.subr.mxu0 0.0
    %7160 = vmatpush1.msra.mxu0 %v325
    %7161 = vmatprep.subr.mxu0 0.0
    %7162 = vmatpush1.msra.mxu0 %v326
    %7163 = vmatprep.subr.mxu0 0.0
    %7164 = vmatpush1.msra.mxu0 %v327
    %7165 = vmatprep.subr.mxu0 0.0
    %7166 = vmatpush1.msra.mxu0 0.0
    %7167 = vmatprep.subr.mxu0 0.0
    %7168 = vmatpush1.msra.mxu0 0.0
    %7169 = vmatprep.subr.mxu0 0.0
    %7170 = vmatpush1.msra.mxu0 0.0
    %7171 = vmatprep.subr.mxu0 0.0
    %7172 = vmatpush1.msra.mxu0 0.0
    %7173 = vmatprep.subr.mxu0 0.0
    %7174 = vmatpush1.msra.mxu0 0.0
    %7175 = vmatprep.subr.mxu0 0.0
    %7176 = vmatpush1.msra.mxu0 0.0
    %7177 = vmatprep.subr.mxu0 0.0
    %7178 = vmatpush1.msra.mxu0 0.0
    %7179 = vmatprep.subr.mxu0 0.0
    %7180 = vmatpush1.msra.mxu0 0.0
    %7181 = vmatprep.subr.mxu0 0.0
    %7182 = vmatpush1.msra.mxu0 0.0
    %7183 = vmatprep.subr.mxu0 0.0
    %7184 = vmatpush1.msra.mxu0 0.0
    %7185 = vmatprep.subr.mxu0 0.0
    %7186 = vmatpush1.msra.mxu0 0.0
    %7187 = vmatprep.subr.mxu0 0.0
    %7188 = vmatpush1.msra.mxu0 0.0
    %7189 = vmatprep.subr.mxu0 0.0
    %7190 = vmatpush1.msra.mxu0 0.0
    %7191 = vmatprep.subr.mxu0 0.0
    %7192 = vmatpush1.msra.mxu0 0.0
    %7193 = vmatprep.subr.mxu0 0.0
    %7194 = vmatpush1.msra.mxu0 0.0
    %7195 = vmatprep.subr.mxu0 0.0
    %7196 = vmatpush1.msra.mxu0 0.0
    %7197 = vmatprep.mubr.f32.mxu0 0.0
    %7198 = vmatmul.mubr.f32.gmra.mrb[0].mxu0 %v7055
    %v7199 = vpop.f32.mrb[0].mxu0
    %v7200 = vadd.f32 0.0, %v7199
    %v7201 = vpop.f32.mrb[0].mxu0
    %7202 = vmatprep.mubr.f32.mxu0 0.0
    %7203 = vmatmul.mubr.f32.gmra.mrb[0].mxu0 %v1334
    %v7204 = vpop.f32.mrb[0].mxu0
    %v7205 = vadd.f32 0.0, %v7204
    %v7206 = vpop.f32.mrb[0].mxu0
    %7207 = vdwg.mxu0
    %7208 = vmatprep.subr.mxu0 0.0
    %7209 = vmatpush1.msra.mxu0 %v399
    %7210 = vmatprep.subr.mxu0 0.0
    %7211 = vmatpush1.msra.mxu0 %v400
    %7212 = vmatprep.subr.mxu0 0.0
    %7213 = vmatpush1.msra.mxu0 %v401
    %7214 = vmatprep.subr.mxu0 0.0
    %7215 = vmatpush1.msra.mxu0 %v402
    %7216 = vmatprep.subr.mxu0 0.0
    %7217 = vmatpush1.msra.mxu0 %v403
    %7218 = vmatprep.subr.mxu0 0.0
    %7219 = vmatpush1.msra.mxu0 %v404
    %7220 = vmatprep.subr.mxu0 0.0
    %7221 = vmatpush1.msra.mxu0 %v405
    %7222 = vmatprep.subr.mxu0 0.0
    %7223 = vmatpush1.msra.mxu0 %v406
    %7224 = vmatprep.subr.mxu0 0.0
    %7225 = vmatpush1.msra.mxu0 %v407
    %7226 = vmatprep.subr.mxu0 0.0
    %7227 = vmatpush1.msra.mxu0 %v408
    %7228 = vmatprep.subr.mxu0 0.0
    %7229 = vmatpush1.msra.mxu0 %v409
    %7230 = vmatprep.subr.mxu0 0.0
    %7231 = vmatpush1.msra.mxu0 %v410
    %7232 = vmatprep.subr.mxu0 0.0
    %7233 = vmatpush1.msra.mxu0 %v411
    %7234 = vmatprep.subr.mxu0 0.0
    %7235 = vmatpush1.msra.mxu0 %v412
    %7236 = vmatprep.subr.mxu0 0.0
    %7237 = vmatpush1.msra.mxu0 %v413
    %7238 = vmatprep.subr.mxu0 0.0
    %7239 = vmatpush1.msra.mxu0 %v414
    %7240 = vmatprep.subr.mxu0 0.0
    %7241 = vmatpush1.msra.mxu0 0.0
    %7242 = vmatprep.subr.mxu0 0.0
    %7243 = vmatpush1.msra.mxu0 0.0
    %7244 = vmatprep.subr.mxu0 0.0
    %7245 = vmatpush1.msra.mxu0 0.0
    %7246 = vmatprep.subr.mxu0 0.0
    %7247 = vmatpush1.msra.mxu0 0.0
    %7248 = vmatprep.subr.mxu0 0.0
    %7249 = vmatpush1.msra.mxu0 0.0
    %7250 = vmatprep.subr.mxu0 0.0
    %7251 = vmatpush1.msra.mxu0 0.0
    %7252 = vmatprep.subr.mxu0 0.0
    %7253 = vmatpush1.msra.mxu0 0.0
    %7254 = vmatprep.subr.mxu0 0.0
    %7255 = vmatpush1.msra.mxu0 0.0
    %7256 = vmatprep.subr.mxu0 0.0
    %7257 = vmatpush1.msra.mxu0 0.0
    %7258 = vmatprep.subr.mxu0 0.0
    %7259 = vmatpush1.msra.mxu0 0.0
    %7260 = vmatprep.subr.mxu0 0.0
    %7261 = vmatpush1.msra.mxu0 0.0
    %7262 = vmatprep.subr.mxu0 0.0
    %7263 = vmatpush1.msra.mxu0 0.0
    %7264 = vmatprep.subr.mxu0 0.0
    %7265 = vmatpush1.msra.mxu0 0.0
    %7266 = vmatprep.subr.mxu0 0.0
    %7267 = vmatpush1.msra.mxu0 0.0
    %7268 = vmatprep.subr.mxu0 0.0
    %7269 = vmatpush1.msra.mxu0 0.0
    %7270 = vmatprep.subr.mxu0 0.0
    %7271 = vmatpush1.msra.mxu0 0.0
    %7272 = vmatprep.mubr.f32.mxu0 0.0
    %7273 = vmatmul.mubr.f32.gmra.mrb[0].mxu0 %v7055
    %v7274 = vpop.f32.mrb[0].mxu0
    %v7275 = vadd.f32 0.0, %v7274
    %v7276 = vpop.f32.mrb[0].mxu0
    %7277 = vmatprep.mubr.f32.mxu0 0.0
    %7278 = vmatmul.mubr.f32.gmra.mrb[0].mxu0 %v1334
    %v7279 = vpop.f32.mrb[0].mxu0
    %v7280 = vadd.f32 0.0, %v7279
    %v7281 = vpop.f32.mrb[0].mxu0
    %7282 = vdwg.mxu0
    %7283 = vmatprep.subr.mxu0 0.0
    %7284 = vmatpush1.msra.mxu0 %v486
    %7285 = vmatprep.subr.mxu0 0.0
    %7286 = vmatpush1.msra.mxu0 %v487
    %7287 = vmatprep.subr.mxu0 0.0
    %7288 = vmatpush1.msra.mxu0 %v488
    %7289 = vmatprep.subr.mxu0 0.0
    %7290 = vmatpush1.msra.mxu0 %v489
    %7291 = vmatprep.subr.mxu0 0.0
    %7292 = vmatpush1.msra.mxu0 %v490
    %7293 = vmatprep.subr.mxu0 0.0
    %7294 = vmatpush1.msra.mxu0 %v491
    %7295 = vmatprep.subr.mxu0 0.0
    %7296 = vmatpush1.msra.mxu0 %v492
    %7297 = vmatprep.subr.mxu0 0.0
    %7298 = vmatpush1.msra.mxu0 %v493
    %7299 = vmatprep.subr.mxu0 0.0
    %7300 = vmatpush1.msra.mxu0 %v494
    %7301 = vmatprep.subr.mxu0 0.0
    %7302 = vmatpush1.msra.mxu0 %v495
    %7303 = vmatprep.subr.mxu0 0.0
    %7304 = vmatpush1.msra.mxu0 %v496
    %7305 = vmatprep.subr.mxu0 0.0
    %7306 = vmatpush1.msra.mxu0 %v497
    %7307 = vmatprep.subr.mxu0 0.0
    %7308 = vmatpush1.msra.mxu0 %v498
    %7309 = vmatprep.subr.mxu0 0.0
    %7310 = vmatpush1.msra.mxu0 %v499
    %7311 = vmatprep.subr.mxu0 0.0
    %7312 = vmatpush1.msra.mxu0 %v500
    %7313 = vmatprep.subr.mxu0 0.0
    %7314 = vmatpush1.msra.mxu0 %v501
    %7315 = vmatprep.subr.mxu0 0.0
    %7316 = vmatpush1.msra.mxu0 0.0
    %7317 = vmatprep.subr.mxu0 0.0
    %7318 = vmatpush1.msra.mxu0 0.0
    %7319 = vmatprep.subr.mxu0 0.0
    %7320 = vmatpush1.msra.mxu0 0.0
    %7321 = vmatprep.subr.mxu0 0.0
    %7322 = vmatpush1.msra.mxu0 0.0
    %7323 = vmatprep.subr.mxu0 0.0
    %7324 = vmatpush1.msra.mxu0 0.0
    %7325 = vmatprep.subr.mxu0 0.0
    %7326 = vmatpush1.msra.mxu0 0.0
    %7327 = vmatprep.subr.mxu0 0.0
    %7328 = vmatpush1.msra.mxu0 0.0
    %7329 = vmatprep.subr.mxu0 0.0
    %7330 = vmatpush1.msra.mxu0 0.0
    %7331 = vmatprep.subr.mxu0 0.0
    %7332 = vmatpush1.msra.mxu0 0.0
    %7333 = vmatprep.subr.mxu0 0.0
    %7334 = vmatpush1.msra.mxu0 0.0
    %7335 = vmatprep.subr.mxu0 0.0
    %7336 = vmatpush1.msra.mxu0 0.0
    %7337 = vmatprep.subr.mxu0 0.0
    %7338 = vmatpush1.msra.mxu0 0.0
    %7339 = vmatprep.subr.mxu0 0.0
    %7340 = vmatpush1.msra.mxu0 0.0
    %7341 = vmatprep.subr.mxu0 0.0
    %7342 = vmatpush1.msra.mxu0 0.0
    %7343 = vmatprep.subr.mxu0 0.0
    %7344 = vmatpush1.msra.mxu0 0.0
    %7345 = vmatprep.subr.mxu0 0.0
    %7346 = vmatpush1.msra.mxu0 0.0
    %7347 = vmatprep.mubr.f32.mxu0 0.0
    %7348 = vmatmul.mubr.f32.gmra.mrb[0].mxu0 %v7055
    %v7349 = vpop.f32.mrb[0].mxu0
    %v7350 = vadd.f32 0.0, %v7349
    %v7351 = vpop.f32.mrb[0].mxu0
    %7352 = vmatprep.mubr.f32.mxu0 0.0
    %7353 = vmatmul.mubr.f32.gmra.mrb[0].mxu0 %v1334
    %v7354 = vpop.f32.mrb[0].mxu0
    %v7355 = vadd.f32 0.0, %v7354
    %v7356 = vpop.f32.mrb[0].mxu0
    %7357 = vdwg.mxu0
    %7358 = vmatprep.subr.mxu0 0.0
    %7359 = vmatpush1.msra.mxu0 %v573
    %7360 = vmatprep.subr.mxu0 0.0
    %7361 = vmatpush1.msra.mxu0 %v574
    %7362 = vmatprep.subr.mxu0 0.0
    %7363 = vmatpush1.msra.mxu0 %v575
    %7364 = vmatprep.subr.mxu0 0.0
    %7365 = vmatpush1.msra.mxu0 %v576
    %7366 = vmatprep.subr.mxu0 0.0
    %7367 = vmatpush1.msra.mxu0 %v577
    %7368 = vmatprep.subr.mxu0 0.0
    %7369 = vmatpush1.msra.mxu0 %v578
    %7370 = vmatprep.subr.mxu0 0.0
    %7371 = vmatpush1.msra.mxu0 %v579
    %7372 = vmatprep.subr.mxu0 0.0
    %7373 = vmatpush1.msra.mxu0 %v580
    %7374 = vmatprep.subr.mxu0 0.0
    %7375 = vmatpush1.msra.mxu0 %v581
    %7376 = vmatprep.subr.mxu0 0.0
    %7377 = vmatpush1.msra.mxu0 %v582
    %7378 = vmatprep.subr.mxu0 0.0
    %7379 = vmatpush1.msra.mxu0 %v583
    %7380 = vmatprep.subr.mxu0 0.0
    %7381 = vmatpush1.msra.mxu0 %v584
    %7382 = vmatprep.subr.mxu0 0.0
    %7383 = vmatpush1.msra.mxu0 %v585
    %7384 = vmatprep.subr.mxu0 0.0
    %7385 = vmatpush1.msra.mxu0 %v586
    %7386 = vmatprep.subr.mxu0 0.0
    %7387 = vmatpush1.msra.mxu0 %v587
    %7388 = vmatprep.subr.mxu0 0.0
    %7389 = vmatpush1.msra.mxu0 %v588
    %7390 = vmatprep.subr.mxu0 0.0
    %7391 = vmatpush1.msra.mxu0 0.0
    %7392 = vmatprep.subr.mxu0 0.0
    %7393 = vmatpush1.msra.mxu0 0.0
    %7394 = vmatprep.subr.mxu0 0.0
    %7395 = vmatpush1.msra.mxu0 0.0
    %7396 = vmatprep.subr.mxu0 0.0
    %7397 = vmatpush1.msra.mxu0 0.0
    %7398 = vmatprep.subr.mxu0 0.0
    %7399 = vmatpush1.msra.mxu0 0.0
    %7400 = vmatprep.subr.mxu0 0.0
    %7401 = vmatpush1.msra.mxu0 0.0
    %7402 = vmatprep.subr.mxu0 0.0
    %7403 = vmatpush1.msra.mxu0 0.0
    %7404 = vmatprep.subr.mxu0 0.0
    %7405 = vmatpush1.msra.mxu0 0.0
    %7406 = vmatprep.subr.mxu0 0.0
    %7407 = vmatpush1.msra.mxu0 0.0
    %7408 = vmatprep.subr.mxu0 0.0
    %7409 = vmatpush1.msra.mxu0 0.0
    %7410 = vmatprep.subr.mxu0 0.0
    %7411 = vmatpush1.msra.mxu0 0.0
    %7412 = vmatprep.subr.mxu0 0.0
    %7413 = vmatpush1.msra.mxu0 0.0
    %7414 = vmatprep.subr.mxu0 0.0
    %7415 = vmatpush1.msra.mxu0 0.0
    %7416 = vmatprep.subr.mxu0 0.0
    %7417 = vmatpush1.msra.mxu0 0.0
    %7418 = vmatprep.subr.mxu0 0.0
    %7419 = vmatpush1.msra.mxu0 0.0
    %7420 = vmatprep.subr.mxu0 0.0
    %7421 = vmatpush1.msra.mxu0 0.0
    %7422 = vmatprep.mubr.f32.mxu0 0.0
    %7423 = vmatmul.mubr.f32.gmra.mrb[0].mxu0 %v7055
    %v7424 = vpop.f32.mrb[0].mxu0
    %v7425 = vadd.f32 0.0, %v7424
    %v7426 = vpop.f32.mrb[0].mxu0
    %7427 = vmatprep.mubr.f32.mxu0 0.0
    %7428 = vmatmul.mubr.f32.gmra.mrb[0].mxu0 %v1334
    %v7429 = vpop.f32.mrb[0].mxu0
    %v7430 = vadd.f32 0.0, %v7429
    %v7431 = vpop.f32.mrb[0].mxu0
    %7432 = vdwg.mxu0
    %7433 = vmatprep.subr.mxu0 0.0
    %7434 = vmatpush1.msra.mxu0 %v660
    %7435 = vmatprep.subr.mxu0 0.0
    %7436 = vmatpush1.msra.mxu0 %v661
    %7437 = vmatprep.subr.mxu0 0.0
    %7438 = vmatpush1.msra.mxu0 %v662
    %7439 = vmatprep.subr.mxu0 0.0
    %7440 = vmatpush1.msra.mxu0 %v663
    %7441 = vmatprep.subr.mxu0 0.0
    %7442 = vmatpush1.msra.mxu0 %v664
    %7443 = vmatprep.subr.mxu0 0.0
    %7444 = vmatpush1.msra.mxu0 %v665
    %7445 = vmatprep.subr.mxu0 0.0
    %7446 = vmatpush1.msra.mxu0 %v666
    %7447 = vmatprep.subr.mxu0 0.0
    %7448 = vmatpush1.msra.mxu0 %v667
    %7449 = vmatprep.subr.mxu0 0.0
    %7450 = vmatpush1.msra.mxu0 %v668
    %7451 = vmatprep.subr.mxu0 0.0
    %7452 = vmatpush1.msra.mxu0 %v669
    %7453 = vmatprep.subr.mxu0 0.0
    %7454 = vmatpush1.msra.mxu0 %v670
    %7455 = vmatprep.subr.mxu0 0.0
    %7456 = vmatpush1.msra.mxu0 %v671
    %7457 = vmatprep.subr.mxu0 0.0
    %7458 = vmatpush1.msra.mxu0 %v672
    %7459 = vmatprep.subr.mxu0 0.0
    %7460 = vmatpush1.msra.mxu0 %v673
    %7461 = vmatprep.subr.mxu0 0.0
    %7462 = vmatpush1.msra.mxu0 %v674
    %7463 = vmatprep.subr.mxu0 0.0
    %7464 = vmatpush1.msra.mxu0 %v675
    %7465 = vmatprep.subr.mxu0 0.0
    %7466 = vmatpush1.msra.mxu0 0.0
    %7467 = vmatprep.subr.mxu0 0.0
    %7468 = vmatpush1.msra.mxu0 0.0
    %7469 = vmatprep.subr.mxu0 0.0
    %7470 = vmatpush1.msra.mxu0 0.0
    %7471 = vmatprep.subr.mxu0 0.0
    %7472 = vmatpush1.msra.mxu0 0.0
    %7473 = vmatprep.subr.mxu0 0.0
    %7474 = vmatpush1.msra.mxu0 0.0
    %7475 = vmatprep.subr.mxu0 0.0
    %7476 = vmatpush1.msra.mxu0 0.0
    %7477 = vmatprep.subr.mxu0 0.0
    %7478 = vmatpush1.msra.mxu0 0.0
    %7479 = vmatprep.subr.mxu0 0.0
    %7480 = vmatpush1.msra.mxu0 0.0
    %7481 = vmatprep.subr.mxu0 0.0
    %7482 = vmatpush1.msra.mxu0 0.0
    %7483 = vmatprep.subr.mxu0 0.0
    %7484 = vmatpush1.msra.mxu0 0.0
    %7485 = vmatprep.subr.mxu0 0.0
    %7486 = vmatpush1.msra.mxu0 0.0
    %7487 = vmatprep.subr.mxu0 0.0
    %7488 = vmatpush1.msra.mxu0 0.0
    %7489 = vmatprep.subr.mxu0 0.0
    %7490 = vmatpush1.msra.mxu0 0.0
    %7491 = vmatprep.subr.mxu0 0.0
    %7492 = vmatpush1.msra.mxu0 0.0
    %7493 = vmatprep.subr.mxu0 0.0
    %7494 = vmatpush1.msra.mxu0 0.0
    %7495 = vmatprep.subr.mxu0 0.0
    %7496 = vmatpush1.msra.mxu0 0.0
    %7497 = vmatprep.mubr.f32.mxu0 0.0
    %7498 = vmatmul.mubr.f32.gmra.mrb[0].mxu0 %v7055
    %v7499 = vpop.f32.mrb[0].mxu0
    %v7500 = vadd.f32 0.0, %v7499
    %v7501 = vpop.f32.mrb[0].mxu0
    %7502 = vmatprep.mubr.f32.mxu0 0.0
    %7503 = vmatmul.mubr.f32.gmra.mrb[0].mxu0 %v1334
    %v7504 = vpop.f32.mrb[0].mxu0
    %v7505 = vadd.f32 0.0, %v7504
    %v7506 = vpop.f32.mrb[0].mxu0
    %7507 = vdwg.mxu0
    %7508 = vmatprep.subr.mxu0 0.0
    %7509 = vmatpush1.msra.mxu0 %v747
    %7510 = vmatprep.subr.mxu0 0.0
    %7511 = vmatpush1.msra.mxu0 %v748
    %7512 = vmatprep.subr.mxu0 0.0
    %7513 = vmatpush1.msra.mxu0 %v749
    %7514 = vmatprep.subr.mxu0 0.0
    %7515 = vmatpush1.msra.mxu0 %v750
    %7516 = vmatprep.subr.mxu0 0.0
    %7517 = vmatpush1.msra.mxu0 %v751
    %7518 = vmatprep.subr.mxu0 0.0
    %7519 = vmatpush1.msra.mxu0 %v752
    %7520 = vmatprep.subr.mxu0 0.0
    %7521 = vmatpush1.msra.mxu0 %v753
    %7522 = vmatprep.subr.mxu0 0.0
    %7523 = vmatpush1.msra.mxu0 %v754
    %7524 = vmatprep.subr.mxu0 0.0
    %7525 = vmatpush1.msra.mxu0 %v755
    %7526 = vmatprep.subr.mxu0 0.0
    %7527 = vmatpush1.msra.mxu0 %v756
    %7528 = vmatprep.subr.mxu0 0.0
    %7529 = vmatpush1.msra.mxu0 %v757
    %7530 = vmatprep.subr.mxu0 0.0
    %7531 = vmatpush1.msra.mxu0 %v758
    %7532 = vmatprep.subr.mxu0 0.0
    %7533 = vmatpush1.msra.mxu0 %v759
    %7534 = vmatprep.subr.mxu0 0.0
    %7535 = vmatpush1.msra.mxu0 %v760
    %7536 = vmatprep.subr.mxu0 0.0
    %7537 = vmatpush1.msra.mxu0 %v761
    %7538 = vmatprep.subr.mxu0 0.0
    %7539 = vmatpush1.msra.mxu0 %v762
    %7540 = vmatprep.subr.mxu0 0.0
    %7541 = vmatpush1.msra.mxu0 0.0
    %7542 = vmatprep.subr.mxu0 0.0
    %7543 = vmatpush1.msra.mxu0 0.0
    %7544 = vmatprep.subr.mxu0 0.0
    %7545 = vmatpush1.msra.mxu0 0.0
    %7546 = vmatprep.subr.mxu0 0.0
    %7547 = vmatpush1.msra.mxu0 0.0
    %7548 = vmatprep.subr.mxu0 0.0
    %7549 = vmatpush1.msra.mxu0 0.0
    %7550 = vmatprep.subr.mxu0 0.0
    %7551 = vmatpush1.msra.mxu0 0.0
    %7552 = vmatprep.subr.mxu0 0.0
    %7553 = vmatpush1.msra.mxu0 0.0
    %7554 = vmatprep.subr.mxu0 0.0
    %7555 = vmatpush1.msra.mxu0 0.0
    %7556 = vmatprep.subr.mxu0 0.0
    %7557 = vmatpush1.msra.mxu0 0.0
    %7558 = vmatprep.subr.mxu0 0.0
    %7559 = vmatpush1.msra.mxu0 0.0
    %7560 = vmatprep.subr.mxu0 0.0
    %7561 = vmatpush1.msra.mxu0 0.0
    %7562 = vmatprep.subr.mxu0 0.0
    %7563 = vmatpush1.msra.mxu0 0.0
    %7564 = vmatprep.subr.mxu0 0.0
    %7565 = vmatpush1.msra.mxu0 0.0
    %7566 = vmatprep.subr.mxu0 0.0
    %7567 = vmatpush1.msra.mxu0 0.0
    %7568 = vmatprep.subr.mxu0 0.0
    %7569 = vmatpush1.msra.mxu0 0.0
    %7570 = vmatprep.subr.mxu0 0.0
    %7571 = vmatpush1.msra.mxu0 0.0
    %7572 = vmatprep.mubr.f32.mxu0 0.0
    %7573 = vmatmul.mubr.f32.gmra.mrb[0].mxu0 %v7055
    %v7574 = vpop.f32.mrb[0].mxu0
    %v7575 = vadd.f32 0.0, %v7574
    %v7576 = vpop.f32.mrb[0].mxu0
    %7577 = vmatprep.mubr.f32.mxu0 0.0
    %7578 = vmatmul.mubr.f32.gmra.mrb[0].mxu0 %v1334
    %v7579 = vpop.f32.mrb[0].mxu0
    %v7580 = vadd.f32 0.0, %v7579
    %v7581 = vpop.f32.mrb[0].mxu0
    %7582 = vdwg.mxu0
    %7583 = vmatprep.subr.mxu0 0.0
    %7584 = vmatpush1.msra.mxu0 %v834
    %7585 = vmatprep.subr.mxu0 0.0
    %7586 = vmatpush1.msra.mxu0 %v835
    %7587 = vmatprep.subr.mxu0 0.0
    %7588 = vmatpush1.msra.mxu0 %v836
    %7589 = vmatprep.subr.mxu0 0.0
    %7590 = vmatpush1.msra.mxu0 %v837
    %7591 = vmatprep.subr.mxu0 0.0
    %7592 = vmatpush1.msra.mxu0 %v838
    %7593 = vmatprep.subr.mxu0 0.0
    %7594 = vmatpush1.msra.mxu0 %v839
    %7595 = vmatprep.subr.mxu0 0.0
    %7596 = vmatpush1.msra.mxu0 %v840
    %7597 = vmatprep.subr.mxu0 0.0
    %7598 = vmatpush1.msra.mxu0 %v841
    %7599 = vmatprep.subr.mxu0 0.0
    %7600 = vmatpush1.msra.mxu0 %v842
    %7601 = vmatprep.subr.mxu0 0.0
    %7602 = vmatpush1.msra.mxu0 %v843
    %7603 = vmatprep.subr.mxu0 0.0
    %7604 = vmatpush1.msra.mxu0 %v844
    %7605 = vmatprep.subr.mxu0 0.0
    %7606 = vmatpush1.msra.mxu0 %v845
    %7607 = vmatprep.subr.mxu0 0.0
    %7608 = vmatpush1.msra.mxu0 %v846
    %7609 = vmatprep.subr.mxu0 0.0
    %7610 = vmatpush1.msra.mxu0 %v847
    %7611 = vmatprep.subr.mxu0 0.0
    %7612 = vmatpush1.msra.mxu0 %v848
    %7613 = vmatprep.subr.mxu0 0.0
    %7614 = vmatpush1.msra.mxu0 %v849
    %7615 = vmatprep.subr.mxu0 0.0
    %7616 = vmatpush1.msra.mxu0 0.0
    %7617 = vmatprep.subr.mxu0 0.0
    %7618 = vmatpush1.msra.mxu0 0.0
    %7619 = vmatprep.subr.mxu0 0.0
    %7620 = vmatpush1.msra.mxu0 0.0
    %7621 = vmatprep.subr.mxu0 0.0
    %7622 = vmatpush1.msra.mxu0 0.0
    %7623 = vmatprep.subr.mxu0 0.0
    %7624 = vmatpush1.msra.mxu0 0.0
    %7625 = vmatprep.subr.mxu0 0.0
    %7626 = vmatpush1.msra.mxu0 0.0
    %7627 = vmatprep.subr.mxu0 0.0
    %7628 = vmatpush1.msra.mxu0 0.0
    %7629 = vmatprep.subr.mxu0 0.0
    %7630 = vmatpush1.msra.mxu0 0.0
    %7631 = vmatprep.subr.mxu0 0.0
    %7632 = vmatpush1.msra.mxu0 0.0
    %7633 = vmatprep.subr.mxu0 0.0
    %7634 = vmatpush1.msra.mxu0 0.0
    %7635 = vmatprep.subr.mxu0 0.0
    %7636 = vmatpush1.msra.mxu0 0.0
    %7637 = vmatprep.subr.mxu0 0.0
    %7638 = vmatpush1.msra.mxu0 0.0
    %7639 = vmatprep.subr.mxu0 0.0
    %7640 = vmatpush1.msra.mxu0 0.0
    %7641 = vmatprep.subr.mxu0 0.0
    %7642 = vmatpush1.msra.mxu0 0.0
    %7643 = vmatprep.subr.mxu0 0.0
    %7644 = vmatpush1.msra.mxu0 0.0
    %7645 = vmatprep.subr.mxu0 0.0
    %7646 = vmatpush1.msra.mxu0 0.0
    %7647 = vmatprep.mubr.f32.mxu0 0.0
    %7648 = vmatmul.mubr.f32.gmra.mrb[0].mxu0 %v7055
    %v7649 = vpop.f32.mrb[0].mxu0
    %v7650 = vadd.f32 0.0, %v7649
    %v7651 = vpop.f32.mrb[0].mxu0
    %7652 = vmatprep.mubr.f32.mxu0 0.0
    %7653 = vmatmul.mubr.f32.gmra.mrb[0].mxu0 %v1334
    %v7654 = vpop.f32.mrb[0].mxu0
    %v7655 = vadd.f32 0.0, %v7654
    %v7656 = vpop.f32.mrb[0].mxu0
    %7657 = vdwg.mxu0
    %7658 = vmatprep.subr.mxu0 0.0
    %7659 = vmatpush1.msra.mxu0 %v921
    %7660 = vmatprep.subr.mxu0 0.0
    %7661 = vmatpush1.msra.mxu0 %v922
    %7662 = vmatprep.subr.mxu0 0.0
    %7663 = vmatpush1.msra.mxu0 %v923
    %7664 = vmatprep.subr.mxu0 0.0
    %7665 = vmatpush1.msra.mxu0 %v924
    %7666 = vmatprep.subr.mxu0 0.0
    %7667 = vmatpush1.msra.mxu0 %v925
    %7668 = vmatprep.subr.mxu0 0.0
    %7669 = vmatpush1.msra.mxu0 %v926
    %7670 = vmatprep.subr.mxu0 0.0
    %7671 = vmatpush1.msra.mxu0 %v927
    %7672 = vmatprep.subr.mxu0 0.0
    %7673 = vmatpush1.msra.mxu0 %v928
    %7674 = vmatprep.subr.mxu0 0.0
    %7675 = vmatpush1.msra.mxu0 %v929
    %7676 = vmatprep.subr.mxu0 0.0
    %7677 = vmatpush1.msra.mxu0 %v930
    %7678 = vmatprep.subr.mxu0 0.0
    %7679 = vmatpush1.msra.mxu0 %v931
    %7680 = vmatprep.subr.mxu0 0.0
    %7681 = vmatpush1.msra.mxu0 %v932
    %7682 = vmatprep.subr.mxu0 0.0
    %7683 = vmatpush1.msra.mxu0 %v933
    %7684 = vmatprep.subr.mxu0 0.0
    %7685 = vmatpush1.msra.mxu0 %v934
    %7686 = vmatprep.subr.mxu0 0.0
    %7687 = vmatpush1.msra.mxu0 %v935
    %7688 = vmatprep.subr.mxu0 0.0
    %7689 = vmatpush1.msra.mxu0 %v936
    %7690 = vmatprep.subr.mxu0 0.0
    %7691 = vmatpush1.msra.mxu0 0.0
    %7692 = vmatprep.subr.mxu0 0.0
    %7693 = vmatpush1.msra.mxu0 0.0
    %7694 = vmatprep.subr.mxu0 0.0
    %7695 = vmatpush1.msra.mxu0 0.0
    %7696 = vmatprep.subr.mxu0 0.0
    %7697 = vmatpush1.msra.mxu0 0.0
    %7698 = vmatprep.subr.mxu0 0.0
    %7699 = vmatpush1.msra.mxu0 0.0
    %7700 = vmatprep.subr.mxu0 0.0
    %7701 = vmatpush1.msra.mxu0 0.0
    %7702 = vmatprep.subr.mxu0 0.0
    %7703 = vmatpush1.msra.mxu0 0.0
    %7704 = vmatprep.subr.mxu0 0.0
    %7705 = vmatpush1.msra.mxu0 0.0
    %7706 = vmatprep.subr.mxu0 0.0
    %7707 = vmatpush1.msra.mxu0 0.0
    %7708 = vmatprep.subr.mxu0 0.0
    %7709 = vmatpush1.msra.mxu0 0.0
    %7710 = vmatprep.subr.mxu0 0.0
    %7711 = vmatpush1.msra.mxu0 0.0
    %7712 = vmatprep.subr.mxu0 0.0
    %7713 = vmatpush1.msra.mxu0 0.0
    %7714 = vmatprep.subr.mxu0 0.0
    %7715 = vmatpush1.msra.mxu0 0.0
    %7716 = vmatprep.subr.mxu0 0.0
    %7717 = vmatpush1.msra.mxu0 0.0
    %7718 = vmatprep.subr.mxu0 0.0
    %7719 = vmatpush1.msra.mxu0 0.0
    %7720 = vmatprep.subr.mxu0 0.0
    %7721 = vmatpush1.msra.mxu0 0.0
    %7722 = vmatprep.mubr.f32.mxu0 0.0
    %7723 = vmatmul.mubr.f32.gmra.mrb[0].mxu0 %v7055
    %v7724 = vpop.f32.mrb[0].mxu0
    %v7725 = vadd.f32 0.0, %v7724
    %v7726 = vpop.f32.mrb[0].mxu0
    %7727 = vmatprep.mubr.f32.mxu0 0.0
    %7728 = vmatmul.mubr.f32.gmra.mrb[0].mxu0 %v1334
    %v7729 = vpop.f32.mrb[0].mxu0
    %v7730 = vadd.f32 0.0, %v7729
    %v7731 = vpop.f32.mrb[0].mxu0
    %7732 = vdwg.mxu0
    %7733 = vmatprep.subr.mxu0 0.0
    %7734 = vmatpush1.msra.mxu0 %v1008
    %7735 = vmatprep.subr.mxu0 0.0
    %7736 = vmatpush1.msra.mxu0 %v1009
    %7737 = vmatprep.subr.mxu0 0.0
    %7738 = vmatpush1.msra.mxu0 %v1010
    %7739 = vmatprep.subr.mxu0 0.0
    %7740 = vmatpush1.msra.mxu0 %v1011
    %7741 = vmatprep.subr.mxu0 0.0
    %7742 = vmatpush1.msra.mxu0 %v1012
    %7743 = vmatprep.subr.mxu0 0.0
    %7744 = vmatpush1.msra.mxu0 %v1013
    %7745 = vmatprep.subr.mxu0 0.0
    %7746 = vmatpush1.msra.mxu0 %v1014
    %7747 = vmatprep.subr.mxu0 0.0
    %7748 = vmatpush1.msra.mxu0 %v1015
    %7749 = vmatprep.subr.mxu0 0.0
    %7750 = vmatpush1.msra.mxu0 %v1016
    %7751 = vmatprep.subr.mxu0 0.0
    %7752 = vmatpush1.msra.mxu0 %v1017
    %7753 = vmatprep.subr.mxu0 0.0
    %7754 = vmatpush1.msra.mxu0 %v1018
    %7755 = vmatprep.subr.mxu0 0.0
    %7756 = vmatpush1.msra.mxu0 %v1019
    %7757 = vmatprep.subr.mxu0 0.0
    %7758 = vmatpush1.msra.mxu0 %v1020
    %7759 = vmatprep.subr.mxu0 0.0
    %7760 = vmatpush1.msra.mxu0 %v1021
    %7761 = vmatprep.subr.mxu0 0.0
    %7762 = vmatpush1.msra.mxu0 %v1022
    %7763 = vmatprep.subr.mxu0 0.0
    %7764 = vmatpush1.msra.mxu0 %v1023
    %7765 = vmatprep.subr.mxu0 0.0
    %7766 = vmatpush1.msra.mxu0 0.0
    %7767 = vmatprep.subr.mxu0 0.0
    %7768 = vmatpush1.msra.mxu0 0.0
    %7769 = vmatprep.subr.mxu0 0.0
    %7770 = vmatpush1.msra.mxu0 0.0
    %7771 = vmatprep.subr.mxu0 0.0
    %7772 = vmatpush1.msra.mxu0 0.0
    %7773 = vmatprep.subr.mxu0 0.0
    %7774 = vmatpush1.msra.mxu0 0.0
    %7775 = vmatprep.subr.mxu0 0.0
    %7776 = vmatpush1.msra.mxu0 0.0
    %7777 = vmatprep.subr.mxu0 0.0
    %7778 = vmatpush1.msra.mxu0 0.0
    %7779 = vmatprep.subr.mxu0 0.0
    %7780 = vmatpush1.msra.mxu0 0.0
    %7781 = vmatprep.subr.mxu0 0.0
    %7782 = vmatpush1.msra.mxu0 0.0
    %7783 = vmatprep.subr.mxu0 0.0
    %7784 = vmatpush1.msra.mxu0 0.0
    %7785 = vmatprep.subr.mxu0 0.0
    %7786 = vmatpush1.msra.mxu0 0.0
    %7787 = vmatprep.subr.mxu0 0.0
    %7788 = vmatpush1.msra.mxu0 0.0
    %7789 = vmatprep.subr.mxu0 0.0
    %7790 = vmatpush1.msra.mxu0 0.0
    %7791 = vmatprep.subr.mxu0 0.0
    %7792 = vmatpush1.msra.mxu0 0.0
    %7793 = vmatprep.subr.mxu0 0.0
    %7794 = vmatpush1.msra.mxu0 0.0
    %7795 = vmatprep.subr.mxu0 0.0
    %7796 = vmatpush1.msra.mxu0 0.0
    %7797 = vmatprep.mubr.f32.mxu0 0.0
    %7798 = vmatmul.mubr.f32.gmra.mrb[0].mxu0 %v7055
    %v7799 = vpop.f32.mrb[0].mxu0
    %v7800 = vadd.f32 0.0, %v7799
    %v7801 = vpop.f32.mrb[0].mxu0
    %7802 = vmatprep.mubr.f32.mxu0 0.0
    %7803 = vmatmul.mubr.f32.gmra.mrb[0].mxu0 %v1334
    %v7804 = vpop.f32.mrb[0].mxu0
    %v7805 = vadd.f32 0.0, %v7804
    %v7806 = vpop.f32.mrb[0].mxu0
    %7807 = vdwg.mxu0
    %7808 = vmatprep.subr.mxu0 0.0
    %7809 = vmatpush1.msra.mxu0 %v1095
    %7810 = vmatprep.subr.mxu0 0.0
    %7811 = vmatpush1.msra.mxu0 %v1096
    %7812 = vmatprep.subr.mxu0 0.0
    %7813 = vmatpush1.msra.mxu0 %v1097
    %7814 = vmatprep.subr.mxu0 0.0
    %7815 = vmatpush1.msra.mxu0 %v1098
    %7816 = vmatprep.subr.mxu0 0.0
    %7817 = vmatpush1.msra.mxu0 %v1099
    %7818 = vmatprep.subr.mxu0 0.0
    %7819 = vmatpush1.msra.mxu0 %v1100
    %7820 = vmatprep.subr.mxu0 0.0
    %7821 = vmatpush1.msra.mxu0 %v1101
    %7822 = vmatprep.subr.mxu0 0.0
    %7823 = vmatpush1.msra.mxu0 %v1102
    %7824 = vmatprep.subr.mxu0 0.0
    %7825 = vmatpush1.msra.mxu0 %v1103
    %7826 = vmatprep.subr.mxu0 0.0
    %7827 = vmatpush1.msra.mxu0 %v1104
    %7828 = vmatprep.subr.mxu0 0.0
    %7829 = vmatpush1.msra.mxu0 %v1105
    %7830 = vmatprep.subr.mxu0 0.0
    %7831 = vmatpush1.msra.mxu0 %v1106
    %7832 = vmatprep.subr.mxu0 0.0
    %7833 = vmatpush1.msra.mxu0 %v1107
    %7834 = vmatprep.subr.mxu0 0.0
    %7835 = vmatpush1.msra.mxu0 %v1108
    %7836 = vmatprep.subr.mxu0 0.0
    %7837 = vmatpush1.msra.mxu0 %v1109
    %7838 = vmatprep.subr.mxu0 0.0
    %7839 = vmatpush1.msra.mxu0 %v1110
    %7840 = vmatprep.subr.mxu0 0.0
    %7841 = vmatpush1.msra.mxu0 0.0
    %7842 = vmatprep.subr.mxu0 0.0
    %7843 = vmatpush1.msra.mxu0 0.0
    %7844 = vmatprep.subr.mxu0 0.0
    %7845 = vmatpush1.msra.mxu0 0.0
    %7846 = vmatprep.subr.mxu0 0.0
    %7847 = vmatpush1.msra.mxu0 0.0
    %7848 = vmatprep.subr.mxu0 0.0
    %7849 = vmatpush1.msra.mxu0 0.0
    %7850 = vmatprep.subr.mxu0 0.0
    %7851 = vmatpush1.msra.mxu0 0.0
    %7852 = vmatprep.subr.mxu0 0.0
    %7853 = vmatpush1.msra.mxu0 0.0
    %7854 = vmatprep.subr.mxu0 0.0
    %7855 = vmatpush1.msra.mxu0 0.0
    %7856 = vmatprep.subr.mxu0 0.0
    %7857 = vmatpush1.msra.mxu0 0.0
    %7858 = vmatprep.subr.mxu0 0.0
    %7859 = vmatpush1.msra.mxu0 0.0
    %7860 = vmatprep.subr.mxu0 0.0
    %7861 = vmatpush1.msra.mxu0 0.0
    %7862 = vmatprep.subr.mxu0 0.0
    %7863 = vmatpush1.msra.mxu0 0.0
    %7864 = vmatprep.subr.mxu0 0.0
    %7865 = vmatpush1.msra.mxu0 0.0
    %7866 = vmatprep.subr.mxu0 0.0
    %7867 = vmatpush1.msra.mxu0 0.0
    %7868 = vmatprep.subr.mxu0 0.0
    %7869 = vmatpush1.msra.mxu0 0.0
    %7870 = vmatprep.subr.mxu0 0.0
    %7871 = vmatpush1.msra.mxu0 0.0
    %7872 = vmatprep.mubr.f32.mxu0 0.0
    %7873 = vmatmul.mubr.f32.gmra.mrb[0].mxu0 %v7055
    %v7874 = vpop.f32.mrb[0].mxu0
    %v7875 = vadd.f32 0.0, %v7874
    %v7876 = vpop.f32.mrb[0].mxu0
    %7877 = vmatprep.mubr.f32.mxu0 0.0
    %7878 = vmatmul.mubr.f32.gmra.mrb[0].mxu0 %v1334
    %v7879 = vpop.f32.mrb[0].mxu0
    %v7880 = vadd.f32 0.0, %v7879
    %v7881 = vpop.f32.mrb[0].mxu0
    %7882 = vdwg.mxu0
    %v7885 = vrot.slane %v7200, 4
    %v7886 = vrot.slane %v7205, 4
    %v7887 = vsel %vm1214, %v7885, %v7886
    %v7892 = vrot.slane %v7350, 4
    %v7893 = vrot.slane %v7355, 4
    %v7894 = vsel %vm1214, %v7892, %v7893
    %v7899 = vrot.slane %v7500, 4
    %v7900 = vrot.slane %v7505, 4
    %v7901 = vsel %vm1214, %v7899, %v7900
    %v7906 = vrot.slane %v7650, 4
    %v7907 = vrot.slane %v7655, 4
    %v7908 = vsel %vm1214, %v7906, %v7907
    %v7913 = vrot.slane %v7800, 4
    %v7914 = vrot.slane %v7805, 4
    %v7915 = vsel %vm1214, %v7913, %v7914
    %v7918 = vsel %vm1214, %v7130, %v7885
    %v7919 = vsel %vm1214, %v7280, %v7892
    %v7920 = vsel %vm1214, %v7430, %v7899
    %v7921 = vsel %vm1214, %v7580, %v7906
    %v7922 = vsel %vm1214, %v7730, %v7913
    %v7923 = vld [vmem:[%s59] sm:$0xff]
    %v7925 = vcombine.high %v7923, %v7923
    %v7926 = vsel %vm4476, %v7925, 0
    %v7929 = vsel %vm1214, %v7880, 0
    %7931 = vmatprep.subr.mxu0 0.0
    %7932 = vmatpush1.msra.mxu0 %v7125
    %7933 = vmatprep.subr.mxu0 0.0
    %7934 = vmatpush1.msra.mxu0 %v7918
    %7935 = vmatprep.subr.mxu0 0.0
    %7936 = vmatpush1.msra.mxu0 %v7887
    %7937 = vmatprep.subr.mxu0 0.0
    %7938 = vmatpush1.msra.mxu0 %v7275
    %7939 = vmatprep.subr.mxu0 0.0
    %7940 = vmatpush1.msra.mxu0 %v7919
    %7941 = vmatprep.subr.mxu0 0.0
    %7942 = vmatpush1.msra.mxu0 %v7894
    %7943 = vmatprep.subr.mxu0 0.0
    %7944 = vmatpush1.msra.mxu0 %v7425
    %7945 = vmatprep.subr.mxu0 0.0
    %7946 = vmatpush1.msra.mxu0 %v7920
    %7947 = vmatprep.subr.mxu0 0.0
    %7948 = vmatpush1.msra.mxu0 %v7901
    %7949 = vmatprep.subr.mxu0 0.0
    %7950 = vmatpush1.msra.mxu0 %v7575
    %7951 = vmatprep.subr.mxu0 0.0
    %7952 = vmatpush1.msra.mxu0 %v7921
    %7953 = vmatprep.subr.mxu0 0.0
    %7954 = vmatpush1.msra.mxu0 %v7908
    %7955 = vmatprep.subr.mxu0 0.0
    %7956 = vmatpush1.msra.mxu0 %v7725
    %7957 = vmatprep.subr.mxu0 0.0
    %7958 = vmatpush1.msra.mxu0 %v7922
    %7959 = vmatprep.subr.mxu0 0.0
    %7960 = vmatpush1.msra.mxu0 %v7915
    %7961 = vmatprep.subr.mxu0 0.0
    %7962 = vmatpush1.msra.mxu0 %v7875
    %7963 = vmatprep.subr.mxu0 0.0
    %7964 = vmatpush1.msra.mxu0 %v7929
    %7965 = vmatprep.subr.mxu0 0.0
    %7966 = vmatpush1.msra.mxu0 0.0
    %7967 = vmatprep.subr.mxu0 0.0
    %7968 = vmatpush1.msra.mxu0 0.0
    %7969 = vmatprep.subr.mxu0 0.0
    %7970 = vmatpush1.msra.mxu0 0.0
    %7971 = vmatprep.subr.mxu0 0.0
    %7972 = vmatpush1.msra.mxu0 0.0
    %7973 = vmatprep.subr.mxu0 0.0
    %7974 = vmatpush1.msra.mxu0 0.0
    %7975 = vmatprep.subr.mxu0 0.0
    %7976 = vmatpush1.msra.mxu0 0.0
    %7977 = vmatprep.subr.mxu0 0.0
    %7978 = vmatpush1.msra.mxu0 0.0
    %7979 = vmatprep.subr.mxu0 0.0
    %7980 = vmatpush1.msra.mxu0 0.0
    %7981 = vmatprep.subr.mxu0 0.0
    %7982 = vmatpush1.msra.mxu0 0.0
    %7983 = vmatprep.subr.mxu0 0.0
    %7984 = vmatpush1.msra.mxu0 0.0
    %7985 = vmatprep.subr.mxu0 0.0
    %7986 = vmatpush1.msra.mxu0 0.0
    %7987 = vmatprep.subr.mxu0 0.0
    %7988 = vmatpush1.msra.mxu0 0.0
    %7989 = vmatprep.subr.mxu0 0.0
    %7990 = vmatpush1.msra.mxu0 0.0
    %7991 = vmatprep.subr.mxu0 0.0
    %7992 = vmatpush1.msra.mxu0 0.0
    %7993 = vmatprep.subr.mxu0 0.0
    %7994 = vmatpush1.msra.mxu0 0.0
    %7995 = vmatprep.mubr.f32.mxu0 %v7926
    %7996 = vmatmul.mubr.f32.gmra.mrb[0].mxu0 %v7923
    %v7997 = vpop.f32.mrb[0].mxu0
    %v7998 = vadd.f32 0.0, %v7997
    %v7999 = vpop.f32.mrb[0].mxu0
    %8000 = vdwg.mxu0
    %v8001 = vsel %vm1214, %v7998, 0.0
    %8002 = vadd.xlane.f32.xlu0 %v8001
    %v8003 = vpop.xlane.xlu0 %8002
    %v8004 = vmul.f32 %v8003, %v1305
    %v8005 = vmul.f32 %v7998, %v7998
    %v8006 = vsel %vm1214, %v8005, 0.0
    %8007 = vadd.xlane.f32.xlu0 %v8006
    %v8008 = vpop.xlane.xlu0 %8007
    %v8009 = vmul.f32 %v8008, %v1305
    %v8010 = vmul.f32 %v8004, %v8004
    %v8011 = vsub.f32 %v8009, %v8010
    %v8012 = vsub.f32 %v7998, %v8004
    %v8013 = vadd.f32 %v8011, 1e-05
    %v8014 = vrsqrt.pop %v8013
    %v8015 = vmul.f32 %v8012, %v8014
    %v8016 = vld [vmem:[%s61] sm:$0xf]
    %8018 = vset.pattern.permute.xlu0 0
    %8019 = vperm.xlu0 %8018, %v8016
    %v8020 = vpop.permute.xlu0 %8019
    %v8022 = vmul.f32 %v8015, %v8020
    %v8023 = vld [vmem:[%s63] sm:$0xf]
    %8025 = vset.pattern.permute.xlu0 0
    %8026 = vperm.xlu0 %8025, %v8023
    %v8027 = vpop.permute.xlu0 %8026
    %v8029 = vadd.f32 %v8022, %v8027
    %vm8030 = vcmp.ge.f32.partialorder %v8029, 0.0
    %v8031 = vmul.f32 %v8029, 0.1
    %v8032 = vsel %vm8030, %v8029, %v8031
    %v8034 = vlaneseq
    %v8035 = vshrl.u32 %v8034, 7
    %v8036 = vsub.s32 0, %v8035
    %v8037 = vrot.slane %v224, %v8036
    %v8039 = vsel %vm1214, %v8032, %v8037
    %v8040 = vld [vmem:[#allocation11] sm:$0x1]
    %v8041 = vld [vmem:[#allocation2] sm:$0x1]
    %8043 = vset.pattern.permute.xlu0 0
    %8044 = vperm.xlu0 %8043, %v8041
    %v8045 = vpop.permute.xlu0 %8044
    %v8047 = vlaneseq
    %v8048 = vshrl.u32 %v8047, 7
    %v8049 = vsub.s32 0, %v8048
    %v8050 = vrot.slane %v8045, %v8049
    %vm8051 = vcmask 39936
    %v8053 = vsel %vm8051, %v8040, 0
    %v8056 = vsel %vm1216, %v8039, 0
    %8058 = vmatprep.subr.mxu0 0.0
    %8059 = vmatpush1.msra.mxu0 %v8056
    %8060 = vmatprep.subr.mxu0 0.0
    %8061 = vmatpush1.msra.mxu0 0.0
    %8062 = vmatprep.subr.mxu0 0.0
    %8063 = vmatpush1.msra.mxu0 0.0
    %8064 = vmatprep.subr.mxu0 0.0
    %8065 = vmatpush1.msra.mxu0 0.0
    %8066 = vmatprep.subr.mxu0 0.0
    %8067 = vmatpush1.msra.mxu0 0.0
    %8068 = vmatprep.subr.mxu0 0.0
    %8069 = vmatpush1.msra.mxu0 0.0
    %8070 = vmatprep.subr.mxu0 0.0
    %8071 = vmatpush1.msra.mxu0 0.0
    %8072 = vmatprep.subr.mxu0 0.0
    %8073 = vmatpush1.msra.mxu0 0.0
    %8074 = vmatprep.subr.mxu0 0.0
    %8075 = vmatpush1.msra.mxu0 0.0
    %8076 = vmatprep.subr.mxu0 0.0
    %8077 = vmatpush1.msra.mxu0 0.0
    %8078 = vmatprep.subr.mxu0 0.0
    %8079 = vmatpush1.msra.mxu0 0.0
    %8080 = vmatprep.subr.mxu0 0.0
    %8081 = vmatpush1.msra.mxu0 0.0
    %8082 = vmatprep.subr.mxu0 0.0
    %8083 = vmatpush1.msra.mxu0 0.0
    %8084 = vmatprep.subr.mxu0 0.0
    %8085 = vmatpush1.msra.mxu0 0.0
    %8086 = vmatprep.subr.mxu0 0.0
    %8087 = vmatpush1.msra.mxu0 0.0
    %8088 = vmatprep.subr.mxu0 0.0
    %8089 = vmatpush1.msra.mxu0 0.0
    %8090 = vmatprep.subr.mxu0 0.0
    %8091 = vmatpush1.msra.mxu0 0.0
    %8092 = vmatprep.subr.mxu0 0.0
    %8093 = vmatpush1.msra.mxu0 0.0
    %8094 = vmatprep.subr.mxu0 0.0
    %8095 = vmatpush1.msra.mxu0 0.0
    %8096 = vmatprep.subr.mxu0 0.0
    %8097 = vmatpush1.msra.mxu0 0.0
    %8098 = vmatprep.subr.mxu0 0.0
    %8099 = vmatpush1.msra.mxu0 0.0
    %8100 = vmatprep.subr.mxu0 0.0
    %8101 = vmatpush1.msra.mxu0 0.0
    %8102 = vmatprep.subr.mxu0 0.0
    %8103 = vmatpush1.msra.mxu0 0.0
    %8104 = vmatprep.subr.mxu0 0.0
    %8105 = vmatpush1.msra.mxu0 0.0
    %8106 = vmatprep.subr.mxu0 0.0
    %8107 = vmatpush1.msra.mxu0 0.0
    %8108 = vmatprep.subr.mxu0 0.0
    %8109 = vmatpush1.msra.mxu0 0.0
    %8110 = vmatprep.subr.mxu0 0.0
    %8111 = vmatpush1.msra.mxu0 0.0
    %8112 = vmatprep.subr.mxu0 0.0
    %8113 = vmatpush1.msra.mxu0 0.0
    %8114 = vmatprep.subr.mxu0 0.0
    %8115 = vmatpush1.msra.mxu0 0.0
    %8116 = vmatprep.subr.mxu0 0.0
    %8117 = vmatpush1.msra.mxu0 0.0
    %8118 = vmatprep.subr.mxu0 0.0
    %8119 = vmatpush1.msra.mxu0 0.0
    %8120 = vmatprep.subr.mxu0 0.0
    %8121 = vmatpush1.msra.mxu0 0.0
    %8122 = vmatprep.mubr.f32.mxu0 0.0
    %8123 = vmatmul.mubr.f32.gmra.mrb[0].mxu0 %v8053
    %v8124 = vpop.f32.mrb[0].mxu0
    %v8125 = vadd.f32 %v8050, %v8124
    %v8126 = vpop.f32.mrb[0].mxu0
    %8127 = vdwg.mxu0
    %v8128 = vtanh.pop %v8125
    %8129 = vst [vmem:[%s69] sm:$0x1] %v8128
    // Predicated region
    $region162: #{unet_forward.1} parent=1 // pred_check
      _
    $region163: #{unet_forward.1} parent=1 // pred_check_branch
      %8131 = sbr.rel (0) target = $region165
    $region164: #{unet_forward.1} parent=1 // pred_region
      _
    $region165: #{unet_forward.1} parent=1 // pred_fallthru
      _
    // Predicated region
    $region166: #{unet_forward.1} parent=1 // pred_check
      _
    $region167: #{unet_forward.1} parent=1 // pred_check_branch
      %8133 = sbr.rel (0) target = $region169
    $region168: #{unet_forward.1} parent=1 // pred_region
      _
    $region169: #{unet_forward.1} parent=1 // pred_fallthru
      _
    %8134 = vsyncpa [#allocation4], 1
    %8135 = vsyncpa [#allocation6], 1
    %8136 = vsyncpa [#allocation9], 1
    %8137 = vsyncpa [#allocation12], 1

</llo_original>
